<compile_context>
chip_gen: v6e
topology: v6e:2x2x1
jax: 0.10.0
libtpu: 0.0.40
codegen_flags: <defaults>
</compile_context>

<pallas_src>
import functools
import math

import jax
import jax.numpy as jnp
from jax.experimental import pallas as pl
from jax.experimental.pallas import tpu as pltpu

BN_EPS = 1e-5
_INV_SQRT2 = 1.0 / math.sqrt(2.0)


# ---------------------------------------------------------------------------
# Fused kernel: 2-phase grid (phase, row_tile).
# ---------------------------------------------------------------------------
def _edge_glam_fused_kernel(gamma_ref, beta_ref, w1_ref, b1_ref, w2_ref, b2_ref,
                            x_ref, out_ref,
                            sum_ref, sumsq_ref, w1f_ref, b1f_ref,
                            *, n_rows, narrow_out, needs_mask):
    p = pl.program_id(0)              # 0 = stats phase, 1 = apply phase
    i = pl.program_id(1)              # row-tile index
    last_tile = pl.num_programs(1) - 1
    block_rows, f = x_ref.shape

    # ---- Phase 0: global batch statistics (accumulated in VMEM scratch) ----
    @pl.when(p == 0)
    def _stats():
        @pl.when(i == 0)
        def _init():
            sum_ref[...] = jnp.zeros_like(sum_ref)
            sumsq_ref[...] = jnp.zeros_like(sumsq_ref)

        x = x_ref[...].astype(jnp.float32)
        if needs_mask:
            # Ragged tail: zero out rows past the true N (no host-side pad).
            row = i * block_rows + jax.lax.broadcasted_iota(
                jnp.int32, x.shape, 0)
            x = jnp.where(row < n_rows, x, 0.0)
        sum_ref[...] += jnp.sum(x, axis=0, keepdims=True)
        sumsq_ref[...] += jnp.sum(x * x, axis=0, keepdims=True)

    # ---- Phase boundary: fold BatchNorm into Linear1 (one-time) ----
    @pl.when((p == 0) & (i == last_tile))
    def _fold():
        inv_n = jnp.float32(1.0 / n_rows)
        mean = sum_ref[...] * inv_n                          # (1, F)
        var = sumsq_ref[...] * inv_n - mean * mean           # biased batch var
        scale = gamma_ref[...] * jax.lax.rsqrt(var + BN_EPS)  # (1, F)
        shift = beta_ref[...] - mean * scale                  # (1, F)
        # w1' = diag(scale) @ w1 on the MXU; builds the diagonal with iotas so
        # the (1,F) row never needs a lane->sublane relayout.
        rows = jax.lax.broadcasted_iota(jnp.int32, (f, f), 0)
        cols = jax.lax.broadcasted_iota(jnp.int32, (f, f), 1)
        scale_diag = jnp.where(rows == cols,
                               jnp.broadcast_to(scale, (f, f)), 0.0)
        w1f_ref[...] = jnp.dot(scale_diag, w1_ref[...],
                               preferred_element_type=jnp.float32)
        b1f_ref[...] = b1_ref[...] + jnp.dot(shift, w1_ref[...],
                                             preferred_element_type=jnp.float32)

    # ---- Phase 1: folded Linear1 -> GELU(erf) -> Linear2 ----
    @pl.when(p == 1)
    def _apply():
        x = x_ref[...].astype(jnp.float32)
        h = jnp.dot(x, w1f_ref[...], preferred_element_type=jnp.float32)
        h = h + b1f_ref[...]                                  # (rows, H)
        h = 0.5 * h * (1.0 + jax.lax.erf(h * _INV_SQRT2))     # exact-erf GELU
        if narrow_out:
            # w2_ref is (1, H): VPU multiply + lane reduce; store lane-dense.
            r = jnp.sum(h * w2_ref[...], axis=-1)             # (rows,)
            out_ref[...] = (jnp.reshape(r, (1, block_rows))
                            + b2_ref[...]).astype(out_ref.dtype)
        else:
            o = jnp.dot(h, w2_ref[...], preferred_element_type=jnp.float32)
            out_ref[...] = (o + b2_ref[...]).astype(out_ref.dtype)


# ---------------------------------------------------------------------------
# Wrapper.
# ---------------------------------------------------------------------------
def edge_glam_forward(x, params, *, tile_rows=1024, resident_bytes=4 << 20):
    """x: (N, input_) float32. Returns torch.squeeze(h, 1)-equivalent output."""
    gamma, beta, w1, b1, w2, b2 = params
    n, f = x.shape
    hdim = w1.shape[1]
    out_dim = w2.shape[1]
    narrow_out = (out_dim == 1)

    # Row tiling: keep x fully VMEM-resident when small (read from HBM once);
    # otherwise tile in multiples of 128 rows (lane-dense narrow output).
    if n * f * x.dtype.itemsize <= resident_bytes:
        block_rows = n
    else:
        block_rows = max(128, (min(tile_rows, n) // 128) * 128)
    n_tiles = pl.cdiv(n, block_rows)
    n_pad = n_tiles * block_rows
    needs_mask = (n_pad != n)

    # Width-1 output: pass w2 as a (1, H) row for the VPU-reduce path.
    w2_arg = w2.T if narrow_out else w2

    if narrow_out:
        # Lane-dense output: one row of length n_pad, sliced/reshaped below.
        out_shape = jax.ShapeDtypeStruct((1, n_pad), jnp.float32)
        out_spec = pl.BlockSpec((1, block_rows), lambda p, i: (0, i * p))
    else:
        out_shape = jax.ShapeDtypeStruct((n_pad, out_dim), jnp.float32)
        out_spec = pl.BlockSpec((block_rows, out_dim), lambda p, i: (i * p, 0))
    # (i * p) maps every phase-0 step to block 0, so no garbage is flushed
    # during the stats phase and phase-1 blocks are written exactly once.

    kernel = functools.partial(_edge_glam_fused_kernel,
                               n_rows=n,
                               narrow_out=narrow_out,
                               needs_mask=needs_mask)

    x_reads = 1 if n_tiles == 1 else 2          # resident path reads x once
    flops = (4 * n * f                          # stats
             + 2 * n_pad * f * hdim             # linear1
             + 8 * n_pad * hdim                 # gelu
             + 2 * n_pad * hdim * out_dim)      # linear2
    bytes_accessed = 4 * (x_reads * n * f + n_pad * out_dim
                          + f * hdim + 2 * f + 2 * hdim
                          + hdim * out_dim + out_dim)

    out = pl.pallas_call(
        kernel,
        out_shape=out_shape,
        grid=(2, n_tiles),
        in_specs=[
            pl.BlockSpec((1, f), lambda p, i: (0, 0)),           # gamma
            pl.BlockSpec((1, f), lambda p, i: (0, 0)),           # beta
            pl.BlockSpec((f, hdim), lambda p, i: (0, 0)),        # w1
            pl.BlockSpec((1, hdim), lambda p, i: (0, 0)),        # b1
            pl.BlockSpec(w2_arg.shape, lambda p, i: (0, 0)),     # w2
            pl.BlockSpec((1, out_dim), lambda p, i: (0, 0)),     # b2
            pl.BlockSpec((block_rows, f), lambda p, i: (i, 0)),  # x row tile
        ],
        out_specs=out_spec,
        scratch_shapes=[
            pltpu.VMEM((1, f), jnp.float32),       # running sum
            pltpu.VMEM((1, f), jnp.float32),       # running sum of squares
            pltpu.VMEM((f, hdim), jnp.float32),    # folded w1'
            pltpu.VMEM((1, hdim), jnp.float32),    # folded b1'
        ],
        compiler_params=pltpu.CompilerParams(
            dimension_semantics=("arbitrary", "arbitrary"),
            vmem_limit_bytes=32 * 1024 * 1024),
        cost_estimate=pl.CostEstimate(flops=flops,
                                      transcendentals=n_pad * hdim,
                                      bytes_accessed=bytes_accessed),
    )(gamma, beta, w1, b1, w2_arg, b2, x)

    if narrow_out:
        # torch.squeeze(h, 1): (N, 1) -> (N,)
        return out.reshape(-1)[:n]
    return out[:n]


# ---------------------------------------------------------------------------
# Parameter init (PyTorch-Linear-style uniform ranges) and reference.
# ---------------------------------------------------------------------------
def init_params(key, input_, h, output_):
    k1, k2, k3, k4 = jax.random.split(key, 4)
    gamma = jnp.ones((1, input_), jnp.float32)
    beta = jnp.zeros((1, input_), jnp.float32)
    bound1 = 1.0 / math.sqrt(input_)
    w1 = jax.random.uniform(k1, (input_, h[0]), jnp.float32, -bound1, bound1)
    b1 = jax.random.uniform(k2, (1, h[0]), jnp.float32, -bound1, bound1)
    bound2 = 1.0 / math.sqrt(h[0])
    w2 = jax.random.uniform(k3, (h[0], output_), jnp.float32, -bound2, bound2)
    b2 = jax.random.uniform(k4, (1, output_), jnp.float32, -bound2, bound2)
    return gamma, beta, w1, b1, w2, b2


def _reference_forward(x, params):
    """Pure-JAX reference: training-mode BatchNorm1d + Linear/GELU/Linear."""
    gamma, beta, w1, b1, w2, b2 = params
    mean = jnp.mean(x, axis=0, keepdims=True)
    var = jnp.mean(jnp.square(x - mean), axis=0, keepdims=True)
    x_bn = (x - mean) / jnp.sqrt(var + BN_EPS) * gamma + beta
    h = x_bn @ w1 + b1
    h = 0.5 * h * (1.0 + jax.lax.erf(h * _INV_SQRT2))
    y = h @ w2 + b2
    return jnp.squeeze(y, axis=1) if y.shape[1] == 1 else y


def _check(y, x, params, tol=1e-4):
    y_ref = _reference_forward(x, params)
    err = float(jnp.max(jnp.abs(y - y_ref)))
    assert jnp.allclose(y, y_ref, atol=tol, rtol=tol), f"max abs err {err}"


if __name__ == "__main__":
    key = jax.random.PRNGKey(0)
    k_p1, k_p2, k_x1, k_x2, k_x3 = jax.random.split(key, 5)

    INPUT, HIDDEN = 32, 64

    # --- Config 1: shipped size, width-1 output, VMEM-resident fast path ---
    params1 = init_params(k_p1, INPUT, [HIDDEN], 1)
    x1 = jax.random.normal(k_x1, (512, INPUT), jnp.float32)
    fwd = jax.jit(edge_glam_forward)
    y1 = jax.block_until_ready(fwd(x1, params1))
    assert y1.shape == (512,), y1.shape
    _check(y1, x1, params1)

    # --- Config 2: tiled path (even division), forced by a tiny residency cap
    fwd_tiled = jax.jit(functools.partial(edge_glam_forward,
                                          tile_rows=256, resident_bytes=0))
    x2 = jax.random.normal(k_x2, (1024, INPUT), jnp.float32)
    y2 = jax.block_until_ready(fwd_tiled(x2, params1))
    assert y2.shape == (1024,), y2.shape
    _check(y2, x2, params1)

    # --- Config 3: tiled path with a ragged tail (in-kernel masking, no pad)
    x3 = jax.random.normal(k_x3, (1000, INPUT), jnp.float32)
    y3 = jax.block_until_ready(fwd_tiled(x3, params1))
    assert y3.shape == (1000,), y3.shape
    _check(y3, x3, params1)

    # --- Config 4: multi-column output (MXU second projection branch) ---
    params4 = init_params(k_p2, INPUT, [HIDDEN], 3)
    y4 = jax.block_until_ready(fwd(x1, params4))
    assert y4.shape == (512, 3), y4.shape
    _check(y4, x1, params4)

    print("KERNEL_OK")
</pallas_src>

<mosaic_0001>
module attributes {stable_mosaic.version = 11 : i64} {
  func.func @_edge_glam_fused_kernel(%arg0: i32, %arg1: i32, %arg2: memref<1x32xf32, #tpu.memory_space<vmem>>, %arg3: memref<1x32xf32, #tpu.memory_space<vmem>>, %arg4: memref<32x64xf32, #tpu.memory_space<vmem>>, %arg5: memref<1x64xf32, #tpu.memory_space<vmem>>, %arg6: memref<1x64xf32, #tpu.memory_space<vmem>>, %arg7: memref<1x1xf32, #tpu.memory_space<vmem>>, %arg8: memref<512x32xf32, #tpu.memory_space<vmem>>, %arg9: memref<1x512xf32, #tpu.memory_space<vmem>>, %arg10: memref<1x32xf32, #tpu.memory_space<vmem>>, %arg11: memref<1x32xf32, #tpu.memory_space<vmem>>, %arg12: memref<32x64xf32, #tpu.memory_space<vmem>>, %arg13: memref<1x64xf32, #tpu.memory_space<vmem>>) attributes {dimension_semantics = [#tpu.dimension_semantics<arbitrary>, #tpu.dimension_semantics<arbitrary>], iteration_bounds = array<i64: 2, 1>, scalar_prefetch = 0 : i64, scratch_operands = 4 : i64, tpu.core_type = #tpu.core_type<tc>, window_params = [{pipeline_mode = #tpu.pipeline_mode<synchronous>, transform_indices = @transform_0, window_bounds = array<i64: 1, 32>}, {pipeline_mode = #tpu.pipeline_mode<synchronous>, transform_indices = @transform_1, window_bounds = array<i64: 1, 32>}, {pipeline_mode = #tpu.pipeline_mode<synchronous>, transform_indices = @transform_2, window_bounds = array<i64: 32, 64>}, {pipeline_mode = #tpu.pipeline_mode<synchronous>, transform_indices = @transform_3, window_bounds = array<i64: 1, 64>}, {pipeline_mode = #tpu.pipeline_mode<synchronous>, transform_indices = @transform_4, window_bounds = array<i64: 1, 64>}, {pipeline_mode = #tpu.pipeline_mode<synchronous>, transform_indices = @transform_5, window_bounds = array<i64: 1, 1>}, {transform_indices = @transform_6, window_bounds = array<i64: 512, 32>}, {transform_indices = @transform_7, window_bounds = array<i64: 1, 512>}]} {
    %c0_i32 = arith.constant 0 : i32
    %0 = arith.cmpi eq, %arg0, %c0_i32 : i32
    %1 = arith.extui %0 : i1 to i32
    %c0_i32_0 = arith.constant 0 : i32
    %2 = arith.cmpi ne, %1, %c0_i32_0 : i32
    scf.if %2 {
      %c0_i32_5 = arith.constant 0 : i32
      %11 = arith.cmpi eq, %arg1, %c0_i32_5 : i32
      %12 = arith.extui %11 : i1 to i32
      %c0_i32_6 = arith.constant 0 : i32
      %13 = arith.cmpi ne, %12, %c0_i32_6 : i32
      scf.if %13 {
        %cst_17 = arith.constant 0.000000e+00 : f32
        %26 = vector.broadcast %cst_17 : f32 to vector<1x32xf32>
        %c0_18 = arith.constant 0 : index
        %c0_19 = arith.constant 0 : index
        %27 = vector.load %arg10[%c0_18, %c0_19] : memref<1x32xf32, #tpu.memory_space<vmem>>, vector<1x32xf32>
        tpu.vector_store %arg10[%c0_18, %c0_19], %26 {strides = array<i32>} : memref<1x32xf32, #tpu.memory_space<vmem>>, vector<1x32xf32>,
        %cst_20 = arith.constant 0.000000e+00 : f32
        %28 = vector.broadcast %cst_20 : f32 to vector<1x32xf32>
        %c0_21 = arith.constant 0 : index
        %c0_22 = arith.constant 0 : index
        %29 = vector.load %arg11[%c0_21, %c0_22] : memref<1x32xf32, #tpu.memory_space<vmem>>, vector<1x32xf32>
        tpu.vector_store %arg11[%c0_21, %c0_22], %28 {strides = array<i32>} : memref<1x32xf32, #tpu.memory_space<vmem>>, vector<1x32xf32>,
      } else {
      }
      %c0 = arith.constant 0 : index
      %c0_7 = arith.constant 0 : index
      %14 = vector.load %arg8[%c0, %c0_7] : memref<512x32xf32, #tpu.memory_space<vmem>>, vector<512x32xf32>
      %c0_8 = arith.constant 0 : index
      %c0_9 = arith.constant 0 : index
      %15 = vector.load %arg10[%c0_8, %c0_9] : memref<1x32xf32, #tpu.memory_space<vmem>>, vector<1x32xf32>
      %cst = arith.constant dense<0.000000e+00> : vector<32xf32>
      %16 = vector.multi_reduction <add>, %14, %cst [0] : vector<512x32xf32> to vector<32xf32>
      %17 = vector.shape_cast %16 : vector<32xf32> to vector<1x32xf32>
      %18 = arith.addf %15, %17 : vector<1x32xf32>
      %c0_10 = arith.constant 0 : index
      %c0_11 = arith.constant 0 : index
      %19 = vector.load %arg10[%c0_10, %c0_11] : memref<1x32xf32, #tpu.memory_space<vmem>>, vector<1x32xf32>
      tpu.vector_store %arg10[%c0_10, %c0_11], %18 {strides = array<i32>} : memref<1x32xf32, #tpu.memory_space<vmem>>, vector<1x32xf32>,
      %c0_12 = arith.constant 0 : index
      %c0_13 = arith.constant 0 : index
      %20 = vector.load %arg11[%c0_12, %c0_13] : memref<1x32xf32, #tpu.memory_space<vmem>>, vector<1x32xf32>
      %21 = arith.mulf %14, %14 : vector<512x32xf32>
      %cst_14 = arith.constant dense<0.000000e+00> : vector<32xf32>
      %22 = vector.multi_reduction <add>, %21, %cst_14 [0] : vector<512x32xf32> to vector<32xf32>
      %23 = vector.shape_cast %22 : vector<32xf32> to vector<1x32xf32>
      %24 = arith.addf %20, %23 : vector<1x32xf32>
      %c0_15 = arith.constant 0 : index
      %c0_16 = arith.constant 0 : index
      %25 = vector.load %arg11[%c0_15, %c0_16] : memref<1x32xf32, #tpu.memory_space<vmem>>, vector<1x32xf32>
      tpu.vector_store %arg11[%c0_15, %c0_16], %24 {strides = array<i32>} : memref<1x32xf32, #tpu.memory_space<vmem>>, vector<1x32xf32>,
    } else {
    }
    %c0_i32_1 = arith.constant 0 : i32
    %3 = arith.cmpi eq, %arg0, %c0_i32_1 : i32
    %c0_i32_2 = arith.constant 0 : i32
    %4 = arith.cmpi eq, %arg1, %c0_i32_2 : i32
    %5 = arith.andi %3, %4 : i1
    %6 = arith.extui %5 : i1 to i32
    %c0_i32_3 = arith.constant 0 : i32
    %7 = arith.cmpi ne, %6, %c0_i32_3 : i32
    scf.if %7 {
      %c0 = arith.constant 0 : index
      %c0_5 = arith.constant 0 : index
      %11 = vector.load %arg10[%c0, %c0_5] : memref<1x32xf32, #tpu.memory_space<vmem>>, vector<1x32xf32>
      %cst = arith.constant 0.001953125 : f32
      %12 = vector.broadcast %cst : f32 to vector<1x32xf32>
      %13 = arith.mulf %11, %12 : vector<1x32xf32>
      %c0_6 = arith.constant 0 : index
      %c0_7 = arith.constant 0 : index
      %14 = vector.load %arg11[%c0_6, %c0_7] : memref<1x32xf32, #tpu.memory_space<vmem>>, vector<1x32xf32>
      %cst_8 = arith.constant 0.001953125 : f32
      %15 = vector.broadcast %cst_8 : f32 to vector<1x32xf32>
      %16 = arith.mulf %14, %15 : vector<1x32xf32>
      %17 = arith.mulf %13, %13 : vector<1x32xf32>
      %18 = arith.subf %16, %17 : vector<1x32xf32>
      %c0_9 = arith.constant 0 : index
      %c0_10 = arith.constant 0 : index
      %19 = vector.load %arg2[%c0_9, %c0_10] : memref<1x32xf32, #tpu.memory_space<vmem>>, vector<1x32xf32>
      %cst_11 = arith.constant 9.99999974E-6 : f32
      %20 = vector.broadcast %cst_11 : f32 to vector<1x32xf32>
      %21 = arith.addf %18, %20 : vector<1x32xf32>
      %22 = math.rsqrt %21 : vector<1x32xf32>
      %23 = arith.mulf %19, %22 : vector<1x32xf32>
      %c0_12 = arith.constant 0 : index
      %c0_13 = arith.constant 0 : index
      %24 = vector.load %arg3[%c0_12, %c0_13] : memref<1x32xf32, #tpu.memory_space<vmem>>, vector<1x32xf32>
      %25 = arith.mulf %13, %23 : vector<1x32xf32>
      %26 = arith.subf %24, %25 : vector<1x32xf32>
      %27 = tpu.iota {dimensions = array<i32: 0>} : vector<32x32xi32>
      %28 = tpu.iota {dimensions = array<i32: 1>} : vector<32x32xi32>
      %29 = arith.cmpi eq, %27, %28 : vector<32x32xi32>
      %30 = vector.shape_cast %23 : vector<1x32xf32> to vector<1x32xf32>
      %31 = vector.broadcast %30 : vector<1x32xf32> to vector<32x32xf32>
      %cst_14 = arith.constant 0.000000e+00 : f32
      %32 = vector.broadcast %cst_14 : f32 to vector<32x32xf32>
      %33 = arith.select %29, %31, %32 : vector<32x32xi1>, vector<32x32xf32>
      %c0_15 = arith.constant 0 : index
      %c0_16 = arith.constant 0 : index
      %34 = vector.load %arg4[%c0_15, %c0_16] : memref<32x64xf32, #tpu.memory_space<vmem>>, vector<32x64xf32>
      %cst_17 = arith.constant dense<0.000000e+00> : vector<32x64xf32>
      %35 = tpu.matmul %33, %34, %cst_17 {dimension_numbers = #tpu.dot_dimension_numbers<[1], [0], [0], [1], [0, 0, 1, 1], [], []>} : vector<32x32xf32>, vector<32x64xf32>, vector<32x64xf32> -> vector<32x64xf32>
      %c0_18 = arith.constant 0 : index
      %c0_19 = arith.constant 0 : index
      %36 = vector.load %arg12[%c0_18, %c0_19] : memref<32x64xf32, #tpu.memory_space<vmem>>, vector<32x64xf32>
      tpu.vector_store %arg12[%c0_18, %c0_19], %35 {strides = array<i32>} : memref<32x64xf32, #tpu.memory_space<vmem>>, vector<32x64xf32>,
      %c0_20 = arith.constant 0 : index
      %c0_21 = arith.constant 0 : index
      %37 = vector.load %arg5[%c0_20, %c0_21] : memref<1x64xf32, #tpu.memory_space<vmem>>, vector<1x64xf32>
      %c0_22 = arith.constant 0 : index
      %c0_23 = arith.constant 0 : index
      %38 = vector.load %arg4[%c0_22, %c0_23] : memref<32x64xf32, #tpu.memory_space<vmem>>, vector<32x64xf32>
      %cst_24 = arith.constant dense<0.000000e+00> : vector<1x64xf32>
      %39 = tpu.matmul %26, %38, %cst_24 {dimension_numbers = #tpu.dot_dimension_numbers<[1], [0], [0], [1], [0, 0, 1, 1], [], []>} : vector<1x32xf32>, vector<32x64xf32>, vector<1x64xf32> -> vector<1x64xf32>
      %40 = arith.addf %37, %39 : vector<1x64xf32>
      %c0_25 = arith.constant 0 : index
      %c0_26 = arith.constant 0 : index
      %41 = vector.load %arg13[%c0_25, %c0_26] : memref<1x64xf32, #tpu.memory_space<vmem>>, vector<1x64xf32>
      tpu.vector_store %arg13[%c0_25, %c0_26], %40 {strides = array<i32>} : memref<1x64xf32, #tpu.memory_space<vmem>>, vector<1x64xf32>,
    } else {
    }
    %c1_i32 = arith.constant 1 : i32
    %8 = arith.cmpi eq, %arg0, %c1_i32 : i32
    %9 = arith.extui %8 : i1 to i32
    %c0_i32_4 = arith.constant 0 : i32
    %10 = arith.cmpi ne, %9, %c0_i32_4 : i32
    scf.if %10 {
      %c0 = arith.constant 0 : index
      %c0_5 = arith.constant 0 : index
      %11 = vector.load %arg8[%c0, %c0_5] : memref<512x32xf32, #tpu.memory_space<vmem>>, vector<512x32xf32>
      %c0_6 = arith.constant 0 : index
      %c0_7 = arith.constant 0 : index
      %12 = vector.load %arg12[%c0_6, %c0_7] : memref<32x64xf32, #tpu.memory_space<vmem>>, vector<32x64xf32>
      %cst = arith.constant dense<0.000000e+00> : vector<512x64xf32>
      %13 = tpu.matmul %11, %12, %cst {dimension_numbers = #tpu.dot_dimension_numbers<[1], [0], [0], [1], [0, 0, 1, 1], [], []>} : vector<512x32xf32>, vector<32x64xf32>, vector<512x64xf32> -> vector<512x64xf32>
      %c0_8 = arith.constant 0 : index
      %c0_9 = arith.constant 0 : index
      %14 = vector.load %arg13[%c0_8, %c0_9] : memref<1x64xf32, #tpu.memory_space<vmem>>, vector<1x64xf32>
      %15 = vector.broadcast %14 : vector<1x64xf32> to vector<512x64xf32>
      %16 = arith.addf %13, %15 : vector<512x64xf32>
      %cst_10 = arith.constant 5.000000e-01 : f32
      %17 = vector.broadcast %cst_10 : f32 to vector<512x64xf32>
      %18 = arith.mulf %17, %16 : vector<512x64xf32>
      %cst_11 = arith.constant 0.707106769 : f32
      %19 = vector.broadcast %cst_11 : f32 to vector<512x64xf32>
      %20 = arith.mulf %16, %19 : vector<512x64xf32>
      %21 = math.erf %20 : vector<512x64xf32>
      %cst_12 = arith.constant 1.000000e+00 : f32
      %22 = vector.broadcast %cst_12 : f32 to vector<512x64xf32>
      %23 = arith.addf %22, %21 : vector<512x64xf32>
      %24 = arith.mulf %18, %23 : vector<512x64xf32>
      %c0_13 = arith.constant 0 : index
      %c0_14 = arith.constant 0 : index
      %25 = vector.load %arg6[%c0_13, %c0_14] : memref<1x64xf32, #tpu.memory_space<vmem>>, vector<1x64xf32>
      %26 = vector.broadcast %25 : vector<1x64xf32> to vector<512x64xf32>
      %27 = arith.mulf %24, %26 : vector<512x64xf32>
      %cst_15 = arith.constant dense<0.000000e+00> : vector<512xf32>
      %28 = vector.multi_reduction <add>, %27, %cst_15 [1] : vector<512x64xf32> to vector<512xf32>
      %29 = vector.shape_cast %28 : vector<512xf32> to vector<1x512xf32>
      %c0_16 = arith.constant 0 : index
      %c0_17 = arith.constant 0 : index
      %30 = vector.load %arg7[%c0_16, %c0_17] : memref<1x1xf32, #tpu.memory_space<vmem>>, vector<1x1xf32>
      %31 = vector.broadcast %30 : vector<1x1xf32> to vector<1x512xf32>
      %32 = arith.addf %29, %31 : vector<1x512xf32>
      %c0_18 = arith.constant 0 : index
      %c0_19 = arith.constant 0 : index
      %33 = vector.load %arg9[%c0_18, %c0_19] : memref<1x512xf32, #tpu.memory_space<vmem>>, vector<1x512xf32>
      tpu.vector_store %arg9[%c0_18, %c0_19], %32 {strides = array<i32>} : memref<1x512xf32, #tpu.memory_space<vmem>>, vector<1x512xf32>,
    } else {
    }
    return
  }
  func.func @transform_0(%arg0: i32, %arg1: i32) -> (i32, i32) {
    %c0_i32 = arith.constant 0 : i32
    %c0_i32_0 = arith.constant 0 : i32
    %c0_i32_1 = arith.constant 0 : i32
    return %c0_i32, %c0_i32_0 : i32, i32
  }
  func.func @transform_1(%arg0: i32, %arg1: i32) -> (i32, i32) {
    %c0_i32 = arith.constant 0 : i32
    %c0_i32_0 = arith.constant 0 : i32
    %c0_i32_1 = arith.constant 0 : i32
    return %c0_i32, %c0_i32_0 : i32, i32
  }
  func.func @transform_2(%arg0: i32, %arg1: i32) -> (i32, i32) {
    %c0_i32 = arith.constant 0 : i32
    %c0_i32_0 = arith.constant 0 : i32
    %c0_i32_1 = arith.constant 0 : i32
    return %c0_i32, %c0_i32_0 : i32, i32
  }
  func.func @transform_3(%arg0: i32, %arg1: i32) -> (i32, i32) {
    %c0_i32 = arith.constant 0 : i32
    %c0_i32_0 = arith.constant 0 : i32
    %c0_i32_1 = arith.constant 0 : i32
    return %c0_i32, %c0_i32_0 : i32, i32
  }
  func.func @transform_4(%arg0: i32, %arg1: i32) -> (i32, i32) {
    %c0_i32 = arith.constant 0 : i32
    %c0_i32_0 = arith.constant 0 : i32
    %c0_i32_1 = arith.constant 0 : i32
    return %c0_i32, %c0_i32_0 : i32, i32
  }
  func.func @transform_5(%arg0: i32, %arg1: i32) -> (i32, i32) {
    %c0_i32 = arith.constant 0 : i32
    %c0_i32_0 = arith.constant 0 : i32
    %c0_i32_1 = arith.constant 0 : i32
    return %c0_i32, %c0_i32_0 : i32, i32
  }
  func.func @transform_6(%arg0: i32, %arg1: i32) -> (i32, i32) {
    %c0_i32 = arith.constant 0 : i32
    %c0_i32_0 = arith.constant 0 : i32
    return %arg1, %c0_i32 : i32, i32
  }
  func.func @transform_7(%arg0: i32, %arg1: i32) -> (i32, i32) {
    %0 = arith.muli %arg1, %arg0 : i32
    %c0_i32 = arith.constant 0 : i32
    %c0_i32_0 = arith.constant 0 : i32
    return %c0_i32, %0 : i32, i32
  }
}

</mosaic_0001>

<llo_original>
// kernel: edge_glam_forward.1
$region0: #{edge_glam_forward.1}
  #allocation0 [shape = 'u32[]', space=smem, size = 0x4, offset = 0x4, fixed_abs, tag = 'smem constant byte address 0x4 - core index']
  #allocation1 [shape = 'u32[144,128]{1,0:T(1,128)}', space=vmem, size = 0x12000, scoped, tag = 'internal scratch']
  #allocation2 [shape = 'f32[1,32]{1,0:T(1,128)}', space=vmem, size = 0x200, scoped, tag = 'scratch operand']
  #allocation3 [shape = 'f32[1,32]{1,0:T(1,128)}', space=vmem, size = 0x200, scoped, tag = 'scratch operand']
  #allocation4 [shape = 'f32[32,64]{1,0:T(8,128)}', space=vmem, size = 0x4000, scoped, tag = 'scratch operand']
  #allocation5 [shape = 'f32[1,64]{1,0:T(1,128)}', space=vmem, size = 0x200, scoped, tag = 'scratch operand']
  #allocation6 [shape = 'f32[1,1]{1,0:T(1,128)S(1)}', space=vmem, size = 0x200, scoped, tag = 'scoped memory for edge_glam_forward.1']
  %s0 = inlined_call_operand.vmem [shape: f32[1,32], index: 0, kind: input, shape index: {}]
  %s1 = inlined_call_operand.vmem [shape: f32[1,32], index: 1, kind: input, shape index: {}]
  %s2 = inlined_call_operand.vmem [shape: f32[32,64], index: 2, kind: input, shape index: {}]
  %s3 = inlined_call_operand.vmem [shape: f32[1,64], index: 3, kind: input, shape index: {}]
  %s4 = inlined_call_operand.vmem [shape: f32[1,64], index: 4, kind: input, shape index: {}]
  %s5 = inlined_call_operand.<no memory space> [shape: f32[1,1], index: 5, kind: input, shape index: {}]
  %s6 = inlined_call_operand.vmem [shape: f32[512,32], index: 6, kind: input, shape index: {}]
  %s7 = inlined_call_operand.hbm [shape: f32[1,512], index: 7, kind: output, shape index: {}]
  %s8 = sld [smem:[#allocation0]]
  $region77: #{edge_glam_forward.1} parent=0
    _
  %s10 = ssub.s32 1, %s8
  %s11 = scalar_select 0, %s10, %s8
  %v12 = vstv %s5
  %13 = vst [vmem:[#allocation6] sm:$0x1] %v12
  $region1: #{edge_glam_forward.1} parent=0
    #allocation7 [shape = 'u8[4096]{0}', space=vmem, size = 0x1000, scoped, tag = 'output window, operand 0']
    #allocation8 [shape = 's32[2]{0}', space=sflag, size = 0x8, scoped, tag = 'scoped memory for edge_glam_forward.1']
    %14 = vsyncpa [#allocation8], 0
    %s15 = scalar_lea.sflag [#allocation8], 1
    %16 = vsyncpa %s15, 0
    loop: start=0, step=1, limit=4
    $region2: #{edge_glam_forward.1} parent=1 // loop_pre_header
      _
    $region3: #{edge_glam_forward.1} parent=1 // loop_header
      %s18 = sphi 0, %s22
      %p19 = scmp.ge.s32.totalorder %s18, 4
      %s25 = sphi 0, %s37
      %s26 = sphi 0, %s33
      %s27 = sphi 0, %s25
      %s28 = sphi 0, %s26
      %s29 = sphi 0, %s27
      %s30 = sphi 0, %s28
      %s38 = sphi 0, %s38
      %s40 = sphi 0, %s38
      %s41 = sphi 0, %s40
      %s55 = sphi 0, %s41
      %s59 = sphi 0, %s59
      %s61 = sphi 0, %s59
      %s62 = sphi 0, %s61
      %s76 = sphi 0, %s62
      %s80 = sphi 0, %s80
      %s82 = sphi 0, %s80
      %s83 = sphi 0, %s82
      %s97 = sphi 0, %s83
      %s101 = sphi 0, %s101
      %s103 = sphi 0, %s101
      %s104 = sphi 0, %s103
      %s118 = sphi 0, %s104
      %s122 = sphi 0, %s122
      %s124 = sphi 0, %s122
      %s125 = sphi 0, %s124
      %s139 = sphi 0, %s125
      %s143 = sphi 0, %s143
      %s145 = sphi 0, %s143
      %s146 = sphi 0, %s145
      %s160 = sphi 0, %s146
      %s166 = sphi 0, %s168
      %s169 = sphi 0, %s166
      %s170 = sphi 0, %s169
      %s186 = sphi 0, %s170
      %s194 = sphi 0, %s196
      %s197 = sphi 0, %s194
      %s198 = sphi 0, %s197
      %s214 = sphi 0, %s198
    $region4: #{edge_glam_forward.1} parent=1 // loop_header_branch
      %21 = sbr.rel (%p19) target = $region8
    $region5: #{edge_glam_forward.1} parent=1 // loop_body
      %s23 = ssub.s32 %s18, 1
      %s24 = ssub.s32 %s18, 2
      %s31 = sadd.s32 1, %s26
      %p32 = scmp.ge.s32.totalorder %s31, 1
      %s33 = scalar_select %p32, 0, %s31
      %s34 = sadd.s32 1, %s25
      %s35 = scalar_select %p32, %s34, %s25
      %p36 = scmp.ge.s32.totalorder %s35, 2
      %s37 = scalar_select %p36, 0, %s35
      %s39 = sadd.s32 %s38, 1
      %p42 = scmp.eq.s32.totalorder %s18, 1
      %p43 = scmp.ne.s32.totalorder %s38, %s40
      %p44 = scmp.eq.s32.totalorder %s18, 0
      %p45 = por %p43, %p44
      %p46 = scmp.ne.s32.totalorder %s38, %s40
      %p47 = scmp.eq.s32.totalorder %s23, 1
      %p48 = por %p46, %p47
      %p49 = scmp.ne.s32.totalorder %s40, %s41
      %p50 = scmp.eq.s32.totalorder %s23, 0
      %p51 = por %p49, %p50
      %p52 = scmp.ne.s32.totalorder %s40, %s41
      %p53 = scmp.eq.s32.totalorder %s24, 1
      %p54 = por %p52, %p53
      %p56 = scmp.ne.s32.totalorder %s41, %s55
      %p57 = scmp.eq.s32.totalorder %s24, 0
      %p58 = por %p56, %p57
      %s60 = sadd.s32 %s59, 1
      %p63 = scmp.eq.s32.totalorder %s18, 1
      %p64 = scmp.ne.s32.totalorder %s59, %s61
      %p65 = scmp.eq.s32.totalorder %s18, 0
      %p66 = por %p64, %p65
      %p67 = scmp.ne.s32.totalorder %s59, %s61
      %p68 = scmp.eq.s32.totalorder %s23, 1
      %p69 = por %p67, %p68
      %p70 = scmp.ne.s32.totalorder %s61, %s62
      %p71 = scmp.eq.s32.totalorder %s23, 0
      %p72 = por %p70, %p71
      %p73 = scmp.ne.s32.totalorder %s61, %s62
      %p74 = scmp.eq.s32.totalorder %s24, 1
      %p75 = por %p73, %p74
      %p77 = scmp.ne.s32.totalorder %s62, %s76
      %p78 = scmp.eq.s32.totalorder %s24, 0
      %p79 = por %p77, %p78
      %s81 = sadd.s32 %s80, 1
      %p84 = scmp.eq.s32.totalorder %s18, 1
      %p85 = scmp.ne.s32.totalorder %s80, %s82
      %p86 = scmp.eq.s32.totalorder %s18, 0
      %p87 = por %p85, %p86
      %p88 = scmp.ne.s32.totalorder %s80, %s82
      %p89 = scmp.eq.s32.totalorder %s23, 1
      %p90 = por %p88, %p89
      %p91 = scmp.ne.s32.totalorder %s82, %s83
      %p92 = scmp.eq.s32.totalorder %s23, 0
      %p93 = por %p91, %p92
      %p94 = scmp.ne.s32.totalorder %s82, %s83
      %p95 = scmp.eq.s32.totalorder %s24, 1
      %p96 = por %p94, %p95
      %p98 = scmp.ne.s32.totalorder %s83, %s97
      %p99 = scmp.eq.s32.totalorder %s24, 0
      %p100 = por %p98, %p99
      %s102 = sadd.s32 %s101, 1
      %p105 = scmp.eq.s32.totalorder %s18, 1
      %p106 = scmp.ne.s32.totalorder %s101, %s103
      %p107 = scmp.eq.s32.totalorder %s18, 0
      %p108 = por %p106, %p107
      %p109 = scmp.ne.s32.totalorder %s101, %s103
      %p110 = scmp.eq.s32.totalorder %s23, 1
      %p111 = por %p109, %p110
      %p112 = scmp.ne.s32.totalorder %s103, %s104
      %p113 = scmp.eq.s32.totalorder %s23, 0
      %p114 = por %p112, %p113
      %p115 = scmp.ne.s32.totalorder %s103, %s104
      %p116 = scmp.eq.s32.totalorder %s24, 1
      %p117 = por %p115, %p116
      %p119 = scmp.ne.s32.totalorder %s104, %s118
      %p120 = scmp.eq.s32.totalorder %s24, 0
      %p121 = por %p119, %p120
      %s123 = sadd.s32 %s122, 1
      %p126 = scmp.eq.s32.totalorder %s18, 1
      %p127 = scmp.ne.s32.totalorder %s122, %s124
      %p128 = scmp.eq.s32.totalorder %s18, 0
      %p129 = por %p127, %p128
      %p130 = scmp.ne.s32.totalorder %s122, %s124
      %p131 = scmp.eq.s32.totalorder %s23, 1
      %p132 = por %p130, %p131
      %p133 = scmp.ne.s32.totalorder %s124, %s125
      %p134 = scmp.eq.s32.totalorder %s23, 0
      %p135 = por %p133, %p134
      %p136 = scmp.ne.s32.totalorder %s124, %s125
      %p137 = scmp.eq.s32.totalorder %s24, 1
      %p138 = por %p136, %p137
      %p140 = scmp.ne.s32.totalorder %s125, %s139
      %p141 = scmp.eq.s32.totalorder %s24, 0
      %p142 = por %p140, %p141
      %s144 = sadd.s32 %s143, 1
      %p147 = scmp.eq.s32.totalorder %s18, 1
      %p148 = scmp.ne.s32.totalorder %s143, %s145
      %p149 = scmp.eq.s32.totalorder %s18, 0
      %p150 = por %p148, %p149
      %p151 = scmp.ne.s32.totalorder %s143, %s145
      %p152 = scmp.eq.s32.totalorder %s23, 1
      %p153 = por %p151, %p152
      %p154 = scmp.ne.s32.totalorder %s145, %s146
      %p155 = scmp.eq.s32.totalorder %s23, 0
      %p156 = por %p154, %p155
      %p157 = scmp.ne.s32.totalorder %s145, %s146
      %p158 = scmp.eq.s32.totalorder %s24, 1
      %p159 = por %p157, %p158
      %p161 = scmp.ne.s32.totalorder %s146, %s160
      %p162 = scmp.eq.s32.totalorder %s24, 0
      %p163 = por %p161, %p162
      %s164 = ssub.s32 %s26, %s33
      %p165 = scmp.eq.s32.totalorder %s164, 0
      %s167 = sadd.s32 %s166, 1
      %s168 = scalar_select %p165, %s166, %s167
      %p171 = pneg %p165
      %p172 = scmp.eq.s32.totalorder %s18, 1
      %p173 = por %p171, %p172
      %p174 = scmp.ne.s32.totalorder %s166, %s169
      %p175 = scmp.eq.s32.totalorder %s18, 0
      %p176 = por %p174, %p175
      %p177 = scmp.ne.s32.totalorder %s166, %s169
      %p178 = scmp.eq.s32.totalorder %s23, 1
      %p179 = por %p177, %p178
      %p180 = scmp.ne.s32.totalorder %s169, %s170
      %p181 = scmp.eq.s32.totalorder %s23, 0
      %p182 = por %p180, %p181
      %p183 = scmp.ne.s32.totalorder %s169, %s170
      %p184 = scmp.eq.s32.totalorder %s24, 1
      %p185 = por %p183, %p184
      %p187 = scmp.ne.s32.totalorder %s170, %s186
      %p188 = scmp.eq.s32.totalorder %s24, 0
      %p189 = por %p187, %p188
      %s190 = smul.u32 %s26, %s25
      %s191 = smul.u32 %s33, %s37
      %s192 = ssub.s32 %s190, %s191
      %p193 = scmp.eq.s32.totalorder %s192, 0
      %s195 = sadd.s32 %s194, 1
      %s196 = scalar_select %p193, %s194, %s195
      %p199 = pneg %p193
      %p200 = scmp.eq.s32.totalorder %s18, 1
      %p201 = por %p199, %p200
      %p202 = scmp.ne.s32.totalorder %s194, %s197
      %p203 = scmp.eq.s32.totalorder %s18, 0
      %p204 = por %p202, %p203
      %p205 = scmp.ne.s32.totalorder %s194, %s197
      %p206 = scmp.eq.s32.totalorder %s23, 1
      %p207 = por %p205, %p206
      %p208 = scmp.ne.s32.totalorder %s197, %s198
      %p209 = scmp.eq.s32.totalorder %s23, 0
      %p210 = por %p208, %p209
      %p211 = scmp.ne.s32.totalorder %s197, %s198
      %p212 = scmp.eq.s32.totalorder %s24, 1
      %p213 = por %p211, %p212
      %p215 = scmp.ne.s32.totalorder %s198, %s214
      %p216 = scmp.eq.s32.totalorder %s24, 0
      %p217 = por %p215, %p216
      %p218 = scmp.le.s32.totalorder 1, %s18
      %p219 = scmp.lt.s32.totalorder %s18, 3
      %p220 = pnand %p218, %p219
      %p221 = pneg %p220
      // Predicated region
      $region9: #{edge_glam_forward.1} parent=5 // pred_check
        _
      $region10: #{edge_glam_forward.1} parent=5 // pred_check_branch
        %223 = sbr.rel (%p220) target = $region12
      $region11: #{edge_glam_forward.1} parent=5 // pred_region
        %s224 = ssub.s32 %s18, 1
        // Predicated region
        $region13: #{edge_glam_forward.1} parent=11 // pred_check
          %p225 = pneg %p51
        $region14: #{edge_glam_forward.1} parent=11 // pred_check_branch
          %227 = sbr.rel (%p225) target = $region16
        $region15: #{edge_glam_forward.1} parent=11 // pred_region
          _
        $region16: #{edge_glam_forward.1} parent=11 // pred_fallthru
          _
        // Predicated region
        $region17: #{edge_glam_forward.1} parent=11 // pred_check
          %p228 = pneg %p72
        $region18: #{edge_glam_forward.1} parent=11 // pred_check_branch
          %230 = sbr.rel (%p228) target = $region20
        $region19: #{edge_glam_forward.1} parent=11 // pred_region
          _
        $region20: #{edge_glam_forward.1} parent=11 // pred_fallthru
          _
        // Predicated region
        $region21: #{edge_glam_forward.1} parent=11 // pred_check
          %p231 = pneg %p93
        $region22: #{edge_glam_forward.1} parent=11 // pred_check_branch
          %233 = sbr.rel (%p231) target = $region24
        $region23: #{edge_glam_forward.1} parent=11 // pred_region
          _
        $region24: #{edge_glam_forward.1} parent=11 // pred_fallthru
          _
        // Predicated region
        $region25: #{edge_glam_forward.1} parent=11 // pred_check
          %p234 = pneg %p114
        $region26: #{edge_glam_forward.1} parent=11 // pred_check_branch
          %236 = sbr.rel (%p234) target = $region28
        $region27: #{edge_glam_forward.1} parent=11 // pred_region
          _
        $region28: #{edge_glam_forward.1} parent=11 // pred_fallthru
          _
        // Predicated region
        $region29: #{edge_glam_forward.1} parent=11 // pred_check
          %p237 = pneg %p135
        $region30: #{edge_glam_forward.1} parent=11 // pred_check_branch
          %239 = sbr.rel (%p237) target = $region32
        $region31: #{edge_glam_forward.1} parent=11 // pred_region
          _
        $region32: #{edge_glam_forward.1} parent=11 // pred_fallthru
          _
        // Predicated region
        $region33: #{edge_glam_forward.1} parent=11 // pred_check
          %p240 = pneg %p156
        $region34: #{edge_glam_forward.1} parent=11 // pred_check_branch
          %242 = sbr.rel (%p240) target = $region36
        $region35: #{edge_glam_forward.1} parent=11 // pred_region
          _
        $region36: #{edge_glam_forward.1} parent=11 // pred_fallthru
          _
        // Predicated region
        $region37: #{edge_glam_forward.1} parent=11 // pred_check
          %p243 = pneg %p182
        $region38: #{edge_glam_forward.1} parent=11 // pred_check_branch
          %245 = sbr.rel (%p243) target = $region40
        $region39: #{edge_glam_forward.1} parent=11 // pred_region
          %s246 = smul.u32 64, %s28
          %p247 = scmp.lt.s32.totalorder %s246, 63
          %s248 = scalar_select %p247, %s246, 63
          %s249 = smul.addr %s248, 8
          %s250 = scalar_lea.vmem %s6, %s249
          %s251 = smul.u32 64, %s28
        $region40: #{edge_glam_forward.1} parent=11 // pred_fallthru
          _
      $region12: #{edge_glam_forward.1} parent=5 // pred_fallthru
        _
      %p252 = scmp.lt.s32.totalorder %s18, 2
      // Predicated region
      $region41: #{edge_glam_forward.1} parent=5 // pred_check
        %p253 = pneg %p252
      $region42: #{edge_glam_forward.1} parent=5 // pred_check_branch
        %255 = sbr.rel (%p253) target = $region44
      $region43: #{edge_glam_forward.1} parent=5 // pred_region
        _
      $region44: #{edge_glam_forward.1} parent=5 // pred_fallthru
        _
      %p256 = scmp.le.s32.totalorder 1, %s18
      %p257 = scmp.lt.s32.totalorder %s18, 3
      %p258 = pnand %p256, %p257
      %p259 = pneg %p258
      // Predicated region
      $region45: #{edge_glam_forward.1} parent=5 // pred_check
        _
      $region46: #{edge_glam_forward.1} parent=5 // pred_check_branch
        %261 = sbr.rel (%p258) target = $region48
      $region47: #{edge_glam_forward.1} parent=5 // pred_region
        %s262 = ssub.s32 %s18, 1
        %p263 = pneg %p51
        %p264 = pneg %p48
        %p265 = pneg %p72
        %p266 = pneg %p69
        %p267 = pneg %p93
        %p268 = pneg %p90
        %p269 = pneg %p114
        %p270 = pneg %p111
        %p271 = pneg %p135
        %p272 = pneg %p132
        %p273 = pneg %p156
        %p274 = pneg %p153
        %s275 = smul.u32 64, %s28
        %p276 = scmp.lt.s32.totalorder %s275, 63
        %s277 = scalar_select %p276, %s275, 63
        %s278 = smul.addr %s277, 8
        %s279 = scalar_lea.vmem %s6, %s278
        %p280 = pneg %p182
        %p281 = pneg %p179
        %p282 = pneg %p210
        %p283 = pneg %p207
        %s284 = sand.u32 %s197, 1
        %s285 = scalar_lea.sflag [#allocation8], %s284
        %s286 = sand.u32 %s197, 1
        %s287 = smul.addr %s286, 4
        %s288 = scalar_lea.vmem [#allocation7], %s287
        %s289 = smul.u32 64, %s28
        %p290 = scmp.lt.s32.totalorder %s289, 63
        %s291 = scalar_select %p290, %s289, 63
        %s292 = smul.addr %s291, 8
        %s293 = scalar_lea.vmem %s6, %s292
        %s294 = smul.u32 64, %s28
        %s295 = smul.u32 %s28, %s27
        %s296 = smul.u32 4, %s295
        %p297 = scmp.eq.s32.totalorder %s27, 0
        // Predicated region
        $region49: #{edge_glam_forward.1} parent=47 // pred_check
          %p298 = pneg %p297
        $region50: #{edge_glam_forward.1} parent=47 // pred_check_branch
          %300 = sbr.rel (%p298) target = $region52
        $region51: #{edge_glam_forward.1} parent=47 // pred_region
          %p301 = scmp.eq.s32.totalorder %s28, 0
          // Predicated region
          $region53: #{edge_glam_forward.1} parent=51 // pred_check
            %p302 = pneg %p301
          $region54: #{edge_glam_forward.1} parent=51 // pred_check_branch
            %304 = sbr.rel (%p302) target = $region56
          $region55: #{edge_glam_forward.1} parent=51 // pred_region
            %vm305 = vcmask 253952
            %306 = vst.msk [vmem:[#allocation2] sm:$0x1] %vm305, 0.0
            %307 = vst.msk [vmem:[#allocation3] sm:$0x1] %vm305, 0.0
          $region56: #{edge_glam_forward.1} parent=51 // pred_fallthru
            _
          %v308 = vld [vmem:[%s293] sm:$0xff]
          %v309 = vld [vmem:[%s293 + $0x8] sm:$0xff]
          %v310 = vld [vmem:[%s293 + $0x10] sm:$0xff]
          %v311 = vld [vmem:[%s293 + $0x18] sm:$0xff]
          %v312 = vld [vmem:[%s293 + $0x20] sm:$0xff]
          %v313 = vld [vmem:[%s293 + $0x28] sm:$0xff]
          %v314 = vld [vmem:[%s293 + $0x30] sm:$0xff]
          %v315 = vld [vmem:[%s293 + $0x38] sm:$0xff]
          %v316 = vld [vmem:[%s293 + $0x40] sm:$0xff]
          %v317 = vld [vmem:[%s293 + $0x48] sm:$0xff]
          %v318 = vld [vmem:[%s293 + $0x50] sm:$0xff]
          %v319 = vld [vmem:[%s293 + $0x58] sm:$0xff]
          %v320 = vld [vmem:[%s293 + $0x60] sm:$0xff]
          %v321 = vld [vmem:[%s293 + $0x68] sm:$0xff]
          %v322 = vld [vmem:[%s293 + $0x70] sm:$0xff]
          %v323 = vld [vmem:[%s293 + $0x78] sm:$0xff]
          %v324 = vld [vmem:[%s293 + $0x80] sm:$0xff]
          %v325 = vld [vmem:[%s293 + $0x88] sm:$0xff]
          %v326 = vld [vmem:[%s293 + $0x90] sm:$0xff]
          %v327 = vld [vmem:[%s293 + $0x98] sm:$0xff]
          %v328 = vld [vmem:[%s293 + $0xa0] sm:$0xff]
          %v329 = vld [vmem:[%s293 + $0xa8] sm:$0xff]
          %v330 = vld [vmem:[%s293 + $0xb0] sm:$0xff]
          %v331 = vld [vmem:[%s293 + $0xb8] sm:$0xff]
          %v332 = vld [vmem:[%s293 + $0xc0] sm:$0xff]
          %v333 = vld [vmem:[%s293 + $0xc8] sm:$0xff]
          %v334 = vld [vmem:[%s293 + $0xd0] sm:$0xff]
          %v335 = vld [vmem:[%s293 + $0xd8] sm:$0xff]
          %v336 = vld [vmem:[%s293 + $0xe0] sm:$0xff]
          %v337 = vld [vmem:[%s293 + $0xe8] sm:$0xff]
          %v338 = vld [vmem:[%s293 + $0xf0] sm:$0xff]
          %v339 = vld [vmem:[%s293 + $0xf8] sm:$0xff]
          %v340 = vld [vmem:[%s293 + $0x100] sm:$0xff]
          %v341 = vld [vmem:[%s293 + $0x108] sm:$0xff]
          %v342 = vld [vmem:[%s293 + $0x110] sm:$0xff]
          %v343 = vld [vmem:[%s293 + $0x118] sm:$0xff]
          %v344 = vld [vmem:[%s293 + $0x120] sm:$0xff]
          %v345 = vld [vmem:[%s293 + $0x128] sm:$0xff]
          %v346 = vld [vmem:[%s293 + $0x130] sm:$0xff]
          %v347 = vld [vmem:[%s293 + $0x138] sm:$0xff]
          %v348 = vld [vmem:[%s293 + $0x140] sm:$0xff]
          %v349 = vld [vmem:[%s293 + $0x148] sm:$0xff]
          %v350 = vld [vmem:[%s293 + $0x150] sm:$0xff]
          %v351 = vld [vmem:[%s293 + $0x158] sm:$0xff]
          %v352 = vld [vmem:[%s293 + $0x160] sm:$0xff]
          %v353 = vld [vmem:[%s293 + $0x168] sm:$0xff]
          %v354 = vld [vmem:[%s293 + $0x170] sm:$0xff]
          %v355 = vld [vmem:[%s293 + $0x178] sm:$0xff]
          %v356 = vld [vmem:[%s293 + $0x180] sm:$0xff]
          %v357 = vld [vmem:[%s293 + $0x188] sm:$0xff]
          %v358 = vld [vmem:[%s293 + $0x190] sm:$0xff]
          %v359 = vld [vmem:[%s293 + $0x198] sm:$0xff]
          %v360 = vld [vmem:[%s293 + $0x1a0] sm:$0xff]
          %v361 = vld [vmem:[%s293 + $0x1a8] sm:$0xff]
          %v362 = vld [vmem:[%s293 + $0x1b0] sm:$0xff]
          %v363 = vld [vmem:[%s293 + $0x1b8] sm:$0xff]
          %v364 = vld [vmem:[%s293 + $0x1c0] sm:$0xff]
          %v365 = vld [vmem:[%s293 + $0x1c8] sm:$0xff]
          %v366 = vld [vmem:[%s293 + $0x1d0] sm:$0xff]
          %v367 = vld [vmem:[%s293 + $0x1d8] sm:$0xff]
          %v368 = vld [vmem:[%s293 + $0x1e0] sm:$0xff]
          %v369 = vld [vmem:[%s293 + $0x1e8] sm:$0xff]
          %v370 = vld [vmem:[%s293 + $0x1f0] sm:$0xff]
          %v371 = vld [vmem:[%s293 + $0x1f8] sm:$0xff]
          %v372 = vld [vmem:[#allocation2] sm:$0x1]
          %vm373 = vcmask 261120
          %v374 = vsel %vm373, %v308, 0.0
          %v375 = vsel %vm373, %v309, 0.0
          %v376 = vadd.f32 %v374, %v375
          %v377 = vsel %vm373, %v310, 0.0
          %v378 = vadd.f32 %v376, %v377
          %v379 = vsel %vm373, %v311, 0.0
          %v380 = vadd.f32 %v378, %v379
          %v381 = vsel %vm373, %v312, 0.0
          %v382 = vadd.f32 %v380, %v381
          %v383 = vsel %vm373, %v313, 0.0
          %v384 = vadd.f32 %v382, %v383
          %v385 = vsel %vm373, %v314, 0.0
          %v386 = vadd.f32 %v384, %v385
          %v387 = vsel %vm373, %v315, 0.0
          %v388 = vadd.f32 %v386, %v387
          %v389 = vsel %vm373, %v316, 0.0
          %v390 = vadd.f32 %v388, %v389
          %v391 = vsel %vm373, %v317, 0.0
          %v392 = vadd.f32 %v390, %v391
          %v393 = vsel %vm373, %v318, 0.0
          %v394 = vadd.f32 %v392, %v393
          %v395 = vsel %vm373, %v319, 0.0
          %v396 = vadd.f32 %v394, %v395
          %v397 = vsel %vm373, %v320, 0.0
          %v398 = vadd.f32 %v396, %v397
          %v399 = vsel %vm373, %v321, 0.0
          %v400 = vadd.f32 %v398, %v399
          %v401 = vsel %vm373, %v322, 0.0
          %v402 = vadd.f32 %v400, %v401
          %v403 = vsel %vm373, %v323, 0.0
          %v404 = vadd.f32 %v402, %v403
          %v405 = vsel %vm373, %v324, 0.0
          %v406 = vadd.f32 %v404, %v405
          %v407 = vsel %vm373, %v325, 0.0
          %v408 = vadd.f32 %v406, %v407
          %v409 = vsel %vm373, %v326, 0.0
          %v410 = vadd.f32 %v408, %v409
          %v411 = vsel %vm373, %v327, 0.0
          %v412 = vadd.f32 %v410, %v411
          %v413 = vsel %vm373, %v328, 0.0
          %v414 = vadd.f32 %v412, %v413
          %v415 = vsel %vm373, %v329, 0.0
          %v416 = vadd.f32 %v414, %v415
          %v417 = vsel %vm373, %v330, 0.0
          %v418 = vadd.f32 %v416, %v417
          %v419 = vsel %vm373, %v331, 0.0
          %v420 = vadd.f32 %v418, %v419
          %v421 = vsel %vm373, %v332, 0.0
          %v422 = vadd.f32 %v420, %v421
          %v423 = vsel %vm373, %v333, 0.0
          %v424 = vadd.f32 %v422, %v423
          %v425 = vsel %vm373, %v334, 0.0
          %v426 = vadd.f32 %v424, %v425
          %v427 = vsel %vm373, %v335, 0.0
          %v428 = vadd.f32 %v426, %v427
          %v429 = vsel %vm373, %v336, 0.0
          %v430 = vadd.f32 %v428, %v429
          %v431 = vsel %vm373, %v337, 0.0
          %v432 = vadd.f32 %v430, %v431
          %v433 = vsel %vm373, %v338, 0.0
          %v434 = vadd.f32 %v432, %v433
          %v435 = vsel %vm373, %v339, 0.0
          %v436 = vadd.f32 %v434, %v435
          %v437 = vsel %vm373, %v340, 0.0
          %v438 = vadd.f32 %v436, %v437
          %v439 = vsel %vm373, %v341, 0.0
          %v440 = vadd.f32 %v438, %v439
          %v441 = vsel %vm373, %v342, 0.0
          %v442 = vadd.f32 %v440, %v441
          %v443 = vsel %vm373, %v343, 0.0
          %v444 = vadd.f32 %v442, %v443
          %v445 = vsel %vm373, %v344, 0.0
          %v446 = vadd.f32 %v444, %v445
          %v447 = vsel %vm373, %v345, 0.0
          %v448 = vadd.f32 %v446, %v447
          %v449 = vsel %vm373, %v346, 0.0
          %v450 = vadd.f32 %v448, %v449
          %v451 = vsel %vm373, %v347, 0.0
          %v452 = vadd.f32 %v450, %v451
          %v453 = vsel %vm373, %v348, 0.0
          %v454 = vadd.f32 %v452, %v453
          %v455 = vsel %vm373, %v349, 0.0
          %v456 = vadd.f32 %v454, %v455
          %v457 = vsel %vm373, %v350, 0.0
          %v458 = vadd.f32 %v456, %v457
          %v459 = vsel %vm373, %v351, 0.0
          %v460 = vadd.f32 %v458, %v459
          %v461 = vsel %vm373, %v352, 0.0
          %v462 = vadd.f32 %v460, %v461
          %v463 = vsel %vm373, %v353, 0.0
          %v464 = vadd.f32 %v462, %v463
          %v465 = vsel %vm373, %v354, 0.0
          %v466 = vadd.f32 %v464, %v465
          %v467 = vsel %vm373, %v355, 0.0
          %v468 = vadd.f32 %v466, %v467
          %v469 = vsel %vm373, %v356, 0.0
          %v470 = vadd.f32 %v468, %v469
          %v471 = vsel %vm373, %v357, 0.0
          %v472 = vadd.f32 %v470, %v471
          %v473 = vsel %vm373, %v358, 0.0
          %v474 = vadd.f32 %v472, %v473
          %v475 = vsel %vm373, %v359, 0.0
          %v476 = vadd.f32 %v474, %v475
          %v477 = vsel %vm373, %v360, 0.0
          %v478 = vadd.f32 %v476, %v477
          %v479 = vsel %vm373, %v361, 0.0
          %v480 = vadd.f32 %v478, %v479
          %v481 = vsel %vm373, %v362, 0.0
          %v482 = vadd.f32 %v480, %v481
          %v483 = vsel %vm373, %v363, 0.0
          %v484 = vadd.f32 %v482, %v483
          %v485 = vsel %vm373, %v364, 0.0
          %v486 = vadd.f32 %v484, %v485
          %v487 = vsel %vm373, %v365, 0.0
          %v488 = vadd.f32 %v486, %v487
          %v489 = vsel %vm373, %v366, 0.0
          %v490 = vadd.f32 %v488, %v489
          %v491 = vsel %vm373, %v367, 0.0
          %v492 = vadd.f32 %v490, %v491
          %v493 = vsel %vm373, %v368, 0.0
          %v494 = vadd.f32 %v492, %v493
          %v495 = vsel %vm373, %v369, 0.0
          %v496 = vadd.f32 %v494, %v495
          %v497 = vsel %vm373, %v370, 0.0
          %v498 = vadd.f32 %v496, %v497
          %v499 = vsel %vm373, %v371, 0.0
          %v500 = vadd.f32 %v498, %v499
          %v501 = vrot.slane %v500, 4
          %v502 = vadd.f32 %v500, %v501
          %v503 = vrot.slane %v502, 2
          %v504 = vadd.f32 %v502, %v503
          %v505 = vrot.slane %v504, 1
          %v506 = vadd.f32 %v504, %v505
          %v507 = vadd.f32 %v372, %v506
          %vm508 = vcmask 253952
          %509 = vst.msk [vmem:[#allocation2] sm:$0x1] %vm508, %v507
          %v510 = vld [vmem:[#allocation3] sm:$0x1]
          %v511 = vmul.f32 %v308, %v308
          %v512 = vmul.f32 %v309, %v309
          %v513 = vmul.f32 %v310, %v310
          %v514 = vmul.f32 %v311, %v311
          %v515 = vmul.f32 %v312, %v312
          %v516 = vmul.f32 %v313, %v313
          %v517 = vmul.f32 %v314, %v314
          %v518 = vmul.f32 %v315, %v315
          %v519 = vmul.f32 %v316, %v316
          %v520 = vmul.f32 %v317, %v317
          %v521 = vmul.f32 %v318, %v318
          %v522 = vmul.f32 %v319, %v319
          %v523 = vmul.f32 %v320, %v320
          %v524 = vmul.f32 %v321, %v321
          %v525 = vmul.f32 %v322, %v322
          %v526 = vmul.f32 %v323, %v323
          %v527 = vmul.f32 %v324, %v324
          %v528 = vmul.f32 %v325, %v325
          %v529 = vmul.f32 %v326, %v326
          %v530 = vmul.f32 %v327, %v327
          %v531 = vmul.f32 %v328, %v328
          %v532 = vmul.f32 %v329, %v329
          %v533 = vmul.f32 %v330, %v330
          %v534 = vmul.f32 %v331, %v331
          %v535 = vmul.f32 %v332, %v332
          %v536 = vmul.f32 %v333, %v333
          %v537 = vmul.f32 %v334, %v334
          %v538 = vmul.f32 %v335, %v335
          %v539 = vmul.f32 %v336, %v336
          %v540 = vmul.f32 %v337, %v337
          %v541 = vmul.f32 %v338, %v338
          %v542 = vmul.f32 %v339, %v339
          %v543 = vmul.f32 %v340, %v340
          %v544 = vmul.f32 %v341, %v341
          %v545 = vmul.f32 %v342, %v342
          %v546 = vmul.f32 %v343, %v343
          %v547 = vmul.f32 %v344, %v344
          %v548 = vmul.f32 %v345, %v345
          %v549 = vmul.f32 %v346, %v346
          %v550 = vmul.f32 %v347, %v347
          %v551 = vmul.f32 %v348, %v348
          %v552 = vmul.f32 %v349, %v349
          %v553 = vmul.f32 %v350, %v350
          %v554 = vmul.f32 %v351, %v351
          %v555 = vmul.f32 %v352, %v352
          %v556 = vmul.f32 %v353, %v353
          %v557 = vmul.f32 %v354, %v354
          %v558 = vmul.f32 %v355, %v355
          %v559 = vmul.f32 %v356, %v356
          %v560 = vmul.f32 %v357, %v357
          %v561 = vmul.f32 %v358, %v358
          %v562 = vmul.f32 %v359, %v359
          %v563 = vmul.f32 %v360, %v360
          %v564 = vmul.f32 %v361, %v361
          %v565 = vmul.f32 %v362, %v362
          %v566 = vmul.f32 %v363, %v363
          %v567 = vmul.f32 %v364, %v364
          %v568 = vmul.f32 %v365, %v365
          %v569 = vmul.f32 %v366, %v366
          %v570 = vmul.f32 %v367, %v367
          %v571 = vmul.f32 %v368, %v368
          %v572 = vmul.f32 %v369, %v369
          %v573 = vmul.f32 %v370, %v370
          %v574 = vmul.f32 %v371, %v371
          %v575 = vsel %vm373, %v511, 0.0
          %v576 = vsel %vm373, %v512, 0.0
          %v577 = vadd.f32 %v575, %v576
          %v578 = vsel %vm373, %v513, 0.0
          %v579 = vadd.f32 %v577, %v578
          %v580 = vsel %vm373, %v514, 0.0
          %v581 = vadd.f32 %v579, %v580
          %v582 = vsel %vm373, %v515, 0.0
          %v583 = vadd.f32 %v581, %v582
          %v584 = vsel %vm373, %v516, 0.0
          %v585 = vadd.f32 %v583, %v584
          %v586 = vsel %vm373, %v517, 0.0
          %v587 = vadd.f32 %v585, %v586
          %v588 = vsel %vm373, %v518, 0.0
          %v589 = vadd.f32 %v587, %v588
          %v590 = vsel %vm373, %v519, 0.0
          %v591 = vadd.f32 %v589, %v590
          %v592 = vsel %vm373, %v520, 0.0
          %v593 = vadd.f32 %v591, %v592
          %v594 = vsel %vm373, %v521, 0.0
          %v595 = vadd.f32 %v593, %v594
          %v596 = vsel %vm373, %v522, 0.0
          %v597 = vadd.f32 %v595, %v596
          %v598 = vsel %vm373, %v523, 0.0
          %v599 = vadd.f32 %v597, %v598
          %v600 = vsel %vm373, %v524, 0.0
          %v601 = vadd.f32 %v599, %v600
          %v602 = vsel %vm373, %v525, 0.0
          %v603 = vadd.f32 %v601, %v602
          %v604 = vsel %vm373, %v526, 0.0
          %v605 = vadd.f32 %v603, %v604
          %v606 = vsel %vm373, %v527, 0.0
          %v607 = vadd.f32 %v605, %v606
          %v608 = vsel %vm373, %v528, 0.0
          %v609 = vadd.f32 %v607, %v608
          %v610 = vsel %vm373, %v529, 0.0
          %v611 = vadd.f32 %v609, %v610
          %v612 = vsel %vm373, %v530, 0.0
          %v613 = vadd.f32 %v611, %v612
          %v614 = vsel %vm373, %v531, 0.0
          %v615 = vadd.f32 %v613, %v614
          %v616 = vsel %vm373, %v532, 0.0
          %v617 = vadd.f32 %v615, %v616
          %v618 = vsel %vm373, %v533, 0.0
          %v619 = vadd.f32 %v617, %v618
          %v620 = vsel %vm373, %v534, 0.0
          %v621 = vadd.f32 %v619, %v620
          %v622 = vsel %vm373, %v535, 0.0
          %v623 = vadd.f32 %v621, %v622
          %v624 = vsel %vm373, %v536, 0.0
          %v625 = vadd.f32 %v623, %v624
          %v626 = vsel %vm373, %v537, 0.0
          %v627 = vadd.f32 %v625, %v626
          %v628 = vsel %vm373, %v538, 0.0
          %v629 = vadd.f32 %v627, %v628
          %v630 = vsel %vm373, %v539, 0.0
          %v631 = vadd.f32 %v629, %v630
          %v632 = vsel %vm373, %v540, 0.0
          %v633 = vadd.f32 %v631, %v632
          %v634 = vsel %vm373, %v541, 0.0
          %v635 = vadd.f32 %v633, %v634
          %v636 = vsel %vm373, %v542, 0.0
          %v637 = vadd.f32 %v635, %v636
          %v638 = vsel %vm373, %v543, 0.0
          %v639 = vadd.f32 %v637, %v638
          %v640 = vsel %vm373, %v544, 0.0
          %v641 = vadd.f32 %v639, %v640
          %v642 = vsel %vm373, %v545, 0.0
          %v643 = vadd.f32 %v641, %v642
          %v644 = vsel %vm373, %v546, 0.0
          %v645 = vadd.f32 %v643, %v644
          %v646 = vsel %vm373, %v547, 0.0
          %v647 = vadd.f32 %v645, %v646
          %v648 = vsel %vm373, %v548, 0.0
          %v649 = vadd.f32 %v647, %v648
          %v650 = vsel %vm373, %v549, 0.0
          %v651 = vadd.f32 %v649, %v650
          %v652 = vsel %vm373, %v550, 0.0
          %v653 = vadd.f32 %v651, %v652
          %v654 = vsel %vm373, %v551, 0.0
          %v655 = vadd.f32 %v653, %v654
          %v656 = vsel %vm373, %v552, 0.0
          %v657 = vadd.f32 %v655, %v656
          %v658 = vsel %vm373, %v553, 0.0
          %v659 = vadd.f32 %v657, %v658
          %v660 = vsel %vm373, %v554, 0.0
          %v661 = vadd.f32 %v659, %v660
          %v662 = vsel %vm373, %v555, 0.0
          %v663 = vadd.f32 %v661, %v662
          %v664 = vsel %vm373, %v556, 0.0
          %v665 = vadd.f32 %v663, %v664
          %v666 = vsel %vm373, %v557, 0.0
          %v667 = vadd.f32 %v665, %v666
          %v668 = vsel %vm373, %v558, 0.0
          %v669 = vadd.f32 %v667, %v668
          %v670 = vsel %vm373, %v559, 0.0
          %v671 = vadd.f32 %v669, %v670
          %v672 = vsel %vm373, %v560, 0.0
          %v673 = vadd.f32 %v671, %v672
          %v674 = vsel %vm373, %v561, 0.0
          %v675 = vadd.f32 %v673, %v674
          %v676 = vsel %vm373, %v562, 0.0
          %v677 = vadd.f32 %v675, %v676
          %v678 = vsel %vm373, %v563, 0.0
          %v679 = vadd.f32 %v677, %v678
          %v680 = vsel %vm373, %v564, 0.0
          %v681 = vadd.f32 %v679, %v680
          %v682 = vsel %vm373, %v565, 0.0
          %v683 = vadd.f32 %v681, %v682
          %v684 = vsel %vm373, %v566, 0.0
          %v685 = vadd.f32 %v683, %v684
          %v686 = vsel %vm373, %v567, 0.0
          %v687 = vadd.f32 %v685, %v686
          %v688 = vsel %vm373, %v568, 0.0
          %v689 = vadd.f32 %v687, %v688
          %v690 = vsel %vm373, %v569, 0.0
          %v691 = vadd.f32 %v689, %v690
          %v692 = vsel %vm373, %v570, 0.0
          %v693 = vadd.f32 %v691, %v692
          %v694 = vsel %vm373, %v571, 0.0
          %v695 = vadd.f32 %v693, %v694
          %v696 = vsel %vm373, %v572, 0.0
          %v697 = vadd.f32 %v695, %v696
          %v698 = vsel %vm373, %v573, 0.0
          %v699 = vadd.f32 %v697, %v698
          %v700 = vsel %vm373, %v574, 0.0
          %v701 = vadd.f32 %v699, %v700
          %v702 = vrot.slane %v701, 4
          %v703 = vadd.f32 %v701, %v702
          %v704 = vrot.slane %v703, 2
          %v705 = vadd.f32 %v703, %v704
          %v706 = vrot.slane %v705, 1
          %v707 = vadd.f32 %v705, %v706
          %v708 = vadd.f32 %v510, %v707
          %709 = vst.msk [vmem:[#allocation3] sm:$0x1] %vm508, %v708
        $region52: #{edge_glam_forward.1} parent=47 // pred_fallthru
          _
        %p710 = scmp.eq.s32.totalorder %s28, 0
        %p711 = pnand %p297, %p710
        %p712 = pneg %p711
        // Predicated region
        $region57: #{edge_glam_forward.1} parent=47 // pred_check
          _
        $region58: #{edge_glam_forward.1} parent=47 // pred_check_branch
          %714 = sbr.rel (%p711) target = $region60
        $region59: #{edge_glam_forward.1} parent=47 // pred_region
          %v715 = vld [vmem:[#allocation2] sm:$0x1]
          %v716 = vmul.f32 %v715, 0.001953125
          %v717 = vld [vmem:[#allocation3] sm:$0x1]
          %v718 = vmul.f32 %v717, 0.001953125
          %v719 = vmul.f32 %v716, %v716
          %v720 = vsub.f32 %v718, %v719
          %v721 = vld [vmem:[%s0] sm:$0x1]
          %v722 = vadd.f32 %v720, 1e-05
          %v723 = vrsqrt.pop %v722
          %v724 = vmul.f32 %v721, %v723
          %v725 = vld [vmem:[%s1] sm:$0x1]
          %v726 = vmul.f32 %v716, %v724
          %v727 = vsub.f32 %v725, %v726
          %v728 = vlaneseq
          %v729 = vshrl.u32 %v728, 7
          %v730 = vadd.s32 %v729, 8
          %v731 = vadd.s32 %v729, 16
          %v732 = vadd.s32 %v729, 24
          %v733 = vlaneseq
          %v734 = vand.u32 %v733, 127
          %vm735 = vcmp.eq.s32.totalorder %v729, %v734
          %vm736 = vcmp.eq.s32.totalorder %v730, %v734
          %vm737 = vcmp.eq.s32.totalorder %v731, %v734
          %vm738 = vcmp.eq.s32.totalorder %v732, %v734
          %v740 = vlaneseq
          %v741 = vshrl.u32 %v740, 7
          %v742 = vsub.s32 0, %v741
          %v743 = vrot.slane %v724, %v742
          %v745 = vsel %vm735, %v743, 0.0
          %v746 = vsel %vm736, %v743, 0.0
          %v747 = vsel %vm737, %v743, 0.0
          %v748 = vsel %vm738, %v743, 0.0
          %v749 = vld [vmem:[%s2] sm:$0xff]
          %v750 = vld [vmem:[%s2 + $0x8] sm:$0xff]
          %v751 = vld [vmem:[%s2 + $0x10] sm:$0xff]
          %v752 = vld [vmem:[%s2 + $0x18] sm:$0xff]
          %vm753 = vcmask 261120
          %v755 = vsel %vm753, %v745, 0
          %v758 = vsel %vm753, %v746, 0
          %v761 = vsel %vm753, %v747, 0
          %v764 = vsel %vm753, %v748, 0
          %766 = vmatprep.subr.mxu0 0.0
          %767 = vmatpush1.msra.mxu0 0.0
          %768 = vmatprep.subr.mxu0 0.0
          %769 = vmatpush1.msra.mxu0 0.0
          %770 = vmatprep.subr.mxu0 0.0
          %771 = vmatpush1.msra.mxu0 0.0
          %772 = vmatprep.subr.mxu0 0.0
          %773 = vmatpush1.msra.mxu0 0.0
          %774 = vmatprep.subr.mxu0 0.0
          %775 = vmatpush1.msra.mxu0 0.0
          %776 = vmatprep.subr.mxu0 0.0
          %777 = vmatpush1.msra.mxu0 0.0
          %778 = vmatprep.subr.mxu0 0.0
          %779 = vmatpush1.msra.mxu0 0.0
          %780 = vmatprep.subr.mxu0 0.0
          %781 = vmatpush1.msra.mxu0 0.0
          %782 = vmatprep.subr.mxu0 0.0
          %783 = vmatpush1.msra.mxu0 0.0
          %784 = vmatprep.subr.mxu0 0.0
          %785 = vmatpush1.msra.mxu0 0.0
          %786 = vmatprep.subr.mxu0 0.0
          %787 = vmatpush1.msra.mxu0 0.0
          %788 = vmatprep.subr.mxu0 0.0
          %789 = vmatpush1.msra.mxu0 0.0
          %790 = vmatprep.subr.mxu0 0.0
          %791 = vmatpush1.msra.mxu0 %v752
          %792 = vmatprep.subr.mxu0 0.0
          %793 = vmatpush1.msra.mxu0 %v751
          %794 = vmatprep.subr.mxu0 0.0
          %795 = vmatpush1.msra.mxu0 %v750
          %796 = vmatprep.subr.mxu0 0.0
          %797 = vmatpush1.msra.mxu0 %v749
          %798 = vmatprep.subr.mxu0 0.0
          %799 = vmatpush2.msra.mxu0 0.0
          %800 = vmatprep.subr.mxu0 0.0
          %801 = vmatpush2.msra.mxu0 0.0
          %802 = vmatprep.subr.mxu0 0.0
          %803 = vmatpush2.msra.mxu0 0.0
          %804 = vmatprep.subr.mxu0 0.0
          %805 = vmatpush2.msra.mxu0 0.0
          %806 = vmatprep.subr.mxu0 0.0
          %807 = vmatpush2.msra.mxu0 0.0
          %808 = vmatprep.subr.mxu0 0.0
          %809 = vmatpush2.msra.mxu0 0.0
          %810 = vmatprep.subr.mxu0 0.0
          %811 = vmatpush2.msra.mxu0 0.0
          %812 = vmatprep.subr.mxu0 0.0
          %813 = vmatpush2.msra.mxu0 0.0
          %814 = vmatprep.subr.mxu0 0.0
          %815 = vmatpush2.msra.mxu0 0.0
          %816 = vmatprep.subr.mxu0 0.0
          %817 = vmatpush2.msra.mxu0 0.0
          %818 = vmatprep.subr.mxu0 0.0
          %819 = vmatpush2.msra.mxu0 0.0
          %820 = vmatprep.subr.mxu0 0.0
          %821 = vmatpush2.msra.mxu0 0.0
          %822 = vmatprep.subr.mxu0 0.0
          %823 = vmatpush2.msra.mxu0 0.0
          %824 = vmatprep.subr.mxu0 0.0
          %825 = vmatpush2.msra.mxu0 0.0
          %826 = vmatprep.subr.mxu0 0.0
          %827 = vmatpush2.msra.mxu0 0.0
          %828 = vmatprep.subr.mxu0 0.0
          %829 = vmatpush2.msra.mxu0 0.0
          %830 = vmatprep.mubr.f32.mxu0 0.0
          %831 = vmatmul.mubr.f32.gmra.mxu0 %v755
          %v832 = vpop.f32.mrf.mxu0
          %v833 = vadd.f32 0.0, %v832
          %v834 = vpop.f32.mrf.mxu0
          %835 = vmatprep.mubr.f32.mxu0 0.0
          %836 = vmatmul.mubr.f32.gmra.mxu0 %v758
          %v837 = vpop.f32.mrf.mxu0
          %v838 = vadd.f32 0.0, %v837
          %v839 = vpop.f32.mrf.mxu0
          %840 = vmatprep.mubr.f32.mxu0 0.0
          %841 = vmatmul.mubr.f32.gmra.mxu0 %v761
          %v842 = vpop.f32.mrf.mxu0
          %v843 = vadd.f32 0.0, %v842
          %v844 = vpop.f32.mrf.mxu0
          %845 = vmatprep.mubr.f32.mxu0 0.0
          %846 = vmatmul.mubr.f32.gmra.mxu0 %v764
          %v847 = vpop.f32.mrf.mxu0
          %v848 = vadd.f32 0.0, %v847
          %v849 = vpop.f32.mrf.mxu0
          %850 = vdwg.mxu0
          %vm851 = vcmask 523264
          %852 = vst.msk [vmem:[#allocation4] sm:$0xff] %vm851, %v833
          %853 = vst.msk [vmem:[#allocation4 + $0x8] sm:$0xff] %vm851, %v838
          %854 = vst.msk [vmem:[#allocation4 + $0x10] sm:$0xff] %vm851, %v843
          %855 = vst.msk [vmem:[#allocation4 + $0x18] sm:$0xff] %vm851, %v848
          %v856 = vld [vmem:[%s3] sm:$0x1]
          %v857 = vld [vmem:[%s2] sm:$0xff]
          %v858 = vld [vmem:[%s2 + $0x8] sm:$0xff]
          %v859 = vld [vmem:[%s2 + $0x10] sm:$0xff]
          %v860 = vld [vmem:[%s2 + $0x18] sm:$0xff]
          %v862 = vsel %vm753, %v727, 0
          %864 = vmatprep.subr.mxu0 0.0
          %865 = vmatpush1.msra.mxu0 0.0
          %866 = vmatprep.subr.mxu0 0.0
          %867 = vmatpush1.msra.mxu0 0.0
          %868 = vmatprep.subr.mxu0 0.0
          %869 = vmatpush1.msra.mxu0 0.0
          %870 = vmatprep.subr.mxu0 0.0
          %871 = vmatpush1.msra.mxu0 0.0
          %872 = vmatprep.subr.mxu0 0.0
          %873 = vmatpush1.msra.mxu0 0.0
          %874 = vmatprep.subr.mxu0 0.0
          %875 = vmatpush1.msra.mxu0 0.0
          %876 = vmatprep.subr.mxu0 0.0
          %877 = vmatpush1.msra.mxu0 0.0
          %878 = vmatprep.subr.mxu0 0.0
          %879 = vmatpush1.msra.mxu0 0.0
          %880 = vmatprep.subr.mxu0 0.0
          %881 = vmatpush1.msra.mxu0 0.0
          %882 = vmatprep.subr.mxu0 0.0
          %883 = vmatpush1.msra.mxu0 0.0
          %884 = vmatprep.subr.mxu0 0.0
          %885 = vmatpush1.msra.mxu0 0.0
          %886 = vmatprep.subr.mxu0 0.0
          %887 = vmatpush1.msra.mxu0 0.0
          %888 = vmatprep.subr.mxu0 0.0
          %889 = vmatpush1.msra.mxu0 %v860
          %890 = vmatprep.subr.mxu0 0.0
          %891 = vmatpush1.msra.mxu0 %v859
          %892 = vmatprep.subr.mxu0 0.0
          %893 = vmatpush1.msra.mxu0 %v858
          %894 = vmatprep.subr.mxu0 0.0
          %895 = vmatpush1.msra.mxu0 %v857
          %896 = vmatprep.subr.mxu0 0.0
          %897 = vmatpush2.msra.mxu0 0.0
          %898 = vmatprep.subr.mxu0 0.0
          %899 = vmatpush2.msra.mxu0 0.0
          %900 = vmatprep.subr.mxu0 0.0
          %901 = vmatpush2.msra.mxu0 0.0
          %902 = vmatprep.subr.mxu0 0.0
          %903 = vmatpush2.msra.mxu0 0.0
          %904 = vmatprep.subr.mxu0 0.0
          %905 = vmatpush2.msra.mxu0 0.0
          %906 = vmatprep.subr.mxu0 0.0
          %907 = vmatpush2.msra.mxu0 0.0
          %908 = vmatprep.subr.mxu0 0.0
          %909 = vmatpush2.msra.mxu0 0.0
          %910 = vmatprep.subr.mxu0 0.0
          %911 = vmatpush2.msra.mxu0 0.0
          %912 = vmatprep.subr.mxu0 0.0
          %913 = vmatpush2.msra.mxu0 0.0
          %914 = vmatprep.subr.mxu0 0.0
          %915 = vmatpush2.msra.mxu0 0.0
          %916 = vmatprep.subr.mxu0 0.0
          %917 = vmatpush2.msra.mxu0 0.0
          %918 = vmatprep.subr.mxu0 0.0
          %919 = vmatpush2.msra.mxu0 0.0
          %920 = vmatprep.subr.mxu0 0.0
          %921 = vmatpush2.msra.mxu0 0.0
          %922 = vmatprep.subr.mxu0 0.0
          %923 = vmatpush2.msra.mxu0 0.0
          %924 = vmatprep.subr.mxu0 0.0
          %925 = vmatpush2.msra.mxu0 0.0
          %926 = vmatprep.subr.mxu0 0.0
          %927 = vmatpush2.msra.mxu0 0.0
          %928 = vmatprep.mubr.f32.mxu0 0.0
          %929 = vmatmul.mubr.f32.gmra.mxu0 %v862
          %v930 = vpop.f32.mrf.mxu0
          %v931 = vadd.f32 0.0, %v930
          %v932 = vpop.f32.mrf.mxu0
          %933 = vdwg.mxu0
          %v934 = vadd.f32 %v856, %v931
          %vm935 = vcmask 516096
          %936 = vst.msk [vmem:[#allocation5] sm:$0x1] %vm935, %v934
        $region60: #{edge_glam_forward.1} parent=47 // pred_fallthru
          _
        %p937 = scmp.eq.s32.totalorder %s27, 1
        // Predicated region
        $region61: #{edge_glam_forward.1} parent=47 // pred_check
          %p938 = pneg %p937
        $region62: #{edge_glam_forward.1} parent=47 // pred_check_branch
          %940 = sbr.rel (%p938) target = $region64
        $region63: #{edge_glam_forward.1} parent=47 // pred_region
          %v941 = vld [vmem:[%s293] sm:$0xff]
          %v942 = vld [vmem:[%s293 + $0x8] sm:$0xff]
          %v943 = vld [vmem:[%s293 + $0x10] sm:$0xff]
          %v944 = vld [vmem:[%s293 + $0x18] sm:$0xff]
          %v945 = vld [vmem:[%s293 + $0x20] sm:$0xff]
          %v946 = vld [vmem:[%s293 + $0x28] sm:$0xff]
          %v947 = vld [vmem:[%s293 + $0x30] sm:$0xff]
          %v948 = vld [vmem:[%s293 + $0x38] sm:$0xff]
          %v949 = vld [vmem:[%s293 + $0x40] sm:$0xff]
          %v950 = vld [vmem:[%s293 + $0x48] sm:$0xff]
          %v951 = vld [vmem:[%s293 + $0x50] sm:$0xff]
          %v952 = vld [vmem:[%s293 + $0x58] sm:$0xff]
          %v953 = vld [vmem:[%s293 + $0x60] sm:$0xff]
          %v954 = vld [vmem:[%s293 + $0x68] sm:$0xff]
          %v955 = vld [vmem:[%s293 + $0x70] sm:$0xff]
          %v956 = vld [vmem:[%s293 + $0x78] sm:$0xff]
          %v957 = vld [vmem:[%s293 + $0x80] sm:$0xff]
          %v958 = vld [vmem:[%s293 + $0x88] sm:$0xff]
          %v959 = vld [vmem:[%s293 + $0x90] sm:$0xff]
          %v960 = vld [vmem:[%s293 + $0x98] sm:$0xff]
          %v961 = vld [vmem:[%s293 + $0xa0] sm:$0xff]
          %v962 = vld [vmem:[%s293 + $0xa8] sm:$0xff]
          %v963 = vld [vmem:[%s293 + $0xb0] sm:$0xff]
          %v964 = vld [vmem:[%s293 + $0xb8] sm:$0xff]
          %v965 = vld [vmem:[%s293 + $0xc0] sm:$0xff]
          %v966 = vld [vmem:[%s293 + $0xc8] sm:$0xff]
          %v967 = vld [vmem:[%s293 + $0xd0] sm:$0xff]
          %v968 = vld [vmem:[%s293 + $0xd8] sm:$0xff]
          %v969 = vld [vmem:[%s293 + $0xe0] sm:$0xff]
          %v970 = vld [vmem:[%s293 + $0xe8] sm:$0xff]
          %v971 = vld [vmem:[%s293 + $0xf0] sm:$0xff]
          %v972 = vld [vmem:[%s293 + $0xf8] sm:$0xff]
          %v973 = vld [vmem:[%s293 + $0x100] sm:$0xff]
          %v974 = vld [vmem:[%s293 + $0x108] sm:$0xff]
          %v975 = vld [vmem:[%s293 + $0x110] sm:$0xff]
          %v976 = vld [vmem:[%s293 + $0x118] sm:$0xff]
          %v977 = vld [vmem:[%s293 + $0x120] sm:$0xff]
          %v978 = vld [vmem:[%s293 + $0x128] sm:$0xff]
          %v979 = vld [vmem:[%s293 + $0x130] sm:$0xff]
          %v980 = vld [vmem:[%s293 + $0x138] sm:$0xff]
          %v981 = vld [vmem:[%s293 + $0x140] sm:$0xff]
          %v982 = vld [vmem:[%s293 + $0x148] sm:$0xff]
          %v983 = vld [vmem:[%s293 + $0x150] sm:$0xff]
          %v984 = vld [vmem:[%s293 + $0x158] sm:$0xff]
          %v985 = vld [vmem:[%s293 + $0x160] sm:$0xff]
          %v986 = vld [vmem:[%s293 + $0x168] sm:$0xff]
          %v987 = vld [vmem:[%s293 + $0x170] sm:$0xff]
          %v988 = vld [vmem:[%s293 + $0x178] sm:$0xff]
          %v989 = vld [vmem:[%s293 + $0x180] sm:$0xff]
          %v990 = vld [vmem:[%s293 + $0x188] sm:$0xff]
          %v991 = vld [vmem:[%s293 + $0x190] sm:$0xff]
          %v992 = vld [vmem:[%s293 + $0x198] sm:$0xff]
          %v993 = vld [vmem:[%s293 + $0x1a0] sm:$0xff]
          %v994 = vld [vmem:[%s293 + $0x1a8] sm:$0xff]
          %v995 = vld [vmem:[%s293 + $0x1b0] sm:$0xff]
          %v996 = vld [vmem:[%s293 + $0x1b8] sm:$0xff]
          %v997 = vld [vmem:[%s293 + $0x1c0] sm:$0xff]
          %v998 = vld [vmem:[%s293 + $0x1c8] sm:$0xff]
          %v999 = vld [vmem:[%s293 + $0x1d0] sm:$0xff]
          %v1000 = vld [vmem:[%s293 + $0x1d8] sm:$0xff]
          %v1001 = vld [vmem:[%s293 + $0x1e0] sm:$0xff]
          %v1002 = vld [vmem:[%s293 + $0x1e8] sm:$0xff]
          %v1003 = vld [vmem:[%s293 + $0x1f0] sm:$0xff]
          %v1004 = vld [vmem:[%s293 + $0x1f8] sm:$0xff]
          %v1005 = vld [vmem:[#allocation4] sm:$0xff]
          %v1006 = vld [vmem:[#allocation4 + $0x8] sm:$0xff]
          %v1007 = vld [vmem:[#allocation4 + $0x10] sm:$0xff]
          %v1008 = vld [vmem:[#allocation4 + $0x18] sm:$0xff]
          %v1009 = vld [vmem:[#allocation5] sm:$0x1]
          %v1011 = vlaneseq
          %v1012 = vshrl.u32 %v1011, 7
          %v1013 = vsub.s32 0, %v1012
          %v1014 = vrot.slane %v1009, %v1013
          %vm1016 = vcmask 261120
          %v1018 = vsel %vm1016, %v941, 0
          %v1021 = vsel %vm1016, %v942, 0
          %v1024 = vsel %vm1016, %v943, 0
          %v1027 = vsel %vm1016, %v944, 0
          %v1030 = vsel %vm1016, %v945, 0
          %v1033 = vsel %vm1016, %v946, 0
          %v1036 = vsel %vm1016, %v947, 0
          %v1039 = vsel %vm1016, %v948, 0
          %v1042 = vsel %vm1016, %v949, 0
          %v1045 = vsel %vm1016, %v950, 0
          %v1048 = vsel %vm1016, %v951, 0
          %v1051 = vsel %vm1016, %v952, 0
          %v1054 = vsel %vm1016, %v953, 0
          %v1057 = vsel %vm1016, %v954, 0
          %v1060 = vsel %vm1016, %v955, 0
          %v1063 = vsel %vm1016, %v956, 0
          %v1066 = vsel %vm1016, %v957, 0
          %v1069 = vsel %vm1016, %v958, 0
          %v1072 = vsel %vm1016, %v959, 0
          %v1075 = vsel %vm1016, %v960, 0
          %v1078 = vsel %vm1016, %v961, 0
          %v1081 = vsel %vm1016, %v962, 0
          %v1084 = vsel %vm1016, %v963, 0
          %v1087 = vsel %vm1016, %v964, 0
          %v1090 = vsel %vm1016, %v965, 0
          %v1093 = vsel %vm1016, %v966, 0
          %v1096 = vsel %vm1016, %v967, 0
          %v1099 = vsel %vm1016, %v968, 0
          %v1102 = vsel %vm1016, %v969, 0
          %v1105 = vsel %vm1016, %v970, 0
          %v1108 = vsel %vm1016, %v971, 0
          %v1111 = vsel %vm1016, %v972, 0
          %v1114 = vsel %vm1016, %v973, 0
          %v1117 = vsel %vm1016, %v974, 0
          %v1120 = vsel %vm1016, %v975, 0
          %v1123 = vsel %vm1016, %v976, 0
          %v1126 = vsel %vm1016, %v977, 0
          %v1129 = vsel %vm1016, %v978, 0
          %v1132 = vsel %vm1016, %v979, 0
          %v1135 = vsel %vm1016, %v980, 0
          %v1138 = vsel %vm1016, %v981, 0
          %v1141 = vsel %vm1016, %v982, 0
          %v1144 = vsel %vm1016, %v983, 0
          %v1147 = vsel %vm1016, %v984, 0
          %v1150 = vsel %vm1016, %v985, 0
          %v1153 = vsel %vm1016, %v986, 0
          %v1156 = vsel %vm1016, %v987, 0
          %v1159 = vsel %vm1016, %v988, 0
          %v1162 = vsel %vm1016, %v989, 0
          %v1165 = vsel %vm1016, %v990, 0
          %v1168 = vsel %vm1016, %v991, 0
          %v1171 = vsel %vm1016, %v992, 0
          %v1174 = vsel %vm1016, %v993, 0
          %v1177 = vsel %vm1016, %v994, 0
          %v1180 = vsel %vm1016, %v995, 0
          %v1183 = vsel %vm1016, %v996, 0
          %v1186 = vsel %vm1016, %v997, 0
          %v1189 = vsel %vm1016, %v998, 0
          %v1192 = vsel %vm1016, %v999, 0
          %v1195 = vsel %vm1016, %v1000, 0
          %v1198 = vsel %vm1016, %v1001, 0
          %v1201 = vsel %vm1016, %v1002, 0
          %v1204 = vsel %vm1016, %v1003, 0
          %v1207 = vsel %vm1016, %v1004, 0
          %1209 = vmatprep.subr.mxu0 0.0
          %1210 = vmatpush1.msra.mxu0 0.0
          %1211 = vmatprep.subr.mxu0 0.0
          %1212 = vmatpush1.msra.mxu0 0.0
          %1213 = vmatprep.subr.mxu0 0.0
          %1214 = vmatpush1.msra.mxu0 0.0
          %1215 = vmatprep.subr.mxu0 0.0
          %1216 = vmatpush1.msra.mxu0 0.0
          %1217 = vmatprep.subr.mxu0 0.0
          %1218 = vmatpush1.msra.mxu0 0.0
          %1219 = vmatprep.subr.mxu0 0.0
          %1220 = vmatpush1.msra.mxu0 0.0
          %1221 = vmatprep.subr.mxu0 0.0
          %1222 = vmatpush1.msra.mxu0 0.0
          %1223 = vmatprep.subr.mxu0 0.0
          %1224 = vmatpush1.msra.mxu0 0.0
          %1225 = vmatprep.subr.mxu0 0.0
          %1226 = vmatpush1.msra.mxu0 0.0
          %1227 = vmatprep.subr.mxu0 0.0
          %1228 = vmatpush1.msra.mxu0 0.0
          %1229 = vmatprep.subr.mxu0 0.0
          %1230 = vmatpush1.msra.mxu0 0.0
          %1231 = vmatprep.subr.mxu0 0.0
          %1232 = vmatpush1.msra.mxu0 0.0
          %1233 = vmatprep.subr.mxu0 0.0
          %1234 = vmatpush1.msra.mxu0 %v1008
          %1235 = vmatprep.subr.mxu0 0.0
          %1236 = vmatpush1.msra.mxu0 %v1007
          %1237 = vmatprep.subr.mxu0 0.0
          %1238 = vmatpush1.msra.mxu0 %v1006
          %1239 = vmatprep.subr.mxu0 0.0
          %1240 = vmatpush1.msra.mxu0 %v1005
          %1241 = vmatprep.subr.mxu0 0.0
          %1242 = vmatpush2.msra.mxu0 0.0
          %1243 = vmatprep.subr.mxu0 0.0
          %1244 = vmatpush2.msra.mxu0 0.0
          %1245 = vmatprep.subr.mxu0 0.0
          %1246 = vmatpush2.msra.mxu0 0.0
          %1247 = vmatprep.subr.mxu0 0.0
          %1248 = vmatpush2.msra.mxu0 0.0
          %1249 = vmatprep.subr.mxu0 0.0
          %1250 = vmatpush2.msra.mxu0 0.0
          %1251 = vmatprep.subr.mxu0 0.0
          %1252 = vmatpush2.msra.mxu0 0.0
          %1253 = vmatprep.subr.mxu0 0.0
          %1254 = vmatpush2.msra.mxu0 0.0
          %1255 = vmatprep.subr.mxu0 0.0
          %1256 = vmatpush2.msra.mxu0 0.0
          %1257 = vmatprep.subr.mxu0 0.0
          %1258 = vmatpush2.msra.mxu0 0.0
          %1259 = vmatprep.subr.mxu0 0.0
          %1260 = vmatpush2.msra.mxu0 0.0
          %1261 = vmatprep.subr.mxu0 0.0
          %1262 = vmatpush2.msra.mxu0 0.0
          %1263 = vmatprep.subr.mxu0 0.0
          %1264 = vmatpush2.msra.mxu0 0.0
          %1265 = vmatprep.subr.mxu0 0.0
          %1266 = vmatpush2.msra.mxu0 0.0
          %1267 = vmatprep.subr.mxu0 0.0
          %1268 = vmatpush2.msra.mxu0 0.0
          %1269 = vmatprep.subr.mxu0 0.0
          %1270 = vmatpush2.msra.mxu0 0.0
          %1271 = vmatprep.subr.mxu0 0.0
          %1272 = vmatpush2.msra.mxu0 0.0
          %1273 = vmatprep.mubr.f32.mxu0 0.0
          %1274 = vmatmul.mubr.f32.gmra.mxu0 %v1018
          %v1275 = vpop.f32.mrf.mxu0
          %v1276 = vadd.f32 %v1014, %v1275
          %v1277 = vpop.f32.mrf.mxu0
          %1278 = vmatprep.mubr.f32.mxu0 0.0
          %1279 = vmatmul.mubr.f32.gmra.mxu0 %v1021
          %v1280 = vpop.f32.mrf.mxu0
          %v1281 = vadd.f32 %v1014, %v1280
          %v1282 = vpop.f32.mrf.mxu0
          %1283 = vmatprep.mubr.f32.mxu0 0.0
          %1284 = vmatmul.mubr.f32.gmra.mxu0 %v1024
          %v1285 = vpop.f32.mrf.mxu0
          %v1286 = vadd.f32 %v1014, %v1285
          %v1287 = vpop.f32.mrf.mxu0
          %1288 = vmatprep.mubr.f32.mxu0 0.0
          %1289 = vmatmul.mubr.f32.gmra.mxu0 %v1027
          %v1290 = vpop.f32.mrf.mxu0
          %v1291 = vadd.f32 %v1014, %v1290
          %v1292 = vpop.f32.mrf.mxu0
          %1293 = vmatprep.mubr.f32.mxu0 0.0
          %1294 = vmatmul.mubr.f32.gmra.mxu0 %v1030
          %v1295 = vpop.f32.mrf.mxu0
          %v1296 = vadd.f32 %v1014, %v1295
          %v1297 = vpop.f32.mrf.mxu0
          %1298 = vmatprep.mubr.f32.mxu0 0.0
          %1299 = vmatmul.mubr.f32.gmra.mxu0 %v1033
          %v1300 = vpop.f32.mrf.mxu0
          %v1301 = vadd.f32 %v1014, %v1300
          %v1302 = vpop.f32.mrf.mxu0
          %1303 = vmatprep.mubr.f32.mxu0 0.0
          %1304 = vmatmul.mubr.f32.gmra.mxu0 %v1036
          %v1305 = vpop.f32.mrf.mxu0
          %v1306 = vadd.f32 %v1014, %v1305
          %v1307 = vpop.f32.mrf.mxu0
          %1308 = vmatprep.mubr.f32.mxu0 0.0
          %1309 = vmatmul.mubr.f32.gmra.mxu0 %v1039
          %v1310 = vpop.f32.mrf.mxu0
          %v1311 = vadd.f32 %v1014, %v1310
          %v1312 = vpop.f32.mrf.mxu0
          %1313 = vmatprep.mubr.f32.mxu0 0.0
          %1314 = vmatmul.mubr.f32.gmra.mxu0 %v1042
          %v1315 = vpop.f32.mrf.mxu0
          %v1316 = vadd.f32 %v1014, %v1315
          %v1317 = vpop.f32.mrf.mxu0
          %1318 = vmatprep.mubr.f32.mxu0 0.0
          %1319 = vmatmul.mubr.f32.gmra.mxu0 %v1045
          %v1320 = vpop.f32.mrf.mxu0
          %v1321 = vadd.f32 %v1014, %v1320
          %v1322 = vpop.f32.mrf.mxu0
          %1323 = vmatprep.mubr.f32.mxu0 0.0
          %1324 = vmatmul.mubr.f32.gmra.mxu0 %v1048
          %v1325 = vpop.f32.mrf.mxu0
          %v1326 = vadd.f32 %v1014, %v1325
          %v1327 = vpop.f32.mrf.mxu0
          %1328 = vmatprep.mubr.f32.mxu0 0.0
          %1329 = vmatmul.mubr.f32.gmra.mxu0 %v1051
          %v1330 = vpop.f32.mrf.mxu0
          %v1331 = vadd.f32 %v1014, %v1330
          %v1332 = vpop.f32.mrf.mxu0
          %1333 = vmatprep.mubr.f32.mxu0 0.0
          %1334 = vmatmul.mubr.f32.gmra.mxu0 %v1054
          %v1335 = vpop.f32.mrf.mxu0
          %v1336 = vadd.f32 %v1014, %v1335
          %v1337 = vpop.f32.mrf.mxu0
          %1338 = vmatprep.mubr.f32.mxu0 0.0
          %1339 = vmatmul.mubr.f32.gmra.mxu0 %v1057
          %v1340 = vpop.f32.mrf.mxu0
          %v1341 = vadd.f32 %v1014, %v1340
          %v1342 = vpop.f32.mrf.mxu0
          %1343 = vmatprep.mubr.f32.mxu0 0.0
          %1344 = vmatmul.mubr.f32.gmra.mxu0 %v1060
          %v1345 = vpop.f32.mrf.mxu0
          %v1346 = vadd.f32 %v1014, %v1345
          %v1347 = vpop.f32.mrf.mxu0
          %1348 = vmatprep.mubr.f32.mxu0 0.0
          %1349 = vmatmul.mubr.f32.gmra.mxu0 %v1063
          %v1350 = vpop.f32.mrf.mxu0
          %v1351 = vadd.f32 %v1014, %v1350
          %v1352 = vpop.f32.mrf.mxu0
          %1353 = vmatprep.mubr.f32.mxu0 0.0
          %1354 = vmatmul.mubr.f32.gmra.mxu0 %v1066
          %v1355 = vpop.f32.mrf.mxu0
          %v1356 = vadd.f32 %v1014, %v1355
          %v1357 = vpop.f32.mrf.mxu0
          %1358 = vmatprep.mubr.f32.mxu0 0.0
          %1359 = vmatmul.mubr.f32.gmra.mxu0 %v1069
          %v1360 = vpop.f32.mrf.mxu0
          %v1361 = vadd.f32 %v1014, %v1360
          %v1362 = vpop.f32.mrf.mxu0
          %1363 = vmatprep.mubr.f32.mxu0 0.0
          %1364 = vmatmul.mubr.f32.gmra.mxu0 %v1072
          %v1365 = vpop.f32.mrf.mxu0
          %v1366 = vadd.f32 %v1014, %v1365
          %v1367 = vpop.f32.mrf.mxu0
          %1368 = vmatprep.mubr.f32.mxu0 0.0
          %1369 = vmatmul.mubr.f32.gmra.mxu0 %v1075
          %v1370 = vpop.f32.mrf.mxu0
          %v1371 = vadd.f32 %v1014, %v1370
          %v1372 = vpop.f32.mrf.mxu0
          %1373 = vmatprep.mubr.f32.mxu0 0.0
          %1374 = vmatmul.mubr.f32.gmra.mxu0 %v1078
          %v1375 = vpop.f32.mrf.mxu0
          %v1376 = vadd.f32 %v1014, %v1375
          %v1377 = vpop.f32.mrf.mxu0
          %1378 = vmatprep.mubr.f32.mxu0 0.0
          %1379 = vmatmul.mubr.f32.gmra.mxu0 %v1081
          %v1380 = vpop.f32.mrf.mxu0
          %v1381 = vadd.f32 %v1014, %v1380
          %v1382 = vpop.f32.mrf.mxu0
          %1383 = vmatprep.mubr.f32.mxu0 0.0
          %1384 = vmatmul.mubr.f32.gmra.mxu0 %v1084
          %v1385 = vpop.f32.mrf.mxu0
          %v1386 = vadd.f32 %v1014, %v1385
          %v1387 = vpop.f32.mrf.mxu0
          %1388 = vmatprep.mubr.f32.mxu0 0.0
          %1389 = vmatmul.mubr.f32.gmra.mxu0 %v1087
          %v1390 = vpop.f32.mrf.mxu0
          %v1391 = vadd.f32 %v1014, %v1390
          %v1392 = vpop.f32.mrf.mxu0
          %1393 = vmatprep.mubr.f32.mxu0 0.0
          %1394 = vmatmul.mubr.f32.gmra.mxu0 %v1090
          %v1395 = vpop.f32.mrf.mxu0
          %v1396 = vadd.f32 %v1014, %v1395
          %v1397 = vpop.f32.mrf.mxu0
          %1398 = vmatprep.mubr.f32.mxu0 0.0
          %1399 = vmatmul.mubr.f32.gmra.mxu0 %v1093
          %v1400 = vpop.f32.mrf.mxu0
          %v1401 = vadd.f32 %v1014, %v1400
          %v1402 = vpop.f32.mrf.mxu0
          %1403 = vmatprep.mubr.f32.mxu0 0.0
          %1404 = vmatmul.mubr.f32.gmra.mxu0 %v1096
          %v1405 = vpop.f32.mrf.mxu0
          %v1406 = vadd.f32 %v1014, %v1405
          %v1407 = vpop.f32.mrf.mxu0
          %1408 = vmatprep.mubr.f32.mxu0 0.0
          %1409 = vmatmul.mubr.f32.gmra.mxu0 %v1099
          %v1410 = vpop.f32.mrf.mxu0
          %v1411 = vadd.f32 %v1014, %v1410
          %v1412 = vpop.f32.mrf.mxu0
          %1413 = vmatprep.mubr.f32.mxu0 0.0
          %1414 = vmatmul.mubr.f32.gmra.mxu0 %v1102
          %v1415 = vpop.f32.mrf.mxu0
          %v1416 = vadd.f32 %v1014, %v1415
          %v1417 = vpop.f32.mrf.mxu0
          %1418 = vmatprep.mubr.f32.mxu0 0.0
          %1419 = vmatmul.mubr.f32.gmra.mxu0 %v1105
          %v1420 = vpop.f32.mrf.mxu0
          %v1421 = vadd.f32 %v1014, %v1420
          %v1422 = vpop.f32.mrf.mxu0
          %1423 = vmatprep.mubr.f32.mxu0 0.0
          %1424 = vmatmul.mubr.f32.gmra.mxu0 %v1108
          %v1425 = vpop.f32.mrf.mxu0
          %v1426 = vadd.f32 %v1014, %v1425
          %v1427 = vpop.f32.mrf.mxu0
          %1428 = vmatprep.mubr.f32.mxu0 0.0
          %1429 = vmatmul.mubr.f32.gmra.mxu0 %v1111
          %v1430 = vpop.f32.mrf.mxu0
          %v1431 = vadd.f32 %v1014, %v1430
          %v1432 = vpop.f32.mrf.mxu0
          %1433 = vmatprep.mubr.f32.mxu0 0.0
          %1434 = vmatmul.mubr.f32.gmra.mxu0 %v1114
          %v1435 = vpop.f32.mrf.mxu0
          %v1436 = vadd.f32 %v1014, %v1435
          %v1437 = vpop.f32.mrf.mxu0
          %1438 = vmatprep.mubr.f32.mxu0 0.0
          %1439 = vmatmul.mubr.f32.gmra.mxu0 %v1117
          %v1440 = vpop.f32.mrf.mxu0
          %v1441 = vadd.f32 %v1014, %v1440
          %v1442 = vpop.f32.mrf.mxu0
          %1443 = vmatprep.mubr.f32.mxu0 0.0
          %1444 = vmatmul.mubr.f32.gmra.mxu0 %v1120
          %v1445 = vpop.f32.mrf.mxu0
          %v1446 = vadd.f32 %v1014, %v1445
          %v1447 = vpop.f32.mrf.mxu0
          %1448 = vmatprep.mubr.f32.mxu0 0.0
          %1449 = vmatmul.mubr.f32.gmra.mxu0 %v1123
          %v1450 = vpop.f32.mrf.mxu0
          %v1451 = vadd.f32 %v1014, %v1450
          %v1452 = vpop.f32.mrf.mxu0
          %1453 = vmatprep.mubr.f32.mxu0 0.0
          %1454 = vmatmul.mubr.f32.gmra.mxu0 %v1126
          %v1455 = vpop.f32.mrf.mxu0
          %v1456 = vadd.f32 %v1014, %v1455
          %v1457 = vpop.f32.mrf.mxu0
          %1458 = vmatprep.mubr.f32.mxu0 0.0
          %1459 = vmatmul.mubr.f32.gmra.mxu0 %v1129
          %v1460 = vpop.f32.mrf.mxu0
          %v1461 = vadd.f32 %v1014, %v1460
          %v1462 = vpop.f32.mrf.mxu0
          %1463 = vmatprep.mubr.f32.mxu0 0.0
          %1464 = vmatmul.mubr.f32.gmra.mxu0 %v1132
          %v1465 = vpop.f32.mrf.mxu0
          %v1466 = vadd.f32 %v1014, %v1465
          %v1467 = vpop.f32.mrf.mxu0
          %1468 = vmatprep.mubr.f32.mxu0 0.0
          %1469 = vmatmul.mubr.f32.gmra.mxu0 %v1135
          %v1470 = vpop.f32.mrf.mxu0
          %v1471 = vadd.f32 %v1014, %v1470
          %v1472 = vpop.f32.mrf.mxu0
          %1473 = vmatprep.mubr.f32.mxu0 0.0
          %1474 = vmatmul.mubr.f32.gmra.mxu0 %v1138
          %v1475 = vpop.f32.mrf.mxu0
          %v1476 = vadd.f32 %v1014, %v1475
          %v1477 = vpop.f32.mrf.mxu0
          %1478 = vmatprep.mubr.f32.mxu0 0.0
          %1479 = vmatmul.mubr.f32.gmra.mxu0 %v1141
          %v1480 = vpop.f32.mrf.mxu0
          %v1481 = vadd.f32 %v1014, %v1480
          %v1482 = vpop.f32.mrf.mxu0
          %1483 = vmatprep.mubr.f32.mxu0 0.0
          %1484 = vmatmul.mubr.f32.gmra.mxu0 %v1144
          %v1485 = vpop.f32.mrf.mxu0
          %v1486 = vadd.f32 %v1014, %v1485
          %v1487 = vpop.f32.mrf.mxu0
          %1488 = vmatprep.mubr.f32.mxu0 0.0
          %1489 = vmatmul.mubr.f32.gmra.mxu0 %v1147
          %v1490 = vpop.f32.mrf.mxu0
          %v1491 = vadd.f32 %v1014, %v1490
          %v1492 = vpop.f32.mrf.mxu0
          %1493 = vmatprep.mubr.f32.mxu0 0.0
          %1494 = vmatmul.mubr.f32.gmra.mxu0 %v1150
          %v1495 = vpop.f32.mrf.mxu0
          %v1496 = vadd.f32 %v1014, %v1495
          %v1497 = vpop.f32.mrf.mxu0
          %1498 = vmatprep.mubr.f32.mxu0 0.0
          %1499 = vmatmul.mubr.f32.gmra.mxu0 %v1153
          %v1500 = vpop.f32.mrf.mxu0
          %v1501 = vadd.f32 %v1014, %v1500
          %v1502 = vpop.f32.mrf.mxu0
          %1503 = vmatprep.mubr.f32.mxu0 0.0
          %1504 = vmatmul.mubr.f32.gmra.mxu0 %v1156
          %v1505 = vpop.f32.mrf.mxu0
          %v1506 = vadd.f32 %v1014, %v1505
          %v1507 = vpop.f32.mrf.mxu0
          %1508 = vmatprep.mubr.f32.mxu0 0.0
          %1509 = vmatmul.mubr.f32.gmra.mxu0 %v1159
          %v1510 = vpop.f32.mrf.mxu0
          %v1511 = vadd.f32 %v1014, %v1510
          %v1512 = vpop.f32.mrf.mxu0
          %1513 = vmatprep.mubr.f32.mxu0 0.0
          %1514 = vmatmul.mubr.f32.gmra.mxu0 %v1162
          %v1515 = vpop.f32.mrf.mxu0
          %v1516 = vadd.f32 %v1014, %v1515
          %v1517 = vpop.f32.mrf.mxu0
          %1518 = vmatprep.mubr.f32.mxu0 0.0
          %1519 = vmatmul.mubr.f32.gmra.mxu0 %v1165
          %v1520 = vpop.f32.mrf.mxu0
          %v1521 = vadd.f32 %v1014, %v1520
          %v1522 = vpop.f32.mrf.mxu0
          %1523 = vmatprep.mubr.f32.mxu0 0.0
          %1524 = vmatmul.mubr.f32.gmra.mxu0 %v1168
          %v1525 = vpop.f32.mrf.mxu0
          %v1526 = vadd.f32 %v1014, %v1525
          %v1527 = vpop.f32.mrf.mxu0
          %1528 = vmatprep.mubr.f32.mxu0 0.0
          %1529 = vmatmul.mubr.f32.gmra.mxu0 %v1171
          %v1530 = vpop.f32.mrf.mxu0
          %v1531 = vadd.f32 %v1014, %v1530
          %v1532 = vpop.f32.mrf.mxu0
          %1533 = vmatprep.mubr.f32.mxu0 0.0
          %1534 = vmatmul.mubr.f32.gmra.mxu0 %v1174
          %v1535 = vpop.f32.mrf.mxu0
          %v1536 = vadd.f32 %v1014, %v1535
          %v1537 = vpop.f32.mrf.mxu0
          %1538 = vmatprep.mubr.f32.mxu0 0.0
          %1539 = vmatmul.mubr.f32.gmra.mxu0 %v1177
          %v1540 = vpop.f32.mrf.mxu0
          %v1541 = vadd.f32 %v1014, %v1540
          %v1542 = vpop.f32.mrf.mxu0
          %1543 = vmatprep.mubr.f32.mxu0 0.0
          %1544 = vmatmul.mubr.f32.gmra.mxu0 %v1180
          %v1545 = vpop.f32.mrf.mxu0
          %v1546 = vadd.f32 %v1014, %v1545
          %v1547 = vpop.f32.mrf.mxu0
          %1548 = vmatprep.mubr.f32.mxu0 0.0
          %1549 = vmatmul.mubr.f32.gmra.mxu0 %v1183
          %v1550 = vpop.f32.mrf.mxu0
          %v1551 = vadd.f32 %v1014, %v1550
          %v1552 = vpop.f32.mrf.mxu0
          %1553 = vmatprep.mubr.f32.mxu0 0.0
          %1554 = vmatmul.mubr.f32.gmra.mxu0 %v1186
          %v1555 = vpop.f32.mrf.mxu0
          %v1556 = vadd.f32 %v1014, %v1555
          %v1557 = vpop.f32.mrf.mxu0
          %1558 = vmatprep.mubr.f32.mxu0 0.0
          %1559 = vmatmul.mubr.f32.gmra.mxu0 %v1189
          %v1560 = vpop.f32.mrf.mxu0
          %v1561 = vadd.f32 %v1014, %v1560
          %v1562 = vpop.f32.mrf.mxu0
          %1563 = vmatprep.mubr.f32.mxu0 0.0
          %1564 = vmatmul.mubr.f32.gmra.mxu0 %v1192
          %v1565 = vpop.f32.mrf.mxu0
          %v1566 = vadd.f32 %v1014, %v1565
          %v1567 = vpop.f32.mrf.mxu0
          %1568 = vmatprep.mubr.f32.mxu0 0.0
          %1569 = vmatmul.mubr.f32.gmra.mxu0 %v1195
          %v1570 = vpop.f32.mrf.mxu0
          %v1571 = vadd.f32 %v1014, %v1570
          %v1572 = vpop.f32.mrf.mxu0
          %1573 = vmatprep.mubr.f32.mxu0 0.0
          %1574 = vmatmul.mubr.f32.gmra.mxu0 %v1198
          %v1575 = vpop.f32.mrf.mxu0
          %v1576 = vadd.f32 %v1014, %v1575
          %v1577 = vpop.f32.mrf.mxu0
          %1578 = vmatprep.mubr.f32.mxu0 0.0
          %1579 = vmatmul.mubr.f32.gmra.mxu0 %v1201
          %v1580 = vpop.f32.mrf.mxu0
          %v1581 = vadd.f32 %v1014, %v1580
          %v1582 = vpop.f32.mrf.mxu0
          %1583 = vmatprep.mubr.f32.mxu0 0.0
          %1584 = vmatmul.mubr.f32.gmra.mxu0 %v1204
          %v1585 = vpop.f32.mrf.mxu0
          %v1586 = vadd.f32 %v1014, %v1585
          %v1587 = vpop.f32.mrf.mxu0
          %1588 = vmatprep.mubr.f32.mxu0 0.0
          %1589 = vmatmul.mubr.f32.gmra.mxu0 %v1207
          %v1590 = vpop.f32.mrf.mxu0
          %v1591 = vadd.f32 %v1014, %v1590
          %v1592 = vpop.f32.mrf.mxu0
          %1593 = vdwg.mxu0
          %v1594 = vmul.f32 %v1276, 0.5
          %v1595 = vmul.f32 %v1281, 0.5
          %v1596 = vmul.f32 %v1286, 0.5
          %v1597 = vmul.f32 %v1291, 0.5
          %v1598 = vmul.f32 %v1296, 0.5
          %v1599 = vmul.f32 %v1301, 0.5
          %v1600 = vmul.f32 %v1306, 0.5
          %v1601 = vmul.f32 %v1311, 0.5
          %v1602 = vmul.f32 %v1316, 0.5
          %v1603 = vmul.f32 %v1321, 0.5
          %v1604 = vmul.f32 %v1326, 0.5
          %v1605 = vmul.f32 %v1331, 0.5
          %v1606 = vmul.f32 %v1336, 0.5
          %v1607 = vmul.f32 %v1341, 0.5
          %v1608 = vmul.f32 %v1346, 0.5
          %v1609 = vmul.f32 %v1351, 0.5
          %v1610 = vmul.f32 %v1356, 0.5
          %v1611 = vmul.f32 %v1361, 0.5
          %v1612 = vmul.f32 %v1366, 0.5
          %v1613 = vmul.f32 %v1371, 0.5
          %v1614 = vmul.f32 %v1376, 0.5
          %v1615 = vmul.f32 %v1381, 0.5
          %v1616 = vmul.f32 %v1386, 0.5
          %v1617 = vmul.f32 %v1391, 0.5
          %v1618 = vmul.f32 %v1396, 0.5
          %v1619 = vmul.f32 %v1401, 0.5
          %v1620 = vmul.f32 %v1406, 0.5
          %v1621 = vmul.f32 %v1411, 0.5
          %v1622 = vmul.f32 %v1416, 0.5
          %v1623 = vmul.f32 %v1421, 0.5
          %v1624 = vmul.f32 %v1426, 0.5
          %v1625 = vmul.f32 %v1431, 0.5
          %v1626 = vmul.f32 %v1436, 0.5
          %v1627 = vmul.f32 %v1441, 0.5
          %v1628 = vmul.f32 %v1446, 0.5
          %v1629 = vmul.f32 %v1451, 0.5
          %v1630 = vmul.f32 %v1456, 0.5
          %v1631 = vmul.f32 %v1461, 0.5
          %v1632 = vmul.f32 %v1466, 0.5
          %v1633 = vmul.f32 %v1471, 0.5
          %v1634 = vmul.f32 %v1476, 0.5
          %v1635 = vmul.f32 %v1481, 0.5
          %v1636 = vmul.f32 %v1486, 0.5
          %v1637 = vmul.f32 %v1491, 0.5
          %v1638 = vmul.f32 %v1496, 0.5
          %v1639 = vmul.f32 %v1501, 0.5
          %v1640 = vmul.f32 %v1506, 0.5
          %v1641 = vmul.f32 %v1511, 0.5
          %v1642 = vmul.f32 %v1516, 0.5
          %v1643 = vmul.f32 %v1521, 0.5
          %v1644 = vmul.f32 %v1526, 0.5
          %v1645 = vmul.f32 %v1531, 0.5
          %v1646 = vmul.f32 %v1536, 0.5
          %v1647 = vmul.f32 %v1541, 0.5
          %v1648 = vmul.f32 %v1546, 0.5
          %v1649 = vmul.f32 %v1551, 0.5
          %v1650 = vmul.f32 %v1556, 0.5
          %v1651 = vmul.f32 %v1561, 0.5
          %v1652 = vmul.f32 %v1566, 0.5
          %v1653 = vmul.f32 %v1571, 0.5
          %v1654 = vmul.f32 %v1576, 0.5
          %v1655 = vmul.f32 %v1581, 0.5
          %v1656 = vmul.f32 %v1586, 0.5
          %v1657 = vmul.f32 %v1591, 0.5
          %v1658 = vmul.f32 %v1276, 0.70710677
          %v1659 = vmul.f32 %v1281, 0.70710677
          %v1660 = vmul.f32 %v1286, 0.70710677
          %v1661 = vmul.f32 %v1291, 0.70710677
          %v1662 = vmul.f32 %v1296, 0.70710677
          %v1663 = vmul.f32 %v1301, 0.70710677
          %v1664 = vmul.f32 %v1306, 0.70710677
          %v1665 = vmul.f32 %v1311, 0.70710677
          %v1666 = vmul.f32 %v1316, 0.70710677
          %v1667 = vmul.f32 %v1321, 0.70710677
          %v1668 = vmul.f32 %v1326, 0.70710677
          %v1669 = vmul.f32 %v1331, 0.70710677
          %v1670 = vmul.f32 %v1336, 0.70710677
          %v1671 = vmul.f32 %v1341, 0.70710677
          %v1672 = vmul.f32 %v1346, 0.70710677
          %v1673 = vmul.f32 %v1351, 0.70710677
          %v1674 = vmul.f32 %v1356, 0.70710677
          %v1675 = vmul.f32 %v1361, 0.70710677
          %v1676 = vmul.f32 %v1366, 0.70710677
          %v1677 = vmul.f32 %v1371, 0.70710677
          %v1678 = vmul.f32 %v1376, 0.70710677
          %v1679 = vmul.f32 %v1381, 0.70710677
          %v1680 = vmul.f32 %v1386, 0.70710677
          %v1681 = vmul.f32 %v1391, 0.70710677
          %v1682 = vmul.f32 %v1396, 0.70710677
          %v1683 = vmul.f32 %v1401, 0.70710677
          %v1684 = vmul.f32 %v1406, 0.70710677
          %v1685 = vmul.f32 %v1411, 0.70710677
          %v1686 = vmul.f32 %v1416, 0.70710677
          %v1687 = vmul.f32 %v1421, 0.70710677
          %v1688 = vmul.f32 %v1426, 0.70710677
          %v1689 = vmul.f32 %v1431, 0.70710677
          %v1690 = vmul.f32 %v1436, 0.70710677
          %v1691 = vmul.f32 %v1441, 0.70710677
          %v1692 = vmul.f32 %v1446, 0.70710677
          %v1693 = vmul.f32 %v1451, 0.70710677
          %v1694 = vmul.f32 %v1456, 0.70710677
          %v1695 = vmul.f32 %v1461, 0.70710677
          %v1696 = vmul.f32 %v1466, 0.70710677
          %v1697 = vmul.f32 %v1471, 0.70710677
          %v1698 = vmul.f32 %v1476, 0.70710677
          %v1699 = vmul.f32 %v1481, 0.70710677
          %v1700 = vmul.f32 %v1486, 0.70710677
          %v1701 = vmul.f32 %v1491, 0.70710677
          %v1702 = vmul.f32 %v1496, 0.70710677
          %v1703 = vmul.f32 %v1501, 0.70710677
          %v1704 = vmul.f32 %v1506, 0.70710677
          %v1705 = vmul.f32 %v1511, 0.70710677
          %v1706 = vmul.f32 %v1516, 0.70710677
          %v1707 = vmul.f32 %v1521, 0.70710677
          %v1708 = vmul.f32 %v1526, 0.70710677
          %v1709 = vmul.f32 %v1531, 0.70710677
          %v1710 = vmul.f32 %v1536, 0.70710677
          %v1711 = vmul.f32 %v1541, 0.70710677
          %v1712 = vmul.f32 %v1546, 0.70710677
          %v1713 = vmul.f32 %v1551, 0.70710677
          %v1714 = vmul.f32 %v1556, 0.70710677
          %v1715 = vmul.f32 %v1561, 0.70710677
          %v1716 = vmul.f32 %v1566, 0.70710677
          %v1717 = vmul.f32 %v1571, 0.70710677
          %v1718 = vmul.f32 %v1576, 0.70710677
          %v1719 = vmul.f32 %v1581, 0.70710677
          %v1720 = vmul.f32 %v1586, 0.70710677
          %v1721 = vmul.f32 %v1591, 0.70710677
          %v1722 = verf.f32.pop %v1658
          %v1723 = verf.f32.pop %v1659
          %v1724 = verf.f32.pop %v1660
          %v1725 = verf.f32.pop %v1661
          %v1726 = verf.f32.pop %v1662
          %v1727 = verf.f32.pop %v1663
          %v1728 = verf.f32.pop %v1664
          %v1729 = verf.f32.pop %v1665
          %v1730 = verf.f32.pop %v1666
          %v1731 = verf.f32.pop %v1667
          %v1732 = verf.f32.pop %v1668
          %v1733 = verf.f32.pop %v1669
          %v1734 = verf.f32.pop %v1670
          %v1735 = verf.f32.pop %v1671
          %v1736 = verf.f32.pop %v1672
          %v1737 = verf.f32.pop %v1673
          %v1738 = verf.f32.pop %v1674
          %v1739 = verf.f32.pop %v1675
          %v1740 = verf.f32.pop %v1676
          %v1741 = verf.f32.pop %v1677
          %v1742 = verf.f32.pop %v1678
          %v1743 = verf.f32.pop %v1679
          %v1744 = verf.f32.pop %v1680
          %v1745 = verf.f32.pop %v1681
          %v1746 = verf.f32.pop %v1682
          %v1747 = verf.f32.pop %v1683
          %v1748 = verf.f32.pop %v1684
          %v1749 = verf.f32.pop %v1685
          %v1750 = verf.f32.pop %v1686
          %v1751 = verf.f32.pop %v1687
          %v1752 = verf.f32.pop %v1688
          %v1753 = verf.f32.pop %v1689
          %v1754 = verf.f32.pop %v1690
          %v1755 = verf.f32.pop %v1691
          %v1756 = verf.f32.pop %v1692
          %v1757 = verf.f32.pop %v1693
          %v1758 = verf.f32.pop %v1694
          %v1759 = verf.f32.pop %v1695
          %v1760 = verf.f32.pop %v1696
          %v1761 = verf.f32.pop %v1697
          %v1762 = verf.f32.pop %v1698
          %v1763 = verf.f32.pop %v1699
          %v1764 = verf.f32.pop %v1700
          %v1765 = verf.f32.pop %v1701
          %v1766 = verf.f32.pop %v1702
          %v1767 = verf.f32.pop %v1703
          %v1768 = verf.f32.pop %v1704
          %v1769 = verf.f32.pop %v1705
          %v1770 = verf.f32.pop %v1706
          %v1771 = verf.f32.pop %v1707
          %v1772 = verf.f32.pop %v1708
          %v1773 = verf.f32.pop %v1709
          %v1774 = verf.f32.pop %v1710
          %v1775 = verf.f32.pop %v1711
          %v1776 = verf.f32.pop %v1712
          %v1777 = verf.f32.pop %v1713
          %v1778 = verf.f32.pop %v1714
          %v1779 = verf.f32.pop %v1715
          %v1780 = verf.f32.pop %v1716
          %v1781 = verf.f32.pop %v1717
          %v1782 = verf.f32.pop %v1718
          %v1783 = verf.f32.pop %v1719
          %v1784 = verf.f32.pop %v1720
          %v1785 = verf.f32.pop %v1721
          %v1786 = vadd.f32 %v1722, 1.0
          %v1787 = vadd.f32 %v1723, 1.0
          %v1788 = vadd.f32 %v1724, 1.0
          %v1789 = vadd.f32 %v1725, 1.0
          %v1790 = vadd.f32 %v1726, 1.0
          %v1791 = vadd.f32 %v1727, 1.0
          %v1792 = vadd.f32 %v1728, 1.0
          %v1793 = vadd.f32 %v1729, 1.0
          %v1794 = vadd.f32 %v1730, 1.0
          %v1795 = vadd.f32 %v1731, 1.0
          %v1796 = vadd.f32 %v1732, 1.0
          %v1797 = vadd.f32 %v1733, 1.0
          %v1798 = vadd.f32 %v1734, 1.0
          %v1799 = vadd.f32 %v1735, 1.0
          %v1800 = vadd.f32 %v1736, 1.0
          %v1801 = vadd.f32 %v1737, 1.0
          %v1802 = vadd.f32 %v1738, 1.0
          %v1803 = vadd.f32 %v1739, 1.0
          %v1804 = vadd.f32 %v1740, 1.0
          %v1805 = vadd.f32 %v1741, 1.0
          %v1806 = vadd.f32 %v1742, 1.0
          %v1807 = vadd.f32 %v1743, 1.0
          %v1808 = vadd.f32 %v1744, 1.0
          %v1809 = vadd.f32 %v1745, 1.0
          %v1810 = vadd.f32 %v1746, 1.0
          %v1811 = vadd.f32 %v1747, 1.0
          %v1812 = vadd.f32 %v1748, 1.0
          %v1813 = vadd.f32 %v1749, 1.0
          %v1814 = vadd.f32 %v1750, 1.0
          %v1815 = vadd.f32 %v1751, 1.0
          %v1816 = vadd.f32 %v1752, 1.0
          %v1817 = vadd.f32 %v1753, 1.0
          %v1818 = vadd.f32 %v1754, 1.0
          %v1819 = vadd.f32 %v1755, 1.0
          %v1820 = vadd.f32 %v1756, 1.0
          %v1821 = vadd.f32 %v1757, 1.0
          %v1822 = vadd.f32 %v1758, 1.0
          %v1823 = vadd.f32 %v1759, 1.0
          %v1824 = vadd.f32 %v1760, 1.0
          %v1825 = vadd.f32 %v1761, 1.0
          %v1826 = vadd.f32 %v1762, 1.0
          %v1827 = vadd.f32 %v1763, 1.0
          %v1828 = vadd.f32 %v1764, 1.0
          %v1829 = vadd.f32 %v1765, 1.0
          %v1830 = vadd.f32 %v1766, 1.0
          %v1831 = vadd.f32 %v1767, 1.0
          %v1832 = vadd.f32 %v1768, 1.0
          %v1833 = vadd.f32 %v1769, 1.0
          %v1834 = vadd.f32 %v1770, 1.0
          %v1835 = vadd.f32 %v1771, 1.0
          %v1836 = vadd.f32 %v1772, 1.0
          %v1837 = vadd.f32 %v1773, 1.0
          %v1838 = vadd.f32 %v1774, 1.0
          %v1839 = vadd.f32 %v1775, 1.0
          %v1840 = vadd.f32 %v1776, 1.0
          %v1841 = vadd.f32 %v1777, 1.0
          %v1842 = vadd.f32 %v1778, 1.0
          %v1843 = vadd.f32 %v1779, 1.0
          %v1844 = vadd.f32 %v1780, 1.0
          %v1845 = vadd.f32 %v1781, 1.0
          %v1846 = vadd.f32 %v1782, 1.0
          %v1847 = vadd.f32 %v1783, 1.0
          %v1848 = vadd.f32 %v1784, 1.0
          %v1849 = vadd.f32 %v1785, 1.0
          %v1850 = vmul.f32 %v1594, %v1786
          %v1851 = vmul.f32 %v1595, %v1787
          %v1852 = vmul.f32 %v1596, %v1788
          %v1853 = vmul.f32 %v1597, %v1789
          %v1854 = vmul.f32 %v1598, %v1790
          %v1855 = vmul.f32 %v1599, %v1791
          %v1856 = vmul.f32 %v1600, %v1792
          %v1857 = vmul.f32 %v1601, %v1793
          %v1858 = vmul.f32 %v1602, %v1794
          %v1859 = vmul.f32 %v1603, %v1795
          %v1860 = vmul.f32 %v1604, %v1796
          %v1861 = vmul.f32 %v1605, %v1797
          %v1862 = vmul.f32 %v1606, %v1798
          %v1863 = vmul.f32 %v1607, %v1799
          %v1864 = vmul.f32 %v1608, %v1800
          %v1865 = vmul.f32 %v1609, %v1801
          %v1866 = vmul.f32 %v1610, %v1802
          %v1867 = vmul.f32 %v1611, %v1803
          %v1868 = vmul.f32 %v1612, %v1804
          %v1869 = vmul.f32 %v1613, %v1805
          %v1870 = vmul.f32 %v1614, %v1806
          %v1871 = vmul.f32 %v1615, %v1807
          %v1872 = vmul.f32 %v1616, %v1808
          %v1873 = vmul.f32 %v1617, %v1809
          %v1874 = vmul.f32 %v1618, %v1810
          %v1875 = vmul.f32 %v1619, %v1811
          %v1876 = vmul.f32 %v1620, %v1812
          %v1877 = vmul.f32 %v1621, %v1813
          %v1878 = vmul.f32 %v1622, %v1814
          %v1879 = vmul.f32 %v1623, %v1815
          %v1880 = vmul.f32 %v1624, %v1816
          %v1881 = vmul.f32 %v1625, %v1817
          %v1882 = vmul.f32 %v1626, %v1818
          %v1883 = vmul.f32 %v1627, %v1819
          %v1884 = vmul.f32 %v1628, %v1820
          %v1885 = vmul.f32 %v1629, %v1821
          %v1886 = vmul.f32 %v1630, %v1822
          %v1887 = vmul.f32 %v1631, %v1823
          %v1888 = vmul.f32 %v1632, %v1824
          %v1889 = vmul.f32 %v1633, %v1825
          %v1890 = vmul.f32 %v1634, %v1826
          %v1891 = vmul.f32 %v1635, %v1827
          %v1892 = vmul.f32 %v1636, %v1828
          %v1893 = vmul.f32 %v1637, %v1829
          %v1894 = vmul.f32 %v1638, %v1830
          %v1895 = vmul.f32 %v1639, %v1831
          %v1896 = vmul.f32 %v1640, %v1832
          %v1897 = vmul.f32 %v1641, %v1833
          %v1898 = vmul.f32 %v1642, %v1834
          %v1899 = vmul.f32 %v1643, %v1835
          %v1900 = vmul.f32 %v1644, %v1836
          %v1901 = vmul.f32 %v1645, %v1837
          %v1902 = vmul.f32 %v1646, %v1838
          %v1903 = vmul.f32 %v1647, %v1839
          %v1904 = vmul.f32 %v1648, %v1840
          %v1905 = vmul.f32 %v1649, %v1841
          %v1906 = vmul.f32 %v1650, %v1842
          %v1907 = vmul.f32 %v1651, %v1843
          %v1908 = vmul.f32 %v1652, %v1844
          %v1909 = vmul.f32 %v1653, %v1845
          %v1910 = vmul.f32 %v1654, %v1846
          %v1911 = vmul.f32 %v1655, %v1847
          %v1912 = vmul.f32 %v1656, %v1848
          %v1913 = vmul.f32 %v1657, %v1849
          %v1914 = vld [vmem:[%s4] sm:$0x1]
          %v1916 = vlaneseq
          %v1917 = vshrl.u32 %v1916, 7
          %v1918 = vsub.s32 0, %v1917
          %v1919 = vrot.slane %v1914, %v1918
          %v1921 = vmul.f32 %v1850, %v1919
          %v1922 = vmul.f32 %v1851, %v1919
          %v1923 = vmul.f32 %v1852, %v1919
          %v1924 = vmul.f32 %v1853, %v1919
          %v1925 = vmul.f32 %v1854, %v1919
          %v1926 = vmul.f32 %v1855, %v1919
          %v1927 = vmul.f32 %v1856, %v1919
          %v1928 = vmul.f32 %v1857, %v1919
          %v1929 = vmul.f32 %v1858, %v1919
          %v1930 = vmul.f32 %v1859, %v1919
          %v1931 = vmul.f32 %v1860, %v1919
          %v1932 = vmul.f32 %v1861, %v1919
          %v1933 = vmul.f32 %v1862, %v1919
          %v1934 = vmul.f32 %v1863, %v1919
          %v1935 = vmul.f32 %v1864, %v1919
          %v1936 = vmul.f32 %v1865, %v1919
          %v1937 = vmul.f32 %v1866, %v1919
          %v1938 = vmul.f32 %v1867, %v1919
          %v1939 = vmul.f32 %v1868, %v1919
          %v1940 = vmul.f32 %v1869, %v1919
          %v1941 = vmul.f32 %v1870, %v1919
          %v1942 = vmul.f32 %v1871, %v1919
          %v1943 = vmul.f32 %v1872, %v1919
          %v1944 = vmul.f32 %v1873, %v1919
          %v1945 = vmul.f32 %v1874, %v1919
          %v1946 = vmul.f32 %v1875, %v1919
          %v1947 = vmul.f32 %v1876, %v1919
          %v1948 = vmul.f32 %v1877, %v1919
          %v1949 = vmul.f32 %v1878, %v1919
          %v1950 = vmul.f32 %v1879, %v1919
          %v1951 = vmul.f32 %v1880, %v1919
          %v1952 = vmul.f32 %v1881, %v1919
          %v1953 = vmul.f32 %v1882, %v1919
          %v1954 = vmul.f32 %v1883, %v1919
          %v1955 = vmul.f32 %v1884, %v1919
          %v1956 = vmul.f32 %v1885, %v1919
          %v1957 = vmul.f32 %v1886, %v1919
          %v1958 = vmul.f32 %v1887, %v1919
          %v1959 = vmul.f32 %v1888, %v1919
          %v1960 = vmul.f32 %v1889, %v1919
          %v1961 = vmul.f32 %v1890, %v1919
          %v1962 = vmul.f32 %v1891, %v1919
          %v1963 = vmul.f32 %v1892, %v1919
          %v1964 = vmul.f32 %v1893, %v1919
          %v1965 = vmul.f32 %v1894, %v1919
          %v1966 = vmul.f32 %v1895, %v1919
          %v1967 = vmul.f32 %v1896, %v1919
          %v1968 = vmul.f32 %v1897, %v1919
          %v1969 = vmul.f32 %v1898, %v1919
          %v1970 = vmul.f32 %v1899, %v1919
          %v1971 = vmul.f32 %v1900, %v1919
          %v1972 = vmul.f32 %v1901, %v1919
          %v1973 = vmul.f32 %v1902, %v1919
          %v1974 = vmul.f32 %v1903, %v1919
          %v1975 = vmul.f32 %v1904, %v1919
          %v1976 = vmul.f32 %v1905, %v1919
          %v1977 = vmul.f32 %v1906, %v1919
          %v1978 = vmul.f32 %v1907, %v1919
          %v1979 = vmul.f32 %v1908, %v1919
          %v1980 = vmul.f32 %v1909, %v1919
          %v1981 = vmul.f32 %v1910, %v1919
          %v1982 = vmul.f32 %v1911, %v1919
          %v1983 = vmul.f32 %v1912, %v1919
          %v1984 = vmul.f32 %v1913, %v1919
          %vm1985 = vcmask 523264
          %v1986 = vsel %vm1985, %v1921, 0.0
          %1987 = vadd.xlane.f32.xlu0 %v1986
          %v1988 = vpop.xlane.xlu0 %1987
          %v1989 = vsel %vm1985, %v1922, 0.0
          %1990 = vadd.xlane.f32.xlu0 %v1989
          %v1991 = vpop.xlane.xlu0 %1990
          %v1992 = vsel %vm1985, %v1923, 0.0
          %1993 = vadd.xlane.f32.xlu0 %v1992
          %v1994 = vpop.xlane.xlu0 %1993
          %v1995 = vsel %vm1985, %v1924, 0.0
          %1996 = vadd.xlane.f32.xlu0 %v1995
          %v1997 = vpop.xlane.xlu0 %1996
          %v1998 = vsel %vm1985, %v1925, 0.0
          %1999 = vadd.xlane.f32.xlu0 %v1998
          %v2000 = vpop.xlane.xlu0 %1999
          %v2001 = vsel %vm1985, %v1926, 0.0
          %2002 = vadd.xlane.f32.xlu0 %v2001
          %v2003 = vpop.xlane.xlu0 %2002
          %v2004 = vsel %vm1985, %v1927, 0.0
          %2005 = vadd.xlane.f32.xlu0 %v2004
          %v2006 = vpop.xlane.xlu0 %2005
          %v2007 = vsel %vm1985, %v1928, 0.0
          %2008 = vadd.xlane.f32.xlu0 %v2007
          %v2009 = vpop.xlane.xlu0 %2008
          %v2010 = vsel %vm1985, %v1929, 0.0
          %2011 = vadd.xlane.f32.xlu0 %v2010
          %v2012 = vpop.xlane.xlu0 %2011
          %v2013 = vsel %vm1985, %v1930, 0.0
          %2014 = vadd.xlane.f32.xlu0 %v2013
          %v2015 = vpop.xlane.xlu0 %2014
          %v2016 = vsel %vm1985, %v1931, 0.0
          %2017 = vadd.xlane.f32.xlu0 %v2016
          %v2018 = vpop.xlane.xlu0 %2017
          %v2019 = vsel %vm1985, %v1932, 0.0
          %2020 = vadd.xlane.f32.xlu0 %v2019
          %v2021 = vpop.xlane.xlu0 %2020
          %v2022 = vsel %vm1985, %v1933, 0.0
          %2023 = vadd.xlane.f32.xlu0 %v2022
          %v2024 = vpop.xlane.xlu0 %2023
          %v2025 = vsel %vm1985, %v1934, 0.0
          %2026 = vadd.xlane.f32.xlu0 %v2025
          %v2027 = vpop.xlane.xlu0 %2026
          %v2028 = vsel %vm1985, %v1935, 0.0
          %2029 = vadd.xlane.f32.xlu0 %v2028
          %v2030 = vpop.xlane.xlu0 %2029
          %v2031 = vsel %vm1985, %v1936, 0.0
          %2032 = vadd.xlane.f32.xlu0 %v2031
          %v2033 = vpop.xlane.xlu0 %2032
          %v2034 = vsel %vm1985, %v1937, 0.0
          %2035 = vadd.xlane.f32.xlu0 %v2034
          %v2036 = vpop.xlane.xlu0 %2035
          %v2037 = vsel %vm1985, %v1938, 0.0
          %2038 = vadd.xlane.f32.xlu0 %v2037
          %v2039 = vpop.xlane.xlu0 %2038
          %v2040 = vsel %vm1985, %v1939, 0.0
          %2041 = vadd.xlane.f32.xlu0 %v2040
          %v2042 = vpop.xlane.xlu0 %2041
          %v2043 = vsel %vm1985, %v1940, 0.0
          %2044 = vadd.xlane.f32.xlu0 %v2043
          %v2045 = vpop.xlane.xlu0 %2044
          %v2046 = vsel %vm1985, %v1941, 0.0
          %2047 = vadd.xlane.f32.xlu0 %v2046
          %v2048 = vpop.xlane.xlu0 %2047
          %v2049 = vsel %vm1985, %v1942, 0.0
          %2050 = vadd.xlane.f32.xlu0 %v2049
          %v2051 = vpop.xlane.xlu0 %2050
          %v2052 = vsel %vm1985, %v1943, 0.0
          %2053 = vadd.xlane.f32.xlu0 %v2052
          %v2054 = vpop.xlane.xlu0 %2053
          %v2055 = vsel %vm1985, %v1944, 0.0
          %2056 = vadd.xlane.f32.xlu0 %v2055
          %v2057 = vpop.xlane.xlu0 %2056
          %v2058 = vsel %vm1985, %v1945, 0.0
          %2059 = vadd.xlane.f32.xlu0 %v2058
          %v2060 = vpop.xlane.xlu0 %2059
          %v2061 = vsel %vm1985, %v1946, 0.0
          %2062 = vadd.xlane.f32.xlu0 %v2061
          %v2063 = vpop.xlane.xlu0 %2062
          %v2064 = vsel %vm1985, %v1947, 0.0
          %2065 = vadd.xlane.f32.xlu0 %v2064
          %v2066 = vpop.xlane.xlu0 %2065
          %v2067 = vsel %vm1985, %v1948, 0.0
          %2068 = vadd.xlane.f32.xlu0 %v2067
          %v2069 = vpop.xlane.xlu0 %2068
          %v2070 = vsel %vm1985, %v1949, 0.0
          %2071 = vadd.xlane.f32.xlu0 %v2070
          %v2072 = vpop.xlane.xlu0 %2071
          %v2073 = vsel %vm1985, %v1950, 0.0
          %2074 = vadd.xlane.f32.xlu0 %v2073
          %v2075 = vpop.xlane.xlu0 %2074
          %v2076 = vsel %vm1985, %v1951, 0.0
          %2077 = vadd.xlane.f32.xlu0 %v2076
          %v2078 = vpop.xlane.xlu0 %2077
          %v2079 = vsel %vm1985, %v1952, 0.0
          %2080 = vadd.xlane.f32.xlu0 %v2079
          %v2081 = vpop.xlane.xlu0 %2080
          %v2082 = vsel %vm1985, %v1953, 0.0
          %2083 = vadd.xlane.f32.xlu0 %v2082
          %v2084 = vpop.xlane.xlu0 %2083
          %v2085 = vsel %vm1985, %v1954, 0.0
          %2086 = vadd.xlane.f32.xlu0 %v2085
          %v2087 = vpop.xlane.xlu0 %2086
          %v2088 = vsel %vm1985, %v1955, 0.0
          %2089 = vadd.xlane.f32.xlu0 %v2088
          %v2090 = vpop.xlane.xlu0 %2089
          %v2091 = vsel %vm1985, %v1956, 0.0
          %2092 = vadd.xlane.f32.xlu0 %v2091
          %v2093 = vpop.xlane.xlu0 %2092
          %v2094 = vsel %vm1985, %v1957, 0.0
          %2095 = vadd.xlane.f32.xlu0 %v2094
          %v2096 = vpop.xlane.xlu0 %2095
          %v2097 = vsel %vm1985, %v1958, 0.0
          %2098 = vadd.xlane.f32.xlu0 %v2097
          %v2099 = vpop.xlane.xlu0 %2098
          %v2100 = vsel %vm1985, %v1959, 0.0
          %2101 = vadd.xlane.f32.xlu0 %v2100
          %v2102 = vpop.xlane.xlu0 %2101
          %v2103 = vsel %vm1985, %v1960, 0.0
          %2104 = vadd.xlane.f32.xlu0 %v2103
          %v2105 = vpop.xlane.xlu0 %2104
          %v2106 = vsel %vm1985, %v1961, 0.0
          %2107 = vadd.xlane.f32.xlu0 %v2106
          %v2108 = vpop.xlane.xlu0 %2107
          %v2109 = vsel %vm1985, %v1962, 0.0
          %2110 = vadd.xlane.f32.xlu0 %v2109
          %v2111 = vpop.xlane.xlu0 %2110
          %v2112 = vsel %vm1985, %v1963, 0.0
          %2113 = vadd.xlane.f32.xlu0 %v2112
          %v2114 = vpop.xlane.xlu0 %2113
          %v2115 = vsel %vm1985, %v1964, 0.0
          %2116 = vadd.xlane.f32.xlu0 %v2115
          %v2117 = vpop.xlane.xlu0 %2116
          %v2118 = vsel %vm1985, %v1965, 0.0
          %2119 = vadd.xlane.f32.xlu0 %v2118
          %v2120 = vpop.xlane.xlu0 %2119
          %v2121 = vsel %vm1985, %v1966, 0.0
          %2122 = vadd.xlane.f32.xlu0 %v2121
          %v2123 = vpop.xlane.xlu0 %2122
          %v2124 = vsel %vm1985, %v1967, 0.0
          %2125 = vadd.xlane.f32.xlu0 %v2124
          %v2126 = vpop.xlane.xlu0 %2125
          %v2127 = vsel %vm1985, %v1968, 0.0
          %2128 = vadd.xlane.f32.xlu0 %v2127
          %v2129 = vpop.xlane.xlu0 %2128
          %v2130 = vsel %vm1985, %v1969, 0.0
          %2131 = vadd.xlane.f32.xlu0 %v2130
          %v2132 = vpop.xlane.xlu0 %2131
          %v2133 = vsel %vm1985, %v1970, 0.0
          %2134 = vadd.xlane.f32.xlu0 %v2133
          %v2135 = vpop.xlane.xlu0 %2134
          %v2136 = vsel %vm1985, %v1971, 0.0
          %2137 = vadd.xlane.f32.xlu0 %v2136
          %v2138 = vpop.xlane.xlu0 %2137
          %v2139 = vsel %vm1985, %v1972, 0.0
          %2140 = vadd.xlane.f32.xlu0 %v2139
          %v2141 = vpop.xlane.xlu0 %2140
          %v2142 = vsel %vm1985, %v1973, 0.0
          %2143 = vadd.xlane.f32.xlu0 %v2142
          %v2144 = vpop.xlane.xlu0 %2143
          %v2145 = vsel %vm1985, %v1974, 0.0
          %2146 = vadd.xlane.f32.xlu0 %v2145
          %v2147 = vpop.xlane.xlu0 %2146
          %v2148 = vsel %vm1985, %v1975, 0.0
          %2149 = vadd.xlane.f32.xlu0 %v2148
          %v2150 = vpop.xlane.xlu0 %2149
          %v2151 = vsel %vm1985, %v1976, 0.0
          %2152 = vadd.xlane.f32.xlu0 %v2151
          %v2153 = vpop.xlane.xlu0 %2152
          %v2154 = vsel %vm1985, %v1977, 0.0
          %2155 = vadd.xlane.f32.xlu0 %v2154
          %v2156 = vpop.xlane.xlu0 %2155
          %v2157 = vsel %vm1985, %v1978, 0.0
          %2158 = vadd.xlane.f32.xlu0 %v2157
          %v2159 = vpop.xlane.xlu0 %2158
          %v2160 = vsel %vm1985, %v1979, 0.0
          %2161 = vadd.xlane.f32.xlu0 %v2160
          %v2162 = vpop.xlane.xlu0 %2161
          %v2163 = vsel %vm1985, %v1980, 0.0
          %2164 = vadd.xlane.f32.xlu0 %v2163
          %v2165 = vpop.xlane.xlu0 %2164
          %v2166 = vsel %vm1985, %v1981, 0.0
          %2167 = vadd.xlane.f32.xlu0 %v2166
          %v2168 = vpop.xlane.xlu0 %2167
          %v2169 = vsel %vm1985, %v1982, 0.0
          %2170 = vadd.xlane.f32.xlu0 %v2169
          %v2171 = vpop.xlane.xlu0 %2170
          %v2172 = vsel %vm1985, %v1983, 0.0
          %2173 = vadd.xlane.f32.xlu0 %v2172
          %v2174 = vpop.xlane.xlu0 %2173
          %v2175 = vsel %vm1985, %v1984, 0.0
          %2176 = vadd.xlane.f32.xlu0 %v2175
          %v2177 = vpop.xlane.xlu0 %2176
          %v2178 = vld [vmem:[#allocation6] sm:$0x1]
          %2180 = vset.pattern.permute.xlu0 0
          %2181 = vperm.xlu0 %2180, %v2178
          %v2182 = vpop.permute.xlu0 %2181
          %v2184 = vlaneseq
          %v2185 = vshrl.u32 %v2184, 7
          %v2186 = vsub.s32 0, %v2185
          %v2187 = vrot.slane %v2182, %v2186
          %v2188 = vadd.f32 %v1988, %v2187
          %v2189 = vadd.f32 %v1991, %v2187
          %v2190 = vadd.f32 %v1994, %v2187
          %v2191 = vadd.f32 %v1997, %v2187
          %v2192 = vadd.f32 %v2000, %v2187
          %v2193 = vadd.f32 %v2003, %v2187
          %v2194 = vadd.f32 %v2006, %v2187
          %v2195 = vadd.f32 %v2009, %v2187
          %v2196 = vadd.f32 %v2012, %v2187
          %v2197 = vadd.f32 %v2015, %v2187
          %v2198 = vadd.f32 %v2018, %v2187
          %v2199 = vadd.f32 %v2021, %v2187
          %v2200 = vadd.f32 %v2024, %v2187
          %v2201 = vadd.f32 %v2027, %v2187
          %v2202 = vadd.f32 %v2030, %v2187
          %v2203 = vadd.f32 %v2033, %v2187
          %v2204 = vadd.f32 %v2036, %v2187
          %v2205 = vadd.f32 %v2039, %v2187
          %v2206 = vadd.f32 %v2042, %v2187
          %v2207 = vadd.f32 %v2045, %v2187
          %v2208 = vadd.f32 %v2048, %v2187
          %v2209 = vadd.f32 %v2051, %v2187
          %v2210 = vadd.f32 %v2054, %v2187
          %v2211 = vadd.f32 %v2057, %v2187
          %v2212 = vadd.f32 %v2060, %v2187
          %v2213 = vadd.f32 %v2063, %v2187
          %v2214 = vadd.f32 %v2066, %v2187
          %v2215 = vadd.f32 %v2069, %v2187
          %v2216 = vadd.f32 %v2072, %v2187
          %v2217 = vadd.f32 %v2075, %v2187
          %v2218 = vadd.f32 %v2078, %v2187
          %v2219 = vadd.f32 %v2081, %v2187
          %v2220 = vadd.f32 %v2084, %v2187
          %v2221 = vadd.f32 %v2087, %v2187
          %v2222 = vadd.f32 %v2090, %v2187
          %v2223 = vadd.f32 %v2093, %v2187
          %v2224 = vadd.f32 %v2096, %v2187
          %v2225 = vadd.f32 %v2099, %v2187
          %v2226 = vadd.f32 %v2102, %v2187
          %v2227 = vadd.f32 %v2105, %v2187
          %v2228 = vadd.f32 %v2108, %v2187
          %v2229 = vadd.f32 %v2111, %v2187
          %v2230 = vadd.f32 %v2114, %v2187
          %v2231 = vadd.f32 %v2117, %v2187
          %v2232 = vadd.f32 %v2120, %v2187
          %v2233 = vadd.f32 %v2123, %v2187
          %v2234 = vadd.f32 %v2126, %v2187
          %v2235 = vadd.f32 %v2129, %v2187
          %v2236 = vadd.f32 %v2132, %v2187
          %v2237 = vadd.f32 %v2135, %v2187
          %v2238 = vadd.f32 %v2138, %v2187
          %v2239 = vadd.f32 %v2141, %v2187
          %v2240 = vadd.f32 %v2144, %v2187
          %v2241 = vadd.f32 %v2147, %v2187
          %v2242 = vadd.f32 %v2150, %v2187
          %v2243 = vadd.f32 %v2153, %v2187
          %v2244 = vadd.f32 %v2156, %v2187
          %v2245 = vadd.f32 %v2159, %v2187
          %v2246 = vadd.f32 %v2162, %v2187
          %v2247 = vadd.f32 %v2165, %v2187
          %v2248 = vadd.f32 %v2168, %v2187
          %v2249 = vadd.f32 %v2171, %v2187
          %v2250 = vadd.f32 %v2174, %v2187
          %v2251 = vadd.f32 %v2177, %v2187
          %v2316 = vlaneseq
          %v2317 = vshrl.u32 %v2316, 7
          %v2318 = vsub.s32 0, %v2317
          %v2319 = vrot.slane %v2188, %v2318
          %v2320 = vlaneseq
          %v2321 = vshrl.u32 %v2320, 7
          %v2322 = vsub.s32 1, %v2321
          %v2323 = vrot.slane %v2188, %v2322
          %v2324 = vlaneseq
          %v2325 = vshrl.u32 %v2324, 7
          %v2326 = vsub.s32 2, %v2325
          %v2327 = vrot.slane %v2188, %v2326
          %v2328 = vlaneseq
          %v2329 = vshrl.u32 %v2328, 7
          %v2330 = vsub.s32 3, %v2329
          %v2331 = vrot.slane %v2188, %v2330
          %v2332 = vlaneseq
          %v2333 = vshrl.u32 %v2332, 7
          %v2334 = vsub.s32 4, %v2333
          %v2335 = vrot.slane %v2188, %v2334
          %v2336 = vlaneseq
          %v2337 = vshrl.u32 %v2336, 7
          %v2338 = vsub.s32 5, %v2337
          %v2339 = vrot.slane %v2188, %v2338
          %v2340 = vlaneseq
          %v2341 = vshrl.u32 %v2340, 7
          %v2342 = vsub.s32 6, %v2341
          %v2343 = vrot.slane %v2188, %v2342
          %v2344 = vlaneseq
          %v2345 = vshrl.u32 %v2344, 7
          %v2346 = vsub.s32 7, %v2345
          %v2347 = vrot.slane %v2188, %v2346
          %v2348 = vlaneseq
          %v2349 = vshrl.u32 %v2348, 7
          %v2350 = vsub.s32 0, %v2349
          %v2351 = vrot.slane %v2189, %v2350
          %v2352 = vlaneseq
          %v2353 = vshrl.u32 %v2352, 7
          %v2354 = vsub.s32 1, %v2353
          %v2355 = vrot.slane %v2189, %v2354
          %v2356 = vlaneseq
          %v2357 = vshrl.u32 %v2356, 7
          %v2358 = vsub.s32 2, %v2357
          %v2359 = vrot.slane %v2189, %v2358
          %v2360 = vlaneseq
          %v2361 = vshrl.u32 %v2360, 7
          %v2362 = vsub.s32 3, %v2361
          %v2363 = vrot.slane %v2189, %v2362
          %v2364 = vlaneseq
          %v2365 = vshrl.u32 %v2364, 7
          %v2366 = vsub.s32 4, %v2365
          %v2367 = vrot.slane %v2189, %v2366
          %v2368 = vlaneseq
          %v2369 = vshrl.u32 %v2368, 7
          %v2370 = vsub.s32 5, %v2369
          %v2371 = vrot.slane %v2189, %v2370
          %v2372 = vlaneseq
          %v2373 = vshrl.u32 %v2372, 7
          %v2374 = vsub.s32 6, %v2373
          %v2375 = vrot.slane %v2189, %v2374
          %v2376 = vlaneseq
          %v2377 = vshrl.u32 %v2376, 7
          %v2378 = vsub.s32 7, %v2377
          %v2379 = vrot.slane %v2189, %v2378
          %v2380 = vlaneseq
          %v2381 = vshrl.u32 %v2380, 7
          %v2382 = vsub.s32 0, %v2381
          %v2383 = vrot.slane %v2190, %v2382
          %v2384 = vlaneseq
          %v2385 = vshrl.u32 %v2384, 7
          %v2386 = vsub.s32 1, %v2385
          %v2387 = vrot.slane %v2190, %v2386
          %v2388 = vlaneseq
          %v2389 = vshrl.u32 %v2388, 7
          %v2390 = vsub.s32 2, %v2389
          %v2391 = vrot.slane %v2190, %v2390
          %v2392 = vlaneseq
          %v2393 = vshrl.u32 %v2392, 7
          %v2394 = vsub.s32 3, %v2393
          %v2395 = vrot.slane %v2190, %v2394
          %v2396 = vlaneseq
          %v2397 = vshrl.u32 %v2396, 7
          %v2398 = vsub.s32 4, %v2397
          %v2399 = vrot.slane %v2190, %v2398
          %v2400 = vlaneseq
          %v2401 = vshrl.u32 %v2400, 7
          %v2402 = vsub.s32 5, %v2401
          %v2403 = vrot.slane %v2190, %v2402
          %v2404 = vlaneseq
          %v2405 = vshrl.u32 %v2404, 7
          %v2406 = vsub.s32 6, %v2405
          %v2407 = vrot.slane %v2190, %v2406
          %v2408 = vlaneseq
          %v2409 = vshrl.u32 %v2408, 7
          %v2410 = vsub.s32 7, %v2409
          %v2411 = vrot.slane %v2190, %v2410
          %v2412 = vlaneseq
          %v2413 = vshrl.u32 %v2412, 7
          %v2414 = vsub.s32 0, %v2413
          %v2415 = vrot.slane %v2191, %v2414
          %v2416 = vlaneseq
          %v2417 = vshrl.u32 %v2416, 7
          %v2418 = vsub.s32 1, %v2417
          %v2419 = vrot.slane %v2191, %v2418
          %v2420 = vlaneseq
          %v2421 = vshrl.u32 %v2420, 7
          %v2422 = vsub.s32 2, %v2421
          %v2423 = vrot.slane %v2191, %v2422
          %v2424 = vlaneseq
          %v2425 = vshrl.u32 %v2424, 7
          %v2426 = vsub.s32 3, %v2425
          %v2427 = vrot.slane %v2191, %v2426
          %v2428 = vlaneseq
          %v2429 = vshrl.u32 %v2428, 7
          %v2430 = vsub.s32 4, %v2429
          %v2431 = vrot.slane %v2191, %v2430
          %v2432 = vlaneseq
          %v2433 = vshrl.u32 %v2432, 7
          %v2434 = vsub.s32 5, %v2433
          %v2435 = vrot.slane %v2191, %v2434
          %v2436 = vlaneseq
          %v2437 = vshrl.u32 %v2436, 7
          %v2438 = vsub.s32 6, %v2437
          %v2439 = vrot.slane %v2191, %v2438
          %v2440 = vlaneseq
          %v2441 = vshrl.u32 %v2440, 7
          %v2442 = vsub.s32 7, %v2441
          %v2443 = vrot.slane %v2191, %v2442
          %v2444 = vlaneseq
          %v2445 = vshrl.u32 %v2444, 7
          %v2446 = vsub.s32 0, %v2445
          %v2447 = vrot.slane %v2192, %v2446
          %v2448 = vlaneseq
          %v2449 = vshrl.u32 %v2448, 7
          %v2450 = vsub.s32 1, %v2449
          %v2451 = vrot.slane %v2192, %v2450
          %v2452 = vlaneseq
          %v2453 = vshrl.u32 %v2452, 7
          %v2454 = vsub.s32 2, %v2453
          %v2455 = vrot.slane %v2192, %v2454
          %v2456 = vlaneseq
          %v2457 = vshrl.u32 %v2456, 7
          %v2458 = vsub.s32 3, %v2457
          %v2459 = vrot.slane %v2192, %v2458
          %v2460 = vlaneseq
          %v2461 = vshrl.u32 %v2460, 7
          %v2462 = vsub.s32 4, %v2461
          %v2463 = vrot.slane %v2192, %v2462
          %v2464 = vlaneseq
          %v2465 = vshrl.u32 %v2464, 7
          %v2466 = vsub.s32 5, %v2465
          %v2467 = vrot.slane %v2192, %v2466
          %v2468 = vlaneseq
          %v2469 = vshrl.u32 %v2468, 7
          %v2470 = vsub.s32 6, %v2469
          %v2471 = vrot.slane %v2192, %v2470
          %v2472 = vlaneseq
          %v2473 = vshrl.u32 %v2472, 7
          %v2474 = vsub.s32 7, %v2473
          %v2475 = vrot.slane %v2192, %v2474
          %v2476 = vlaneseq
          %v2477 = vshrl.u32 %v2476, 7
          %v2478 = vsub.s32 0, %v2477
          %v2479 = vrot.slane %v2193, %v2478
          %v2480 = vlaneseq
          %v2481 = vshrl.u32 %v2480, 7
          %v2482 = vsub.s32 1, %v2481
          %v2483 = vrot.slane %v2193, %v2482
          %v2484 = vlaneseq
          %v2485 = vshrl.u32 %v2484, 7
          %v2486 = vsub.s32 2, %v2485
          %v2487 = vrot.slane %v2193, %v2486
          %v2488 = vlaneseq
          %v2489 = vshrl.u32 %v2488, 7
          %v2490 = vsub.s32 3, %v2489
          %v2491 = vrot.slane %v2193, %v2490
          %v2492 = vlaneseq
          %v2493 = vshrl.u32 %v2492, 7
          %v2494 = vsub.s32 4, %v2493
          %v2495 = vrot.slane %v2193, %v2494
          %v2496 = vlaneseq
          %v2497 = vshrl.u32 %v2496, 7
          %v2498 = vsub.s32 5, %v2497
          %v2499 = vrot.slane %v2193, %v2498
          %v2500 = vlaneseq
          %v2501 = vshrl.u32 %v2500, 7
          %v2502 = vsub.s32 6, %v2501
          %v2503 = vrot.slane %v2193, %v2502
          %v2504 = vlaneseq
          %v2505 = vshrl.u32 %v2504, 7
          %v2506 = vsub.s32 7, %v2505
          %v2507 = vrot.slane %v2193, %v2506
          %v2508 = vlaneseq
          %v2509 = vshrl.u32 %v2508, 7
          %v2510 = vsub.s32 0, %v2509
          %v2511 = vrot.slane %v2194, %v2510
          %v2512 = vlaneseq
          %v2513 = vshrl.u32 %v2512, 7
          %v2514 = vsub.s32 1, %v2513
          %v2515 = vrot.slane %v2194, %v2514
          %v2516 = vlaneseq
          %v2517 = vshrl.u32 %v2516, 7
          %v2518 = vsub.s32 2, %v2517
          %v2519 = vrot.slane %v2194, %v2518
          %v2520 = vlaneseq
          %v2521 = vshrl.u32 %v2520, 7
          %v2522 = vsub.s32 3, %v2521
          %v2523 = vrot.slane %v2194, %v2522
          %v2524 = vlaneseq
          %v2525 = vshrl.u32 %v2524, 7
          %v2526 = vsub.s32 4, %v2525
          %v2527 = vrot.slane %v2194, %v2526
          %v2528 = vlaneseq
          %v2529 = vshrl.u32 %v2528, 7
          %v2530 = vsub.s32 5, %v2529
          %v2531 = vrot.slane %v2194, %v2530
          %v2532 = vlaneseq
          %v2533 = vshrl.u32 %v2532, 7
          %v2534 = vsub.s32 6, %v2533
          %v2535 = vrot.slane %v2194, %v2534
          %v2536 = vlaneseq
          %v2537 = vshrl.u32 %v2536, 7
          %v2538 = vsub.s32 7, %v2537
          %v2539 = vrot.slane %v2194, %v2538
          %v2540 = vlaneseq
          %v2541 = vshrl.u32 %v2540, 7
          %v2542 = vsub.s32 0, %v2541
          %v2543 = vrot.slane %v2195, %v2542
          %v2544 = vlaneseq
          %v2545 = vshrl.u32 %v2544, 7
          %v2546 = vsub.s32 1, %v2545
          %v2547 = vrot.slane %v2195, %v2546
          %v2548 = vlaneseq
          %v2549 = vshrl.u32 %v2548, 7
          %v2550 = vsub.s32 2, %v2549
          %v2551 = vrot.slane %v2195, %v2550
          %v2552 = vlaneseq
          %v2553 = vshrl.u32 %v2552, 7
          %v2554 = vsub.s32 3, %v2553
          %v2555 = vrot.slane %v2195, %v2554
          %v2556 = vlaneseq
          %v2557 = vshrl.u32 %v2556, 7
          %v2558 = vsub.s32 4, %v2557
          %v2559 = vrot.slane %v2195, %v2558
          %v2560 = vlaneseq
          %v2561 = vshrl.u32 %v2560, 7
          %v2562 = vsub.s32 5, %v2561
          %v2563 = vrot.slane %v2195, %v2562
          %v2564 = vlaneseq
          %v2565 = vshrl.u32 %v2564, 7
          %v2566 = vsub.s32 6, %v2565
          %v2567 = vrot.slane %v2195, %v2566
          %v2568 = vlaneseq
          %v2569 = vshrl.u32 %v2568, 7
          %v2570 = vsub.s32 7, %v2569
          %v2571 = vrot.slane %v2195, %v2570
          %v2572 = vlaneseq
          %v2573 = vshrl.u32 %v2572, 7
          %v2574 = vsub.s32 0, %v2573
          %v2575 = vrot.slane %v2196, %v2574
          %v2576 = vlaneseq
          %v2577 = vshrl.u32 %v2576, 7
          %v2578 = vsub.s32 1, %v2577
          %v2579 = vrot.slane %v2196, %v2578
          %v2580 = vlaneseq
          %v2581 = vshrl.u32 %v2580, 7
          %v2582 = vsub.s32 2, %v2581
          %v2583 = vrot.slane %v2196, %v2582
          %v2584 = vlaneseq
          %v2585 = vshrl.u32 %v2584, 7
          %v2586 = vsub.s32 3, %v2585
          %v2587 = vrot.slane %v2196, %v2586
          %v2588 = vlaneseq
          %v2589 = vshrl.u32 %v2588, 7
          %v2590 = vsub.s32 4, %v2589
          %v2591 = vrot.slane %v2196, %v2590
          %v2592 = vlaneseq
          %v2593 = vshrl.u32 %v2592, 7
          %v2594 = vsub.s32 5, %v2593
          %v2595 = vrot.slane %v2196, %v2594
          %v2596 = vlaneseq
          %v2597 = vshrl.u32 %v2596, 7
          %v2598 = vsub.s32 6, %v2597
          %v2599 = vrot.slane %v2196, %v2598
          %v2600 = vlaneseq
          %v2601 = vshrl.u32 %v2600, 7
          %v2602 = vsub.s32 7, %v2601
          %v2603 = vrot.slane %v2196, %v2602
          %v2604 = vlaneseq
          %v2605 = vshrl.u32 %v2604, 7
          %v2606 = vsub.s32 0, %v2605
          %v2607 = vrot.slane %v2197, %v2606
          %v2608 = vlaneseq
          %v2609 = vshrl.u32 %v2608, 7
          %v2610 = vsub.s32 1, %v2609
          %v2611 = vrot.slane %v2197, %v2610
          %v2612 = vlaneseq
          %v2613 = vshrl.u32 %v2612, 7
          %v2614 = vsub.s32 2, %v2613
          %v2615 = vrot.slane %v2197, %v2614
          %v2616 = vlaneseq
          %v2617 = vshrl.u32 %v2616, 7
          %v2618 = vsub.s32 3, %v2617
          %v2619 = vrot.slane %v2197, %v2618
          %v2620 = vlaneseq
          %v2621 = vshrl.u32 %v2620, 7
          %v2622 = vsub.s32 4, %v2621
          %v2623 = vrot.slane %v2197, %v2622
          %v2624 = vlaneseq
          %v2625 = vshrl.u32 %v2624, 7
          %v2626 = vsub.s32 5, %v2625
          %v2627 = vrot.slane %v2197, %v2626
          %v2628 = vlaneseq
          %v2629 = vshrl.u32 %v2628, 7
          %v2630 = vsub.s32 6, %v2629
          %v2631 = vrot.slane %v2197, %v2630
          %v2632 = vlaneseq
          %v2633 = vshrl.u32 %v2632, 7
          %v2634 = vsub.s32 7, %v2633
          %v2635 = vrot.slane %v2197, %v2634
          %v2636 = vlaneseq
          %v2637 = vshrl.u32 %v2636, 7
          %v2638 = vsub.s32 0, %v2637
          %v2639 = vrot.slane %v2198, %v2638
          %v2640 = vlaneseq
          %v2641 = vshrl.u32 %v2640, 7
          %v2642 = vsub.s32 1, %v2641
          %v2643 = vrot.slane %v2198, %v2642
          %v2644 = vlaneseq
          %v2645 = vshrl.u32 %v2644, 7
          %v2646 = vsub.s32 2, %v2645
          %v2647 = vrot.slane %v2198, %v2646
          %v2648 = vlaneseq
          %v2649 = vshrl.u32 %v2648, 7
          %v2650 = vsub.s32 3, %v2649
          %v2651 = vrot.slane %v2198, %v2650
          %v2652 = vlaneseq
          %v2653 = vshrl.u32 %v2652, 7
          %v2654 = vsub.s32 4, %v2653
          %v2655 = vrot.slane %v2198, %v2654
          %v2656 = vlaneseq
          %v2657 = vshrl.u32 %v2656, 7
          %v2658 = vsub.s32 5, %v2657
          %v2659 = vrot.slane %v2198, %v2658
          %v2660 = vlaneseq
          %v2661 = vshrl.u32 %v2660, 7
          %v2662 = vsub.s32 6, %v2661
          %v2663 = vrot.slane %v2198, %v2662
          %v2664 = vlaneseq
          %v2665 = vshrl.u32 %v2664, 7
          %v2666 = vsub.s32 7, %v2665
          %v2667 = vrot.slane %v2198, %v2666
          %v2668 = vlaneseq
          %v2669 = vshrl.u32 %v2668, 7
          %v2670 = vsub.s32 0, %v2669
          %v2671 = vrot.slane %v2199, %v2670
          %v2672 = vlaneseq
          %v2673 = vshrl.u32 %v2672, 7
          %v2674 = vsub.s32 1, %v2673
          %v2675 = vrot.slane %v2199, %v2674
          %v2676 = vlaneseq
          %v2677 = vshrl.u32 %v2676, 7
          %v2678 = vsub.s32 2, %v2677
          %v2679 = vrot.slane %v2199, %v2678
          %v2680 = vlaneseq
          %v2681 = vshrl.u32 %v2680, 7
          %v2682 = vsub.s32 3, %v2681
          %v2683 = vrot.slane %v2199, %v2682
          %v2684 = vlaneseq
          %v2685 = vshrl.u32 %v2684, 7
          %v2686 = vsub.s32 4, %v2685
          %v2687 = vrot.slane %v2199, %v2686
          %v2688 = vlaneseq
          %v2689 = vshrl.u32 %v2688, 7
          %v2690 = vsub.s32 5, %v2689
          %v2691 = vrot.slane %v2199, %v2690
          %v2692 = vlaneseq
          %v2693 = vshrl.u32 %v2692, 7
          %v2694 = vsub.s32 6, %v2693
          %v2695 = vrot.slane %v2199, %v2694
          %v2696 = vlaneseq
          %v2697 = vshrl.u32 %v2696, 7
          %v2698 = vsub.s32 7, %v2697
          %v2699 = vrot.slane %v2199, %v2698
          %v2700 = vlaneseq
          %v2701 = vshrl.u32 %v2700, 7
          %v2702 = vsub.s32 0, %v2701
          %v2703 = vrot.slane %v2200, %v2702
          %v2704 = vlaneseq
          %v2705 = vshrl.u32 %v2704, 7
          %v2706 = vsub.s32 1, %v2705
          %v2707 = vrot.slane %v2200, %v2706
          %v2708 = vlaneseq
          %v2709 = vshrl.u32 %v2708, 7
          %v2710 = vsub.s32 2, %v2709
          %v2711 = vrot.slane %v2200, %v2710
          %v2712 = vlaneseq
          %v2713 = vshrl.u32 %v2712, 7
          %v2714 = vsub.s32 3, %v2713
          %v2715 = vrot.slane %v2200, %v2714
          %v2716 = vlaneseq
          %v2717 = vshrl.u32 %v2716, 7
          %v2718 = vsub.s32 4, %v2717
          %v2719 = vrot.slane %v2200, %v2718
          %v2720 = vlaneseq
          %v2721 = vshrl.u32 %v2720, 7
          %v2722 = vsub.s32 5, %v2721
          %v2723 = vrot.slane %v2200, %v2722
          %v2724 = vlaneseq
          %v2725 = vshrl.u32 %v2724, 7
          %v2726 = vsub.s32 6, %v2725
          %v2727 = vrot.slane %v2200, %v2726
          %v2728 = vlaneseq
          %v2729 = vshrl.u32 %v2728, 7
          %v2730 = vsub.s32 7, %v2729
          %v2731 = vrot.slane %v2200, %v2730
          %v2732 = vlaneseq
          %v2733 = vshrl.u32 %v2732, 7
          %v2734 = vsub.s32 0, %v2733
          %v2735 = vrot.slane %v2201, %v2734
          %v2736 = vlaneseq
          %v2737 = vshrl.u32 %v2736, 7
          %v2738 = vsub.s32 1, %v2737
          %v2739 = vrot.slane %v2201, %v2738
          %v2740 = vlaneseq
          %v2741 = vshrl.u32 %v2740, 7
          %v2742 = vsub.s32 2, %v2741
          %v2743 = vrot.slane %v2201, %v2742
          %v2744 = vlaneseq
          %v2745 = vshrl.u32 %v2744, 7
          %v2746 = vsub.s32 3, %v2745
          %v2747 = vrot.slane %v2201, %v2746
          %v2748 = vlaneseq
          %v2749 = vshrl.u32 %v2748, 7
          %v2750 = vsub.s32 4, %v2749
          %v2751 = vrot.slane %v2201, %v2750
          %v2752 = vlaneseq
          %v2753 = vshrl.u32 %v2752, 7
          %v2754 = vsub.s32 5, %v2753
          %v2755 = vrot.slane %v2201, %v2754
          %v2756 = vlaneseq
          %v2757 = vshrl.u32 %v2756, 7
          %v2758 = vsub.s32 6, %v2757
          %v2759 = vrot.slane %v2201, %v2758
          %v2760 = vlaneseq
          %v2761 = vshrl.u32 %v2760, 7
          %v2762 = vsub.s32 7, %v2761
          %v2763 = vrot.slane %v2201, %v2762
          %v2764 = vlaneseq
          %v2765 = vshrl.u32 %v2764, 7
          %v2766 = vsub.s32 0, %v2765
          %v2767 = vrot.slane %v2202, %v2766
          %v2768 = vlaneseq
          %v2769 = vshrl.u32 %v2768, 7
          %v2770 = vsub.s32 1, %v2769
          %v2771 = vrot.slane %v2202, %v2770
          %v2772 = vlaneseq
          %v2773 = vshrl.u32 %v2772, 7
          %v2774 = vsub.s32 2, %v2773
          %v2775 = vrot.slane %v2202, %v2774
          %v2776 = vlaneseq
          %v2777 = vshrl.u32 %v2776, 7
          %v2778 = vsub.s32 3, %v2777
          %v2779 = vrot.slane %v2202, %v2778
          %v2780 = vlaneseq
          %v2781 = vshrl.u32 %v2780, 7
          %v2782 = vsub.s32 4, %v2781
          %v2783 = vrot.slane %v2202, %v2782
          %v2784 = vlaneseq
          %v2785 = vshrl.u32 %v2784, 7
          %v2786 = vsub.s32 5, %v2785
          %v2787 = vrot.slane %v2202, %v2786
          %v2788 = vlaneseq
          %v2789 = vshrl.u32 %v2788, 7
          %v2790 = vsub.s32 6, %v2789
          %v2791 = vrot.slane %v2202, %v2790
          %v2792 = vlaneseq
          %v2793 = vshrl.u32 %v2792, 7
          %v2794 = vsub.s32 7, %v2793
          %v2795 = vrot.slane %v2202, %v2794
          %v2796 = vlaneseq
          %v2797 = vshrl.u32 %v2796, 7
          %v2798 = vsub.s32 0, %v2797
          %v2799 = vrot.slane %v2203, %v2798
          %v2800 = vlaneseq
          %v2801 = vshrl.u32 %v2800, 7
          %v2802 = vsub.s32 1, %v2801
          %v2803 = vrot.slane %v2203, %v2802
          %v2804 = vlaneseq
          %v2805 = vshrl.u32 %v2804, 7
          %v2806 = vsub.s32 2, %v2805
          %v2807 = vrot.slane %v2203, %v2806
          %v2808 = vlaneseq
          %v2809 = vshrl.u32 %v2808, 7
          %v2810 = vsub.s32 3, %v2809
          %v2811 = vrot.slane %v2203, %v2810
          %v2812 = vlaneseq
          %v2813 = vshrl.u32 %v2812, 7
          %v2814 = vsub.s32 4, %v2813
          %v2815 = vrot.slane %v2203, %v2814
          %v2816 = vlaneseq
          %v2817 = vshrl.u32 %v2816, 7
          %v2818 = vsub.s32 5, %v2817
          %v2819 = vrot.slane %v2203, %v2818
          %v2820 = vlaneseq
          %v2821 = vshrl.u32 %v2820, 7
          %v2822 = vsub.s32 6, %v2821
          %v2823 = vrot.slane %v2203, %v2822
          %v2824 = vlaneseq
          %v2825 = vshrl.u32 %v2824, 7
          %v2826 = vsub.s32 7, %v2825
          %v2827 = vrot.slane %v2203, %v2826
          %v2828 = vlaneseq
          %v2829 = vshrl.u32 %v2828, 7
          %v2830 = vsub.s32 0, %v2829
          %v2831 = vrot.slane %v2204, %v2830
          %v2832 = vlaneseq
          %v2833 = vshrl.u32 %v2832, 7
          %v2834 = vsub.s32 1, %v2833
          %v2835 = vrot.slane %v2204, %v2834
          %v2836 = vlaneseq
          %v2837 = vshrl.u32 %v2836, 7
          %v2838 = vsub.s32 2, %v2837
          %v2839 = vrot.slane %v2204, %v2838
          %v2840 = vlaneseq
          %v2841 = vshrl.u32 %v2840, 7
          %v2842 = vsub.s32 3, %v2841
          %v2843 = vrot.slane %v2204, %v2842
          %v2844 = vlaneseq
          %v2845 = vshrl.u32 %v2844, 7
          %v2846 = vsub.s32 4, %v2845
          %v2847 = vrot.slane %v2204, %v2846
          %v2848 = vlaneseq
          %v2849 = vshrl.u32 %v2848, 7
          %v2850 = vsub.s32 5, %v2849
          %v2851 = vrot.slane %v2204, %v2850
          %v2852 = vlaneseq
          %v2853 = vshrl.u32 %v2852, 7
          %v2854 = vsub.s32 6, %v2853
          %v2855 = vrot.slane %v2204, %v2854
          %v2856 = vlaneseq
          %v2857 = vshrl.u32 %v2856, 7
          %v2858 = vsub.s32 7, %v2857
          %v2859 = vrot.slane %v2204, %v2858
          %v2860 = vlaneseq
          %v2861 = vshrl.u32 %v2860, 7
          %v2862 = vsub.s32 0, %v2861
          %v2863 = vrot.slane %v2205, %v2862
          %v2864 = vlaneseq
          %v2865 = vshrl.u32 %v2864, 7
          %v2866 = vsub.s32 1, %v2865
          %v2867 = vrot.slane %v2205, %v2866
          %v2868 = vlaneseq
          %v2869 = vshrl.u32 %v2868, 7
          %v2870 = vsub.s32 2, %v2869
          %v2871 = vrot.slane %v2205, %v2870
          %v2872 = vlaneseq
          %v2873 = vshrl.u32 %v2872, 7
          %v2874 = vsub.s32 3, %v2873
          %v2875 = vrot.slane %v2205, %v2874
          %v2876 = vlaneseq
          %v2877 = vshrl.u32 %v2876, 7
          %v2878 = vsub.s32 4, %v2877
          %v2879 = vrot.slane %v2205, %v2878
          %v2880 = vlaneseq
          %v2881 = vshrl.u32 %v2880, 7
          %v2882 = vsub.s32 5, %v2881
          %v2883 = vrot.slane %v2205, %v2882
          %v2884 = vlaneseq
          %v2885 = vshrl.u32 %v2884, 7
          %v2886 = vsub.s32 6, %v2885
          %v2887 = vrot.slane %v2205, %v2886
          %v2888 = vlaneseq
          %v2889 = vshrl.u32 %v2888, 7
          %v2890 = vsub.s32 7, %v2889
          %v2891 = vrot.slane %v2205, %v2890
          %v2892 = vlaneseq
          %v2893 = vshrl.u32 %v2892, 7
          %v2894 = vsub.s32 0, %v2893
          %v2895 = vrot.slane %v2206, %v2894
          %v2896 = vlaneseq
          %v2897 = vshrl.u32 %v2896, 7
          %v2898 = vsub.s32 1, %v2897
          %v2899 = vrot.slane %v2206, %v2898
          %v2900 = vlaneseq
          %v2901 = vshrl.u32 %v2900, 7
          %v2902 = vsub.s32 2, %v2901
          %v2903 = vrot.slane %v2206, %v2902
          %v2904 = vlaneseq
          %v2905 = vshrl.u32 %v2904, 7
          %v2906 = vsub.s32 3, %v2905
          %v2907 = vrot.slane %v2206, %v2906
          %v2908 = vlaneseq
          %v2909 = vshrl.u32 %v2908, 7
          %v2910 = vsub.s32 4, %v2909
          %v2911 = vrot.slane %v2206, %v2910
          %v2912 = vlaneseq
          %v2913 = vshrl.u32 %v2912, 7
          %v2914 = vsub.s32 5, %v2913
          %v2915 = vrot.slane %v2206, %v2914
          %v2916 = vlaneseq
          %v2917 = vshrl.u32 %v2916, 7
          %v2918 = vsub.s32 6, %v2917
          %v2919 = vrot.slane %v2206, %v2918
          %v2920 = vlaneseq
          %v2921 = vshrl.u32 %v2920, 7
          %v2922 = vsub.s32 7, %v2921
          %v2923 = vrot.slane %v2206, %v2922
          %v2924 = vlaneseq
          %v2925 = vshrl.u32 %v2924, 7
          %v2926 = vsub.s32 0, %v2925
          %v2927 = vrot.slane %v2207, %v2926
          %v2928 = vlaneseq
          %v2929 = vshrl.u32 %v2928, 7
          %v2930 = vsub.s32 1, %v2929
          %v2931 = vrot.slane %v2207, %v2930
          %v2932 = vlaneseq
          %v2933 = vshrl.u32 %v2932, 7
          %v2934 = vsub.s32 2, %v2933
          %v2935 = vrot.slane %v2207, %v2934
          %v2936 = vlaneseq
          %v2937 = vshrl.u32 %v2936, 7
          %v2938 = vsub.s32 3, %v2937
          %v2939 = vrot.slane %v2207, %v2938
          %v2940 = vlaneseq
          %v2941 = vshrl.u32 %v2940, 7
          %v2942 = vsub.s32 4, %v2941
          %v2943 = vrot.slane %v2207, %v2942
          %v2944 = vlaneseq
          %v2945 = vshrl.u32 %v2944, 7
          %v2946 = vsub.s32 5, %v2945
          %v2947 = vrot.slane %v2207, %v2946
          %v2948 = vlaneseq
          %v2949 = vshrl.u32 %v2948, 7
          %v2950 = vsub.s32 6, %v2949
          %v2951 = vrot.slane %v2207, %v2950
          %v2952 = vlaneseq
          %v2953 = vshrl.u32 %v2952, 7
          %v2954 = vsub.s32 7, %v2953
          %v2955 = vrot.slane %v2207, %v2954
          %v2956 = vlaneseq
          %v2957 = vshrl.u32 %v2956, 7
          %v2958 = vsub.s32 0, %v2957
          %v2959 = vrot.slane %v2208, %v2958
          %v2960 = vlaneseq
          %v2961 = vshrl.u32 %v2960, 7
          %v2962 = vsub.s32 1, %v2961
          %v2963 = vrot.slane %v2208, %v2962
          %v2964 = vlaneseq
          %v2965 = vshrl.u32 %v2964, 7
          %v2966 = vsub.s32 2, %v2965
          %v2967 = vrot.slane %v2208, %v2966
          %v2968 = vlaneseq
          %v2969 = vshrl.u32 %v2968, 7
          %v2970 = vsub.s32 3, %v2969
          %v2971 = vrot.slane %v2208, %v2970
          %v2972 = vlaneseq
          %v2973 = vshrl.u32 %v2972, 7
          %v2974 = vsub.s32 4, %v2973
          %v2975 = vrot.slane %v2208, %v2974
          %v2976 = vlaneseq
          %v2977 = vshrl.u32 %v2976, 7
          %v2978 = vsub.s32 5, %v2977
          %v2979 = vrot.slane %v2208, %v2978
          %v2980 = vlaneseq
          %v2981 = vshrl.u32 %v2980, 7
          %v2982 = vsub.s32 6, %v2981
          %v2983 = vrot.slane %v2208, %v2982
          %v2984 = vlaneseq
          %v2985 = vshrl.u32 %v2984, 7
          %v2986 = vsub.s32 7, %v2985
          %v2987 = vrot.slane %v2208, %v2986
          %v2988 = vlaneseq
          %v2989 = vshrl.u32 %v2988, 7
          %v2990 = vsub.s32 0, %v2989
          %v2991 = vrot.slane %v2209, %v2990
          %v2992 = vlaneseq
          %v2993 = vshrl.u32 %v2992, 7
          %v2994 = vsub.s32 1, %v2993
          %v2995 = vrot.slane %v2209, %v2994
          %v2996 = vlaneseq
          %v2997 = vshrl.u32 %v2996, 7
          %v2998 = vsub.s32 2, %v2997
          %v2999 = vrot.slane %v2209, %v2998
          %v3000 = vlaneseq
          %v3001 = vshrl.u32 %v3000, 7
          %v3002 = vsub.s32 3, %v3001
          %v3003 = vrot.slane %v2209, %v3002
          %v3004 = vlaneseq
          %v3005 = vshrl.u32 %v3004, 7
          %v3006 = vsub.s32 4, %v3005
          %v3007 = vrot.slane %v2209, %v3006
          %v3008 = vlaneseq
          %v3009 = vshrl.u32 %v3008, 7
          %v3010 = vsub.s32 5, %v3009
          %v3011 = vrot.slane %v2209, %v3010
          %v3012 = vlaneseq
          %v3013 = vshrl.u32 %v3012, 7
          %v3014 = vsub.s32 6, %v3013
          %v3015 = vrot.slane %v2209, %v3014
          %v3016 = vlaneseq
          %v3017 = vshrl.u32 %v3016, 7
          %v3018 = vsub.s32 7, %v3017
          %v3019 = vrot.slane %v2209, %v3018
          %v3020 = vlaneseq
          %v3021 = vshrl.u32 %v3020, 7
          %v3022 = vsub.s32 0, %v3021
          %v3023 = vrot.slane %v2210, %v3022
          %v3024 = vlaneseq
          %v3025 = vshrl.u32 %v3024, 7
          %v3026 = vsub.s32 1, %v3025
          %v3027 = vrot.slane %v2210, %v3026
          %v3028 = vlaneseq
          %v3029 = vshrl.u32 %v3028, 7
          %v3030 = vsub.s32 2, %v3029
          %v3031 = vrot.slane %v2210, %v3030
          %v3032 = vlaneseq
          %v3033 = vshrl.u32 %v3032, 7
          %v3034 = vsub.s32 3, %v3033
          %v3035 = vrot.slane %v2210, %v3034
          %v3036 = vlaneseq
          %v3037 = vshrl.u32 %v3036, 7
          %v3038 = vsub.s32 4, %v3037
          %v3039 = vrot.slane %v2210, %v3038
          %v3040 = vlaneseq
          %v3041 = vshrl.u32 %v3040, 7
          %v3042 = vsub.s32 5, %v3041
          %v3043 = vrot.slane %v2210, %v3042
          %v3044 = vlaneseq
          %v3045 = vshrl.u32 %v3044, 7
          %v3046 = vsub.s32 6, %v3045
          %v3047 = vrot.slane %v2210, %v3046
          %v3048 = vlaneseq
          %v3049 = vshrl.u32 %v3048, 7
          %v3050 = vsub.s32 7, %v3049
          %v3051 = vrot.slane %v2210, %v3050
          %v3052 = vlaneseq
          %v3053 = vshrl.u32 %v3052, 7
          %v3054 = vsub.s32 0, %v3053
          %v3055 = vrot.slane %v2211, %v3054
          %v3056 = vlaneseq
          %v3057 = vshrl.u32 %v3056, 7
          %v3058 = vsub.s32 1, %v3057
          %v3059 = vrot.slane %v2211, %v3058
          %v3060 = vlaneseq
          %v3061 = vshrl.u32 %v3060, 7
          %v3062 = vsub.s32 2, %v3061
          %v3063 = vrot.slane %v2211, %v3062
          %v3064 = vlaneseq
          %v3065 = vshrl.u32 %v3064, 7
          %v3066 = vsub.s32 3, %v3065
          %v3067 = vrot.slane %v2211, %v3066
          %v3068 = vlaneseq
          %v3069 = vshrl.u32 %v3068, 7
          %v3070 = vsub.s32 4, %v3069
          %v3071 = vrot.slane %v2211, %v3070
          %v3072 = vlaneseq
          %v3073 = vshrl.u32 %v3072, 7
          %v3074 = vsub.s32 5, %v3073
          %v3075 = vrot.slane %v2211, %v3074
          %v3076 = vlaneseq
          %v3077 = vshrl.u32 %v3076, 7
          %v3078 = vsub.s32 6, %v3077
          %v3079 = vrot.slane %v2211, %v3078
          %v3080 = vlaneseq
          %v3081 = vshrl.u32 %v3080, 7
          %v3082 = vsub.s32 7, %v3081
          %v3083 = vrot.slane %v2211, %v3082
          %v3084 = vlaneseq
          %v3085 = vshrl.u32 %v3084, 7
          %v3086 = vsub.s32 0, %v3085
          %v3087 = vrot.slane %v2212, %v3086
          %v3088 = vlaneseq
          %v3089 = vshrl.u32 %v3088, 7
          %v3090 = vsub.s32 1, %v3089
          %v3091 = vrot.slane %v2212, %v3090
          %v3092 = vlaneseq
          %v3093 = vshrl.u32 %v3092, 7
          %v3094 = vsub.s32 2, %v3093
          %v3095 = vrot.slane %v2212, %v3094
          %v3096 = vlaneseq
          %v3097 = vshrl.u32 %v3096, 7
          %v3098 = vsub.s32 3, %v3097
          %v3099 = vrot.slane %v2212, %v3098
          %v3100 = vlaneseq
          %v3101 = vshrl.u32 %v3100, 7
          %v3102 = vsub.s32 4, %v3101
          %v3103 = vrot.slane %v2212, %v3102
          %v3104 = vlaneseq
          %v3105 = vshrl.u32 %v3104, 7
          %v3106 = vsub.s32 5, %v3105
          %v3107 = vrot.slane %v2212, %v3106
          %v3108 = vlaneseq
          %v3109 = vshrl.u32 %v3108, 7
          %v3110 = vsub.s32 6, %v3109
          %v3111 = vrot.slane %v2212, %v3110
          %v3112 = vlaneseq
          %v3113 = vshrl.u32 %v3112, 7
          %v3114 = vsub.s32 7, %v3113
          %v3115 = vrot.slane %v2212, %v3114
          %v3116 = vlaneseq
          %v3117 = vshrl.u32 %v3116, 7
          %v3118 = vsub.s32 0, %v3117
          %v3119 = vrot.slane %v2213, %v3118
          %v3120 = vlaneseq
          %v3121 = vshrl.u32 %v3120, 7
          %v3122 = vsub.s32 1, %v3121
          %v3123 = vrot.slane %v2213, %v3122
          %v3124 = vlaneseq
          %v3125 = vshrl.u32 %v3124, 7
          %v3126 = vsub.s32 2, %v3125
          %v3127 = vrot.slane %v2213, %v3126
          %v3128 = vlaneseq
          %v3129 = vshrl.u32 %v3128, 7
          %v3130 = vsub.s32 3, %v3129
          %v3131 = vrot.slane %v2213, %v3130
          %v3132 = vlaneseq
          %v3133 = vshrl.u32 %v3132, 7
          %v3134 = vsub.s32 4, %v3133
          %v3135 = vrot.slane %v2213, %v3134
          %v3136 = vlaneseq
          %v3137 = vshrl.u32 %v3136, 7
          %v3138 = vsub.s32 5, %v3137
          %v3139 = vrot.slane %v2213, %v3138
          %v3140 = vlaneseq
          %v3141 = vshrl.u32 %v3140, 7
          %v3142 = vsub.s32 6, %v3141
          %v3143 = vrot.slane %v2213, %v3142
          %v3144 = vlaneseq
          %v3145 = vshrl.u32 %v3144, 7
          %v3146 = vsub.s32 7, %v3145
          %v3147 = vrot.slane %v2213, %v3146
          %v3148 = vlaneseq
          %v3149 = vshrl.u32 %v3148, 7
          %v3150 = vsub.s32 0, %v3149
          %v3151 = vrot.slane %v2214, %v3150
          %v3152 = vlaneseq
          %v3153 = vshrl.u32 %v3152, 7
          %v3154 = vsub.s32 1, %v3153
          %v3155 = vrot.slane %v2214, %v3154
          %v3156 = vlaneseq
          %v3157 = vshrl.u32 %v3156, 7
          %v3158 = vsub.s32 2, %v3157
          %v3159 = vrot.slane %v2214, %v3158
          %v3160 = vlaneseq
          %v3161 = vshrl.u32 %v3160, 7
          %v3162 = vsub.s32 3, %v3161
          %v3163 = vrot.slane %v2214, %v3162
          %v3164 = vlaneseq
          %v3165 = vshrl.u32 %v3164, 7
          %v3166 = vsub.s32 4, %v3165
          %v3167 = vrot.slane %v2214, %v3166
          %v3168 = vlaneseq
          %v3169 = vshrl.u32 %v3168, 7
          %v3170 = vsub.s32 5, %v3169
          %v3171 = vrot.slane %v2214, %v3170
          %v3172 = vlaneseq
          %v3173 = vshrl.u32 %v3172, 7
          %v3174 = vsub.s32 6, %v3173
          %v3175 = vrot.slane %v2214, %v3174
          %v3176 = vlaneseq
          %v3177 = vshrl.u32 %v3176, 7
          %v3178 = vsub.s32 7, %v3177
          %v3179 = vrot.slane %v2214, %v3178
          %v3180 = vlaneseq
          %v3181 = vshrl.u32 %v3180, 7
          %v3182 = vsub.s32 0, %v3181
          %v3183 = vrot.slane %v2215, %v3182
          %v3184 = vlaneseq
          %v3185 = vshrl.u32 %v3184, 7
          %v3186 = vsub.s32 1, %v3185
          %v3187 = vrot.slane %v2215, %v3186
          %v3188 = vlaneseq
          %v3189 = vshrl.u32 %v3188, 7
          %v3190 = vsub.s32 2, %v3189
          %v3191 = vrot.slane %v2215, %v3190
          %v3192 = vlaneseq
          %v3193 = vshrl.u32 %v3192, 7
          %v3194 = vsub.s32 3, %v3193
          %v3195 = vrot.slane %v2215, %v3194
          %v3196 = vlaneseq
          %v3197 = vshrl.u32 %v3196, 7
          %v3198 = vsub.s32 4, %v3197
          %v3199 = vrot.slane %v2215, %v3198
          %v3200 = vlaneseq
          %v3201 = vshrl.u32 %v3200, 7
          %v3202 = vsub.s32 5, %v3201
          %v3203 = vrot.slane %v2215, %v3202
          %v3204 = vlaneseq
          %v3205 = vshrl.u32 %v3204, 7
          %v3206 = vsub.s32 6, %v3205
          %v3207 = vrot.slane %v2215, %v3206
          %v3208 = vlaneseq
          %v3209 = vshrl.u32 %v3208, 7
          %v3210 = vsub.s32 7, %v3209
          %v3211 = vrot.slane %v2215, %v3210
          %v3212 = vlaneseq
          %v3213 = vshrl.u32 %v3212, 7
          %v3214 = vsub.s32 0, %v3213
          %v3215 = vrot.slane %v2216, %v3214
          %v3216 = vlaneseq
          %v3217 = vshrl.u32 %v3216, 7
          %v3218 = vsub.s32 1, %v3217
          %v3219 = vrot.slane %v2216, %v3218
          %v3220 = vlaneseq
          %v3221 = vshrl.u32 %v3220, 7
          %v3222 = vsub.s32 2, %v3221
          %v3223 = vrot.slane %v2216, %v3222
          %v3224 = vlaneseq
          %v3225 = vshrl.u32 %v3224, 7
          %v3226 = vsub.s32 3, %v3225
          %v3227 = vrot.slane %v2216, %v3226
          %v3228 = vlaneseq
          %v3229 = vshrl.u32 %v3228, 7
          %v3230 = vsub.s32 4, %v3229
          %v3231 = vrot.slane %v2216, %v3230
          %v3232 = vlaneseq
          %v3233 = vshrl.u32 %v3232, 7
          %v3234 = vsub.s32 5, %v3233
          %v3235 = vrot.slane %v2216, %v3234
          %v3236 = vlaneseq
          %v3237 = vshrl.u32 %v3236, 7
          %v3238 = vsub.s32 6, %v3237
          %v3239 = vrot.slane %v2216, %v3238
          %v3240 = vlaneseq
          %v3241 = vshrl.u32 %v3240, 7
          %v3242 = vsub.s32 7, %v3241
          %v3243 = vrot.slane %v2216, %v3242
          %v3244 = vlaneseq
          %v3245 = vshrl.u32 %v3244, 7
          %v3246 = vsub.s32 0, %v3245
          %v3247 = vrot.slane %v2217, %v3246
          %v3248 = vlaneseq
          %v3249 = vshrl.u32 %v3248, 7
          %v3250 = vsub.s32 1, %v3249
          %v3251 = vrot.slane %v2217, %v3250
          %v3252 = vlaneseq
          %v3253 = vshrl.u32 %v3252, 7
          %v3254 = vsub.s32 2, %v3253
          %v3255 = vrot.slane %v2217, %v3254
          %v3256 = vlaneseq
          %v3257 = vshrl.u32 %v3256, 7
          %v3258 = vsub.s32 3, %v3257
          %v3259 = vrot.slane %v2217, %v3258
          %v3260 = vlaneseq
          %v3261 = vshrl.u32 %v3260, 7
          %v3262 = vsub.s32 4, %v3261
          %v3263 = vrot.slane %v2217, %v3262
          %v3264 = vlaneseq
          %v3265 = vshrl.u32 %v3264, 7
          %v3266 = vsub.s32 5, %v3265
          %v3267 = vrot.slane %v2217, %v3266
          %v3268 = vlaneseq
          %v3269 = vshrl.u32 %v3268, 7
          %v3270 = vsub.s32 6, %v3269
          %v3271 = vrot.slane %v2217, %v3270
          %v3272 = vlaneseq
          %v3273 = vshrl.u32 %v3272, 7
          %v3274 = vsub.s32 7, %v3273
          %v3275 = vrot.slane %v2217, %v3274
          %v3276 = vlaneseq
          %v3277 = vshrl.u32 %v3276, 7
          %v3278 = vsub.s32 0, %v3277
          %v3279 = vrot.slane %v2218, %v3278
          %v3280 = vlaneseq
          %v3281 = vshrl.u32 %v3280, 7
          %v3282 = vsub.s32 1, %v3281
          %v3283 = vrot.slane %v2218, %v3282
          %v3284 = vlaneseq
          %v3285 = vshrl.u32 %v3284, 7
          %v3286 = vsub.s32 2, %v3285
          %v3287 = vrot.slane %v2218, %v3286
          %v3288 = vlaneseq
          %v3289 = vshrl.u32 %v3288, 7
          %v3290 = vsub.s32 3, %v3289
          %v3291 = vrot.slane %v2218, %v3290
          %v3292 = vlaneseq
          %v3293 = vshrl.u32 %v3292, 7
          %v3294 = vsub.s32 4, %v3293
          %v3295 = vrot.slane %v2218, %v3294
          %v3296 = vlaneseq
          %v3297 = vshrl.u32 %v3296, 7
          %v3298 = vsub.s32 5, %v3297
          %v3299 = vrot.slane %v2218, %v3298
          %v3300 = vlaneseq
          %v3301 = vshrl.u32 %v3300, 7
          %v3302 = vsub.s32 6, %v3301
          %v3303 = vrot.slane %v2218, %v3302
          %v3304 = vlaneseq
          %v3305 = vshrl.u32 %v3304, 7
          %v3306 = vsub.s32 7, %v3305
          %v3307 = vrot.slane %v2218, %v3306
          %v3308 = vlaneseq
          %v3309 = vshrl.u32 %v3308, 7
          %v3310 = vsub.s32 0, %v3309
          %v3311 = vrot.slane %v2219, %v3310
          %v3312 = vlaneseq
          %v3313 = vshrl.u32 %v3312, 7
          %v3314 = vsub.s32 1, %v3313
          %v3315 = vrot.slane %v2219, %v3314
          %v3316 = vlaneseq
          %v3317 = vshrl.u32 %v3316, 7
          %v3318 = vsub.s32 2, %v3317
          %v3319 = vrot.slane %v2219, %v3318
          %v3320 = vlaneseq
          %v3321 = vshrl.u32 %v3320, 7
          %v3322 = vsub.s32 3, %v3321
          %v3323 = vrot.slane %v2219, %v3322
          %v3324 = vlaneseq
          %v3325 = vshrl.u32 %v3324, 7
          %v3326 = vsub.s32 4, %v3325
          %v3327 = vrot.slane %v2219, %v3326
          %v3328 = vlaneseq
          %v3329 = vshrl.u32 %v3328, 7
          %v3330 = vsub.s32 5, %v3329
          %v3331 = vrot.slane %v2219, %v3330
          %v3332 = vlaneseq
          %v3333 = vshrl.u32 %v3332, 7
          %v3334 = vsub.s32 6, %v3333
          %v3335 = vrot.slane %v2219, %v3334
          %v3336 = vlaneseq
          %v3337 = vshrl.u32 %v3336, 7
          %v3338 = vsub.s32 7, %v3337
          %v3339 = vrot.slane %v2219, %v3338
          %v3340 = vlaneseq
          %v3341 = vshrl.u32 %v3340, 7
          %v3342 = vsub.s32 0, %v3341
          %v3343 = vrot.slane %v2220, %v3342
          %v3344 = vlaneseq
          %v3345 = vshrl.u32 %v3344, 7
          %v3346 = vsub.s32 1, %v3345
          %v3347 = vrot.slane %v2220, %v3346
          %v3348 = vlaneseq
          %v3349 = vshrl.u32 %v3348, 7
          %v3350 = vsub.s32 2, %v3349
          %v3351 = vrot.slane %v2220, %v3350
          %v3352 = vlaneseq
          %v3353 = vshrl.u32 %v3352, 7
          %v3354 = vsub.s32 3, %v3353
          %v3355 = vrot.slane %v2220, %v3354
          %v3356 = vlaneseq
          %v3357 = vshrl.u32 %v3356, 7
          %v3358 = vsub.s32 4, %v3357
          %v3359 = vrot.slane %v2220, %v3358
          %v3360 = vlaneseq
          %v3361 = vshrl.u32 %v3360, 7
          %v3362 = vsub.s32 5, %v3361
          %v3363 = vrot.slane %v2220, %v3362
          %v3364 = vlaneseq
          %v3365 = vshrl.u32 %v3364, 7
          %v3366 = vsub.s32 6, %v3365
          %v3367 = vrot.slane %v2220, %v3366
          %v3368 = vlaneseq
          %v3369 = vshrl.u32 %v3368, 7
          %v3370 = vsub.s32 7, %v3369
          %v3371 = vrot.slane %v2220, %v3370
          %v3372 = vlaneseq
          %v3373 = vshrl.u32 %v3372, 7
          %v3374 = vsub.s32 0, %v3373
          %v3375 = vrot.slane %v2221, %v3374
          %v3376 = vlaneseq
          %v3377 = vshrl.u32 %v3376, 7
          %v3378 = vsub.s32 1, %v3377
          %v3379 = vrot.slane %v2221, %v3378
          %v3380 = vlaneseq
          %v3381 = vshrl.u32 %v3380, 7
          %v3382 = vsub.s32 2, %v3381
          %v3383 = vrot.slane %v2221, %v3382
          %v3384 = vlaneseq
          %v3385 = vshrl.u32 %v3384, 7
          %v3386 = vsub.s32 3, %v3385
          %v3387 = vrot.slane %v2221, %v3386
          %v3388 = vlaneseq
          %v3389 = vshrl.u32 %v3388, 7
          %v3390 = vsub.s32 4, %v3389
          %v3391 = vrot.slane %v2221, %v3390
          %v3392 = vlaneseq
          %v3393 = vshrl.u32 %v3392, 7
          %v3394 = vsub.s32 5, %v3393
          %v3395 = vrot.slane %v2221, %v3394
          %v3396 = vlaneseq
          %v3397 = vshrl.u32 %v3396, 7
          %v3398 = vsub.s32 6, %v3397
          %v3399 = vrot.slane %v2221, %v3398
          %v3400 = vlaneseq
          %v3401 = vshrl.u32 %v3400, 7
          %v3402 = vsub.s32 7, %v3401
          %v3403 = vrot.slane %v2221, %v3402
          %v3404 = vlaneseq
          %v3405 = vshrl.u32 %v3404, 7
          %v3406 = vsub.s32 0, %v3405
          %v3407 = vrot.slane %v2222, %v3406
          %v3408 = vlaneseq
          %v3409 = vshrl.u32 %v3408, 7
          %v3410 = vsub.s32 1, %v3409
          %v3411 = vrot.slane %v2222, %v3410
          %v3412 = vlaneseq
          %v3413 = vshrl.u32 %v3412, 7
          %v3414 = vsub.s32 2, %v3413
          %v3415 = vrot.slane %v2222, %v3414
          %v3416 = vlaneseq
          %v3417 = vshrl.u32 %v3416, 7
          %v3418 = vsub.s32 3, %v3417
          %v3419 = vrot.slane %v2222, %v3418
          %v3420 = vlaneseq
          %v3421 = vshrl.u32 %v3420, 7
          %v3422 = vsub.s32 4, %v3421
          %v3423 = vrot.slane %v2222, %v3422
          %v3424 = vlaneseq
          %v3425 = vshrl.u32 %v3424, 7
          %v3426 = vsub.s32 5, %v3425
          %v3427 = vrot.slane %v2222, %v3426
          %v3428 = vlaneseq
          %v3429 = vshrl.u32 %v3428, 7
          %v3430 = vsub.s32 6, %v3429
          %v3431 = vrot.slane %v2222, %v3430
          %v3432 = vlaneseq
          %v3433 = vshrl.u32 %v3432, 7
          %v3434 = vsub.s32 7, %v3433
          %v3435 = vrot.slane %v2222, %v3434
          %v3436 = vlaneseq
          %v3437 = vshrl.u32 %v3436, 7
          %v3438 = vsub.s32 0, %v3437
          %v3439 = vrot.slane %v2223, %v3438
          %v3440 = vlaneseq
          %v3441 = vshrl.u32 %v3440, 7
          %v3442 = vsub.s32 1, %v3441
          %v3443 = vrot.slane %v2223, %v3442
          %v3444 = vlaneseq
          %v3445 = vshrl.u32 %v3444, 7
          %v3446 = vsub.s32 2, %v3445
          %v3447 = vrot.slane %v2223, %v3446
          %v3448 = vlaneseq
          %v3449 = vshrl.u32 %v3448, 7
          %v3450 = vsub.s32 3, %v3449
          %v3451 = vrot.slane %v2223, %v3450
          %v3452 = vlaneseq
          %v3453 = vshrl.u32 %v3452, 7
          %v3454 = vsub.s32 4, %v3453
          %v3455 = vrot.slane %v2223, %v3454
          %v3456 = vlaneseq
          %v3457 = vshrl.u32 %v3456, 7
          %v3458 = vsub.s32 5, %v3457
          %v3459 = vrot.slane %v2223, %v3458
          %v3460 = vlaneseq
          %v3461 = vshrl.u32 %v3460, 7
          %v3462 = vsub.s32 6, %v3461
          %v3463 = vrot.slane %v2223, %v3462
          %v3464 = vlaneseq
          %v3465 = vshrl.u32 %v3464, 7
          %v3466 = vsub.s32 7, %v3465
          %v3467 = vrot.slane %v2223, %v3466
          %v3468 = vlaneseq
          %v3469 = vshrl.u32 %v3468, 7
          %v3470 = vsub.s32 0, %v3469
          %v3471 = vrot.slane %v2224, %v3470
          %v3472 = vlaneseq
          %v3473 = vshrl.u32 %v3472, 7
          %v3474 = vsub.s32 1, %v3473
          %v3475 = vrot.slane %v2224, %v3474
          %v3476 = vlaneseq
          %v3477 = vshrl.u32 %v3476, 7
          %v3478 = vsub.s32 2, %v3477
          %v3479 = vrot.slane %v2224, %v3478
          %v3480 = vlaneseq
          %v3481 = vshrl.u32 %v3480, 7
          %v3482 = vsub.s32 3, %v3481
          %v3483 = vrot.slane %v2224, %v3482
          %v3484 = vlaneseq
          %v3485 = vshrl.u32 %v3484, 7
          %v3486 = vsub.s32 4, %v3485
          %v3487 = vrot.slane %v2224, %v3486
          %v3488 = vlaneseq
          %v3489 = vshrl.u32 %v3488, 7
          %v3490 = vsub.s32 5, %v3489
          %v3491 = vrot.slane %v2224, %v3490
          %v3492 = vlaneseq
          %v3493 = vshrl.u32 %v3492, 7
          %v3494 = vsub.s32 6, %v3493
          %v3495 = vrot.slane %v2224, %v3494
          %v3496 = vlaneseq
          %v3497 = vshrl.u32 %v3496, 7
          %v3498 = vsub.s32 7, %v3497
          %v3499 = vrot.slane %v2224, %v3498
          %v3500 = vlaneseq
          %v3501 = vshrl.u32 %v3500, 7
          %v3502 = vsub.s32 0, %v3501
          %v3503 = vrot.slane %v2225, %v3502
          %v3504 = vlaneseq
          %v3505 = vshrl.u32 %v3504, 7
          %v3506 = vsub.s32 1, %v3505
          %v3507 = vrot.slane %v2225, %v3506
          %v3508 = vlaneseq
          %v3509 = vshrl.u32 %v3508, 7
          %v3510 = vsub.s32 2, %v3509
          %v3511 = vrot.slane %v2225, %v3510
          %v3512 = vlaneseq
          %v3513 = vshrl.u32 %v3512, 7
          %v3514 = vsub.s32 3, %v3513
          %v3515 = vrot.slane %v2225, %v3514
          %v3516 = vlaneseq
          %v3517 = vshrl.u32 %v3516, 7
          %v3518 = vsub.s32 4, %v3517
          %v3519 = vrot.slane %v2225, %v3518
          %v3520 = vlaneseq
          %v3521 = vshrl.u32 %v3520, 7
          %v3522 = vsub.s32 5, %v3521
          %v3523 = vrot.slane %v2225, %v3522
          %v3524 = vlaneseq
          %v3525 = vshrl.u32 %v3524, 7
          %v3526 = vsub.s32 6, %v3525
          %v3527 = vrot.slane %v2225, %v3526
          %v3528 = vlaneseq
          %v3529 = vshrl.u32 %v3528, 7
          %v3530 = vsub.s32 7, %v3529
          %v3531 = vrot.slane %v2225, %v3530
          %v3532 = vlaneseq
          %v3533 = vshrl.u32 %v3532, 7
          %v3534 = vsub.s32 0, %v3533
          %v3535 = vrot.slane %v2226, %v3534
          %v3536 = vlaneseq
          %v3537 = vshrl.u32 %v3536, 7
          %v3538 = vsub.s32 1, %v3537
          %v3539 = vrot.slane %v2226, %v3538
          %v3540 = vlaneseq
          %v3541 = vshrl.u32 %v3540, 7
          %v3542 = vsub.s32 2, %v3541
          %v3543 = vrot.slane %v2226, %v3542
          %v3544 = vlaneseq
          %v3545 = vshrl.u32 %v3544, 7
          %v3546 = vsub.s32 3, %v3545
          %v3547 = vrot.slane %v2226, %v3546
          %v3548 = vlaneseq
          %v3549 = vshrl.u32 %v3548, 7
          %v3550 = vsub.s32 4, %v3549
          %v3551 = vrot.slane %v2226, %v3550
          %v3552 = vlaneseq
          %v3553 = vshrl.u32 %v3552, 7
          %v3554 = vsub.s32 5, %v3553
          %v3555 = vrot.slane %v2226, %v3554
          %v3556 = vlaneseq
          %v3557 = vshrl.u32 %v3556, 7
          %v3558 = vsub.s32 6, %v3557
          %v3559 = vrot.slane %v2226, %v3558
          %v3560 = vlaneseq
          %v3561 = vshrl.u32 %v3560, 7
          %v3562 = vsub.s32 7, %v3561
          %v3563 = vrot.slane %v2226, %v3562
          %v3564 = vlaneseq
          %v3565 = vshrl.u32 %v3564, 7
          %v3566 = vsub.s32 0, %v3565
          %v3567 = vrot.slane %v2227, %v3566
          %v3568 = vlaneseq
          %v3569 = vshrl.u32 %v3568, 7
          %v3570 = vsub.s32 1, %v3569
          %v3571 = vrot.slane %v2227, %v3570
          %v3572 = vlaneseq
          %v3573 = vshrl.u32 %v3572, 7
          %v3574 = vsub.s32 2, %v3573
          %v3575 = vrot.slane %v2227, %v3574
          %v3576 = vlaneseq
          %v3577 = vshrl.u32 %v3576, 7
          %v3578 = vsub.s32 3, %v3577
          %v3579 = vrot.slane %v2227, %v3578
          %v3580 = vlaneseq
          %v3581 = vshrl.u32 %v3580, 7
          %v3582 = vsub.s32 4, %v3581
          %v3583 = vrot.slane %v2227, %v3582
          %v3584 = vlaneseq
          %v3585 = vshrl.u32 %v3584, 7
          %v3586 = vsub.s32 5, %v3585
          %v3587 = vrot.slane %v2227, %v3586
          %v3588 = vlaneseq
          %v3589 = vshrl.u32 %v3588, 7
          %v3590 = vsub.s32 6, %v3589
          %v3591 = vrot.slane %v2227, %v3590
          %v3592 = vlaneseq
          %v3593 = vshrl.u32 %v3592, 7
          %v3594 = vsub.s32 7, %v3593
          %v3595 = vrot.slane %v2227, %v3594
          %v3596 = vlaneseq
          %v3597 = vshrl.u32 %v3596, 7
          %v3598 = vsub.s32 0, %v3597
          %v3599 = vrot.slane %v2228, %v3598
          %v3600 = vlaneseq
          %v3601 = vshrl.u32 %v3600, 7
          %v3602 = vsub.s32 1, %v3601
          %v3603 = vrot.slane %v2228, %v3602
          %v3604 = vlaneseq
          %v3605 = vshrl.u32 %v3604, 7
          %v3606 = vsub.s32 2, %v3605
          %v3607 = vrot.slane %v2228, %v3606
          %v3608 = vlaneseq
          %v3609 = vshrl.u32 %v3608, 7
          %v3610 = vsub.s32 3, %v3609
          %v3611 = vrot.slane %v2228, %v3610
          %v3612 = vlaneseq
          %v3613 = vshrl.u32 %v3612, 7
          %v3614 = vsub.s32 4, %v3613
          %v3615 = vrot.slane %v2228, %v3614
          %v3616 = vlaneseq
          %v3617 = vshrl.u32 %v3616, 7
          %v3618 = vsub.s32 5, %v3617
          %v3619 = vrot.slane %v2228, %v3618
          %v3620 = vlaneseq
          %v3621 = vshrl.u32 %v3620, 7
          %v3622 = vsub.s32 6, %v3621
          %v3623 = vrot.slane %v2228, %v3622
          %v3624 = vlaneseq
          %v3625 = vshrl.u32 %v3624, 7
          %v3626 = vsub.s32 7, %v3625
          %v3627 = vrot.slane %v2228, %v3626
          %v3628 = vlaneseq
          %v3629 = vshrl.u32 %v3628, 7
          %v3630 = vsub.s32 0, %v3629
          %v3631 = vrot.slane %v2229, %v3630
          %v3632 = vlaneseq
          %v3633 = vshrl.u32 %v3632, 7
          %v3634 = vsub.s32 1, %v3633
          %v3635 = vrot.slane %v2229, %v3634
          %v3636 = vlaneseq
          %v3637 = vshrl.u32 %v3636, 7
          %v3638 = vsub.s32 2, %v3637
          %v3639 = vrot.slane %v2229, %v3638
          %v3640 = vlaneseq
          %v3641 = vshrl.u32 %v3640, 7
          %v3642 = vsub.s32 3, %v3641
          %v3643 = vrot.slane %v2229, %v3642
          %v3644 = vlaneseq
          %v3645 = vshrl.u32 %v3644, 7
          %v3646 = vsub.s32 4, %v3645
          %v3647 = vrot.slane %v2229, %v3646
          %v3648 = vlaneseq
          %v3649 = vshrl.u32 %v3648, 7
          %v3650 = vsub.s32 5, %v3649
          %v3651 = vrot.slane %v2229, %v3650
          %v3652 = vlaneseq
          %v3653 = vshrl.u32 %v3652, 7
          %v3654 = vsub.s32 6, %v3653
          %v3655 = vrot.slane %v2229, %v3654
          %v3656 = vlaneseq
          %v3657 = vshrl.u32 %v3656, 7
          %v3658 = vsub.s32 7, %v3657
          %v3659 = vrot.slane %v2229, %v3658
          %v3660 = vlaneseq
          %v3661 = vshrl.u32 %v3660, 7
          %v3662 = vsub.s32 0, %v3661
          %v3663 = vrot.slane %v2230, %v3662
          %v3664 = vlaneseq
          %v3665 = vshrl.u32 %v3664, 7
          %v3666 = vsub.s32 1, %v3665
          %v3667 = vrot.slane %v2230, %v3666
          %v3668 = vlaneseq
          %v3669 = vshrl.u32 %v3668, 7
          %v3670 = vsub.s32 2, %v3669
          %v3671 = vrot.slane %v2230, %v3670
          %v3672 = vlaneseq
          %v3673 = vshrl.u32 %v3672, 7
          %v3674 = vsub.s32 3, %v3673
          %v3675 = vrot.slane %v2230, %v3674
          %v3676 = vlaneseq
          %v3677 = vshrl.u32 %v3676, 7
          %v3678 = vsub.s32 4, %v3677
          %v3679 = vrot.slane %v2230, %v3678
          %v3680 = vlaneseq
          %v3681 = vshrl.u32 %v3680, 7
          %v3682 = vsub.s32 5, %v3681
          %v3683 = vrot.slane %v2230, %v3682
          %v3684 = vlaneseq
          %v3685 = vshrl.u32 %v3684, 7
          %v3686 = vsub.s32 6, %v3685
          %v3687 = vrot.slane %v2230, %v3686
          %v3688 = vlaneseq
          %v3689 = vshrl.u32 %v3688, 7
          %v3690 = vsub.s32 7, %v3689
          %v3691 = vrot.slane %v2230, %v3690
          %v3692 = vlaneseq
          %v3693 = vshrl.u32 %v3692, 7
          %v3694 = vsub.s32 0, %v3693
          %v3695 = vrot.slane %v2231, %v3694
          %v3696 = vlaneseq
          %v3697 = vshrl.u32 %v3696, 7
          %v3698 = vsub.s32 1, %v3697
          %v3699 = vrot.slane %v2231, %v3698
          %v3700 = vlaneseq
          %v3701 = vshrl.u32 %v3700, 7
          %v3702 = vsub.s32 2, %v3701
          %v3703 = vrot.slane %v2231, %v3702
          %v3704 = vlaneseq
          %v3705 = vshrl.u32 %v3704, 7
          %v3706 = vsub.s32 3, %v3705
          %v3707 = vrot.slane %v2231, %v3706
          %v3708 = vlaneseq
          %v3709 = vshrl.u32 %v3708, 7
          %v3710 = vsub.s32 4, %v3709
          %v3711 = vrot.slane %v2231, %v3710
          %v3712 = vlaneseq
          %v3713 = vshrl.u32 %v3712, 7
          %v3714 = vsub.s32 5, %v3713
          %v3715 = vrot.slane %v2231, %v3714
          %v3716 = vlaneseq
          %v3717 = vshrl.u32 %v3716, 7
          %v3718 = vsub.s32 6, %v3717
          %v3719 = vrot.slane %v2231, %v3718
          %v3720 = vlaneseq
          %v3721 = vshrl.u32 %v3720, 7
          %v3722 = vsub.s32 7, %v3721
          %v3723 = vrot.slane %v2231, %v3722
          %v3724 = vlaneseq
          %v3725 = vshrl.u32 %v3724, 7
          %v3726 = vsub.s32 0, %v3725
          %v3727 = vrot.slane %v2232, %v3726
          %v3728 = vlaneseq
          %v3729 = vshrl.u32 %v3728, 7
          %v3730 = vsub.s32 1, %v3729
          %v3731 = vrot.slane %v2232, %v3730
          %v3732 = vlaneseq
          %v3733 = vshrl.u32 %v3732, 7
          %v3734 = vsub.s32 2, %v3733
          %v3735 = vrot.slane %v2232, %v3734
          %v3736 = vlaneseq
          %v3737 = vshrl.u32 %v3736, 7
          %v3738 = vsub.s32 3, %v3737
          %v3739 = vrot.slane %v2232, %v3738
          %v3740 = vlaneseq
          %v3741 = vshrl.u32 %v3740, 7
          %v3742 = vsub.s32 4, %v3741
          %v3743 = vrot.slane %v2232, %v3742
          %v3744 = vlaneseq
          %v3745 = vshrl.u32 %v3744, 7
          %v3746 = vsub.s32 5, %v3745
          %v3747 = vrot.slane %v2232, %v3746
          %v3748 = vlaneseq
          %v3749 = vshrl.u32 %v3748, 7
          %v3750 = vsub.s32 6, %v3749
          %v3751 = vrot.slane %v2232, %v3750
          %v3752 = vlaneseq
          %v3753 = vshrl.u32 %v3752, 7
          %v3754 = vsub.s32 7, %v3753
          %v3755 = vrot.slane %v2232, %v3754
          %v3756 = vlaneseq
          %v3757 = vshrl.u32 %v3756, 7
          %v3758 = vsub.s32 0, %v3757
          %v3759 = vrot.slane %v2233, %v3758
          %v3760 = vlaneseq
          %v3761 = vshrl.u32 %v3760, 7
          %v3762 = vsub.s32 1, %v3761
          %v3763 = vrot.slane %v2233, %v3762
          %v3764 = vlaneseq
          %v3765 = vshrl.u32 %v3764, 7
          %v3766 = vsub.s32 2, %v3765
          %v3767 = vrot.slane %v2233, %v3766
          %v3768 = vlaneseq
          %v3769 = vshrl.u32 %v3768, 7
          %v3770 = vsub.s32 3, %v3769
          %v3771 = vrot.slane %v2233, %v3770
          %v3772 = vlaneseq
          %v3773 = vshrl.u32 %v3772, 7
          %v3774 = vsub.s32 4, %v3773
          %v3775 = vrot.slane %v2233, %v3774
          %v3776 = vlaneseq
          %v3777 = vshrl.u32 %v3776, 7
          %v3778 = vsub.s32 5, %v3777
          %v3779 = vrot.slane %v2233, %v3778
          %v3780 = vlaneseq
          %v3781 = vshrl.u32 %v3780, 7
          %v3782 = vsub.s32 6, %v3781
          %v3783 = vrot.slane %v2233, %v3782
          %v3784 = vlaneseq
          %v3785 = vshrl.u32 %v3784, 7
          %v3786 = vsub.s32 7, %v3785
          %v3787 = vrot.slane %v2233, %v3786
          %v3788 = vlaneseq
          %v3789 = vshrl.u32 %v3788, 7
          %v3790 = vsub.s32 0, %v3789
          %v3791 = vrot.slane %v2234, %v3790
          %v3792 = vlaneseq
          %v3793 = vshrl.u32 %v3792, 7
          %v3794 = vsub.s32 1, %v3793
          %v3795 = vrot.slane %v2234, %v3794
          %v3796 = vlaneseq
          %v3797 = vshrl.u32 %v3796, 7
          %v3798 = vsub.s32 2, %v3797
          %v3799 = vrot.slane %v2234, %v3798
          %v3800 = vlaneseq
          %v3801 = vshrl.u32 %v3800, 7
          %v3802 = vsub.s32 3, %v3801
          %v3803 = vrot.slane %v2234, %v3802
          %v3804 = vlaneseq
          %v3805 = vshrl.u32 %v3804, 7
          %v3806 = vsub.s32 4, %v3805
          %v3807 = vrot.slane %v2234, %v3806
          %v3808 = vlaneseq
          %v3809 = vshrl.u32 %v3808, 7
          %v3810 = vsub.s32 5, %v3809
          %v3811 = vrot.slane %v2234, %v3810
          %v3812 = vlaneseq
          %v3813 = vshrl.u32 %v3812, 7
          %v3814 = vsub.s32 6, %v3813
          %v3815 = vrot.slane %v2234, %v3814
          %v3816 = vlaneseq
          %v3817 = vshrl.u32 %v3816, 7
          %v3818 = vsub.s32 7, %v3817
          %v3819 = vrot.slane %v2234, %v3818
          %v3820 = vlaneseq
          %v3821 = vshrl.u32 %v3820, 7
          %v3822 = vsub.s32 0, %v3821
          %v3823 = vrot.slane %v2235, %v3822
          %v3824 = vlaneseq
          %v3825 = vshrl.u32 %v3824, 7
          %v3826 = vsub.s32 1, %v3825
          %v3827 = vrot.slane %v2235, %v3826
          %v3828 = vlaneseq
          %v3829 = vshrl.u32 %v3828, 7
          %v3830 = vsub.s32 2, %v3829
          %v3831 = vrot.slane %v2235, %v3830
          %v3832 = vlaneseq
          %v3833 = vshrl.u32 %v3832, 7
          %v3834 = vsub.s32 3, %v3833
          %v3835 = vrot.slane %v2235, %v3834
          %v3836 = vlaneseq
          %v3837 = vshrl.u32 %v3836, 7
          %v3838 = vsub.s32 4, %v3837
          %v3839 = vrot.slane %v2235, %v3838
          %v3840 = vlaneseq
          %v3841 = vshrl.u32 %v3840, 7
          %v3842 = vsub.s32 5, %v3841
          %v3843 = vrot.slane %v2235, %v3842
          %v3844 = vlaneseq
          %v3845 = vshrl.u32 %v3844, 7
          %v3846 = vsub.s32 6, %v3845
          %v3847 = vrot.slane %v2235, %v3846
          %v3848 = vlaneseq
          %v3849 = vshrl.u32 %v3848, 7
          %v3850 = vsub.s32 7, %v3849
          %v3851 = vrot.slane %v2235, %v3850
          %v3852 = vlaneseq
          %v3853 = vshrl.u32 %v3852, 7
          %v3854 = vsub.s32 0, %v3853
          %v3855 = vrot.slane %v2236, %v3854
          %v3856 = vlaneseq
          %v3857 = vshrl.u32 %v3856, 7
          %v3858 = vsub.s32 1, %v3857
          %v3859 = vrot.slane %v2236, %v3858
          %v3860 = vlaneseq
          %v3861 = vshrl.u32 %v3860, 7
          %v3862 = vsub.s32 2, %v3861
          %v3863 = vrot.slane %v2236, %v3862
          %v3864 = vlaneseq
          %v3865 = vshrl.u32 %v3864, 7
          %v3866 = vsub.s32 3, %v3865
          %v3867 = vrot.slane %v2236, %v3866
          %v3868 = vlaneseq
          %v3869 = vshrl.u32 %v3868, 7
          %v3870 = vsub.s32 4, %v3869
          %v3871 = vrot.slane %v2236, %v3870
          %v3872 = vlaneseq
          %v3873 = vshrl.u32 %v3872, 7
          %v3874 = vsub.s32 5, %v3873
          %v3875 = vrot.slane %v2236, %v3874
          %v3876 = vlaneseq
          %v3877 = vshrl.u32 %v3876, 7
          %v3878 = vsub.s32 6, %v3877
          %v3879 = vrot.slane %v2236, %v3878
          %v3880 = vlaneseq
          %v3881 = vshrl.u32 %v3880, 7
          %v3882 = vsub.s32 7, %v3881
          %v3883 = vrot.slane %v2236, %v3882
          %v3884 = vlaneseq
          %v3885 = vshrl.u32 %v3884, 7
          %v3886 = vsub.s32 0, %v3885
          %v3887 = vrot.slane %v2237, %v3886
          %v3888 = vlaneseq
          %v3889 = vshrl.u32 %v3888, 7
          %v3890 = vsub.s32 1, %v3889
          %v3891 = vrot.slane %v2237, %v3890
          %v3892 = vlaneseq
          %v3893 = vshrl.u32 %v3892, 7
          %v3894 = vsub.s32 2, %v3893
          %v3895 = vrot.slane %v2237, %v3894
          %v3896 = vlaneseq
          %v3897 = vshrl.u32 %v3896, 7
          %v3898 = vsub.s32 3, %v3897
          %v3899 = vrot.slane %v2237, %v3898
          %v3900 = vlaneseq
          %v3901 = vshrl.u32 %v3900, 7
          %v3902 = vsub.s32 4, %v3901
          %v3903 = vrot.slane %v2237, %v3902
          %v3904 = vlaneseq
          %v3905 = vshrl.u32 %v3904, 7
          %v3906 = vsub.s32 5, %v3905
          %v3907 = vrot.slane %v2237, %v3906
          %v3908 = vlaneseq
          %v3909 = vshrl.u32 %v3908, 7
          %v3910 = vsub.s32 6, %v3909
          %v3911 = vrot.slane %v2237, %v3910
          %v3912 = vlaneseq
          %v3913 = vshrl.u32 %v3912, 7
          %v3914 = vsub.s32 7, %v3913
          %v3915 = vrot.slane %v2237, %v3914
          %v3916 = vlaneseq
          %v3917 = vshrl.u32 %v3916, 7
          %v3918 = vsub.s32 0, %v3917
          %v3919 = vrot.slane %v2238, %v3918
          %v3920 = vlaneseq
          %v3921 = vshrl.u32 %v3920, 7
          %v3922 = vsub.s32 1, %v3921
          %v3923 = vrot.slane %v2238, %v3922
          %v3924 = vlaneseq
          %v3925 = vshrl.u32 %v3924, 7
          %v3926 = vsub.s32 2, %v3925
          %v3927 = vrot.slane %v2238, %v3926
          %v3928 = vlaneseq
          %v3929 = vshrl.u32 %v3928, 7
          %v3930 = vsub.s32 3, %v3929
          %v3931 = vrot.slane %v2238, %v3930
          %v3932 = vlaneseq
          %v3933 = vshrl.u32 %v3932, 7
          %v3934 = vsub.s32 4, %v3933
          %v3935 = vrot.slane %v2238, %v3934
          %v3936 = vlaneseq
          %v3937 = vshrl.u32 %v3936, 7
          %v3938 = vsub.s32 5, %v3937
          %v3939 = vrot.slane %v2238, %v3938
          %v3940 = vlaneseq
          %v3941 = vshrl.u32 %v3940, 7
          %v3942 = vsub.s32 6, %v3941
          %v3943 = vrot.slane %v2238, %v3942
          %v3944 = vlaneseq
          %v3945 = vshrl.u32 %v3944, 7
          %v3946 = vsub.s32 7, %v3945
          %v3947 = vrot.slane %v2238, %v3946
          %v3948 = vlaneseq
          %v3949 = vshrl.u32 %v3948, 7
          %v3950 = vsub.s32 0, %v3949
          %v3951 = vrot.slane %v2239, %v3950
          %v3952 = vlaneseq
          %v3953 = vshrl.u32 %v3952, 7
          %v3954 = vsub.s32 1, %v3953
          %v3955 = vrot.slane %v2239, %v3954
          %v3956 = vlaneseq
          %v3957 = vshrl.u32 %v3956, 7
          %v3958 = vsub.s32 2, %v3957
          %v3959 = vrot.slane %v2239, %v3958
          %v3960 = vlaneseq
          %v3961 = vshrl.u32 %v3960, 7
          %v3962 = vsub.s32 3, %v3961
          %v3963 = vrot.slane %v2239, %v3962
          %v3964 = vlaneseq
          %v3965 = vshrl.u32 %v3964, 7
          %v3966 = vsub.s32 4, %v3965
          %v3967 = vrot.slane %v2239, %v3966
          %v3968 = vlaneseq
          %v3969 = vshrl.u32 %v3968, 7
          %v3970 = vsub.s32 5, %v3969
          %v3971 = vrot.slane %v2239, %v3970
          %v3972 = vlaneseq
          %v3973 = vshrl.u32 %v3972, 7
          %v3974 = vsub.s32 6, %v3973
          %v3975 = vrot.slane %v2239, %v3974
          %v3976 = vlaneseq
          %v3977 = vshrl.u32 %v3976, 7
          %v3978 = vsub.s32 7, %v3977
          %v3979 = vrot.slane %v2239, %v3978
          %v3980 = vlaneseq
          %v3981 = vshrl.u32 %v3980, 7
          %v3982 = vsub.s32 0, %v3981
          %v3983 = vrot.slane %v2240, %v3982
          %v3984 = vlaneseq
          %v3985 = vshrl.u32 %v3984, 7
          %v3986 = vsub.s32 1, %v3985
          %v3987 = vrot.slane %v2240, %v3986
          %v3988 = vlaneseq
          %v3989 = vshrl.u32 %v3988, 7
          %v3990 = vsub.s32 2, %v3989
          %v3991 = vrot.slane %v2240, %v3990
          %v3992 = vlaneseq
          %v3993 = vshrl.u32 %v3992, 7
          %v3994 = vsub.s32 3, %v3993
          %v3995 = vrot.slane %v2240, %v3994
          %v3996 = vlaneseq
          %v3997 = vshrl.u32 %v3996, 7
          %v3998 = vsub.s32 4, %v3997
          %v3999 = vrot.slane %v2240, %v3998
          %v4000 = vlaneseq
          %v4001 = vshrl.u32 %v4000, 7
          %v4002 = vsub.s32 5, %v4001
          %v4003 = vrot.slane %v2240, %v4002
          %v4004 = vlaneseq
          %v4005 = vshrl.u32 %v4004, 7
          %v4006 = vsub.s32 6, %v4005
          %v4007 = vrot.slane %v2240, %v4006
          %v4008 = vlaneseq
          %v4009 = vshrl.u32 %v4008, 7
          %v4010 = vsub.s32 7, %v4009
          %v4011 = vrot.slane %v2240, %v4010
          %v4012 = vlaneseq
          %v4013 = vshrl.u32 %v4012, 7
          %v4014 = vsub.s32 0, %v4013
          %v4015 = vrot.slane %v2241, %v4014
          %v4016 = vlaneseq
          %v4017 = vshrl.u32 %v4016, 7
          %v4018 = vsub.s32 1, %v4017
          %v4019 = vrot.slane %v2241, %v4018
          %v4020 = vlaneseq
          %v4021 = vshrl.u32 %v4020, 7
          %v4022 = vsub.s32 2, %v4021
          %v4023 = vrot.slane %v2241, %v4022
          %v4024 = vlaneseq
          %v4025 = vshrl.u32 %v4024, 7
          %v4026 = vsub.s32 3, %v4025
          %v4027 = vrot.slane %v2241, %v4026
          %v4028 = vlaneseq
          %v4029 = vshrl.u32 %v4028, 7
          %v4030 = vsub.s32 4, %v4029
          %v4031 = vrot.slane %v2241, %v4030
          %v4032 = vlaneseq
          %v4033 = vshrl.u32 %v4032, 7
          %v4034 = vsub.s32 5, %v4033
          %v4035 = vrot.slane %v2241, %v4034
          %v4036 = vlaneseq
          %v4037 = vshrl.u32 %v4036, 7
          %v4038 = vsub.s32 6, %v4037
          %v4039 = vrot.slane %v2241, %v4038
          %v4040 = vlaneseq
          %v4041 = vshrl.u32 %v4040, 7
          %v4042 = vsub.s32 7, %v4041
          %v4043 = vrot.slane %v2241, %v4042
          %v4044 = vlaneseq
          %v4045 = vshrl.u32 %v4044, 7
          %v4046 = vsub.s32 0, %v4045
          %v4047 = vrot.slane %v2242, %v4046
          %v4048 = vlaneseq
          %v4049 = vshrl.u32 %v4048, 7
          %v4050 = vsub.s32 1, %v4049
          %v4051 = vrot.slane %v2242, %v4050
          %v4052 = vlaneseq
          %v4053 = vshrl.u32 %v4052, 7
          %v4054 = vsub.s32 2, %v4053
          %v4055 = vrot.slane %v2242, %v4054
          %v4056 = vlaneseq
          %v4057 = vshrl.u32 %v4056, 7
          %v4058 = vsub.s32 3, %v4057
          %v4059 = vrot.slane %v2242, %v4058
          %v4060 = vlaneseq
          %v4061 = vshrl.u32 %v4060, 7
          %v4062 = vsub.s32 4, %v4061
          %v4063 = vrot.slane %v2242, %v4062
          %v4064 = vlaneseq
          %v4065 = vshrl.u32 %v4064, 7
          %v4066 = vsub.s32 5, %v4065
          %v4067 = vrot.slane %v2242, %v4066
          %v4068 = vlaneseq
          %v4069 = vshrl.u32 %v4068, 7
          %v4070 = vsub.s32 6, %v4069
          %v4071 = vrot.slane %v2242, %v4070
          %v4072 = vlaneseq
          %v4073 = vshrl.u32 %v4072, 7
          %v4074 = vsub.s32 7, %v4073
          %v4075 = vrot.slane %v2242, %v4074
          %v4076 = vlaneseq
          %v4077 = vshrl.u32 %v4076, 7
          %v4078 = vsub.s32 0, %v4077
          %v4079 = vrot.slane %v2243, %v4078
          %v4080 = vlaneseq
          %v4081 = vshrl.u32 %v4080, 7
          %v4082 = vsub.s32 1, %v4081
          %v4083 = vrot.slane %v2243, %v4082
          %v4084 = vlaneseq
          %v4085 = vshrl.u32 %v4084, 7
          %v4086 = vsub.s32 2, %v4085
          %v4087 = vrot.slane %v2243, %v4086
          %v4088 = vlaneseq
          %v4089 = vshrl.u32 %v4088, 7
          %v4090 = vsub.s32 3, %v4089
          %v4091 = vrot.slane %v2243, %v4090
          %v4092 = vlaneseq
          %v4093 = vshrl.u32 %v4092, 7
          %v4094 = vsub.s32 4, %v4093
          %v4095 = vrot.slane %v2243, %v4094
          %v4096 = vlaneseq
          %v4097 = vshrl.u32 %v4096, 7
          %v4098 = vsub.s32 5, %v4097
          %v4099 = vrot.slane %v2243, %v4098
          %v4100 = vlaneseq
          %v4101 = vshrl.u32 %v4100, 7
          %v4102 = vsub.s32 6, %v4101
          %v4103 = vrot.slane %v2243, %v4102
          %v4104 = vlaneseq
          %v4105 = vshrl.u32 %v4104, 7
          %v4106 = vsub.s32 7, %v4105
          %v4107 = vrot.slane %v2243, %v4106
          %v4108 = vlaneseq
          %v4109 = vshrl.u32 %v4108, 7
          %v4110 = vsub.s32 0, %v4109
          %v4111 = vrot.slane %v2244, %v4110
          %v4112 = vlaneseq
          %v4113 = vshrl.u32 %v4112, 7
          %v4114 = vsub.s32 1, %v4113
          %v4115 = vrot.slane %v2244, %v4114
          %v4116 = vlaneseq
          %v4117 = vshrl.u32 %v4116, 7
          %v4118 = vsub.s32 2, %v4117
          %v4119 = vrot.slane %v2244, %v4118
          %v4120 = vlaneseq
          %v4121 = vshrl.u32 %v4120, 7
          %v4122 = vsub.s32 3, %v4121
          %v4123 = vrot.slane %v2244, %v4122
          %v4124 = vlaneseq
          %v4125 = vshrl.u32 %v4124, 7
          %v4126 = vsub.s32 4, %v4125
          %v4127 = vrot.slane %v2244, %v4126
          %v4128 = vlaneseq
          %v4129 = vshrl.u32 %v4128, 7
          %v4130 = vsub.s32 5, %v4129
          %v4131 = vrot.slane %v2244, %v4130
          %v4132 = vlaneseq
          %v4133 = vshrl.u32 %v4132, 7
          %v4134 = vsub.s32 6, %v4133
          %v4135 = vrot.slane %v2244, %v4134
          %v4136 = vlaneseq
          %v4137 = vshrl.u32 %v4136, 7
          %v4138 = vsub.s32 7, %v4137
          %v4139 = vrot.slane %v2244, %v4138
          %v4140 = vlaneseq
          %v4141 = vshrl.u32 %v4140, 7
          %v4142 = vsub.s32 0, %v4141
          %v4143 = vrot.slane %v2245, %v4142
          %v4144 = vlaneseq
          %v4145 = vshrl.u32 %v4144, 7
          %v4146 = vsub.s32 1, %v4145
          %v4147 = vrot.slane %v2245, %v4146
          %v4148 = vlaneseq
          %v4149 = vshrl.u32 %v4148, 7
          %v4150 = vsub.s32 2, %v4149
          %v4151 = vrot.slane %v2245, %v4150
          %v4152 = vlaneseq
          %v4153 = vshrl.u32 %v4152, 7
          %v4154 = vsub.s32 3, %v4153
          %v4155 = vrot.slane %v2245, %v4154
          %v4156 = vlaneseq
          %v4157 = vshrl.u32 %v4156, 7
          %v4158 = vsub.s32 4, %v4157
          %v4159 = vrot.slane %v2245, %v4158
          %v4160 = vlaneseq
          %v4161 = vshrl.u32 %v4160, 7
          %v4162 = vsub.s32 5, %v4161
          %v4163 = vrot.slane %v2245, %v4162
          %v4164 = vlaneseq
          %v4165 = vshrl.u32 %v4164, 7
          %v4166 = vsub.s32 6, %v4165
          %v4167 = vrot.slane %v2245, %v4166
          %v4168 = vlaneseq
          %v4169 = vshrl.u32 %v4168, 7
          %v4170 = vsub.s32 7, %v4169
          %v4171 = vrot.slane %v2245, %v4170
          %v4172 = vlaneseq
          %v4173 = vshrl.u32 %v4172, 7
          %v4174 = vsub.s32 0, %v4173
          %v4175 = vrot.slane %v2246, %v4174
          %v4176 = vlaneseq
          %v4177 = vshrl.u32 %v4176, 7
          %v4178 = vsub.s32 1, %v4177
          %v4179 = vrot.slane %v2246, %v4178
          %v4180 = vlaneseq
          %v4181 = vshrl.u32 %v4180, 7
          %v4182 = vsub.s32 2, %v4181
          %v4183 = vrot.slane %v2246, %v4182
          %v4184 = vlaneseq
          %v4185 = vshrl.u32 %v4184, 7
          %v4186 = vsub.s32 3, %v4185
          %v4187 = vrot.slane %v2246, %v4186
          %v4188 = vlaneseq
          %v4189 = vshrl.u32 %v4188, 7
          %v4190 = vsub.s32 4, %v4189
          %v4191 = vrot.slane %v2246, %v4190
          %v4192 = vlaneseq
          %v4193 = vshrl.u32 %v4192, 7
          %v4194 = vsub.s32 5, %v4193
          %v4195 = vrot.slane %v2246, %v4194
          %v4196 = vlaneseq
          %v4197 = vshrl.u32 %v4196, 7
          %v4198 = vsub.s32 6, %v4197
          %v4199 = vrot.slane %v2246, %v4198
          %v4200 = vlaneseq
          %v4201 = vshrl.u32 %v4200, 7
          %v4202 = vsub.s32 7, %v4201
          %v4203 = vrot.slane %v2246, %v4202
          %v4204 = vlaneseq
          %v4205 = vshrl.u32 %v4204, 7
          %v4206 = vsub.s32 0, %v4205
          %v4207 = vrot.slane %v2247, %v4206
          %v4208 = vlaneseq
          %v4209 = vshrl.u32 %v4208, 7
          %v4210 = vsub.s32 1, %v4209
          %v4211 = vrot.slane %v2247, %v4210
          %v4212 = vlaneseq
          %v4213 = vshrl.u32 %v4212, 7
          %v4214 = vsub.s32 2, %v4213
          %v4215 = vrot.slane %v2247, %v4214
          %v4216 = vlaneseq
          %v4217 = vshrl.u32 %v4216, 7
          %v4218 = vsub.s32 3, %v4217
          %v4219 = vrot.slane %v2247, %v4218
          %v4220 = vlaneseq
          %v4221 = vshrl.u32 %v4220, 7
          %v4222 = vsub.s32 4, %v4221
          %v4223 = vrot.slane %v2247, %v4222
          %v4224 = vlaneseq
          %v4225 = vshrl.u32 %v4224, 7
          %v4226 = vsub.s32 5, %v4225
          %v4227 = vrot.slane %v2247, %v4226
          %v4228 = vlaneseq
          %v4229 = vshrl.u32 %v4228, 7
          %v4230 = vsub.s32 6, %v4229
          %v4231 = vrot.slane %v2247, %v4230
          %v4232 = vlaneseq
          %v4233 = vshrl.u32 %v4232, 7
          %v4234 = vsub.s32 7, %v4233
          %v4235 = vrot.slane %v2247, %v4234
          %v4236 = vlaneseq
          %v4237 = vshrl.u32 %v4236, 7
          %v4238 = vsub.s32 0, %v4237
          %v4239 = vrot.slane %v2248, %v4238
          %v4240 = vlaneseq
          %v4241 = vshrl.u32 %v4240, 7
          %v4242 = vsub.s32 1, %v4241
          %v4243 = vrot.slane %v2248, %v4242
          %v4244 = vlaneseq
          %v4245 = vshrl.u32 %v4244, 7
          %v4246 = vsub.s32 2, %v4245
          %v4247 = vrot.slane %v2248, %v4246
          %v4248 = vlaneseq
          %v4249 = vshrl.u32 %v4248, 7
          %v4250 = vsub.s32 3, %v4249
          %v4251 = vrot.slane %v2248, %v4250
          %v4252 = vlaneseq
          %v4253 = vshrl.u32 %v4252, 7
          %v4254 = vsub.s32 4, %v4253
          %v4255 = vrot.slane %v2248, %v4254
          %v4256 = vlaneseq
          %v4257 = vshrl.u32 %v4256, 7
          %v4258 = vsub.s32 5, %v4257
          %v4259 = vrot.slane %v2248, %v4258
          %v4260 = vlaneseq
          %v4261 = vshrl.u32 %v4260, 7
          %v4262 = vsub.s32 6, %v4261
          %v4263 = vrot.slane %v2248, %v4262
          %v4264 = vlaneseq
          %v4265 = vshrl.u32 %v4264, 7
          %v4266 = vsub.s32 7, %v4265
          %v4267 = vrot.slane %v2248, %v4266
          %v4268 = vlaneseq
          %v4269 = vshrl.u32 %v4268, 7
          %v4270 = vsub.s32 0, %v4269
          %v4271 = vrot.slane %v2249, %v4270
          %v4272 = vlaneseq
          %v4273 = vshrl.u32 %v4272, 7
          %v4274 = vsub.s32 1, %v4273
          %v4275 = vrot.slane %v2249, %v4274
          %v4276 = vlaneseq
          %v4277 = vshrl.u32 %v4276, 7
          %v4278 = vsub.s32 2, %v4277
          %v4279 = vrot.slane %v2249, %v4278
          %v4280 = vlaneseq
          %v4281 = vshrl.u32 %v4280, 7
          %v4282 = vsub.s32 3, %v4281
          %v4283 = vrot.slane %v2249, %v4282
          %v4284 = vlaneseq
          %v4285 = vshrl.u32 %v4284, 7
          %v4286 = vsub.s32 4, %v4285
          %v4287 = vrot.slane %v2249, %v4286
          %v4288 = vlaneseq
          %v4289 = vshrl.u32 %v4288, 7
          %v4290 = vsub.s32 5, %v4289
          %v4291 = vrot.slane %v2249, %v4290
          %v4292 = vlaneseq
          %v4293 = vshrl.u32 %v4292, 7
          %v4294 = vsub.s32 6, %v4293
          %v4295 = vrot.slane %v2249, %v4294
          %v4296 = vlaneseq
          %v4297 = vshrl.u32 %v4296, 7
          %v4298 = vsub.s32 7, %v4297
          %v4299 = vrot.slane %v2249, %v4298
          %v4300 = vlaneseq
          %v4301 = vshrl.u32 %v4300, 7
          %v4302 = vsub.s32 0, %v4301
          %v4303 = vrot.slane %v2250, %v4302
          %v4304 = vlaneseq
          %v4305 = vshrl.u32 %v4304, 7
          %v4306 = vsub.s32 1, %v4305
          %v4307 = vrot.slane %v2250, %v4306
          %v4308 = vlaneseq
          %v4309 = vshrl.u32 %v4308, 7
          %v4310 = vsub.s32 2, %v4309
          %v4311 = vrot.slane %v2250, %v4310
          %v4312 = vlaneseq
          %v4313 = vshrl.u32 %v4312, 7
          %v4314 = vsub.s32 3, %v4313
          %v4315 = vrot.slane %v2250, %v4314
          %v4316 = vlaneseq
          %v4317 = vshrl.u32 %v4316, 7
          %v4318 = vsub.s32 4, %v4317
          %v4319 = vrot.slane %v2250, %v4318
          %v4320 = vlaneseq
          %v4321 = vshrl.u32 %v4320, 7
          %v4322 = vsub.s32 5, %v4321
          %v4323 = vrot.slane %v2250, %v4322
          %v4324 = vlaneseq
          %v4325 = vshrl.u32 %v4324, 7
          %v4326 = vsub.s32 6, %v4325
          %v4327 = vrot.slane %v2250, %v4326
          %v4328 = vlaneseq
          %v4329 = vshrl.u32 %v4328, 7
          %v4330 = vsub.s32 7, %v4329
          %v4331 = vrot.slane %v2250, %v4330
          %v4332 = vlaneseq
          %v4333 = vshrl.u32 %v4332, 7
          %v4334 = vsub.s32 0, %v4333
          %v4335 = vrot.slane %v2251, %v4334
          %v4336 = vlaneseq
          %v4337 = vshrl.u32 %v4336, 7
          %v4338 = vsub.s32 1, %v4337
          %v4339 = vrot.slane %v2251, %v4338
          %v4340 = vlaneseq
          %v4341 = vshrl.u32 %v4340, 7
          %v4342 = vsub.s32 2, %v4341
          %v4343 = vrot.slane %v2251, %v4342
          %v4344 = vlaneseq
          %v4345 = vshrl.u32 %v4344, 7
          %v4346 = vsub.s32 3, %v4345
          %v4347 = vrot.slane %v2251, %v4346
          %v4348 = vlaneseq
          %v4349 = vshrl.u32 %v4348, 7
          %v4350 = vsub.s32 4, %v4349
          %v4351 = vrot.slane %v2251, %v4350
          %v4352 = vlaneseq
          %v4353 = vshrl.u32 %v4352, 7
          %v4354 = vsub.s32 5, %v4353
          %v4355 = vrot.slane %v2251, %v4354
          %v4356 = vlaneseq
          %v4357 = vshrl.u32 %v4356, 7
          %v4358 = vsub.s32 6, %v4357
          %v4359 = vrot.slane %v2251, %v4358
          %v4360 = vlaneseq
          %v4361 = vshrl.u32 %v4360, 7
          %v4362 = vsub.s32 7, %v4361
          %v4363 = vrot.slane %v2251, %v4362
          %v4364 = vcombine.low %v2319, %v2323
          %v4365 = vcombine.low %v2327, %v2331
          %v4366 = vcombine.low %v2335, %v2339
          %v4367 = vcombine.low %v2343, %v2347
          %v4369 = vunpack.c.l.s4 1966171168
          %v4370 = vunpack.c.0.s8 %v4369
          %v4371 = vlaneseq
          %v4372 = vshrl.u32 %v4371, 7
          %v4373 = vsub.s32 %v4370, %v4372
          %v4374 = vrot.slane %v4364, %v4373
          %v4376 = vunpack.c.l.s4 1966171168
          %v4377 = vunpack.c.0.s8 %v4376
          %v4378 = vlaneseq
          %v4379 = vshrl.u32 %v4378, 7
          %v4380 = vsub.s32 %v4377, %v4379
          %v4381 = vrot.slane %v4365, %v4380
          %v4383 = vunpack.c.l.s4 1966171168
          %v4384 = vunpack.c.0.s8 %v4383
          %v4385 = vlaneseq
          %v4386 = vshrl.u32 %v4385, 7
          %v4387 = vsub.s32 %v4384, %v4386
          %v4388 = vrot.slane %v4366, %v4387
          %v4390 = vunpack.c.l.s4 1966171168
          %v4391 = vunpack.c.0.s8 %v4390
          %v4392 = vlaneseq
          %v4393 = vshrl.u32 %v4392, 7
          %v4394 = vsub.s32 %v4391, %v4393
          %v4395 = vrot.slane %v4367, %v4394
          %v4396 = vcombine.low %v4374, %v4381
          %v4397 = vcombine.low %v4388, %v4395
          %v4399 = vunpack.c.l.s4 1966171168
          %v4400 = vunpack.c.0.s8 %v4399
          %v4401 = vlaneseq
          %v4402 = vshrl.u32 %v4401, 7
          %v4403 = vsub.s32 %v4400, %v4402
          %v4404 = vrot.slane %v4396, %v4403
          %v4406 = vunpack.c.l.s4 1966171168
          %v4407 = vunpack.c.0.s8 %v4406
          %v4408 = vlaneseq
          %v4409 = vshrl.u32 %v4408, 7
          %v4410 = vsub.s32 %v4407, %v4409
          %v4411 = vrot.slane %v4397, %v4410
          %v4412 = vcombine.low %v4404, %v4411
          %v4413 = vcombine.low %v2351, %v2355
          %v4414 = vcombine.low %v2359, %v2363
          %v4415 = vcombine.low %v2367, %v2371
          %v4416 = vcombine.low %v2375, %v2379
          %v4418 = vunpack.c.l.s4 1966171168
          %v4419 = vunpack.c.0.s8 %v4418
          %v4420 = vlaneseq
          %v4421 = vshrl.u32 %v4420, 7
          %v4422 = vsub.s32 %v4419, %v4421
          %v4423 = vrot.slane %v4413, %v4422
          %v4425 = vunpack.c.l.s4 1966171168
          %v4426 = vunpack.c.0.s8 %v4425
          %v4427 = vlaneseq
          %v4428 = vshrl.u32 %v4427, 7
          %v4429 = vsub.s32 %v4426, %v4428
          %v4430 = vrot.slane %v4414, %v4429
          %v4432 = vunpack.c.l.s4 1966171168
          %v4433 = vunpack.c.0.s8 %v4432
          %v4434 = vlaneseq
          %v4435 = vshrl.u32 %v4434, 7
          %v4436 = vsub.s32 %v4433, %v4435
          %v4437 = vrot.slane %v4415, %v4436
          %v4439 = vunpack.c.l.s4 1966171168
          %v4440 = vunpack.c.0.s8 %v4439
          %v4441 = vlaneseq
          %v4442 = vshrl.u32 %v4441, 7
          %v4443 = vsub.s32 %v4440, %v4442
          %v4444 = vrot.slane %v4416, %v4443
          %v4445 = vcombine.low %v4423, %v4430
          %v4446 = vcombine.low %v4437, %v4444
          %v4448 = vunpack.c.l.s4 1966171168
          %v4449 = vunpack.c.0.s8 %v4448
          %v4450 = vlaneseq
          %v4451 = vshrl.u32 %v4450, 7
          %v4452 = vsub.s32 %v4449, %v4451
          %v4453 = vrot.slane %v4445, %v4452
          %v4455 = vunpack.c.l.s4 1966171168
          %v4456 = vunpack.c.0.s8 %v4455
          %v4457 = vlaneseq
          %v4458 = vshrl.u32 %v4457, 7
          %v4459 = vsub.s32 %v4456, %v4458
          %v4460 = vrot.slane %v4446, %v4459
          %v4461 = vcombine.low %v4453, %v4460
          %v4462 = vcombine.low %v2383, %v2387
          %v4463 = vcombine.low %v2391, %v2395
          %v4464 = vcombine.low %v2399, %v2403
          %v4465 = vcombine.low %v2407, %v2411
          %v4467 = vunpack.c.l.s4 1966171168
          %v4468 = vunpack.c.0.s8 %v4467
          %v4469 = vlaneseq
          %v4470 = vshrl.u32 %v4469, 7
          %v4471 = vsub.s32 %v4468, %v4470
          %v4472 = vrot.slane %v4462, %v4471
          %v4474 = vunpack.c.l.s4 1966171168
          %v4475 = vunpack.c.0.s8 %v4474
          %v4476 = vlaneseq
          %v4477 = vshrl.u32 %v4476, 7
          %v4478 = vsub.s32 %v4475, %v4477
          %v4479 = vrot.slane %v4463, %v4478
          %v4481 = vunpack.c.l.s4 1966171168
          %v4482 = vunpack.c.0.s8 %v4481
          %v4483 = vlaneseq
          %v4484 = vshrl.u32 %v4483, 7
          %v4485 = vsub.s32 %v4482, %v4484
          %v4486 = vrot.slane %v4464, %v4485
          %v4488 = vunpack.c.l.s4 1966171168
          %v4489 = vunpack.c.0.s8 %v4488
          %v4490 = vlaneseq
          %v4491 = vshrl.u32 %v4490, 7
          %v4492 = vsub.s32 %v4489, %v4491
          %v4493 = vrot.slane %v4465, %v4492
          %v4494 = vcombine.low %v4472, %v4479
          %v4495 = vcombine.low %v4486, %v4493
          %v4497 = vunpack.c.l.s4 1966171168
          %v4498 = vunpack.c.0.s8 %v4497
          %v4499 = vlaneseq
          %v4500 = vshrl.u32 %v4499, 7
          %v4501 = vsub.s32 %v4498, %v4500
          %v4502 = vrot.slane %v4494, %v4501
          %v4504 = vunpack.c.l.s4 1966171168
          %v4505 = vunpack.c.0.s8 %v4504
          %v4506 = vlaneseq
          %v4507 = vshrl.u32 %v4506, 7
          %v4508 = vsub.s32 %v4505, %v4507
          %v4509 = vrot.slane %v4495, %v4508
          %v4510 = vcombine.low %v4502, %v4509
          %v4511 = vcombine.low %v2415, %v2419
          %v4512 = vcombine.low %v2423, %v2427
          %v4513 = vcombine.low %v2431, %v2435
          %v4514 = vcombine.low %v2439, %v2443
          %v4516 = vunpack.c.l.s4 1966171168
          %v4517 = vunpack.c.0.s8 %v4516
          %v4518 = vlaneseq
          %v4519 = vshrl.u32 %v4518, 7
          %v4520 = vsub.s32 %v4517, %v4519
          %v4521 = vrot.slane %v4511, %v4520
          %v4523 = vunpack.c.l.s4 1966171168
          %v4524 = vunpack.c.0.s8 %v4523
          %v4525 = vlaneseq
          %v4526 = vshrl.u32 %v4525, 7
          %v4527 = vsub.s32 %v4524, %v4526
          %v4528 = vrot.slane %v4512, %v4527
          %v4530 = vunpack.c.l.s4 1966171168
          %v4531 = vunpack.c.0.s8 %v4530
          %v4532 = vlaneseq
          %v4533 = vshrl.u32 %v4532, 7
          %v4534 = vsub.s32 %v4531, %v4533
          %v4535 = vrot.slane %v4513, %v4534
          %v4537 = vunpack.c.l.s4 1966171168
          %v4538 = vunpack.c.0.s8 %v4537
          %v4539 = vlaneseq
          %v4540 = vshrl.u32 %v4539, 7
          %v4541 = vsub.s32 %v4538, %v4540
          %v4542 = vrot.slane %v4514, %v4541
          %v4543 = vcombine.low %v4521, %v4528
          %v4544 = vcombine.low %v4535, %v4542
          %v4546 = vunpack.c.l.s4 1966171168
          %v4547 = vunpack.c.0.s8 %v4546
          %v4548 = vlaneseq
          %v4549 = vshrl.u32 %v4548, 7
          %v4550 = vsub.s32 %v4547, %v4549
          %v4551 = vrot.slane %v4543, %v4550
          %v4553 = vunpack.c.l.s4 1966171168
          %v4554 = vunpack.c.0.s8 %v4553
          %v4555 = vlaneseq
          %v4556 = vshrl.u32 %v4555, 7
          %v4557 = vsub.s32 %v4554, %v4556
          %v4558 = vrot.slane %v4544, %v4557
          %v4559 = vcombine.low %v4551, %v4558
          %v4560 = vcombine.low %v2447, %v2451
          %v4561 = vcombine.low %v2455, %v2459
          %v4562 = vcombine.low %v2463, %v2467
          %v4563 = vcombine.low %v2471, %v2475
          %v4565 = vunpack.c.l.s4 1966171168
          %v4566 = vunpack.c.0.s8 %v4565
          %v4567 = vlaneseq
          %v4568 = vshrl.u32 %v4567, 7
          %v4569 = vsub.s32 %v4566, %v4568
          %v4570 = vrot.slane %v4560, %v4569
          %v4572 = vunpack.c.l.s4 1966171168
          %v4573 = vunpack.c.0.s8 %v4572
          %v4574 = vlaneseq
          %v4575 = vshrl.u32 %v4574, 7
          %v4576 = vsub.s32 %v4573, %v4575
          %v4577 = vrot.slane %v4561, %v4576
          %v4579 = vunpack.c.l.s4 1966171168
          %v4580 = vunpack.c.0.s8 %v4579
          %v4581 = vlaneseq
          %v4582 = vshrl.u32 %v4581, 7
          %v4583 = vsub.s32 %v4580, %v4582
          %v4584 = vrot.slane %v4562, %v4583
          %v4586 = vunpack.c.l.s4 1966171168
          %v4587 = vunpack.c.0.s8 %v4586
          %v4588 = vlaneseq
          %v4589 = vshrl.u32 %v4588, 7
          %v4590 = vsub.s32 %v4587, %v4589
          %v4591 = vrot.slane %v4563, %v4590
          %v4592 = vcombine.low %v4570, %v4577
          %v4593 = vcombine.low %v4584, %v4591
          %v4595 = vunpack.c.l.s4 1966171168
          %v4596 = vunpack.c.0.s8 %v4595
          %v4597 = vlaneseq
          %v4598 = vshrl.u32 %v4597, 7
          %v4599 = vsub.s32 %v4596, %v4598
          %v4600 = vrot.slane %v4592, %v4599
          %v4602 = vunpack.c.l.s4 1966171168
          %v4603 = vunpack.c.0.s8 %v4602
          %v4604 = vlaneseq
          %v4605 = vshrl.u32 %v4604, 7
          %v4606 = vsub.s32 %v4603, %v4605
          %v4607 = vrot.slane %v4593, %v4606
          %v4608 = vcombine.low %v4600, %v4607
          %v4609 = vcombine.low %v2479, %v2483
          %v4610 = vcombine.low %v2487, %v2491
          %v4611 = vcombine.low %v2495, %v2499
          %v4612 = vcombine.low %v2503, %v2507
          %v4614 = vunpack.c.l.s4 1966171168
          %v4615 = vunpack.c.0.s8 %v4614
          %v4616 = vlaneseq
          %v4617 = vshrl.u32 %v4616, 7
          %v4618 = vsub.s32 %v4615, %v4617
          %v4619 = vrot.slane %v4609, %v4618
          %v4621 = vunpack.c.l.s4 1966171168
          %v4622 = vunpack.c.0.s8 %v4621
          %v4623 = vlaneseq
          %v4624 = vshrl.u32 %v4623, 7
          %v4625 = vsub.s32 %v4622, %v4624
          %v4626 = vrot.slane %v4610, %v4625
          %v4628 = vunpack.c.l.s4 1966171168
          %v4629 = vunpack.c.0.s8 %v4628
          %v4630 = vlaneseq
          %v4631 = vshrl.u32 %v4630, 7
          %v4632 = vsub.s32 %v4629, %v4631
          %v4633 = vrot.slane %v4611, %v4632
          %v4635 = vunpack.c.l.s4 1966171168
          %v4636 = vunpack.c.0.s8 %v4635
          %v4637 = vlaneseq
          %v4638 = vshrl.u32 %v4637, 7
          %v4639 = vsub.s32 %v4636, %v4638
          %v4640 = vrot.slane %v4612, %v4639
          %v4641 = vcombine.low %v4619, %v4626
          %v4642 = vcombine.low %v4633, %v4640
          %v4644 = vunpack.c.l.s4 1966171168
          %v4645 = vunpack.c.0.s8 %v4644
          %v4646 = vlaneseq
          %v4647 = vshrl.u32 %v4646, 7
          %v4648 = vsub.s32 %v4645, %v4647
          %v4649 = vrot.slane %v4641, %v4648
          %v4651 = vunpack.c.l.s4 1966171168
          %v4652 = vunpack.c.0.s8 %v4651
          %v4653 = vlaneseq
          %v4654 = vshrl.u32 %v4653, 7
          %v4655 = vsub.s32 %v4652, %v4654
          %v4656 = vrot.slane %v4642, %v4655
          %v4657 = vcombine.low %v4649, %v4656
          %v4658 = vcombine.low %v2511, %v2515
          %v4659 = vcombine.low %v2519, %v2523
          %v4660 = vcombine.low %v2527, %v2531
          %v4661 = vcombine.low %v2535, %v2539
          %v4663 = vunpack.c.l.s4 1966171168
          %v4664 = vunpack.c.0.s8 %v4663
          %v4665 = vlaneseq
          %v4666 = vshrl.u32 %v4665, 7
          %v4667 = vsub.s32 %v4664, %v4666
          %v4668 = vrot.slane %v4658, %v4667
          %v4670 = vunpack.c.l.s4 1966171168
          %v4671 = vunpack.c.0.s8 %v4670
          %v4672 = vlaneseq
          %v4673 = vshrl.u32 %v4672, 7
          %v4674 = vsub.s32 %v4671, %v4673
          %v4675 = vrot.slane %v4659, %v4674
          %v4677 = vunpack.c.l.s4 1966171168
          %v4678 = vunpack.c.0.s8 %v4677
          %v4679 = vlaneseq
          %v4680 = vshrl.u32 %v4679, 7
          %v4681 = vsub.s32 %v4678, %v4680
          %v4682 = vrot.slane %v4660, %v4681
          %v4684 = vunpack.c.l.s4 1966171168
          %v4685 = vunpack.c.0.s8 %v4684
          %v4686 = vlaneseq
          %v4687 = vshrl.u32 %v4686, 7
          %v4688 = vsub.s32 %v4685, %v4687
          %v4689 = vrot.slane %v4661, %v4688
          %v4690 = vcombine.low %v4668, %v4675
          %v4691 = vcombine.low %v4682, %v4689
          %v4693 = vunpack.c.l.s4 1966171168
          %v4694 = vunpack.c.0.s8 %v4693
          %v4695 = vlaneseq
          %v4696 = vshrl.u32 %v4695, 7
          %v4697 = vsub.s32 %v4694, %v4696
          %v4698 = vrot.slane %v4690, %v4697
          %v4700 = vunpack.c.l.s4 1966171168
          %v4701 = vunpack.c.0.s8 %v4700
          %v4702 = vlaneseq
          %v4703 = vshrl.u32 %v4702, 7
          %v4704 = vsub.s32 %v4701, %v4703
          %v4705 = vrot.slane %v4691, %v4704
          %v4706 = vcombine.low %v4698, %v4705
          %v4707 = vcombine.low %v2543, %v2547
          %v4708 = vcombine.low %v2551, %v2555
          %v4709 = vcombine.low %v2559, %v2563
          %v4710 = vcombine.low %v2567, %v2571
          %v4712 = vunpack.c.l.s4 1966171168
          %v4713 = vunpack.c.0.s8 %v4712
          %v4714 = vlaneseq
          %v4715 = vshrl.u32 %v4714, 7
          %v4716 = vsub.s32 %v4713, %v4715
          %v4717 = vrot.slane %v4707, %v4716
          %v4719 = vunpack.c.l.s4 1966171168
          %v4720 = vunpack.c.0.s8 %v4719
          %v4721 = vlaneseq
          %v4722 = vshrl.u32 %v4721, 7
          %v4723 = vsub.s32 %v4720, %v4722
          %v4724 = vrot.slane %v4708, %v4723
          %v4726 = vunpack.c.l.s4 1966171168
          %v4727 = vunpack.c.0.s8 %v4726
          %v4728 = vlaneseq
          %v4729 = vshrl.u32 %v4728, 7
          %v4730 = vsub.s32 %v4727, %v4729
          %v4731 = vrot.slane %v4709, %v4730
          %v4733 = vunpack.c.l.s4 1966171168
          %v4734 = vunpack.c.0.s8 %v4733
          %v4735 = vlaneseq
          %v4736 = vshrl.u32 %v4735, 7
          %v4737 = vsub.s32 %v4734, %v4736
          %v4738 = vrot.slane %v4710, %v4737
          %v4739 = vcombine.low %v4717, %v4724
          %v4740 = vcombine.low %v4731, %v4738
          %v4742 = vunpack.c.l.s4 1966171168
          %v4743 = vunpack.c.0.s8 %v4742
          %v4744 = vlaneseq
          %v4745 = vshrl.u32 %v4744, 7
          %v4746 = vsub.s32 %v4743, %v4745
          %v4747 = vrot.slane %v4739, %v4746
          %v4749 = vunpack.c.l.s4 1966171168
          %v4750 = vunpack.c.0.s8 %v4749
          %v4751 = vlaneseq
          %v4752 = vshrl.u32 %v4751, 7
          %v4753 = vsub.s32 %v4750, %v4752
          %v4754 = vrot.slane %v4740, %v4753
          %v4755 = vcombine.low %v4747, %v4754
          %v4756 = vcombine.low %v2575, %v2579
          %v4757 = vcombine.low %v2583, %v2587
          %v4758 = vcombine.low %v2591, %v2595
          %v4759 = vcombine.low %v2599, %v2603
          %v4761 = vunpack.c.l.s4 1966171168
          %v4762 = vunpack.c.0.s8 %v4761
          %v4763 = vlaneseq
          %v4764 = vshrl.u32 %v4763, 7
          %v4765 = vsub.s32 %v4762, %v4764
          %v4766 = vrot.slane %v4756, %v4765
          %v4768 = vunpack.c.l.s4 1966171168
          %v4769 = vunpack.c.0.s8 %v4768
          %v4770 = vlaneseq
          %v4771 = vshrl.u32 %v4770, 7
          %v4772 = vsub.s32 %v4769, %v4771
          %v4773 = vrot.slane %v4757, %v4772
          %v4775 = vunpack.c.l.s4 1966171168
          %v4776 = vunpack.c.0.s8 %v4775
          %v4777 = vlaneseq
          %v4778 = vshrl.u32 %v4777, 7
          %v4779 = vsub.s32 %v4776, %v4778
          %v4780 = vrot.slane %v4758, %v4779
          %v4782 = vunpack.c.l.s4 1966171168
          %v4783 = vunpack.c.0.s8 %v4782
          %v4784 = vlaneseq
          %v4785 = vshrl.u32 %v4784, 7
          %v4786 = vsub.s32 %v4783, %v4785
          %v4787 = vrot.slane %v4759, %v4786
          %v4788 = vcombine.low %v4766, %v4773
          %v4789 = vcombine.low %v4780, %v4787
          %v4791 = vunpack.c.l.s4 1966171168
          %v4792 = vunpack.c.0.s8 %v4791
          %v4793 = vlaneseq
          %v4794 = vshrl.u32 %v4793, 7
          %v4795 = vsub.s32 %v4792, %v4794
          %v4796 = vrot.slane %v4788, %v4795
          %v4798 = vunpack.c.l.s4 1966171168
          %v4799 = vunpack.c.0.s8 %v4798
          %v4800 = vlaneseq
          %v4801 = vshrl.u32 %v4800, 7
          %v4802 = vsub.s32 %v4799, %v4801
          %v4803 = vrot.slane %v4789, %v4802
          %v4804 = vcombine.low %v4796, %v4803
          %v4805 = vcombine.low %v2607, %v2611
          %v4806 = vcombine.low %v2615, %v2619
          %v4807 = vcombine.low %v2623, %v2627
          %v4808 = vcombine.low %v2631, %v2635
          %v4810 = vunpack.c.l.s4 1966171168
          %v4811 = vunpack.c.0.s8 %v4810
          %v4812 = vlaneseq
          %v4813 = vshrl.u32 %v4812, 7
          %v4814 = vsub.s32 %v4811, %v4813
          %v4815 = vrot.slane %v4805, %v4814
          %v4817 = vunpack.c.l.s4 1966171168
          %v4818 = vunpack.c.0.s8 %v4817
          %v4819 = vlaneseq
          %v4820 = vshrl.u32 %v4819, 7
          %v4821 = vsub.s32 %v4818, %v4820
          %v4822 = vrot.slane %v4806, %v4821
          %v4824 = vunpack.c.l.s4 1966171168
          %v4825 = vunpack.c.0.s8 %v4824
          %v4826 = vlaneseq
          %v4827 = vshrl.u32 %v4826, 7
          %v4828 = vsub.s32 %v4825, %v4827
          %v4829 = vrot.slane %v4807, %v4828
          %v4831 = vunpack.c.l.s4 1966171168
          %v4832 = vunpack.c.0.s8 %v4831
          %v4833 = vlaneseq
          %v4834 = vshrl.u32 %v4833, 7
          %v4835 = vsub.s32 %v4832, %v4834
          %v4836 = vrot.slane %v4808, %v4835
          %v4837 = vcombine.low %v4815, %v4822
          %v4838 = vcombine.low %v4829, %v4836
          %v4840 = vunpack.c.l.s4 1966171168
          %v4841 = vunpack.c.0.s8 %v4840
          %v4842 = vlaneseq
          %v4843 = vshrl.u32 %v4842, 7
          %v4844 = vsub.s32 %v4841, %v4843
          %v4845 = vrot.slane %v4837, %v4844
          %v4847 = vunpack.c.l.s4 1966171168
          %v4848 = vunpack.c.0.s8 %v4847
          %v4849 = vlaneseq
          %v4850 = vshrl.u32 %v4849, 7
          %v4851 = vsub.s32 %v4848, %v4850
          %v4852 = vrot.slane %v4838, %v4851
          %v4853 = vcombine.low %v4845, %v4852
          %v4854 = vcombine.low %v2639, %v2643
          %v4855 = vcombine.low %v2647, %v2651
          %v4856 = vcombine.low %v2655, %v2659
          %v4857 = vcombine.low %v2663, %v2667
          %v4859 = vunpack.c.l.s4 1966171168
          %v4860 = vunpack.c.0.s8 %v4859
          %v4861 = vlaneseq
          %v4862 = vshrl.u32 %v4861, 7
          %v4863 = vsub.s32 %v4860, %v4862
          %v4864 = vrot.slane %v4854, %v4863
          %v4866 = vunpack.c.l.s4 1966171168
          %v4867 = vunpack.c.0.s8 %v4866
          %v4868 = vlaneseq
          %v4869 = vshrl.u32 %v4868, 7
          %v4870 = vsub.s32 %v4867, %v4869
          %v4871 = vrot.slane %v4855, %v4870
          %v4873 = vunpack.c.l.s4 1966171168
          %v4874 = vunpack.c.0.s8 %v4873
          %v4875 = vlaneseq
          %v4876 = vshrl.u32 %v4875, 7
          %v4877 = vsub.s32 %v4874, %v4876
          %v4878 = vrot.slane %v4856, %v4877
          %v4880 = vunpack.c.l.s4 1966171168
          %v4881 = vunpack.c.0.s8 %v4880
          %v4882 = vlaneseq
          %v4883 = vshrl.u32 %v4882, 7
          %v4884 = vsub.s32 %v4881, %v4883
          %v4885 = vrot.slane %v4857, %v4884
          %v4886 = vcombine.low %v4864, %v4871
          %v4887 = vcombine.low %v4878, %v4885
          %v4889 = vunpack.c.l.s4 1966171168
          %v4890 = vunpack.c.0.s8 %v4889
          %v4891 = vlaneseq
          %v4892 = vshrl.u32 %v4891, 7
          %v4893 = vsub.s32 %v4890, %v4892
          %v4894 = vrot.slane %v4886, %v4893
          %v4896 = vunpack.c.l.s4 1966171168
          %v4897 = vunpack.c.0.s8 %v4896
          %v4898 = vlaneseq
          %v4899 = vshrl.u32 %v4898, 7
          %v4900 = vsub.s32 %v4897, %v4899
          %v4901 = vrot.slane %v4887, %v4900
          %v4902 = vcombine.low %v4894, %v4901
          %v4903 = vcombine.low %v2671, %v2675
          %v4904 = vcombine.low %v2679, %v2683
          %v4905 = vcombine.low %v2687, %v2691
          %v4906 = vcombine.low %v2695, %v2699
          %v4908 = vunpack.c.l.s4 1966171168
          %v4909 = vunpack.c.0.s8 %v4908
          %v4910 = vlaneseq
          %v4911 = vshrl.u32 %v4910, 7
          %v4912 = vsub.s32 %v4909, %v4911
          %v4913 = vrot.slane %v4903, %v4912
          %v4915 = vunpack.c.l.s4 1966171168
          %v4916 = vunpack.c.0.s8 %v4915
          %v4917 = vlaneseq
          %v4918 = vshrl.u32 %v4917, 7
          %v4919 = vsub.s32 %v4916, %v4918
          %v4920 = vrot.slane %v4904, %v4919
          %v4922 = vunpack.c.l.s4 1966171168
          %v4923 = vunpack.c.0.s8 %v4922
          %v4924 = vlaneseq
          %v4925 = vshrl.u32 %v4924, 7
          %v4926 = vsub.s32 %v4923, %v4925
          %v4927 = vrot.slane %v4905, %v4926
          %v4929 = vunpack.c.l.s4 1966171168
          %v4930 = vunpack.c.0.s8 %v4929
          %v4931 = vlaneseq
          %v4932 = vshrl.u32 %v4931, 7
          %v4933 = vsub.s32 %v4930, %v4932
          %v4934 = vrot.slane %v4906, %v4933
          %v4935 = vcombine.low %v4913, %v4920
          %v4936 = vcombine.low %v4927, %v4934
          %v4938 = vunpack.c.l.s4 1966171168
          %v4939 = vunpack.c.0.s8 %v4938
          %v4940 = vlaneseq
          %v4941 = vshrl.u32 %v4940, 7
          %v4942 = vsub.s32 %v4939, %v4941
          %v4943 = vrot.slane %v4935, %v4942
          %v4945 = vunpack.c.l.s4 1966171168
          %v4946 = vunpack.c.0.s8 %v4945
          %v4947 = vlaneseq
          %v4948 = vshrl.u32 %v4947, 7
          %v4949 = vsub.s32 %v4946, %v4948
          %v4950 = vrot.slane %v4936, %v4949
          %v4951 = vcombine.low %v4943, %v4950
          %v4952 = vcombine.low %v2703, %v2707
          %v4953 = vcombine.low %v2711, %v2715
          %v4954 = vcombine.low %v2719, %v2723
          %v4955 = vcombine.low %v2727, %v2731
          %v4957 = vunpack.c.l.s4 1966171168
          %v4958 = vunpack.c.0.s8 %v4957
          %v4959 = vlaneseq
          %v4960 = vshrl.u32 %v4959, 7
          %v4961 = vsub.s32 %v4958, %v4960
          %v4962 = vrot.slane %v4952, %v4961
          %v4964 = vunpack.c.l.s4 1966171168
          %v4965 = vunpack.c.0.s8 %v4964
          %v4966 = vlaneseq
          %v4967 = vshrl.u32 %v4966, 7
          %v4968 = vsub.s32 %v4965, %v4967
          %v4969 = vrot.slane %v4953, %v4968
          %v4971 = vunpack.c.l.s4 1966171168
          %v4972 = vunpack.c.0.s8 %v4971
          %v4973 = vlaneseq
          %v4974 = vshrl.u32 %v4973, 7
          %v4975 = vsub.s32 %v4972, %v4974
          %v4976 = vrot.slane %v4954, %v4975
          %v4978 = vunpack.c.l.s4 1966171168
          %v4979 = vunpack.c.0.s8 %v4978
          %v4980 = vlaneseq
          %v4981 = vshrl.u32 %v4980, 7
          %v4982 = vsub.s32 %v4979, %v4981
          %v4983 = vrot.slane %v4955, %v4982
          %v4984 = vcombine.low %v4962, %v4969
          %v4985 = vcombine.low %v4976, %v4983
          %v4987 = vunpack.c.l.s4 1966171168
          %v4988 = vunpack.c.0.s8 %v4987
          %v4989 = vlaneseq
          %v4990 = vshrl.u32 %v4989, 7
          %v4991 = vsub.s32 %v4988, %v4990
          %v4992 = vrot.slane %v4984, %v4991
          %v4994 = vunpack.c.l.s4 1966171168
          %v4995 = vunpack.c.0.s8 %v4994
          %v4996 = vlaneseq
          %v4997 = vshrl.u32 %v4996, 7
          %v4998 = vsub.s32 %v4995, %v4997
          %v4999 = vrot.slane %v4985, %v4998
          %v5000 = vcombine.low %v4992, %v4999
          %v5001 = vcombine.low %v2735, %v2739
          %v5002 = vcombine.low %v2743, %v2747
          %v5003 = vcombine.low %v2751, %v2755
          %v5004 = vcombine.low %v2759, %v2763
          %v5006 = vunpack.c.l.s4 1966171168
          %v5007 = vunpack.c.0.s8 %v5006
          %v5008 = vlaneseq
          %v5009 = vshrl.u32 %v5008, 7
          %v5010 = vsub.s32 %v5007, %v5009
          %v5011 = vrot.slane %v5001, %v5010
          %v5013 = vunpack.c.l.s4 1966171168
          %v5014 = vunpack.c.0.s8 %v5013
          %v5015 = vlaneseq
          %v5016 = vshrl.u32 %v5015, 7
          %v5017 = vsub.s32 %v5014, %v5016
          %v5018 = vrot.slane %v5002, %v5017
          %v5020 = vunpack.c.l.s4 1966171168
          %v5021 = vunpack.c.0.s8 %v5020
          %v5022 = vlaneseq
          %v5023 = vshrl.u32 %v5022, 7
          %v5024 = vsub.s32 %v5021, %v5023
          %v5025 = vrot.slane %v5003, %v5024
          %v5027 = vunpack.c.l.s4 1966171168
          %v5028 = vunpack.c.0.s8 %v5027
          %v5029 = vlaneseq
          %v5030 = vshrl.u32 %v5029, 7
          %v5031 = vsub.s32 %v5028, %v5030
          %v5032 = vrot.slane %v5004, %v5031
          %v5033 = vcombine.low %v5011, %v5018
          %v5034 = vcombine.low %v5025, %v5032
          %v5036 = vunpack.c.l.s4 1966171168
          %v5037 = vunpack.c.0.s8 %v5036
          %v5038 = vlaneseq
          %v5039 = vshrl.u32 %v5038, 7
          %v5040 = vsub.s32 %v5037, %v5039
          %v5041 = vrot.slane %v5033, %v5040
          %v5043 = vunpack.c.l.s4 1966171168
          %v5044 = vunpack.c.0.s8 %v5043
          %v5045 = vlaneseq
          %v5046 = vshrl.u32 %v5045, 7
          %v5047 = vsub.s32 %v5044, %v5046
          %v5048 = vrot.slane %v5034, %v5047
          %v5049 = vcombine.low %v5041, %v5048
          %v5050 = vcombine.low %v2767, %v2771
          %v5051 = vcombine.low %v2775, %v2779
          %v5052 = vcombine.low %v2783, %v2787
          %v5053 = vcombine.low %v2791, %v2795
          %v5055 = vunpack.c.l.s4 1966171168
          %v5056 = vunpack.c.0.s8 %v5055
          %v5057 = vlaneseq
          %v5058 = vshrl.u32 %v5057, 7
          %v5059 = vsub.s32 %v5056, %v5058
          %v5060 = vrot.slane %v5050, %v5059
          %v5062 = vunpack.c.l.s4 1966171168
          %v5063 = vunpack.c.0.s8 %v5062
          %v5064 = vlaneseq
          %v5065 = vshrl.u32 %v5064, 7
          %v5066 = vsub.s32 %v5063, %v5065
          %v5067 = vrot.slane %v5051, %v5066
          %v5069 = vunpack.c.l.s4 1966171168
          %v5070 = vunpack.c.0.s8 %v5069
          %v5071 = vlaneseq
          %v5072 = vshrl.u32 %v5071, 7
          %v5073 = vsub.s32 %v5070, %v5072
          %v5074 = vrot.slane %v5052, %v5073
          %v5076 = vunpack.c.l.s4 1966171168
          %v5077 = vunpack.c.0.s8 %v5076
          %v5078 = vlaneseq
          %v5079 = vshrl.u32 %v5078, 7
          %v5080 = vsub.s32 %v5077, %v5079
          %v5081 = vrot.slane %v5053, %v5080
          %v5082 = vcombine.low %v5060, %v5067
          %v5083 = vcombine.low %v5074, %v5081
          %v5085 = vunpack.c.l.s4 1966171168
          %v5086 = vunpack.c.0.s8 %v5085
          %v5087 = vlaneseq
          %v5088 = vshrl.u32 %v5087, 7
          %v5089 = vsub.s32 %v5086, %v5088
          %v5090 = vrot.slane %v5082, %v5089
          %v5092 = vunpack.c.l.s4 1966171168
          %v5093 = vunpack.c.0.s8 %v5092
          %v5094 = vlaneseq
          %v5095 = vshrl.u32 %v5094, 7
          %v5096 = vsub.s32 %v5093, %v5095
          %v5097 = vrot.slane %v5083, %v5096
          %v5098 = vcombine.low %v5090, %v5097
          %v5099 = vcombine.low %v2799, %v2803
          %v5100 = vcombine.low %v2807, %v2811
          %v5101 = vcombine.low %v2815, %v2819
          %v5102 = vcombine.low %v2823, %v2827
          %v5104 = vunpack.c.l.s4 1966171168
          %v5105 = vunpack.c.0.s8 %v5104
          %v5106 = vlaneseq
          %v5107 = vshrl.u32 %v5106, 7
          %v5108 = vsub.s32 %v5105, %v5107
          %v5109 = vrot.slane %v5099, %v5108
          %v5111 = vunpack.c.l.s4 1966171168
          %v5112 = vunpack.c.0.s8 %v5111
          %v5113 = vlaneseq
          %v5114 = vshrl.u32 %v5113, 7
          %v5115 = vsub.s32 %v5112, %v5114
          %v5116 = vrot.slane %v5100, %v5115
          %v5118 = vunpack.c.l.s4 1966171168
          %v5119 = vunpack.c.0.s8 %v5118
          %v5120 = vlaneseq
          %v5121 = vshrl.u32 %v5120, 7
          %v5122 = vsub.s32 %v5119, %v5121
          %v5123 = vrot.slane %v5101, %v5122
          %v5125 = vunpack.c.l.s4 1966171168
          %v5126 = vunpack.c.0.s8 %v5125
          %v5127 = vlaneseq
          %v5128 = vshrl.u32 %v5127, 7
          %v5129 = vsub.s32 %v5126, %v5128
          %v5130 = vrot.slane %v5102, %v5129
          %v5131 = vcombine.low %v5109, %v5116
          %v5132 = vcombine.low %v5123, %v5130
          %v5134 = vunpack.c.l.s4 1966171168
          %v5135 = vunpack.c.0.s8 %v5134
          %v5136 = vlaneseq
          %v5137 = vshrl.u32 %v5136, 7
          %v5138 = vsub.s32 %v5135, %v5137
          %v5139 = vrot.slane %v5131, %v5138
          %v5141 = vunpack.c.l.s4 1966171168
          %v5142 = vunpack.c.0.s8 %v5141
          %v5143 = vlaneseq
          %v5144 = vshrl.u32 %v5143, 7
          %v5145 = vsub.s32 %v5142, %v5144
          %v5146 = vrot.slane %v5132, %v5145
          %v5147 = vcombine.low %v5139, %v5146
          %v5148 = vcombine.low %v2831, %v2835
          %v5149 = vcombine.low %v2839, %v2843
          %v5150 = vcombine.low %v2847, %v2851
          %v5151 = vcombine.low %v2855, %v2859
          %v5153 = vunpack.c.l.s4 1966171168
          %v5154 = vunpack.c.0.s8 %v5153
          %v5155 = vlaneseq
          %v5156 = vshrl.u32 %v5155, 7
          %v5157 = vsub.s32 %v5154, %v5156
          %v5158 = vrot.slane %v5148, %v5157
          %v5160 = vunpack.c.l.s4 1966171168
          %v5161 = vunpack.c.0.s8 %v5160
          %v5162 = vlaneseq
          %v5163 = vshrl.u32 %v5162, 7
          %v5164 = vsub.s32 %v5161, %v5163
          %v5165 = vrot.slane %v5149, %v5164
          %v5167 = vunpack.c.l.s4 1966171168
          %v5168 = vunpack.c.0.s8 %v5167
          %v5169 = vlaneseq
          %v5170 = vshrl.u32 %v5169, 7
          %v5171 = vsub.s32 %v5168, %v5170
          %v5172 = vrot.slane %v5150, %v5171
          %v5174 = vunpack.c.l.s4 1966171168
          %v5175 = vunpack.c.0.s8 %v5174
          %v5176 = vlaneseq
          %v5177 = vshrl.u32 %v5176, 7
          %v5178 = vsub.s32 %v5175, %v5177
          %v5179 = vrot.slane %v5151, %v5178
          %v5180 = vcombine.low %v5158, %v5165
          %v5181 = vcombine.low %v5172, %v5179
          %v5183 = vunpack.c.l.s4 1966171168
          %v5184 = vunpack.c.0.s8 %v5183
          %v5185 = vlaneseq
          %v5186 = vshrl.u32 %v5185, 7
          %v5187 = vsub.s32 %v5184, %v5186
          %v5188 = vrot.slane %v5180, %v5187
          %v5190 = vunpack.c.l.s4 1966171168
          %v5191 = vunpack.c.0.s8 %v5190
          %v5192 = vlaneseq
          %v5193 = vshrl.u32 %v5192, 7
          %v5194 = vsub.s32 %v5191, %v5193
          %v5195 = vrot.slane %v5181, %v5194
          %v5196 = vcombine.low %v5188, %v5195
          %v5197 = vcombine.low %v2863, %v2867
          %v5198 = vcombine.low %v2871, %v2875
          %v5199 = vcombine.low %v2879, %v2883
          %v5200 = vcombine.low %v2887, %v2891
          %v5202 = vunpack.c.l.s4 1966171168
          %v5203 = vunpack.c.0.s8 %v5202
          %v5204 = vlaneseq
          %v5205 = vshrl.u32 %v5204, 7
          %v5206 = vsub.s32 %v5203, %v5205
          %v5207 = vrot.slane %v5197, %v5206
          %v5209 = vunpack.c.l.s4 1966171168
          %v5210 = vunpack.c.0.s8 %v5209
          %v5211 = vlaneseq
          %v5212 = vshrl.u32 %v5211, 7
          %v5213 = vsub.s32 %v5210, %v5212
          %v5214 = vrot.slane %v5198, %v5213
          %v5216 = vunpack.c.l.s4 1966171168
          %v5217 = vunpack.c.0.s8 %v5216
          %v5218 = vlaneseq
          %v5219 = vshrl.u32 %v5218, 7
          %v5220 = vsub.s32 %v5217, %v5219
          %v5221 = vrot.slane %v5199, %v5220
          %v5223 = vunpack.c.l.s4 1966171168
          %v5224 = vunpack.c.0.s8 %v5223
          %v5225 = vlaneseq
          %v5226 = vshrl.u32 %v5225, 7
          %v5227 = vsub.s32 %v5224, %v5226
          %v5228 = vrot.slane %v5200, %v5227
          %v5229 = vcombine.low %v5207, %v5214
          %v5230 = vcombine.low %v5221, %v5228
          %v5232 = vunpack.c.l.s4 1966171168
          %v5233 = vunpack.c.0.s8 %v5232
          %v5234 = vlaneseq
          %v5235 = vshrl.u32 %v5234, 7
          %v5236 = vsub.s32 %v5233, %v5235
          %v5237 = vrot.slane %v5229, %v5236
          %v5239 = vunpack.c.l.s4 1966171168
          %v5240 = vunpack.c.0.s8 %v5239
          %v5241 = vlaneseq
          %v5242 = vshrl.u32 %v5241, 7
          %v5243 = vsub.s32 %v5240, %v5242
          %v5244 = vrot.slane %v5230, %v5243
          %v5245 = vcombine.low %v5237, %v5244
          %v5246 = vcombine.low %v2895, %v2899
          %v5247 = vcombine.low %v2903, %v2907
          %v5248 = vcombine.low %v2911, %v2915
          %v5249 = vcombine.low %v2919, %v2923
          %v5251 = vunpack.c.l.s4 1966171168
          %v5252 = vunpack.c.0.s8 %v5251
          %v5253 = vlaneseq
          %v5254 = vshrl.u32 %v5253, 7
          %v5255 = vsub.s32 %v5252, %v5254
          %v5256 = vrot.slane %v5246, %v5255
          %v5258 = vunpack.c.l.s4 1966171168
          %v5259 = vunpack.c.0.s8 %v5258
          %v5260 = vlaneseq
          %v5261 = vshrl.u32 %v5260, 7
          %v5262 = vsub.s32 %v5259, %v5261
          %v5263 = vrot.slane %v5247, %v5262
          %v5265 = vunpack.c.l.s4 1966171168
          %v5266 = vunpack.c.0.s8 %v5265
          %v5267 = vlaneseq
          %v5268 = vshrl.u32 %v5267, 7
          %v5269 = vsub.s32 %v5266, %v5268
          %v5270 = vrot.slane %v5248, %v5269
          %v5272 = vunpack.c.l.s4 1966171168
          %v5273 = vunpack.c.0.s8 %v5272
          %v5274 = vlaneseq
          %v5275 = vshrl.u32 %v5274, 7
          %v5276 = vsub.s32 %v5273, %v5275
          %v5277 = vrot.slane %v5249, %v5276
          %v5278 = vcombine.low %v5256, %v5263
          %v5279 = vcombine.low %v5270, %v5277
          %v5281 = vunpack.c.l.s4 1966171168
          %v5282 = vunpack.c.0.s8 %v5281
          %v5283 = vlaneseq
          %v5284 = vshrl.u32 %v5283, 7
          %v5285 = vsub.s32 %v5282, %v5284
          %v5286 = vrot.slane %v5278, %v5285
          %v5288 = vunpack.c.l.s4 1966171168
          %v5289 = vunpack.c.0.s8 %v5288
          %v5290 = vlaneseq
          %v5291 = vshrl.u32 %v5290, 7
          %v5292 = vsub.s32 %v5289, %v5291
          %v5293 = vrot.slane %v5279, %v5292
          %v5294 = vcombine.low %v5286, %v5293
          %v5295 = vcombine.low %v2927, %v2931
          %v5296 = vcombine.low %v2935, %v2939
          %v5297 = vcombine.low %v2943, %v2947
          %v5298 = vcombine.low %v2951, %v2955
          %v5300 = vunpack.c.l.s4 1966171168
          %v5301 = vunpack.c.0.s8 %v5300
          %v5302 = vlaneseq
          %v5303 = vshrl.u32 %v5302, 7
          %v5304 = vsub.s32 %v5301, %v5303
          %v5305 = vrot.slane %v5295, %v5304
          %v5307 = vunpack.c.l.s4 1966171168
          %v5308 = vunpack.c.0.s8 %v5307
          %v5309 = vlaneseq
          %v5310 = vshrl.u32 %v5309, 7
          %v5311 = vsub.s32 %v5308, %v5310
          %v5312 = vrot.slane %v5296, %v5311
          %v5314 = vunpack.c.l.s4 1966171168
          %v5315 = vunpack.c.0.s8 %v5314
          %v5316 = vlaneseq
          %v5317 = vshrl.u32 %v5316, 7
          %v5318 = vsub.s32 %v5315, %v5317
          %v5319 = vrot.slane %v5297, %v5318
          %v5321 = vunpack.c.l.s4 1966171168
          %v5322 = vunpack.c.0.s8 %v5321
          %v5323 = vlaneseq
          %v5324 = vshrl.u32 %v5323, 7
          %v5325 = vsub.s32 %v5322, %v5324
          %v5326 = vrot.slane %v5298, %v5325
          %v5327 = vcombine.low %v5305, %v5312
          %v5328 = vcombine.low %v5319, %v5326
          %v5330 = vunpack.c.l.s4 1966171168
          %v5331 = vunpack.c.0.s8 %v5330
          %v5332 = vlaneseq
          %v5333 = vshrl.u32 %v5332, 7
          %v5334 = vsub.s32 %v5331, %v5333
          %v5335 = vrot.slane %v5327, %v5334
          %v5337 = vunpack.c.l.s4 1966171168
          %v5338 = vunpack.c.0.s8 %v5337
          %v5339 = vlaneseq
          %v5340 = vshrl.u32 %v5339, 7
          %v5341 = vsub.s32 %v5338, %v5340
          %v5342 = vrot.slane %v5328, %v5341
          %v5343 = vcombine.low %v5335, %v5342
          %v5344 = vcombine.low %v2959, %v2963
          %v5345 = vcombine.low %v2967, %v2971
          %v5346 = vcombine.low %v2975, %v2979
          %v5347 = vcombine.low %v2983, %v2987
          %v5349 = vunpack.c.l.s4 1966171168
          %v5350 = vunpack.c.0.s8 %v5349
          %v5351 = vlaneseq
          %v5352 = vshrl.u32 %v5351, 7
          %v5353 = vsub.s32 %v5350, %v5352
          %v5354 = vrot.slane %v5344, %v5353
          %v5356 = vunpack.c.l.s4 1966171168
          %v5357 = vunpack.c.0.s8 %v5356
          %v5358 = vlaneseq
          %v5359 = vshrl.u32 %v5358, 7
          %v5360 = vsub.s32 %v5357, %v5359
          %v5361 = vrot.slane %v5345, %v5360
          %v5363 = vunpack.c.l.s4 1966171168
          %v5364 = vunpack.c.0.s8 %v5363
          %v5365 = vlaneseq
          %v5366 = vshrl.u32 %v5365, 7
          %v5367 = vsub.s32 %v5364, %v5366
          %v5368 = vrot.slane %v5346, %v5367
          %v5370 = vunpack.c.l.s4 1966171168
          %v5371 = vunpack.c.0.s8 %v5370
          %v5372 = vlaneseq
          %v5373 = vshrl.u32 %v5372, 7
          %v5374 = vsub.s32 %v5371, %v5373
          %v5375 = vrot.slane %v5347, %v5374
          %v5376 = vcombine.low %v5354, %v5361
          %v5377 = vcombine.low %v5368, %v5375
          %v5379 = vunpack.c.l.s4 1966171168
          %v5380 = vunpack.c.0.s8 %v5379
          %v5381 = vlaneseq
          %v5382 = vshrl.u32 %v5381, 7
          %v5383 = vsub.s32 %v5380, %v5382
          %v5384 = vrot.slane %v5376, %v5383
          %v5386 = vunpack.c.l.s4 1966171168
          %v5387 = vunpack.c.0.s8 %v5386
          %v5388 = vlaneseq
          %v5389 = vshrl.u32 %v5388, 7
          %v5390 = vsub.s32 %v5387, %v5389
          %v5391 = vrot.slane %v5377, %v5390
          %v5392 = vcombine.low %v5384, %v5391
          %v5393 = vcombine.low %v2991, %v2995
          %v5394 = vcombine.low %v2999, %v3003
          %v5395 = vcombine.low %v3007, %v3011
          %v5396 = vcombine.low %v3015, %v3019
          %v5398 = vunpack.c.l.s4 1966171168
          %v5399 = vunpack.c.0.s8 %v5398
          %v5400 = vlaneseq
          %v5401 = vshrl.u32 %v5400, 7
          %v5402 = vsub.s32 %v5399, %v5401
          %v5403 = vrot.slane %v5393, %v5402
          %v5405 = vunpack.c.l.s4 1966171168
          %v5406 = vunpack.c.0.s8 %v5405
          %v5407 = vlaneseq
          %v5408 = vshrl.u32 %v5407, 7
          %v5409 = vsub.s32 %v5406, %v5408
          %v5410 = vrot.slane %v5394, %v5409
          %v5412 = vunpack.c.l.s4 1966171168
          %v5413 = vunpack.c.0.s8 %v5412
          %v5414 = vlaneseq
          %v5415 = vshrl.u32 %v5414, 7
          %v5416 = vsub.s32 %v5413, %v5415
          %v5417 = vrot.slane %v5395, %v5416
          %v5419 = vunpack.c.l.s4 1966171168
          %v5420 = vunpack.c.0.s8 %v5419
          %v5421 = vlaneseq
          %v5422 = vshrl.u32 %v5421, 7
          %v5423 = vsub.s32 %v5420, %v5422
          %v5424 = vrot.slane %v5396, %v5423
          %v5425 = vcombine.low %v5403, %v5410
          %v5426 = vcombine.low %v5417, %v5424
          %v5428 = vunpack.c.l.s4 1966171168
          %v5429 = vunpack.c.0.s8 %v5428
          %v5430 = vlaneseq
          %v5431 = vshrl.u32 %v5430, 7
          %v5432 = vsub.s32 %v5429, %v5431
          %v5433 = vrot.slane %v5425, %v5432
          %v5435 = vunpack.c.l.s4 1966171168
          %v5436 = vunpack.c.0.s8 %v5435
          %v5437 = vlaneseq
          %v5438 = vshrl.u32 %v5437, 7
          %v5439 = vsub.s32 %v5436, %v5438
          %v5440 = vrot.slane %v5426, %v5439
          %v5441 = vcombine.low %v5433, %v5440
          %v5442 = vcombine.low %v3023, %v3027
          %v5443 = vcombine.low %v3031, %v3035
          %v5444 = vcombine.low %v3039, %v3043
          %v5445 = vcombine.low %v3047, %v3051
          %v5447 = vunpack.c.l.s4 1966171168
          %v5448 = vunpack.c.0.s8 %v5447
          %v5449 = vlaneseq
          %v5450 = vshrl.u32 %v5449, 7
          %v5451 = vsub.s32 %v5448, %v5450
          %v5452 = vrot.slane %v5442, %v5451
          %v5454 = vunpack.c.l.s4 1966171168
          %v5455 = vunpack.c.0.s8 %v5454
          %v5456 = vlaneseq
          %v5457 = vshrl.u32 %v5456, 7
          %v5458 = vsub.s32 %v5455, %v5457
          %v5459 = vrot.slane %v5443, %v5458
          %v5461 = vunpack.c.l.s4 1966171168
          %v5462 = vunpack.c.0.s8 %v5461
          %v5463 = vlaneseq
          %v5464 = vshrl.u32 %v5463, 7
          %v5465 = vsub.s32 %v5462, %v5464
          %v5466 = vrot.slane %v5444, %v5465
          %v5468 = vunpack.c.l.s4 1966171168
          %v5469 = vunpack.c.0.s8 %v5468
          %v5470 = vlaneseq
          %v5471 = vshrl.u32 %v5470, 7
          %v5472 = vsub.s32 %v5469, %v5471
          %v5473 = vrot.slane %v5445, %v5472
          %v5474 = vcombine.low %v5452, %v5459
          %v5475 = vcombine.low %v5466, %v5473
          %v5477 = vunpack.c.l.s4 1966171168
          %v5478 = vunpack.c.0.s8 %v5477
          %v5479 = vlaneseq
          %v5480 = vshrl.u32 %v5479, 7
          %v5481 = vsub.s32 %v5478, %v5480
          %v5482 = vrot.slane %v5474, %v5481
          %v5484 = vunpack.c.l.s4 1966171168
          %v5485 = vunpack.c.0.s8 %v5484
          %v5486 = vlaneseq
          %v5487 = vshrl.u32 %v5486, 7
          %v5488 = vsub.s32 %v5485, %v5487
          %v5489 = vrot.slane %v5475, %v5488
          %v5490 = vcombine.low %v5482, %v5489
          %v5491 = vcombine.low %v3055, %v3059
          %v5492 = vcombine.low %v3063, %v3067
          %v5493 = vcombine.low %v3071, %v3075
          %v5494 = vcombine.low %v3079, %v3083
          %v5496 = vunpack.c.l.s4 1966171168
          %v5497 = vunpack.c.0.s8 %v5496
          %v5498 = vlaneseq
          %v5499 = vshrl.u32 %v5498, 7
          %v5500 = vsub.s32 %v5497, %v5499
          %v5501 = vrot.slane %v5491, %v5500
          %v5503 = vunpack.c.l.s4 1966171168
          %v5504 = vunpack.c.0.s8 %v5503
          %v5505 = vlaneseq
          %v5506 = vshrl.u32 %v5505, 7
          %v5507 = vsub.s32 %v5504, %v5506
          %v5508 = vrot.slane %v5492, %v5507
          %v5510 = vunpack.c.l.s4 1966171168
          %v5511 = vunpack.c.0.s8 %v5510
          %v5512 = vlaneseq
          %v5513 = vshrl.u32 %v5512, 7
          %v5514 = vsub.s32 %v5511, %v5513
          %v5515 = vrot.slane %v5493, %v5514
          %v5517 = vunpack.c.l.s4 1966171168
          %v5518 = vunpack.c.0.s8 %v5517
          %v5519 = vlaneseq
          %v5520 = vshrl.u32 %v5519, 7
          %v5521 = vsub.s32 %v5518, %v5520
          %v5522 = vrot.slane %v5494, %v5521
          %v5523 = vcombine.low %v5501, %v5508
          %v5524 = vcombine.low %v5515, %v5522
          %v5526 = vunpack.c.l.s4 1966171168
          %v5527 = vunpack.c.0.s8 %v5526
          %v5528 = vlaneseq
          %v5529 = vshrl.u32 %v5528, 7
          %v5530 = vsub.s32 %v5527, %v5529
          %v5531 = vrot.slane %v5523, %v5530
          %v5533 = vunpack.c.l.s4 1966171168
          %v5534 = vunpack.c.0.s8 %v5533
          %v5535 = vlaneseq
          %v5536 = vshrl.u32 %v5535, 7
          %v5537 = vsub.s32 %v5534, %v5536
          %v5538 = vrot.slane %v5524, %v5537
          %v5539 = vcombine.low %v5531, %v5538
          %v5540 = vcombine.low %v3087, %v3091
          %v5541 = vcombine.low %v3095, %v3099
          %v5542 = vcombine.low %v3103, %v3107
          %v5543 = vcombine.low %v3111, %v3115
          %v5545 = vunpack.c.l.s4 1966171168
          %v5546 = vunpack.c.0.s8 %v5545
          %v5547 = vlaneseq
          %v5548 = vshrl.u32 %v5547, 7
          %v5549 = vsub.s32 %v5546, %v5548
          %v5550 = vrot.slane %v5540, %v5549
          %v5552 = vunpack.c.l.s4 1966171168
          %v5553 = vunpack.c.0.s8 %v5552
          %v5554 = vlaneseq
          %v5555 = vshrl.u32 %v5554, 7
          %v5556 = vsub.s32 %v5553, %v5555
          %v5557 = vrot.slane %v5541, %v5556
          %v5559 = vunpack.c.l.s4 1966171168
          %v5560 = vunpack.c.0.s8 %v5559
          %v5561 = vlaneseq
          %v5562 = vshrl.u32 %v5561, 7
          %v5563 = vsub.s32 %v5560, %v5562
          %v5564 = vrot.slane %v5542, %v5563
          %v5566 = vunpack.c.l.s4 1966171168
          %v5567 = vunpack.c.0.s8 %v5566
          %v5568 = vlaneseq
          %v5569 = vshrl.u32 %v5568, 7
          %v5570 = vsub.s32 %v5567, %v5569
          %v5571 = vrot.slane %v5543, %v5570
          %v5572 = vcombine.low %v5550, %v5557
          %v5573 = vcombine.low %v5564, %v5571
          %v5575 = vunpack.c.l.s4 1966171168
          %v5576 = vunpack.c.0.s8 %v5575
          %v5577 = vlaneseq
          %v5578 = vshrl.u32 %v5577, 7
          %v5579 = vsub.s32 %v5576, %v5578
          %v5580 = vrot.slane %v5572, %v5579
          %v5582 = vunpack.c.l.s4 1966171168
          %v5583 = vunpack.c.0.s8 %v5582
          %v5584 = vlaneseq
          %v5585 = vshrl.u32 %v5584, 7
          %v5586 = vsub.s32 %v5583, %v5585
          %v5587 = vrot.slane %v5573, %v5586
          %v5588 = vcombine.low %v5580, %v5587
          %v5589 = vcombine.low %v3119, %v3123
          %v5590 = vcombine.low %v3127, %v3131
          %v5591 = vcombine.low %v3135, %v3139
          %v5592 = vcombine.low %v3143, %v3147
          %v5594 = vunpack.c.l.s4 1966171168
          %v5595 = vunpack.c.0.s8 %v5594
          %v5596 = vlaneseq
          %v5597 = vshrl.u32 %v5596, 7
          %v5598 = vsub.s32 %v5595, %v5597
          %v5599 = vrot.slane %v5589, %v5598
          %v5601 = vunpack.c.l.s4 1966171168
          %v5602 = vunpack.c.0.s8 %v5601
          %v5603 = vlaneseq
          %v5604 = vshrl.u32 %v5603, 7
          %v5605 = vsub.s32 %v5602, %v5604
          %v5606 = vrot.slane %v5590, %v5605
          %v5608 = vunpack.c.l.s4 1966171168
          %v5609 = vunpack.c.0.s8 %v5608
          %v5610 = vlaneseq
          %v5611 = vshrl.u32 %v5610, 7
          %v5612 = vsub.s32 %v5609, %v5611
          %v5613 = vrot.slane %v5591, %v5612
          %v5615 = vunpack.c.l.s4 1966171168
          %v5616 = vunpack.c.0.s8 %v5615
          %v5617 = vlaneseq
          %v5618 = vshrl.u32 %v5617, 7
          %v5619 = vsub.s32 %v5616, %v5618
          %v5620 = vrot.slane %v5592, %v5619
          %v5621 = vcombine.low %v5599, %v5606
          %v5622 = vcombine.low %v5613, %v5620
          %v5624 = vunpack.c.l.s4 1966171168
          %v5625 = vunpack.c.0.s8 %v5624
          %v5626 = vlaneseq
          %v5627 = vshrl.u32 %v5626, 7
          %v5628 = vsub.s32 %v5625, %v5627
          %v5629 = vrot.slane %v5621, %v5628
          %v5631 = vunpack.c.l.s4 1966171168
          %v5632 = vunpack.c.0.s8 %v5631
          %v5633 = vlaneseq
          %v5634 = vshrl.u32 %v5633, 7
          %v5635 = vsub.s32 %v5632, %v5634
          %v5636 = vrot.slane %v5622, %v5635
          %v5637 = vcombine.low %v5629, %v5636
          %v5638 = vcombine.low %v3151, %v3155
          %v5639 = vcombine.low %v3159, %v3163
          %v5640 = vcombine.low %v3167, %v3171
          %v5641 = vcombine.low %v3175, %v3179
          %v5643 = vunpack.c.l.s4 1966171168
          %v5644 = vunpack.c.0.s8 %v5643
          %v5645 = vlaneseq
          %v5646 = vshrl.u32 %v5645, 7
          %v5647 = vsub.s32 %v5644, %v5646
          %v5648 = vrot.slane %v5638, %v5647
          %v5650 = vunpack.c.l.s4 1966171168
          %v5651 = vunpack.c.0.s8 %v5650
          %v5652 = vlaneseq
          %v5653 = vshrl.u32 %v5652, 7
          %v5654 = vsub.s32 %v5651, %v5653
          %v5655 = vrot.slane %v5639, %v5654
          %v5657 = vunpack.c.l.s4 1966171168
          %v5658 = vunpack.c.0.s8 %v5657
          %v5659 = vlaneseq
          %v5660 = vshrl.u32 %v5659, 7
          %v5661 = vsub.s32 %v5658, %v5660
          %v5662 = vrot.slane %v5640, %v5661
          %v5664 = vunpack.c.l.s4 1966171168
          %v5665 = vunpack.c.0.s8 %v5664
          %v5666 = vlaneseq
          %v5667 = vshrl.u32 %v5666, 7
          %v5668 = vsub.s32 %v5665, %v5667
          %v5669 = vrot.slane %v5641, %v5668
          %v5670 = vcombine.low %v5648, %v5655
          %v5671 = vcombine.low %v5662, %v5669
          %v5673 = vunpack.c.l.s4 1966171168
          %v5674 = vunpack.c.0.s8 %v5673
          %v5675 = vlaneseq
          %v5676 = vshrl.u32 %v5675, 7
          %v5677 = vsub.s32 %v5674, %v5676
          %v5678 = vrot.slane %v5670, %v5677
          %v5680 = vunpack.c.l.s4 1966171168
          %v5681 = vunpack.c.0.s8 %v5680
          %v5682 = vlaneseq
          %v5683 = vshrl.u32 %v5682, 7
          %v5684 = vsub.s32 %v5681, %v5683
          %v5685 = vrot.slane %v5671, %v5684
          %v5686 = vcombine.low %v5678, %v5685
          %v5687 = vcombine.low %v3183, %v3187
          %v5688 = vcombine.low %v3191, %v3195
          %v5689 = vcombine.low %v3199, %v3203
          %v5690 = vcombine.low %v3207, %v3211
          %v5692 = vunpack.c.l.s4 1966171168
          %v5693 = vunpack.c.0.s8 %v5692
          %v5694 = vlaneseq
          %v5695 = vshrl.u32 %v5694, 7
          %v5696 = vsub.s32 %v5693, %v5695
          %v5697 = vrot.slane %v5687, %v5696
          %v5699 = vunpack.c.l.s4 1966171168
          %v5700 = vunpack.c.0.s8 %v5699
          %v5701 = vlaneseq
          %v5702 = vshrl.u32 %v5701, 7
          %v5703 = vsub.s32 %v5700, %v5702
          %v5704 = vrot.slane %v5688, %v5703
          %v5706 = vunpack.c.l.s4 1966171168
          %v5707 = vunpack.c.0.s8 %v5706
          %v5708 = vlaneseq
          %v5709 = vshrl.u32 %v5708, 7
          %v5710 = vsub.s32 %v5707, %v5709
          %v5711 = vrot.slane %v5689, %v5710
          %v5713 = vunpack.c.l.s4 1966171168
          %v5714 = vunpack.c.0.s8 %v5713
          %v5715 = vlaneseq
          %v5716 = vshrl.u32 %v5715, 7
          %v5717 = vsub.s32 %v5714, %v5716
          %v5718 = vrot.slane %v5690, %v5717
          %v5719 = vcombine.low %v5697, %v5704
          %v5720 = vcombine.low %v5711, %v5718
          %v5722 = vunpack.c.l.s4 1966171168
          %v5723 = vunpack.c.0.s8 %v5722
          %v5724 = vlaneseq
          %v5725 = vshrl.u32 %v5724, 7
          %v5726 = vsub.s32 %v5723, %v5725
          %v5727 = vrot.slane %v5719, %v5726
          %v5729 = vunpack.c.l.s4 1966171168
          %v5730 = vunpack.c.0.s8 %v5729
          %v5731 = vlaneseq
          %v5732 = vshrl.u32 %v5731, 7
          %v5733 = vsub.s32 %v5730, %v5732
          %v5734 = vrot.slane %v5720, %v5733
          %v5735 = vcombine.low %v5727, %v5734
          %v5736 = vcombine.low %v3215, %v3219
          %v5737 = vcombine.low %v3223, %v3227
          %v5738 = vcombine.low %v3231, %v3235
          %v5739 = vcombine.low %v3239, %v3243
          %v5741 = vunpack.c.l.s4 1966171168
          %v5742 = vunpack.c.0.s8 %v5741
          %v5743 = vlaneseq
          %v5744 = vshrl.u32 %v5743, 7
          %v5745 = vsub.s32 %v5742, %v5744
          %v5746 = vrot.slane %v5736, %v5745
          %v5748 = vunpack.c.l.s4 1966171168
          %v5749 = vunpack.c.0.s8 %v5748
          %v5750 = vlaneseq
          %v5751 = vshrl.u32 %v5750, 7
          %v5752 = vsub.s32 %v5749, %v5751
          %v5753 = vrot.slane %v5737, %v5752
          %v5755 = vunpack.c.l.s4 1966171168
          %v5756 = vunpack.c.0.s8 %v5755
          %v5757 = vlaneseq
          %v5758 = vshrl.u32 %v5757, 7
          %v5759 = vsub.s32 %v5756, %v5758
          %v5760 = vrot.slane %v5738, %v5759
          %v5762 = vunpack.c.l.s4 1966171168
          %v5763 = vunpack.c.0.s8 %v5762
          %v5764 = vlaneseq
          %v5765 = vshrl.u32 %v5764, 7
          %v5766 = vsub.s32 %v5763, %v5765
          %v5767 = vrot.slane %v5739, %v5766
          %v5768 = vcombine.low %v5746, %v5753
          %v5769 = vcombine.low %v5760, %v5767
          %v5771 = vunpack.c.l.s4 1966171168
          %v5772 = vunpack.c.0.s8 %v5771
          %v5773 = vlaneseq
          %v5774 = vshrl.u32 %v5773, 7
          %v5775 = vsub.s32 %v5772, %v5774
          %v5776 = vrot.slane %v5768, %v5775
          %v5778 = vunpack.c.l.s4 1966171168
          %v5779 = vunpack.c.0.s8 %v5778
          %v5780 = vlaneseq
          %v5781 = vshrl.u32 %v5780, 7
          %v5782 = vsub.s32 %v5779, %v5781
          %v5783 = vrot.slane %v5769, %v5782
          %v5784 = vcombine.low %v5776, %v5783
          %v5785 = vcombine.low %v3247, %v3251
          %v5786 = vcombine.low %v3255, %v3259
          %v5787 = vcombine.low %v3263, %v3267
          %v5788 = vcombine.low %v3271, %v3275
          %v5790 = vunpack.c.l.s4 1966171168
          %v5791 = vunpack.c.0.s8 %v5790
          %v5792 = vlaneseq
          %v5793 = vshrl.u32 %v5792, 7
          %v5794 = vsub.s32 %v5791, %v5793
          %v5795 = vrot.slane %v5785, %v5794
          %v5797 = vunpack.c.l.s4 1966171168
          %v5798 = vunpack.c.0.s8 %v5797
          %v5799 = vlaneseq
          %v5800 = vshrl.u32 %v5799, 7
          %v5801 = vsub.s32 %v5798, %v5800
          %v5802 = vrot.slane %v5786, %v5801
          %v5804 = vunpack.c.l.s4 1966171168
          %v5805 = vunpack.c.0.s8 %v5804
          %v5806 = vlaneseq
          %v5807 = vshrl.u32 %v5806, 7
          %v5808 = vsub.s32 %v5805, %v5807
          %v5809 = vrot.slane %v5787, %v5808
          %v5811 = vunpack.c.l.s4 1966171168
          %v5812 = vunpack.c.0.s8 %v5811
          %v5813 = vlaneseq
          %v5814 = vshrl.u32 %v5813, 7
          %v5815 = vsub.s32 %v5812, %v5814
          %v5816 = vrot.slane %v5788, %v5815
          %v5817 = vcombine.low %v5795, %v5802
          %v5818 = vcombine.low %v5809, %v5816
          %v5820 = vunpack.c.l.s4 1966171168
          %v5821 = vunpack.c.0.s8 %v5820
          %v5822 = vlaneseq
          %v5823 = vshrl.u32 %v5822, 7
          %v5824 = vsub.s32 %v5821, %v5823
          %v5825 = vrot.slane %v5817, %v5824
          %v5827 = vunpack.c.l.s4 1966171168
          %v5828 = vunpack.c.0.s8 %v5827
          %v5829 = vlaneseq
          %v5830 = vshrl.u32 %v5829, 7
          %v5831 = vsub.s32 %v5828, %v5830
          %v5832 = vrot.slane %v5818, %v5831
          %v5833 = vcombine.low %v5825, %v5832
          %v5834 = vcombine.low %v3279, %v3283
          %v5835 = vcombine.low %v3287, %v3291
          %v5836 = vcombine.low %v3295, %v3299
          %v5837 = vcombine.low %v3303, %v3307
          %v5839 = vunpack.c.l.s4 1966171168
          %v5840 = vunpack.c.0.s8 %v5839
          %v5841 = vlaneseq
          %v5842 = vshrl.u32 %v5841, 7
          %v5843 = vsub.s32 %v5840, %v5842
          %v5844 = vrot.slane %v5834, %v5843
          %v5846 = vunpack.c.l.s4 1966171168
          %v5847 = vunpack.c.0.s8 %v5846
          %v5848 = vlaneseq
          %v5849 = vshrl.u32 %v5848, 7
          %v5850 = vsub.s32 %v5847, %v5849
          %v5851 = vrot.slane %v5835, %v5850
          %v5853 = vunpack.c.l.s4 1966171168
          %v5854 = vunpack.c.0.s8 %v5853
          %v5855 = vlaneseq
          %v5856 = vshrl.u32 %v5855, 7
          %v5857 = vsub.s32 %v5854, %v5856
          %v5858 = vrot.slane %v5836, %v5857
          %v5860 = vunpack.c.l.s4 1966171168
          %v5861 = vunpack.c.0.s8 %v5860
          %v5862 = vlaneseq
          %v5863 = vshrl.u32 %v5862, 7
          %v5864 = vsub.s32 %v5861, %v5863
          %v5865 = vrot.slane %v5837, %v5864
          %v5866 = vcombine.low %v5844, %v5851
          %v5867 = vcombine.low %v5858, %v5865
          %v5869 = vunpack.c.l.s4 1966171168
          %v5870 = vunpack.c.0.s8 %v5869
          %v5871 = vlaneseq
          %v5872 = vshrl.u32 %v5871, 7
          %v5873 = vsub.s32 %v5870, %v5872
          %v5874 = vrot.slane %v5866, %v5873
          %v5876 = vunpack.c.l.s4 1966171168
          %v5877 = vunpack.c.0.s8 %v5876
          %v5878 = vlaneseq
          %v5879 = vshrl.u32 %v5878, 7
          %v5880 = vsub.s32 %v5877, %v5879
          %v5881 = vrot.slane %v5867, %v5880
          %v5882 = vcombine.low %v5874, %v5881
          %v5883 = vcombine.low %v3311, %v3315
          %v5884 = vcombine.low %v3319, %v3323
          %v5885 = vcombine.low %v3327, %v3331
          %v5886 = vcombine.low %v3335, %v3339
          %v5888 = vunpack.c.l.s4 1966171168
          %v5889 = vunpack.c.0.s8 %v5888
          %v5890 = vlaneseq
          %v5891 = vshrl.u32 %v5890, 7
          %v5892 = vsub.s32 %v5889, %v5891
          %v5893 = vrot.slane %v5883, %v5892
          %v5895 = vunpack.c.l.s4 1966171168
          %v5896 = vunpack.c.0.s8 %v5895
          %v5897 = vlaneseq
          %v5898 = vshrl.u32 %v5897, 7
          %v5899 = vsub.s32 %v5896, %v5898
          %v5900 = vrot.slane %v5884, %v5899
          %v5902 = vunpack.c.l.s4 1966171168
          %v5903 = vunpack.c.0.s8 %v5902
          %v5904 = vlaneseq
          %v5905 = vshrl.u32 %v5904, 7
          %v5906 = vsub.s32 %v5903, %v5905
          %v5907 = vrot.slane %v5885, %v5906
          %v5909 = vunpack.c.l.s4 1966171168
          %v5910 = vunpack.c.0.s8 %v5909
          %v5911 = vlaneseq
          %v5912 = vshrl.u32 %v5911, 7
          %v5913 = vsub.s32 %v5910, %v5912
          %v5914 = vrot.slane %v5886, %v5913
          %v5915 = vcombine.low %v5893, %v5900
          %v5916 = vcombine.low %v5907, %v5914
          %v5918 = vunpack.c.l.s4 1966171168
          %v5919 = vunpack.c.0.s8 %v5918
          %v5920 = vlaneseq
          %v5921 = vshrl.u32 %v5920, 7
          %v5922 = vsub.s32 %v5919, %v5921
          %v5923 = vrot.slane %v5915, %v5922
          %v5925 = vunpack.c.l.s4 1966171168
          %v5926 = vunpack.c.0.s8 %v5925
          %v5927 = vlaneseq
          %v5928 = vshrl.u32 %v5927, 7
          %v5929 = vsub.s32 %v5926, %v5928
          %v5930 = vrot.slane %v5916, %v5929
          %v5931 = vcombine.low %v5923, %v5930
          %v5932 = vcombine.low %v3343, %v3347
          %v5933 = vcombine.low %v3351, %v3355
          %v5934 = vcombine.low %v3359, %v3363
          %v5935 = vcombine.low %v3367, %v3371
          %v5937 = vunpack.c.l.s4 1966171168
          %v5938 = vunpack.c.0.s8 %v5937
          %v5939 = vlaneseq
          %v5940 = vshrl.u32 %v5939, 7
          %v5941 = vsub.s32 %v5938, %v5940
          %v5942 = vrot.slane %v5932, %v5941
          %v5944 = vunpack.c.l.s4 1966171168
          %v5945 = vunpack.c.0.s8 %v5944
          %v5946 = vlaneseq
          %v5947 = vshrl.u32 %v5946, 7
          %v5948 = vsub.s32 %v5945, %v5947
          %v5949 = vrot.slane %v5933, %v5948
          %v5951 = vunpack.c.l.s4 1966171168
          %v5952 = vunpack.c.0.s8 %v5951
          %v5953 = vlaneseq
          %v5954 = vshrl.u32 %v5953, 7
          %v5955 = vsub.s32 %v5952, %v5954
          %v5956 = vrot.slane %v5934, %v5955
          %v5958 = vunpack.c.l.s4 1966171168
          %v5959 = vunpack.c.0.s8 %v5958
          %v5960 = vlaneseq
          %v5961 = vshrl.u32 %v5960, 7
          %v5962 = vsub.s32 %v5959, %v5961
          %v5963 = vrot.slane %v5935, %v5962
          %v5964 = vcombine.low %v5942, %v5949
          %v5965 = vcombine.low %v5956, %v5963
          %v5967 = vunpack.c.l.s4 1966171168
          %v5968 = vunpack.c.0.s8 %v5967
          %v5969 = vlaneseq
          %v5970 = vshrl.u32 %v5969, 7
          %v5971 = vsub.s32 %v5968, %v5970
          %v5972 = vrot.slane %v5964, %v5971
          %v5974 = vunpack.c.l.s4 1966171168
          %v5975 = vunpack.c.0.s8 %v5974
          %v5976 = vlaneseq
          %v5977 = vshrl.u32 %v5976, 7
          %v5978 = vsub.s32 %v5975, %v5977
          %v5979 = vrot.slane %v5965, %v5978
          %v5980 = vcombine.low %v5972, %v5979
          %v5981 = vcombine.low %v3375, %v3379
          %v5982 = vcombine.low %v3383, %v3387
          %v5983 = vcombine.low %v3391, %v3395
          %v5984 = vcombine.low %v3399, %v3403
          %v5986 = vunpack.c.l.s4 1966171168
          %v5987 = vunpack.c.0.s8 %v5986
          %v5988 = vlaneseq
          %v5989 = vshrl.u32 %v5988, 7
          %v5990 = vsub.s32 %v5987, %v5989
          %v5991 = vrot.slane %v5981, %v5990
          %v5993 = vunpack.c.l.s4 1966171168
          %v5994 = vunpack.c.0.s8 %v5993
          %v5995 = vlaneseq
          %v5996 = vshrl.u32 %v5995, 7
          %v5997 = vsub.s32 %v5994, %v5996
          %v5998 = vrot.slane %v5982, %v5997
          %v6000 = vunpack.c.l.s4 1966171168
          %v6001 = vunpack.c.0.s8 %v6000
          %v6002 = vlaneseq
          %v6003 = vshrl.u32 %v6002, 7
          %v6004 = vsub.s32 %v6001, %v6003
          %v6005 = vrot.slane %v5983, %v6004
          %v6007 = vunpack.c.l.s4 1966171168
          %v6008 = vunpack.c.0.s8 %v6007
          %v6009 = vlaneseq
          %v6010 = vshrl.u32 %v6009, 7
          %v6011 = vsub.s32 %v6008, %v6010
          %v6012 = vrot.slane %v5984, %v6011
          %v6013 = vcombine.low %v5991, %v5998
          %v6014 = vcombine.low %v6005, %v6012
          %v6016 = vunpack.c.l.s4 1966171168
          %v6017 = vunpack.c.0.s8 %v6016
          %v6018 = vlaneseq
          %v6019 = vshrl.u32 %v6018, 7
          %v6020 = vsub.s32 %v6017, %v6019
          %v6021 = vrot.slane %v6013, %v6020
          %v6023 = vunpack.c.l.s4 1966171168
          %v6024 = vunpack.c.0.s8 %v6023
          %v6025 = vlaneseq
          %v6026 = vshrl.u32 %v6025, 7
          %v6027 = vsub.s32 %v6024, %v6026
          %v6028 = vrot.slane %v6014, %v6027
          %v6029 = vcombine.low %v6021, %v6028
          %v6030 = vcombine.low %v3407, %v3411
          %v6031 = vcombine.low %v3415, %v3419
          %v6032 = vcombine.low %v3423, %v3427
          %v6033 = vcombine.low %v3431, %v3435
          %v6035 = vunpack.c.l.s4 1966171168
          %v6036 = vunpack.c.0.s8 %v6035
          %v6037 = vlaneseq
          %v6038 = vshrl.u32 %v6037, 7
          %v6039 = vsub.s32 %v6036, %v6038
          %v6040 = vrot.slane %v6030, %v6039
          %v6042 = vunpack.c.l.s4 1966171168
          %v6043 = vunpack.c.0.s8 %v6042
          %v6044 = vlaneseq
          %v6045 = vshrl.u32 %v6044, 7
          %v6046 = vsub.s32 %v6043, %v6045
          %v6047 = vrot.slane %v6031, %v6046
          %v6049 = vunpack.c.l.s4 1966171168
          %v6050 = vunpack.c.0.s8 %v6049
          %v6051 = vlaneseq
          %v6052 = vshrl.u32 %v6051, 7
          %v6053 = vsub.s32 %v6050, %v6052
          %v6054 = vrot.slane %v6032, %v6053
          %v6056 = vunpack.c.l.s4 1966171168
          %v6057 = vunpack.c.0.s8 %v6056
          %v6058 = vlaneseq
          %v6059 = vshrl.u32 %v6058, 7
          %v6060 = vsub.s32 %v6057, %v6059
          %v6061 = vrot.slane %v6033, %v6060
          %v6062 = vcombine.low %v6040, %v6047
          %v6063 = vcombine.low %v6054, %v6061
          %v6065 = vunpack.c.l.s4 1966171168
          %v6066 = vunpack.c.0.s8 %v6065
          %v6067 = vlaneseq
          %v6068 = vshrl.u32 %v6067, 7
          %v6069 = vsub.s32 %v6066, %v6068
          %v6070 = vrot.slane %v6062, %v6069
          %v6072 = vunpack.c.l.s4 1966171168
          %v6073 = vunpack.c.0.s8 %v6072
          %v6074 = vlaneseq
          %v6075 = vshrl.u32 %v6074, 7
          %v6076 = vsub.s32 %v6073, %v6075
          %v6077 = vrot.slane %v6063, %v6076
          %v6078 = vcombine.low %v6070, %v6077
          %v6079 = vcombine.low %v3439, %v3443
          %v6080 = vcombine.low %v3447, %v3451
          %v6081 = vcombine.low %v3455, %v3459
          %v6082 = vcombine.low %v3463, %v3467
          %v6084 = vunpack.c.l.s4 1966171168
          %v6085 = vunpack.c.0.s8 %v6084
          %v6086 = vlaneseq
          %v6087 = vshrl.u32 %v6086, 7
          %v6088 = vsub.s32 %v6085, %v6087
          %v6089 = vrot.slane %v6079, %v6088
          %v6091 = vunpack.c.l.s4 1966171168
          %v6092 = vunpack.c.0.s8 %v6091
          %v6093 = vlaneseq
          %v6094 = vshrl.u32 %v6093, 7
          %v6095 = vsub.s32 %v6092, %v6094
          %v6096 = vrot.slane %v6080, %v6095
          %v6098 = vunpack.c.l.s4 1966171168
          %v6099 = vunpack.c.0.s8 %v6098
          %v6100 = vlaneseq
          %v6101 = vshrl.u32 %v6100, 7
          %v6102 = vsub.s32 %v6099, %v6101
          %v6103 = vrot.slane %v6081, %v6102
          %v6105 = vunpack.c.l.s4 1966171168
          %v6106 = vunpack.c.0.s8 %v6105
          %v6107 = vlaneseq
          %v6108 = vshrl.u32 %v6107, 7
          %v6109 = vsub.s32 %v6106, %v6108
          %v6110 = vrot.slane %v6082, %v6109
          %v6111 = vcombine.low %v6089, %v6096
          %v6112 = vcombine.low %v6103, %v6110
          %v6114 = vunpack.c.l.s4 1966171168
          %v6115 = vunpack.c.0.s8 %v6114
          %v6116 = vlaneseq
          %v6117 = vshrl.u32 %v6116, 7
          %v6118 = vsub.s32 %v6115, %v6117
          %v6119 = vrot.slane %v6111, %v6118
          %v6121 = vunpack.c.l.s4 1966171168
          %v6122 = vunpack.c.0.s8 %v6121
          %v6123 = vlaneseq
          %v6124 = vshrl.u32 %v6123, 7
          %v6125 = vsub.s32 %v6122, %v6124
          %v6126 = vrot.slane %v6112, %v6125
          %v6127 = vcombine.low %v6119, %v6126
          %v6128 = vcombine.low %v3471, %v3475
          %v6129 = vcombine.low %v3479, %v3483
          %v6130 = vcombine.low %v3487, %v3491
          %v6131 = vcombine.low %v3495, %v3499
          %v6133 = vunpack.c.l.s4 1966171168
          %v6134 = vunpack.c.0.s8 %v6133
          %v6135 = vlaneseq
          %v6136 = vshrl.u32 %v6135, 7
          %v6137 = vsub.s32 %v6134, %v6136
          %v6138 = vrot.slane %v6128, %v6137
          %v6140 = vunpack.c.l.s4 1966171168
          %v6141 = vunpack.c.0.s8 %v6140
          %v6142 = vlaneseq
          %v6143 = vshrl.u32 %v6142, 7
          %v6144 = vsub.s32 %v6141, %v6143
          %v6145 = vrot.slane %v6129, %v6144
          %v6147 = vunpack.c.l.s4 1966171168
          %v6148 = vunpack.c.0.s8 %v6147
          %v6149 = vlaneseq
          %v6150 = vshrl.u32 %v6149, 7
          %v6151 = vsub.s32 %v6148, %v6150
          %v6152 = vrot.slane %v6130, %v6151
          %v6154 = vunpack.c.l.s4 1966171168
          %v6155 = vunpack.c.0.s8 %v6154
          %v6156 = vlaneseq
          %v6157 = vshrl.u32 %v6156, 7
          %v6158 = vsub.s32 %v6155, %v6157
          %v6159 = vrot.slane %v6131, %v6158
          %v6160 = vcombine.low %v6138, %v6145
          %v6161 = vcombine.low %v6152, %v6159
          %v6163 = vunpack.c.l.s4 1966171168
          %v6164 = vunpack.c.0.s8 %v6163
          %v6165 = vlaneseq
          %v6166 = vshrl.u32 %v6165, 7
          %v6167 = vsub.s32 %v6164, %v6166
          %v6168 = vrot.slane %v6160, %v6167
          %v6170 = vunpack.c.l.s4 1966171168
          %v6171 = vunpack.c.0.s8 %v6170
          %v6172 = vlaneseq
          %v6173 = vshrl.u32 %v6172, 7
          %v6174 = vsub.s32 %v6171, %v6173
          %v6175 = vrot.slane %v6161, %v6174
          %v6176 = vcombine.low %v6168, %v6175
          %v6177 = vcombine.low %v3503, %v3507
          %v6178 = vcombine.low %v3511, %v3515
          %v6179 = vcombine.low %v3519, %v3523
          %v6180 = vcombine.low %v3527, %v3531
          %v6182 = vunpack.c.l.s4 1966171168
          %v6183 = vunpack.c.0.s8 %v6182
          %v6184 = vlaneseq
          %v6185 = vshrl.u32 %v6184, 7
          %v6186 = vsub.s32 %v6183, %v6185
          %v6187 = vrot.slane %v6177, %v6186
          %v6189 = vunpack.c.l.s4 1966171168
          %v6190 = vunpack.c.0.s8 %v6189
          %v6191 = vlaneseq
          %v6192 = vshrl.u32 %v6191, 7
          %v6193 = vsub.s32 %v6190, %v6192
          %v6194 = vrot.slane %v6178, %v6193
          %v6196 = vunpack.c.l.s4 1966171168
          %v6197 = vunpack.c.0.s8 %v6196
          %v6198 = vlaneseq
          %v6199 = vshrl.u32 %v6198, 7
          %v6200 = vsub.s32 %v6197, %v6199
          %v6201 = vrot.slane %v6179, %v6200
          %v6203 = vunpack.c.l.s4 1966171168
          %v6204 = vunpack.c.0.s8 %v6203
          %v6205 = vlaneseq
          %v6206 = vshrl.u32 %v6205, 7
          %v6207 = vsub.s32 %v6204, %v6206
          %v6208 = vrot.slane %v6180, %v6207
          %v6209 = vcombine.low %v6187, %v6194
          %v6210 = vcombine.low %v6201, %v6208
          %v6212 = vunpack.c.l.s4 1966171168
          %v6213 = vunpack.c.0.s8 %v6212
          %v6214 = vlaneseq
          %v6215 = vshrl.u32 %v6214, 7
          %v6216 = vsub.s32 %v6213, %v6215
          %v6217 = vrot.slane %v6209, %v6216
          %v6219 = vunpack.c.l.s4 1966171168
          %v6220 = vunpack.c.0.s8 %v6219
          %v6221 = vlaneseq
          %v6222 = vshrl.u32 %v6221, 7
          %v6223 = vsub.s32 %v6220, %v6222
          %v6224 = vrot.slane %v6210, %v6223
          %v6225 = vcombine.low %v6217, %v6224
          %v6226 = vcombine.low %v3535, %v3539
          %v6227 = vcombine.low %v3543, %v3547
          %v6228 = vcombine.low %v3551, %v3555
          %v6229 = vcombine.low %v3559, %v3563
          %v6231 = vunpack.c.l.s4 1966171168
          %v6232 = vunpack.c.0.s8 %v6231
          %v6233 = vlaneseq
          %v6234 = vshrl.u32 %v6233, 7
          %v6235 = vsub.s32 %v6232, %v6234
          %v6236 = vrot.slane %v6226, %v6235
          %v6238 = vunpack.c.l.s4 1966171168
          %v6239 = vunpack.c.0.s8 %v6238
          %v6240 = vlaneseq
          %v6241 = vshrl.u32 %v6240, 7
          %v6242 = vsub.s32 %v6239, %v6241
          %v6243 = vrot.slane %v6227, %v6242
          %v6245 = vunpack.c.l.s4 1966171168
          %v6246 = vunpack.c.0.s8 %v6245
          %v6247 = vlaneseq
          %v6248 = vshrl.u32 %v6247, 7
          %v6249 = vsub.s32 %v6246, %v6248
          %v6250 = vrot.slane %v6228, %v6249
          %v6252 = vunpack.c.l.s4 1966171168
          %v6253 = vunpack.c.0.s8 %v6252
          %v6254 = vlaneseq
          %v6255 = vshrl.u32 %v6254, 7
          %v6256 = vsub.s32 %v6253, %v6255
          %v6257 = vrot.slane %v6229, %v6256
          %v6258 = vcombine.low %v6236, %v6243
          %v6259 = vcombine.low %v6250, %v6257
          %v6261 = vunpack.c.l.s4 1966171168
          %v6262 = vunpack.c.0.s8 %v6261
          %v6263 = vlaneseq
          %v6264 = vshrl.u32 %v6263, 7
          %v6265 = vsub.s32 %v6262, %v6264
          %v6266 = vrot.slane %v6258, %v6265
          %v6268 = vunpack.c.l.s4 1966171168
          %v6269 = vunpack.c.0.s8 %v6268
          %v6270 = vlaneseq
          %v6271 = vshrl.u32 %v6270, 7
          %v6272 = vsub.s32 %v6269, %v6271
          %v6273 = vrot.slane %v6259, %v6272
          %v6274 = vcombine.low %v6266, %v6273
          %v6275 = vcombine.low %v3567, %v3571
          %v6276 = vcombine.low %v3575, %v3579
          %v6277 = vcombine.low %v3583, %v3587
          %v6278 = vcombine.low %v3591, %v3595
          %v6280 = vunpack.c.l.s4 1966171168
          %v6281 = vunpack.c.0.s8 %v6280
          %v6282 = vlaneseq
          %v6283 = vshrl.u32 %v6282, 7
          %v6284 = vsub.s32 %v6281, %v6283
          %v6285 = vrot.slane %v6275, %v6284
          %v6287 = vunpack.c.l.s4 1966171168
          %v6288 = vunpack.c.0.s8 %v6287
          %v6289 = vlaneseq
          %v6290 = vshrl.u32 %v6289, 7
          %v6291 = vsub.s32 %v6288, %v6290
          %v6292 = vrot.slane %v6276, %v6291
          %v6294 = vunpack.c.l.s4 1966171168
          %v6295 = vunpack.c.0.s8 %v6294
          %v6296 = vlaneseq
          %v6297 = vshrl.u32 %v6296, 7
          %v6298 = vsub.s32 %v6295, %v6297
          %v6299 = vrot.slane %v6277, %v6298
          %v6301 = vunpack.c.l.s4 1966171168
          %v6302 = vunpack.c.0.s8 %v6301
          %v6303 = vlaneseq
          %v6304 = vshrl.u32 %v6303, 7
          %v6305 = vsub.s32 %v6302, %v6304
          %v6306 = vrot.slane %v6278, %v6305
          %v6307 = vcombine.low %v6285, %v6292
          %v6308 = vcombine.low %v6299, %v6306
          %v6310 = vunpack.c.l.s4 1966171168
          %v6311 = vunpack.c.0.s8 %v6310
          %v6312 = vlaneseq
          %v6313 = vshrl.u32 %v6312, 7
          %v6314 = vsub.s32 %v6311, %v6313
          %v6315 = vrot.slane %v6307, %v6314
          %v6317 = vunpack.c.l.s4 1966171168
          %v6318 = vunpack.c.0.s8 %v6317
          %v6319 = vlaneseq
          %v6320 = vshrl.u32 %v6319, 7
          %v6321 = vsub.s32 %v6318, %v6320
          %v6322 = vrot.slane %v6308, %v6321
          %v6323 = vcombine.low %v6315, %v6322
          %v6324 = vcombine.low %v3599, %v3603
          %v6325 = vcombine.low %v3607, %v3611
          %v6326 = vcombine.low %v3615, %v3619
          %v6327 = vcombine.low %v3623, %v3627
          %v6329 = vunpack.c.l.s4 1966171168
          %v6330 = vunpack.c.0.s8 %v6329
          %v6331 = vlaneseq
          %v6332 = vshrl.u32 %v6331, 7
          %v6333 = vsub.s32 %v6330, %v6332
          %v6334 = vrot.slane %v6324, %v6333
          %v6336 = vunpack.c.l.s4 1966171168
          %v6337 = vunpack.c.0.s8 %v6336
          %v6338 = vlaneseq
          %v6339 = vshrl.u32 %v6338, 7
          %v6340 = vsub.s32 %v6337, %v6339
          %v6341 = vrot.slane %v6325, %v6340
          %v6343 = vunpack.c.l.s4 1966171168
          %v6344 = vunpack.c.0.s8 %v6343
          %v6345 = vlaneseq
          %v6346 = vshrl.u32 %v6345, 7
          %v6347 = vsub.s32 %v6344, %v6346
          %v6348 = vrot.slane %v6326, %v6347
          %v6350 = vunpack.c.l.s4 1966171168
          %v6351 = vunpack.c.0.s8 %v6350
          %v6352 = vlaneseq
          %v6353 = vshrl.u32 %v6352, 7
          %v6354 = vsub.s32 %v6351, %v6353
          %v6355 = vrot.slane %v6327, %v6354
          %v6356 = vcombine.low %v6334, %v6341
          %v6357 = vcombine.low %v6348, %v6355
          %v6359 = vunpack.c.l.s4 1966171168
          %v6360 = vunpack.c.0.s8 %v6359
          %v6361 = vlaneseq
          %v6362 = vshrl.u32 %v6361, 7
          %v6363 = vsub.s32 %v6360, %v6362
          %v6364 = vrot.slane %v6356, %v6363
          %v6366 = vunpack.c.l.s4 1966171168
          %v6367 = vunpack.c.0.s8 %v6366
          %v6368 = vlaneseq
          %v6369 = vshrl.u32 %v6368, 7
          %v6370 = vsub.s32 %v6367, %v6369
          %v6371 = vrot.slane %v6357, %v6370
          %v6372 = vcombine.low %v6364, %v6371
          %v6373 = vcombine.low %v3631, %v3635
          %v6374 = vcombine.low %v3639, %v3643
          %v6375 = vcombine.low %v3647, %v3651
          %v6376 = vcombine.low %v3655, %v3659
          %v6378 = vunpack.c.l.s4 1966171168
          %v6379 = vunpack.c.0.s8 %v6378
          %v6380 = vlaneseq
          %v6381 = vshrl.u32 %v6380, 7
          %v6382 = vsub.s32 %v6379, %v6381
          %v6383 = vrot.slane %v6373, %v6382
          %v6385 = vunpack.c.l.s4 1966171168
          %v6386 = vunpack.c.0.s8 %v6385
          %v6387 = vlaneseq
          %v6388 = vshrl.u32 %v6387, 7
          %v6389 = vsub.s32 %v6386, %v6388
          %v6390 = vrot.slane %v6374, %v6389
          %v6392 = vunpack.c.l.s4 1966171168
          %v6393 = vunpack.c.0.s8 %v6392
          %v6394 = vlaneseq
          %v6395 = vshrl.u32 %v6394, 7
          %v6396 = vsub.s32 %v6393, %v6395
          %v6397 = vrot.slane %v6375, %v6396
          %v6399 = vunpack.c.l.s4 1966171168
          %v6400 = vunpack.c.0.s8 %v6399
          %v6401 = vlaneseq
          %v6402 = vshrl.u32 %v6401, 7
          %v6403 = vsub.s32 %v6400, %v6402
          %v6404 = vrot.slane %v6376, %v6403
          %v6405 = vcombine.low %v6383, %v6390
          %v6406 = vcombine.low %v6397, %v6404
          %v6408 = vunpack.c.l.s4 1966171168
          %v6409 = vunpack.c.0.s8 %v6408
          %v6410 = vlaneseq
          %v6411 = vshrl.u32 %v6410, 7
          %v6412 = vsub.s32 %v6409, %v6411
          %v6413 = vrot.slane %v6405, %v6412
          %v6415 = vunpack.c.l.s4 1966171168
          %v6416 = vunpack.c.0.s8 %v6415
          %v6417 = vlaneseq
          %v6418 = vshrl.u32 %v6417, 7
          %v6419 = vsub.s32 %v6416, %v6418
          %v6420 = vrot.slane %v6406, %v6419
          %v6421 = vcombine.low %v6413, %v6420
          %v6422 = vcombine.low %v3663, %v3667
          %v6423 = vcombine.low %v3671, %v3675
          %v6424 = vcombine.low %v3679, %v3683
          %v6425 = vcombine.low %v3687, %v3691
          %v6427 = vunpack.c.l.s4 1966171168
          %v6428 = vunpack.c.0.s8 %v6427
          %v6429 = vlaneseq
          %v6430 = vshrl.u32 %v6429, 7
          %v6431 = vsub.s32 %v6428, %v6430
          %v6432 = vrot.slane %v6422, %v6431
          %v6434 = vunpack.c.l.s4 1966171168
          %v6435 = vunpack.c.0.s8 %v6434
          %v6436 = vlaneseq
          %v6437 = vshrl.u32 %v6436, 7
          %v6438 = vsub.s32 %v6435, %v6437
          %v6439 = vrot.slane %v6423, %v6438
          %v6441 = vunpack.c.l.s4 1966171168
          %v6442 = vunpack.c.0.s8 %v6441
          %v6443 = vlaneseq
          %v6444 = vshrl.u32 %v6443, 7
          %v6445 = vsub.s32 %v6442, %v6444
          %v6446 = vrot.slane %v6424, %v6445
          %v6448 = vunpack.c.l.s4 1966171168
          %v6449 = vunpack.c.0.s8 %v6448
          %v6450 = vlaneseq
          %v6451 = vshrl.u32 %v6450, 7
          %v6452 = vsub.s32 %v6449, %v6451
          %v6453 = vrot.slane %v6425, %v6452
          %v6454 = vcombine.low %v6432, %v6439
          %v6455 = vcombine.low %v6446, %v6453
          %v6457 = vunpack.c.l.s4 1966171168
          %v6458 = vunpack.c.0.s8 %v6457
          %v6459 = vlaneseq
          %v6460 = vshrl.u32 %v6459, 7
          %v6461 = vsub.s32 %v6458, %v6460
          %v6462 = vrot.slane %v6454, %v6461
          %v6464 = vunpack.c.l.s4 1966171168
          %v6465 = vunpack.c.0.s8 %v6464
          %v6466 = vlaneseq
          %v6467 = vshrl.u32 %v6466, 7
          %v6468 = vsub.s32 %v6465, %v6467
          %v6469 = vrot.slane %v6455, %v6468
          %v6470 = vcombine.low %v6462, %v6469
          %v6471 = vcombine.low %v3695, %v3699
          %v6472 = vcombine.low %v3703, %v3707
          %v6473 = vcombine.low %v3711, %v3715
          %v6474 = vcombine.low %v3719, %v3723
          %v6476 = vunpack.c.l.s4 1966171168
          %v6477 = vunpack.c.0.s8 %v6476
          %v6478 = vlaneseq
          %v6479 = vshrl.u32 %v6478, 7
          %v6480 = vsub.s32 %v6477, %v6479
          %v6481 = vrot.slane %v6471, %v6480
          %v6483 = vunpack.c.l.s4 1966171168
          %v6484 = vunpack.c.0.s8 %v6483
          %v6485 = vlaneseq
          %v6486 = vshrl.u32 %v6485, 7
          %v6487 = vsub.s32 %v6484, %v6486
          %v6488 = vrot.slane %v6472, %v6487
          %v6490 = vunpack.c.l.s4 1966171168
          %v6491 = vunpack.c.0.s8 %v6490
          %v6492 = vlaneseq
          %v6493 = vshrl.u32 %v6492, 7
          %v6494 = vsub.s32 %v6491, %v6493
          %v6495 = vrot.slane %v6473, %v6494
          %v6497 = vunpack.c.l.s4 1966171168
          %v6498 = vunpack.c.0.s8 %v6497
          %v6499 = vlaneseq
          %v6500 = vshrl.u32 %v6499, 7
          %v6501 = vsub.s32 %v6498, %v6500
          %v6502 = vrot.slane %v6474, %v6501
          %v6503 = vcombine.low %v6481, %v6488
          %v6504 = vcombine.low %v6495, %v6502
          %v6506 = vunpack.c.l.s4 1966171168
          %v6507 = vunpack.c.0.s8 %v6506
          %v6508 = vlaneseq
          %v6509 = vshrl.u32 %v6508, 7
          %v6510 = vsub.s32 %v6507, %v6509
          %v6511 = vrot.slane %v6503, %v6510
          %v6513 = vunpack.c.l.s4 1966171168
          %v6514 = vunpack.c.0.s8 %v6513
          %v6515 = vlaneseq
          %v6516 = vshrl.u32 %v6515, 7
          %v6517 = vsub.s32 %v6514, %v6516
          %v6518 = vrot.slane %v6504, %v6517
          %v6519 = vcombine.low %v6511, %v6518
          %v6520 = vcombine.low %v3727, %v3731
          %v6521 = vcombine.low %v3735, %v3739
          %v6522 = vcombine.low %v3743, %v3747
          %v6523 = vcombine.low %v3751, %v3755
          %v6525 = vunpack.c.l.s4 1966171168
          %v6526 = vunpack.c.0.s8 %v6525
          %v6527 = vlaneseq
          %v6528 = vshrl.u32 %v6527, 7
          %v6529 = vsub.s32 %v6526, %v6528
          %v6530 = vrot.slane %v6520, %v6529
          %v6532 = vunpack.c.l.s4 1966171168
          %v6533 = vunpack.c.0.s8 %v6532
          %v6534 = vlaneseq
          %v6535 = vshrl.u32 %v6534, 7
          %v6536 = vsub.s32 %v6533, %v6535
          %v6537 = vrot.slane %v6521, %v6536
          %v6539 = vunpack.c.l.s4 1966171168
          %v6540 = vunpack.c.0.s8 %v6539
          %v6541 = vlaneseq
          %v6542 = vshrl.u32 %v6541, 7
          %v6543 = vsub.s32 %v6540, %v6542
          %v6544 = vrot.slane %v6522, %v6543
          %v6546 = vunpack.c.l.s4 1966171168
          %v6547 = vunpack.c.0.s8 %v6546
          %v6548 = vlaneseq
          %v6549 = vshrl.u32 %v6548, 7
          %v6550 = vsub.s32 %v6547, %v6549
          %v6551 = vrot.slane %v6523, %v6550
          %v6552 = vcombine.low %v6530, %v6537
          %v6553 = vcombine.low %v6544, %v6551
          %v6555 = vunpack.c.l.s4 1966171168
          %v6556 = vunpack.c.0.s8 %v6555
          %v6557 = vlaneseq
          %v6558 = vshrl.u32 %v6557, 7
          %v6559 = vsub.s32 %v6556, %v6558
          %v6560 = vrot.slane %v6552, %v6559
          %v6562 = vunpack.c.l.s4 1966171168
          %v6563 = vunpack.c.0.s8 %v6562
          %v6564 = vlaneseq
          %v6565 = vshrl.u32 %v6564, 7
          %v6566 = vsub.s32 %v6563, %v6565
          %v6567 = vrot.slane %v6553, %v6566
          %v6568 = vcombine.low %v6560, %v6567
          %v6569 = vcombine.low %v3759, %v3763
          %v6570 = vcombine.low %v3767, %v3771
          %v6571 = vcombine.low %v3775, %v3779
          %v6572 = vcombine.low %v3783, %v3787
          %v6574 = vunpack.c.l.s4 1966171168
          %v6575 = vunpack.c.0.s8 %v6574
          %v6576 = vlaneseq
          %v6577 = vshrl.u32 %v6576, 7
          %v6578 = vsub.s32 %v6575, %v6577
          %v6579 = vrot.slane %v6569, %v6578
          %v6581 = vunpack.c.l.s4 1966171168
          %v6582 = vunpack.c.0.s8 %v6581
          %v6583 = vlaneseq
          %v6584 = vshrl.u32 %v6583, 7
          %v6585 = vsub.s32 %v6582, %v6584
          %v6586 = vrot.slane %v6570, %v6585
          %v6588 = vunpack.c.l.s4 1966171168
          %v6589 = vunpack.c.0.s8 %v6588
          %v6590 = vlaneseq
          %v6591 = vshrl.u32 %v6590, 7
          %v6592 = vsub.s32 %v6589, %v6591
          %v6593 = vrot.slane %v6571, %v6592
          %v6595 = vunpack.c.l.s4 1966171168
          %v6596 = vunpack.c.0.s8 %v6595
          %v6597 = vlaneseq
          %v6598 = vshrl.u32 %v6597, 7
          %v6599 = vsub.s32 %v6596, %v6598
          %v6600 = vrot.slane %v6572, %v6599
          %v6601 = vcombine.low %v6579, %v6586
          %v6602 = vcombine.low %v6593, %v6600
          %v6604 = vunpack.c.l.s4 1966171168
          %v6605 = vunpack.c.0.s8 %v6604
          %v6606 = vlaneseq
          %v6607 = vshrl.u32 %v6606, 7
          %v6608 = vsub.s32 %v6605, %v6607
          %v6609 = vrot.slane %v6601, %v6608
          %v6611 = vunpack.c.l.s4 1966171168
          %v6612 = vunpack.c.0.s8 %v6611
          %v6613 = vlaneseq
          %v6614 = vshrl.u32 %v6613, 7
          %v6615 = vsub.s32 %v6612, %v6614
          %v6616 = vrot.slane %v6602, %v6615
          %v6617 = vcombine.low %v6609, %v6616
          %v6618 = vcombine.low %v3791, %v3795
          %v6619 = vcombine.low %v3799, %v3803
          %v6620 = vcombine.low %v3807, %v3811
          %v6621 = vcombine.low %v3815, %v3819
          %v6623 = vunpack.c.l.s4 1966171168
          %v6624 = vunpack.c.0.s8 %v6623
          %v6625 = vlaneseq
          %v6626 = vshrl.u32 %v6625, 7
          %v6627 = vsub.s32 %v6624, %v6626
          %v6628 = vrot.slane %v6618, %v6627
          %v6630 = vunpack.c.l.s4 1966171168
          %v6631 = vunpack.c.0.s8 %v6630
          %v6632 = vlaneseq
          %v6633 = vshrl.u32 %v6632, 7
          %v6634 = vsub.s32 %v6631, %v6633
          %v6635 = vrot.slane %v6619, %v6634
          %v6637 = vunpack.c.l.s4 1966171168
          %v6638 = vunpack.c.0.s8 %v6637
          %v6639 = vlaneseq
          %v6640 = vshrl.u32 %v6639, 7
          %v6641 = vsub.s32 %v6638, %v6640
          %v6642 = vrot.slane %v6620, %v6641
          %v6644 = vunpack.c.l.s4 1966171168
          %v6645 = vunpack.c.0.s8 %v6644
          %v6646 = vlaneseq
          %v6647 = vshrl.u32 %v6646, 7
          %v6648 = vsub.s32 %v6645, %v6647
          %v6649 = vrot.slane %v6621, %v6648
          %v6650 = vcombine.low %v6628, %v6635
          %v6651 = vcombine.low %v6642, %v6649
          %v6653 = vunpack.c.l.s4 1966171168
          %v6654 = vunpack.c.0.s8 %v6653
          %v6655 = vlaneseq
          %v6656 = vshrl.u32 %v6655, 7
          %v6657 = vsub.s32 %v6654, %v6656
          %v6658 = vrot.slane %v6650, %v6657
          %v6660 = vunpack.c.l.s4 1966171168
          %v6661 = vunpack.c.0.s8 %v6660
          %v6662 = vlaneseq
          %v6663 = vshrl.u32 %v6662, 7
          %v6664 = vsub.s32 %v6661, %v6663
          %v6665 = vrot.slane %v6651, %v6664
          %v6666 = vcombine.low %v6658, %v6665
          %v6667 = vcombine.low %v3823, %v3827
          %v6668 = vcombine.low %v3831, %v3835
          %v6669 = vcombine.low %v3839, %v3843
          %v6670 = vcombine.low %v3847, %v3851
          %v6672 = vunpack.c.l.s4 1966171168
          %v6673 = vunpack.c.0.s8 %v6672
          %v6674 = vlaneseq
          %v6675 = vshrl.u32 %v6674, 7
          %v6676 = vsub.s32 %v6673, %v6675
          %v6677 = vrot.slane %v6667, %v6676
          %v6679 = vunpack.c.l.s4 1966171168
          %v6680 = vunpack.c.0.s8 %v6679
          %v6681 = vlaneseq
          %v6682 = vshrl.u32 %v6681, 7
          %v6683 = vsub.s32 %v6680, %v6682
          %v6684 = vrot.slane %v6668, %v6683
          %v6686 = vunpack.c.l.s4 1966171168
          %v6687 = vunpack.c.0.s8 %v6686
          %v6688 = vlaneseq
          %v6689 = vshrl.u32 %v6688, 7
          %v6690 = vsub.s32 %v6687, %v6689
          %v6691 = vrot.slane %v6669, %v6690
          %v6693 = vunpack.c.l.s4 1966171168
          %v6694 = vunpack.c.0.s8 %v6693
          %v6695 = vlaneseq
          %v6696 = vshrl.u32 %v6695, 7
          %v6697 = vsub.s32 %v6694, %v6696
          %v6698 = vrot.slane %v6670, %v6697
          %v6699 = vcombine.low %v6677, %v6684
          %v6700 = vcombine.low %v6691, %v6698
          %v6702 = vunpack.c.l.s4 1966171168
          %v6703 = vunpack.c.0.s8 %v6702
          %v6704 = vlaneseq
          %v6705 = vshrl.u32 %v6704, 7
          %v6706 = vsub.s32 %v6703, %v6705
          %v6707 = vrot.slane %v6699, %v6706
          %v6709 = vunpack.c.l.s4 1966171168
          %v6710 = vunpack.c.0.s8 %v6709
          %v6711 = vlaneseq
          %v6712 = vshrl.u32 %v6711, 7
          %v6713 = vsub.s32 %v6710, %v6712
          %v6714 = vrot.slane %v6700, %v6713
          %v6715 = vcombine.low %v6707, %v6714
          %v6716 = vcombine.low %v3855, %v3859
          %v6717 = vcombine.low %v3863, %v3867
          %v6718 = vcombine.low %v3871, %v3875
          %v6719 = vcombine.low %v3879, %v3883
          %v6721 = vunpack.c.l.s4 1966171168
          %v6722 = vunpack.c.0.s8 %v6721
          %v6723 = vlaneseq
          %v6724 = vshrl.u32 %v6723, 7
          %v6725 = vsub.s32 %v6722, %v6724
          %v6726 = vrot.slane %v6716, %v6725
          %v6728 = vunpack.c.l.s4 1966171168
          %v6729 = vunpack.c.0.s8 %v6728
          %v6730 = vlaneseq
          %v6731 = vshrl.u32 %v6730, 7
          %v6732 = vsub.s32 %v6729, %v6731
          %v6733 = vrot.slane %v6717, %v6732
          %v6735 = vunpack.c.l.s4 1966171168
          %v6736 = vunpack.c.0.s8 %v6735
          %v6737 = vlaneseq
          %v6738 = vshrl.u32 %v6737, 7
          %v6739 = vsub.s32 %v6736, %v6738
          %v6740 = vrot.slane %v6718, %v6739
          %v6742 = vunpack.c.l.s4 1966171168
          %v6743 = vunpack.c.0.s8 %v6742
          %v6744 = vlaneseq
          %v6745 = vshrl.u32 %v6744, 7
          %v6746 = vsub.s32 %v6743, %v6745
          %v6747 = vrot.slane %v6719, %v6746
          %v6748 = vcombine.low %v6726, %v6733
          %v6749 = vcombine.low %v6740, %v6747
          %v6751 = vunpack.c.l.s4 1966171168
          %v6752 = vunpack.c.0.s8 %v6751
          %v6753 = vlaneseq
          %v6754 = vshrl.u32 %v6753, 7
          %v6755 = vsub.s32 %v6752, %v6754
          %v6756 = vrot.slane %v6748, %v6755
          %v6758 = vunpack.c.l.s4 1966171168
          %v6759 = vunpack.c.0.s8 %v6758
          %v6760 = vlaneseq
          %v6761 = vshrl.u32 %v6760, 7
          %v6762 = vsub.s32 %v6759, %v6761
          %v6763 = vrot.slane %v6749, %v6762
          %v6764 = vcombine.low %v6756, %v6763
          %v6765 = vcombine.low %v3887, %v3891
          %v6766 = vcombine.low %v3895, %v3899
          %v6767 = vcombine.low %v3903, %v3907
          %v6768 = vcombine.low %v3911, %v3915
          %v6770 = vunpack.c.l.s4 1966171168
          %v6771 = vunpack.c.0.s8 %v6770
          %v6772 = vlaneseq
          %v6773 = vshrl.u32 %v6772, 7
          %v6774 = vsub.s32 %v6771, %v6773
          %v6775 = vrot.slane %v6765, %v6774
          %v6777 = vunpack.c.l.s4 1966171168
          %v6778 = vunpack.c.0.s8 %v6777
          %v6779 = vlaneseq
          %v6780 = vshrl.u32 %v6779, 7
          %v6781 = vsub.s32 %v6778, %v6780
          %v6782 = vrot.slane %v6766, %v6781
          %v6784 = vunpack.c.l.s4 1966171168
          %v6785 = vunpack.c.0.s8 %v6784
          %v6786 = vlaneseq
          %v6787 = vshrl.u32 %v6786, 7
          %v6788 = vsub.s32 %v6785, %v6787
          %v6789 = vrot.slane %v6767, %v6788
          %v6791 = vunpack.c.l.s4 1966171168
          %v6792 = vunpack.c.0.s8 %v6791
          %v6793 = vlaneseq
          %v6794 = vshrl.u32 %v6793, 7
          %v6795 = vsub.s32 %v6792, %v6794
          %v6796 = vrot.slane %v6768, %v6795
          %v6797 = vcombine.low %v6775, %v6782
          %v6798 = vcombine.low %v6789, %v6796
          %v6800 = vunpack.c.l.s4 1966171168
          %v6801 = vunpack.c.0.s8 %v6800
          %v6802 = vlaneseq
          %v6803 = vshrl.u32 %v6802, 7
          %v6804 = vsub.s32 %v6801, %v6803
          %v6805 = vrot.slane %v6797, %v6804
          %v6807 = vunpack.c.l.s4 1966171168
          %v6808 = vunpack.c.0.s8 %v6807
          %v6809 = vlaneseq
          %v6810 = vshrl.u32 %v6809, 7
          %v6811 = vsub.s32 %v6808, %v6810
          %v6812 = vrot.slane %v6798, %v6811
          %v6813 = vcombine.low %v6805, %v6812
          %v6814 = vcombine.low %v3919, %v3923
          %v6815 = vcombine.low %v3927, %v3931
          %v6816 = vcombine.low %v3935, %v3939
          %v6817 = vcombine.low %v3943, %v3947
          %v6819 = vunpack.c.l.s4 1966171168
          %v6820 = vunpack.c.0.s8 %v6819
          %v6821 = vlaneseq
          %v6822 = vshrl.u32 %v6821, 7
          %v6823 = vsub.s32 %v6820, %v6822
          %v6824 = vrot.slane %v6814, %v6823
          %v6826 = vunpack.c.l.s4 1966171168
          %v6827 = vunpack.c.0.s8 %v6826
          %v6828 = vlaneseq
          %v6829 = vshrl.u32 %v6828, 7
          %v6830 = vsub.s32 %v6827, %v6829
          %v6831 = vrot.slane %v6815, %v6830
          %v6833 = vunpack.c.l.s4 1966171168
          %v6834 = vunpack.c.0.s8 %v6833
          %v6835 = vlaneseq
          %v6836 = vshrl.u32 %v6835, 7
          %v6837 = vsub.s32 %v6834, %v6836
          %v6838 = vrot.slane %v6816, %v6837
          %v6840 = vunpack.c.l.s4 1966171168
          %v6841 = vunpack.c.0.s8 %v6840
          %v6842 = vlaneseq
          %v6843 = vshrl.u32 %v6842, 7
          %v6844 = vsub.s32 %v6841, %v6843
          %v6845 = vrot.slane %v6817, %v6844
          %v6846 = vcombine.low %v6824, %v6831
          %v6847 = vcombine.low %v6838, %v6845
          %v6849 = vunpack.c.l.s4 1966171168
          %v6850 = vunpack.c.0.s8 %v6849
          %v6851 = vlaneseq
          %v6852 = vshrl.u32 %v6851, 7
          %v6853 = vsub.s32 %v6850, %v6852
          %v6854 = vrot.slane %v6846, %v6853
          %v6856 = vunpack.c.l.s4 1966171168
          %v6857 = vunpack.c.0.s8 %v6856
          %v6858 = vlaneseq
          %v6859 = vshrl.u32 %v6858, 7
          %v6860 = vsub.s32 %v6857, %v6859
          %v6861 = vrot.slane %v6847, %v6860
          %v6862 = vcombine.low %v6854, %v6861
          %v6863 = vcombine.low %v3951, %v3955
          %v6864 = vcombine.low %v3959, %v3963
          %v6865 = vcombine.low %v3967, %v3971
          %v6866 = vcombine.low %v3975, %v3979
          %v6868 = vunpack.c.l.s4 1966171168
          %v6869 = vunpack.c.0.s8 %v6868
          %v6870 = vlaneseq
          %v6871 = vshrl.u32 %v6870, 7
          %v6872 = vsub.s32 %v6869, %v6871
          %v6873 = vrot.slane %v6863, %v6872
          %v6875 = vunpack.c.l.s4 1966171168
          %v6876 = vunpack.c.0.s8 %v6875
          %v6877 = vlaneseq
          %v6878 = vshrl.u32 %v6877, 7
          %v6879 = vsub.s32 %v6876, %v6878
          %v6880 = vrot.slane %v6864, %v6879
          %v6882 = vunpack.c.l.s4 1966171168
          %v6883 = vunpack.c.0.s8 %v6882
          %v6884 = vlaneseq
          %v6885 = vshrl.u32 %v6884, 7
          %v6886 = vsub.s32 %v6883, %v6885
          %v6887 = vrot.slane %v6865, %v6886
          %v6889 = vunpack.c.l.s4 1966171168
          %v6890 = vunpack.c.0.s8 %v6889
          %v6891 = vlaneseq
          %v6892 = vshrl.u32 %v6891, 7
          %v6893 = vsub.s32 %v6890, %v6892
          %v6894 = vrot.slane %v6866, %v6893
          %v6895 = vcombine.low %v6873, %v6880
          %v6896 = vcombine.low %v6887, %v6894
          %v6898 = vunpack.c.l.s4 1966171168
          %v6899 = vunpack.c.0.s8 %v6898
          %v6900 = vlaneseq
          %v6901 = vshrl.u32 %v6900, 7
          %v6902 = vsub.s32 %v6899, %v6901
          %v6903 = vrot.slane %v6895, %v6902
          %v6905 = vunpack.c.l.s4 1966171168
          %v6906 = vunpack.c.0.s8 %v6905
          %v6907 = vlaneseq
          %v6908 = vshrl.u32 %v6907, 7
          %v6909 = vsub.s32 %v6906, %v6908
          %v6910 = vrot.slane %v6896, %v6909
          %v6911 = vcombine.low %v6903, %v6910
          %v6912 = vcombine.low %v3983, %v3987
          %v6913 = vcombine.low %v3991, %v3995
          %v6914 = vcombine.low %v3999, %v4003
          %v6915 = vcombine.low %v4007, %v4011
          %v6917 = vunpack.c.l.s4 1966171168
          %v6918 = vunpack.c.0.s8 %v6917
          %v6919 = vlaneseq
          %v6920 = vshrl.u32 %v6919, 7
          %v6921 = vsub.s32 %v6918, %v6920
          %v6922 = vrot.slane %v6912, %v6921
          %v6924 = vunpack.c.l.s4 1966171168
          %v6925 = vunpack.c.0.s8 %v6924
          %v6926 = vlaneseq
          %v6927 = vshrl.u32 %v6926, 7
          %v6928 = vsub.s32 %v6925, %v6927
          %v6929 = vrot.slane %v6913, %v6928
          %v6931 = vunpack.c.l.s4 1966171168
          %v6932 = vunpack.c.0.s8 %v6931
          %v6933 = vlaneseq
          %v6934 = vshrl.u32 %v6933, 7
          %v6935 = vsub.s32 %v6932, %v6934
          %v6936 = vrot.slane %v6914, %v6935
          %v6938 = vunpack.c.l.s4 1966171168
          %v6939 = vunpack.c.0.s8 %v6938
          %v6940 = vlaneseq
          %v6941 = vshrl.u32 %v6940, 7
          %v6942 = vsub.s32 %v6939, %v6941
          %v6943 = vrot.slane %v6915, %v6942
          %v6944 = vcombine.low %v6922, %v6929
          %v6945 = vcombine.low %v6936, %v6943
          %v6947 = vunpack.c.l.s4 1966171168
          %v6948 = vunpack.c.0.s8 %v6947
          %v6949 = vlaneseq
          %v6950 = vshrl.u32 %v6949, 7
          %v6951 = vsub.s32 %v6948, %v6950
          %v6952 = vrot.slane %v6944, %v6951
          %v6954 = vunpack.c.l.s4 1966171168
          %v6955 = vunpack.c.0.s8 %v6954
          %v6956 = vlaneseq
          %v6957 = vshrl.u32 %v6956, 7
          %v6958 = vsub.s32 %v6955, %v6957
          %v6959 = vrot.slane %v6945, %v6958
          %v6960 = vcombine.low %v6952, %v6959
          %v6961 = vcombine.low %v4015, %v4019
          %v6962 = vcombine.low %v4023, %v4027
          %v6963 = vcombine.low %v4031, %v4035
          %v6964 = vcombine.low %v4039, %v4043
          %v6966 = vunpack.c.l.s4 1966171168
          %v6967 = vunpack.c.0.s8 %v6966
          %v6968 = vlaneseq
          %v6969 = vshrl.u32 %v6968, 7
          %v6970 = vsub.s32 %v6967, %v6969
          %v6971 = vrot.slane %v6961, %v6970
          %v6973 = vunpack.c.l.s4 1966171168
          %v6974 = vunpack.c.0.s8 %v6973
          %v6975 = vlaneseq
          %v6976 = vshrl.u32 %v6975, 7
          %v6977 = vsub.s32 %v6974, %v6976
          %v6978 = vrot.slane %v6962, %v6977
          %v6980 = vunpack.c.l.s4 1966171168
          %v6981 = vunpack.c.0.s8 %v6980
          %v6982 = vlaneseq
          %v6983 = vshrl.u32 %v6982, 7
          %v6984 = vsub.s32 %v6981, %v6983
          %v6985 = vrot.slane %v6963, %v6984
          %v6987 = vunpack.c.l.s4 1966171168
          %v6988 = vunpack.c.0.s8 %v6987
          %v6989 = vlaneseq
          %v6990 = vshrl.u32 %v6989, 7
          %v6991 = vsub.s32 %v6988, %v6990
          %v6992 = vrot.slane %v6964, %v6991
          %v6993 = vcombine.low %v6971, %v6978
          %v6994 = vcombine.low %v6985, %v6992
          %v6996 = vunpack.c.l.s4 1966171168
          %v6997 = vunpack.c.0.s8 %v6996
          %v6998 = vlaneseq
          %v6999 = vshrl.u32 %v6998, 7
          %v7000 = vsub.s32 %v6997, %v6999
          %v7001 = vrot.slane %v6993, %v7000
          %v7003 = vunpack.c.l.s4 1966171168
          %v7004 = vunpack.c.0.s8 %v7003
          %v7005 = vlaneseq
          %v7006 = vshrl.u32 %v7005, 7
          %v7007 = vsub.s32 %v7004, %v7006
          %v7008 = vrot.slane %v6994, %v7007
          %v7009 = vcombine.low %v7001, %v7008
          %v7010 = vcombine.low %v4047, %v4051
          %v7011 = vcombine.low %v4055, %v4059
          %v7012 = vcombine.low %v4063, %v4067
          %v7013 = vcombine.low %v4071, %v4075
          %v7015 = vunpack.c.l.s4 1966171168
          %v7016 = vunpack.c.0.s8 %v7015
          %v7017 = vlaneseq
          %v7018 = vshrl.u32 %v7017, 7
          %v7019 = vsub.s32 %v7016, %v7018
          %v7020 = vrot.slane %v7010, %v7019
          %v7022 = vunpack.c.l.s4 1966171168
          %v7023 = vunpack.c.0.s8 %v7022
          %v7024 = vlaneseq
          %v7025 = vshrl.u32 %v7024, 7
          %v7026 = vsub.s32 %v7023, %v7025
          %v7027 = vrot.slane %v7011, %v7026
          %v7029 = vunpack.c.l.s4 1966171168
          %v7030 = vunpack.c.0.s8 %v7029
          %v7031 = vlaneseq
          %v7032 = vshrl.u32 %v7031, 7
          %v7033 = vsub.s32 %v7030, %v7032
          %v7034 = vrot.slane %v7012, %v7033
          %v7036 = vunpack.c.l.s4 1966171168
          %v7037 = vunpack.c.0.s8 %v7036
          %v7038 = vlaneseq
          %v7039 = vshrl.u32 %v7038, 7
          %v7040 = vsub.s32 %v7037, %v7039
          %v7041 = vrot.slane %v7013, %v7040
          %v7042 = vcombine.low %v7020, %v7027
          %v7043 = vcombine.low %v7034, %v7041
          %v7045 = vunpack.c.l.s4 1966171168
          %v7046 = vunpack.c.0.s8 %v7045
          %v7047 = vlaneseq
          %v7048 = vshrl.u32 %v7047, 7
          %v7049 = vsub.s32 %v7046, %v7048
          %v7050 = vrot.slane %v7042, %v7049
          %v7052 = vunpack.c.l.s4 1966171168
          %v7053 = vunpack.c.0.s8 %v7052
          %v7054 = vlaneseq
          %v7055 = vshrl.u32 %v7054, 7
          %v7056 = vsub.s32 %v7053, %v7055
          %v7057 = vrot.slane %v7043, %v7056
          %v7058 = vcombine.low %v7050, %v7057
          %v7059 = vcombine.low %v4079, %v4083
          %v7060 = vcombine.low %v4087, %v4091
          %v7061 = vcombine.low %v4095, %v4099
          %v7062 = vcombine.low %v4103, %v4107
          %v7064 = vunpack.c.l.s4 1966171168
          %v7065 = vunpack.c.0.s8 %v7064
          %v7066 = vlaneseq
          %v7067 = vshrl.u32 %v7066, 7
          %v7068 = vsub.s32 %v7065, %v7067
          %v7069 = vrot.slane %v7059, %v7068
          %v7071 = vunpack.c.l.s4 1966171168
          %v7072 = vunpack.c.0.s8 %v7071
          %v7073 = vlaneseq
          %v7074 = vshrl.u32 %v7073, 7
          %v7075 = vsub.s32 %v7072, %v7074
          %v7076 = vrot.slane %v7060, %v7075
          %v7078 = vunpack.c.l.s4 1966171168
          %v7079 = vunpack.c.0.s8 %v7078
          %v7080 = vlaneseq
          %v7081 = vshrl.u32 %v7080, 7
          %v7082 = vsub.s32 %v7079, %v7081
          %v7083 = vrot.slane %v7061, %v7082
          %v7085 = vunpack.c.l.s4 1966171168
          %v7086 = vunpack.c.0.s8 %v7085
          %v7087 = vlaneseq
          %v7088 = vshrl.u32 %v7087, 7
          %v7089 = vsub.s32 %v7086, %v7088
          %v7090 = vrot.slane %v7062, %v7089
          %v7091 = vcombine.low %v7069, %v7076
          %v7092 = vcombine.low %v7083, %v7090
          %v7094 = vunpack.c.l.s4 1966171168
          %v7095 = vunpack.c.0.s8 %v7094
          %v7096 = vlaneseq
          %v7097 = vshrl.u32 %v7096, 7
          %v7098 = vsub.s32 %v7095, %v7097
          %v7099 = vrot.slane %v7091, %v7098
          %v7101 = vunpack.c.l.s4 1966171168
          %v7102 = vunpack.c.0.s8 %v7101
          %v7103 = vlaneseq
          %v7104 = vshrl.u32 %v7103, 7
          %v7105 = vsub.s32 %v7102, %v7104
          %v7106 = vrot.slane %v7092, %v7105
          %v7107 = vcombine.low %v7099, %v7106
          %v7108 = vcombine.low %v4111, %v4115
          %v7109 = vcombine.low %v4119, %v4123
          %v7110 = vcombine.low %v4127, %v4131
          %v7111 = vcombine.low %v4135, %v4139
          %v7113 = vunpack.c.l.s4 1966171168
          %v7114 = vunpack.c.0.s8 %v7113
          %v7115 = vlaneseq
          %v7116 = vshrl.u32 %v7115, 7
          %v7117 = vsub.s32 %v7114, %v7116
          %v7118 = vrot.slane %v7108, %v7117
          %v7120 = vunpack.c.l.s4 1966171168
          %v7121 = vunpack.c.0.s8 %v7120
          %v7122 = vlaneseq
          %v7123 = vshrl.u32 %v7122, 7
          %v7124 = vsub.s32 %v7121, %v7123
          %v7125 = vrot.slane %v7109, %v7124
          %v7127 = vunpack.c.l.s4 1966171168
          %v7128 = vunpack.c.0.s8 %v7127
          %v7129 = vlaneseq
          %v7130 = vshrl.u32 %v7129, 7
          %v7131 = vsub.s32 %v7128, %v7130
          %v7132 = vrot.slane %v7110, %v7131
          %v7134 = vunpack.c.l.s4 1966171168
          %v7135 = vunpack.c.0.s8 %v7134
          %v7136 = vlaneseq
          %v7137 = vshrl.u32 %v7136, 7
          %v7138 = vsub.s32 %v7135, %v7137
          %v7139 = vrot.slane %v7111, %v7138
          %v7140 = vcombine.low %v7118, %v7125
          %v7141 = vcombine.low %v7132, %v7139
          %v7143 = vunpack.c.l.s4 1966171168
          %v7144 = vunpack.c.0.s8 %v7143
          %v7145 = vlaneseq
          %v7146 = vshrl.u32 %v7145, 7
          %v7147 = vsub.s32 %v7144, %v7146
          %v7148 = vrot.slane %v7140, %v7147
          %v7150 = vunpack.c.l.s4 1966171168
          %v7151 = vunpack.c.0.s8 %v7150
          %v7152 = vlaneseq
          %v7153 = vshrl.u32 %v7152, 7
          %v7154 = vsub.s32 %v7151, %v7153
          %v7155 = vrot.slane %v7141, %v7154
          %v7156 = vcombine.low %v7148, %v7155
          %v7157 = vcombine.low %v4143, %v4147
          %v7158 = vcombine.low %v4151, %v4155
          %v7159 = vcombine.low %v4159, %v4163
          %v7160 = vcombine.low %v4167, %v4171
          %v7162 = vunpack.c.l.s4 1966171168
          %v7163 = vunpack.c.0.s8 %v7162
          %v7164 = vlaneseq
          %v7165 = vshrl.u32 %v7164, 7
          %v7166 = vsub.s32 %v7163, %v7165
          %v7167 = vrot.slane %v7157, %v7166
          %v7169 = vunpack.c.l.s4 1966171168
          %v7170 = vunpack.c.0.s8 %v7169
          %v7171 = vlaneseq
          %v7172 = vshrl.u32 %v7171, 7
          %v7173 = vsub.s32 %v7170, %v7172
          %v7174 = vrot.slane %v7158, %v7173
          %v7176 = vunpack.c.l.s4 1966171168
          %v7177 = vunpack.c.0.s8 %v7176
          %v7178 = vlaneseq
          %v7179 = vshrl.u32 %v7178, 7
          %v7180 = vsub.s32 %v7177, %v7179
          %v7181 = vrot.slane %v7159, %v7180
          %v7183 = vunpack.c.l.s4 1966171168
          %v7184 = vunpack.c.0.s8 %v7183
          %v7185 = vlaneseq
          %v7186 = vshrl.u32 %v7185, 7
          %v7187 = vsub.s32 %v7184, %v7186
          %v7188 = vrot.slane %v7160, %v7187
          %v7189 = vcombine.low %v7167, %v7174
          %v7190 = vcombine.low %v7181, %v7188
          %v7192 = vunpack.c.l.s4 1966171168
          %v7193 = vunpack.c.0.s8 %v7192
          %v7194 = vlaneseq
          %v7195 = vshrl.u32 %v7194, 7
          %v7196 = vsub.s32 %v7193, %v7195
          %v7197 = vrot.slane %v7189, %v7196
          %v7199 = vunpack.c.l.s4 1966171168
          %v7200 = vunpack.c.0.s8 %v7199
          %v7201 = vlaneseq
          %v7202 = vshrl.u32 %v7201, 7
          %v7203 = vsub.s32 %v7200, %v7202
          %v7204 = vrot.slane %v7190, %v7203
          %v7205 = vcombine.low %v7197, %v7204
          %v7206 = vcombine.low %v4175, %v4179
          %v7207 = vcombine.low %v4183, %v4187
          %v7208 = vcombine.low %v4191, %v4195
          %v7209 = vcombine.low %v4199, %v4203
          %v7211 = vunpack.c.l.s4 1966171168
          %v7212 = vunpack.c.0.s8 %v7211
          %v7213 = vlaneseq
          %v7214 = vshrl.u32 %v7213, 7
          %v7215 = vsub.s32 %v7212, %v7214
          %v7216 = vrot.slane %v7206, %v7215
          %v7218 = vunpack.c.l.s4 1966171168
          %v7219 = vunpack.c.0.s8 %v7218
          %v7220 = vlaneseq
          %v7221 = vshrl.u32 %v7220, 7
          %v7222 = vsub.s32 %v7219, %v7221
          %v7223 = vrot.slane %v7207, %v7222
          %v7225 = vunpack.c.l.s4 1966171168
          %v7226 = vunpack.c.0.s8 %v7225
          %v7227 = vlaneseq
          %v7228 = vshrl.u32 %v7227, 7
          %v7229 = vsub.s32 %v7226, %v7228
          %v7230 = vrot.slane %v7208, %v7229
          %v7232 = vunpack.c.l.s4 1966171168
          %v7233 = vunpack.c.0.s8 %v7232
          %v7234 = vlaneseq
          %v7235 = vshrl.u32 %v7234, 7
          %v7236 = vsub.s32 %v7233, %v7235
          %v7237 = vrot.slane %v7209, %v7236
          %v7238 = vcombine.low %v7216, %v7223
          %v7239 = vcombine.low %v7230, %v7237
          %v7241 = vunpack.c.l.s4 1966171168
          %v7242 = vunpack.c.0.s8 %v7241
          %v7243 = vlaneseq
          %v7244 = vshrl.u32 %v7243, 7
          %v7245 = vsub.s32 %v7242, %v7244
          %v7246 = vrot.slane %v7238, %v7245
          %v7248 = vunpack.c.l.s4 1966171168
          %v7249 = vunpack.c.0.s8 %v7248
          %v7250 = vlaneseq
          %v7251 = vshrl.u32 %v7250, 7
          %v7252 = vsub.s32 %v7249, %v7251
          %v7253 = vrot.slane %v7239, %v7252
          %v7254 = vcombine.low %v7246, %v7253
          %v7255 = vcombine.low %v4207, %v4211
          %v7256 = vcombine.low %v4215, %v4219
          %v7257 = vcombine.low %v4223, %v4227
          %v7258 = vcombine.low %v4231, %v4235
          %v7260 = vunpack.c.l.s4 1966171168
          %v7261 = vunpack.c.0.s8 %v7260
          %v7262 = vlaneseq
          %v7263 = vshrl.u32 %v7262, 7
          %v7264 = vsub.s32 %v7261, %v7263
          %v7265 = vrot.slane %v7255, %v7264
          %v7267 = vunpack.c.l.s4 1966171168
          %v7268 = vunpack.c.0.s8 %v7267
          %v7269 = vlaneseq
          %v7270 = vshrl.u32 %v7269, 7
          %v7271 = vsub.s32 %v7268, %v7270
          %v7272 = vrot.slane %v7256, %v7271
          %v7274 = vunpack.c.l.s4 1966171168
          %v7275 = vunpack.c.0.s8 %v7274
          %v7276 = vlaneseq
          %v7277 = vshrl.u32 %v7276, 7
          %v7278 = vsub.s32 %v7275, %v7277
          %v7279 = vrot.slane %v7257, %v7278
          %v7281 = vunpack.c.l.s4 1966171168
          %v7282 = vunpack.c.0.s8 %v7281
          %v7283 = vlaneseq
          %v7284 = vshrl.u32 %v7283, 7
          %v7285 = vsub.s32 %v7282, %v7284
          %v7286 = vrot.slane %v7258, %v7285
          %v7287 = vcombine.low %v7265, %v7272
          %v7288 = vcombine.low %v7279, %v7286
          %v7290 = vunpack.c.l.s4 1966171168
          %v7291 = vunpack.c.0.s8 %v7290
          %v7292 = vlaneseq
          %v7293 = vshrl.u32 %v7292, 7
          %v7294 = vsub.s32 %v7291, %v7293
          %v7295 = vrot.slane %v7287, %v7294
          %v7297 = vunpack.c.l.s4 1966171168
          %v7298 = vunpack.c.0.s8 %v7297
          %v7299 = vlaneseq
          %v7300 = vshrl.u32 %v7299, 7
          %v7301 = vsub.s32 %v7298, %v7300
          %v7302 = vrot.slane %v7288, %v7301
          %v7303 = vcombine.low %v7295, %v7302
          %v7304 = vcombine.low %v4239, %v4243
          %v7305 = vcombine.low %v4247, %v4251
          %v7306 = vcombine.low %v4255, %v4259
          %v7307 = vcombine.low %v4263, %v4267
          %v7309 = vunpack.c.l.s4 1966171168
          %v7310 = vunpack.c.0.s8 %v7309
          %v7311 = vlaneseq
          %v7312 = vshrl.u32 %v7311, 7
          %v7313 = vsub.s32 %v7310, %v7312
          %v7314 = vrot.slane %v7304, %v7313
          %v7316 = vunpack.c.l.s4 1966171168
          %v7317 = vunpack.c.0.s8 %v7316
          %v7318 = vlaneseq
          %v7319 = vshrl.u32 %v7318, 7
          %v7320 = vsub.s32 %v7317, %v7319
          %v7321 = vrot.slane %v7305, %v7320
          %v7323 = vunpack.c.l.s4 1966171168
          %v7324 = vunpack.c.0.s8 %v7323
          %v7325 = vlaneseq
          %v7326 = vshrl.u32 %v7325, 7
          %v7327 = vsub.s32 %v7324, %v7326
          %v7328 = vrot.slane %v7306, %v7327
          %v7330 = vunpack.c.l.s4 1966171168
          %v7331 = vunpack.c.0.s8 %v7330
          %v7332 = vlaneseq
          %v7333 = vshrl.u32 %v7332, 7
          %v7334 = vsub.s32 %v7331, %v7333
          %v7335 = vrot.slane %v7307, %v7334
          %v7336 = vcombine.low %v7314, %v7321
          %v7337 = vcombine.low %v7328, %v7335
          %v7339 = vunpack.c.l.s4 1966171168
          %v7340 = vunpack.c.0.s8 %v7339
          %v7341 = vlaneseq
          %v7342 = vshrl.u32 %v7341, 7
          %v7343 = vsub.s32 %v7340, %v7342
          %v7344 = vrot.slane %v7336, %v7343
          %v7346 = vunpack.c.l.s4 1966171168
          %v7347 = vunpack.c.0.s8 %v7346
          %v7348 = vlaneseq
          %v7349 = vshrl.u32 %v7348, 7
          %v7350 = vsub.s32 %v7347, %v7349
          %v7351 = vrot.slane %v7337, %v7350
          %v7352 = vcombine.low %v7344, %v7351
          %v7353 = vcombine.low %v4271, %v4275
          %v7354 = vcombine.low %v4279, %v4283
          %v7355 = vcombine.low %v4287, %v4291
          %v7356 = vcombine.low %v4295, %v4299
          %v7358 = vunpack.c.l.s4 1966171168
          %v7359 = vunpack.c.0.s8 %v7358
          %v7360 = vlaneseq
          %v7361 = vshrl.u32 %v7360, 7
          %v7362 = vsub.s32 %v7359, %v7361
          %v7363 = vrot.slane %v7353, %v7362
          %v7365 = vunpack.c.l.s4 1966171168
          %v7366 = vunpack.c.0.s8 %v7365
          %v7367 = vlaneseq
          %v7368 = vshrl.u32 %v7367, 7
          %v7369 = vsub.s32 %v7366, %v7368
          %v7370 = vrot.slane %v7354, %v7369
          %v7372 = vunpack.c.l.s4 1966171168
          %v7373 = vunpack.c.0.s8 %v7372
          %v7374 = vlaneseq
          %v7375 = vshrl.u32 %v7374, 7
          %v7376 = vsub.s32 %v7373, %v7375
          %v7377 = vrot.slane %v7355, %v7376
          %v7379 = vunpack.c.l.s4 1966171168
          %v7380 = vunpack.c.0.s8 %v7379
          %v7381 = vlaneseq
          %v7382 = vshrl.u32 %v7381, 7
          %v7383 = vsub.s32 %v7380, %v7382
          %v7384 = vrot.slane %v7356, %v7383
          %v7385 = vcombine.low %v7363, %v7370
          %v7386 = vcombine.low %v7377, %v7384
          %v7388 = vunpack.c.l.s4 1966171168
          %v7389 = vunpack.c.0.s8 %v7388
          %v7390 = vlaneseq
          %v7391 = vshrl.u32 %v7390, 7
          %v7392 = vsub.s32 %v7389, %v7391
          %v7393 = vrot.slane %v7385, %v7392
          %v7395 = vunpack.c.l.s4 1966171168
          %v7396 = vunpack.c.0.s8 %v7395
          %v7397 = vlaneseq
          %v7398 = vshrl.u32 %v7397, 7
          %v7399 = vsub.s32 %v7396, %v7398
          %v7400 = vrot.slane %v7386, %v7399
          %v7401 = vcombine.low %v7393, %v7400
          %v7402 = vcombine.low %v4303, %v4307
          %v7403 = vcombine.low %v4311, %v4315
          %v7404 = vcombine.low %v4319, %v4323
          %v7405 = vcombine.low %v4327, %v4331
          %v7407 = vunpack.c.l.s4 1966171168
          %v7408 = vunpack.c.0.s8 %v7407
          %v7409 = vlaneseq
          %v7410 = vshrl.u32 %v7409, 7
          %v7411 = vsub.s32 %v7408, %v7410
          %v7412 = vrot.slane %v7402, %v7411
          %v7414 = vunpack.c.l.s4 1966171168
          %v7415 = vunpack.c.0.s8 %v7414
          %v7416 = vlaneseq
          %v7417 = vshrl.u32 %v7416, 7
          %v7418 = vsub.s32 %v7415, %v7417
          %v7419 = vrot.slane %v7403, %v7418
          %v7421 = vunpack.c.l.s4 1966171168
          %v7422 = vunpack.c.0.s8 %v7421
          %v7423 = vlaneseq
          %v7424 = vshrl.u32 %v7423, 7
          %v7425 = vsub.s32 %v7422, %v7424
          %v7426 = vrot.slane %v7404, %v7425
          %v7428 = vunpack.c.l.s4 1966171168
          %v7429 = vunpack.c.0.s8 %v7428
          %v7430 = vlaneseq
          %v7431 = vshrl.u32 %v7430, 7
          %v7432 = vsub.s32 %v7429, %v7431
          %v7433 = vrot.slane %v7405, %v7432
          %v7434 = vcombine.low %v7412, %v7419
          %v7435 = vcombine.low %v7426, %v7433
          %v7437 = vunpack.c.l.s4 1966171168
          %v7438 = vunpack.c.0.s8 %v7437
          %v7439 = vlaneseq
          %v7440 = vshrl.u32 %v7439, 7
          %v7441 = vsub.s32 %v7438, %v7440
          %v7442 = vrot.slane %v7434, %v7441
          %v7444 = vunpack.c.l.s4 1966171168
          %v7445 = vunpack.c.0.s8 %v7444
          %v7446 = vlaneseq
          %v7447 = vshrl.u32 %v7446, 7
          %v7448 = vsub.s32 %v7445, %v7447
          %v7449 = vrot.slane %v7435, %v7448
          %v7450 = vcombine.low %v7442, %v7449
          %v7451 = vcombine.low %v4335, %v4339
          %v7452 = vcombine.low %v4343, %v4347
          %v7453 = vcombine.low %v4351, %v4355
          %v7454 = vcombine.low %v4359, %v4363
          %v7456 = vunpack.c.l.s4 1966171168
          %v7457 = vunpack.c.0.s8 %v7456
          %v7458 = vlaneseq
          %v7459 = vshrl.u32 %v7458, 7
          %v7460 = vsub.s32 %v7457, %v7459
          %v7461 = vrot.slane %v7451, %v7460
          %v7463 = vunpack.c.l.s4 1966171168
          %v7464 = vunpack.c.0.s8 %v7463
          %v7465 = vlaneseq
          %v7466 = vshrl.u32 %v7465, 7
          %v7467 = vsub.s32 %v7464, %v7466
          %v7468 = vrot.slane %v7452, %v7467
          %v7470 = vunpack.c.l.s4 1966171168
          %v7471 = vunpack.c.0.s8 %v7470
          %v7472 = vlaneseq
          %v7473 = vshrl.u32 %v7472, 7
          %v7474 = vsub.s32 %v7471, %v7473
          %v7475 = vrot.slane %v7453, %v7474
          %v7477 = vunpack.c.l.s4 1966171168
          %v7478 = vunpack.c.0.s8 %v7477
          %v7479 = vlaneseq
          %v7480 = vshrl.u32 %v7479, 7
          %v7481 = vsub.s32 %v7478, %v7480
          %v7482 = vrot.slane %v7454, %v7481
          %v7483 = vcombine.low %v7461, %v7468
          %v7484 = vcombine.low %v7475, %v7482
          %v7486 = vunpack.c.l.s4 1966171168
          %v7487 = vunpack.c.0.s8 %v7486
          %v7488 = vlaneseq
          %v7489 = vshrl.u32 %v7488, 7
          %v7490 = vsub.s32 %v7487, %v7489
          %v7491 = vrot.slane %v7483, %v7490
          %v7493 = vunpack.c.l.s4 1966171168
          %v7494 = vunpack.c.0.s8 %v7493
          %v7495 = vlaneseq
          %v7496 = vshrl.u32 %v7495, 7
          %v7497 = vsub.s32 %v7494, %v7496
          %v7498 = vrot.slane %v7484, %v7497
          %v7499 = vcombine.low %v7491, %v7498
          %7500 = vset.pattern.permute.xlu0 0
          %7501 = vperm.xlu0 %7500, %v4412
          %v7502 = vpop.permute.xlu0 %7501
          %7503 = vset.pattern.permute.xlu0 0
          %7504 = vperm.xlu0 %7503, %v4461
          %v7505 = vpop.permute.xlu0 %7504
          %7506 = vset.pattern.permute.xlu0 0
          %7507 = vperm.xlu0 %7506, %v4510
          %v7508 = vpop.permute.xlu0 %7507
          %7509 = vset.pattern.permute.xlu0 0
          %7510 = vperm.xlu0 %7509, %v4559
          %v7511 = vpop.permute.xlu0 %7510
          %7512 = vset.pattern.permute.xlu0 0
          %7513 = vperm.xlu0 %7512, %v4608
          %v7514 = vpop.permute.xlu0 %7513
          %7515 = vset.pattern.permute.xlu0 0
          %7516 = vperm.xlu0 %7515, %v4657
          %v7517 = vpop.permute.xlu0 %7516
          %7518 = vset.pattern.permute.xlu0 0
          %7519 = vperm.xlu0 %7518, %v4706
          %v7520 = vpop.permute.xlu0 %7519
          %7521 = vset.pattern.permute.xlu0 0
          %7522 = vperm.xlu0 %7521, %v4755
          %v7523 = vpop.permute.xlu0 %7522
          %7524 = vset.pattern.permute.xlu0 0
          %7525 = vperm.xlu0 %7524, %v4804
          %v7526 = vpop.permute.xlu0 %7525
          %7527 = vset.pattern.permute.xlu0 0
          %7528 = vperm.xlu0 %7527, %v4853
          %v7529 = vpop.permute.xlu0 %7528
          %7530 = vset.pattern.permute.xlu0 0
          %7531 = vperm.xlu0 %7530, %v4902
          %v7532 = vpop.permute.xlu0 %7531
          %7533 = vset.pattern.permute.xlu0 0
          %7534 = vperm.xlu0 %7533, %v4951
          %v7535 = vpop.permute.xlu0 %7534
          %7536 = vset.pattern.permute.xlu0 0
          %7537 = vperm.xlu0 %7536, %v5000
          %v7538 = vpop.permute.xlu0 %7537
          %7539 = vset.pattern.permute.xlu0 0
          %7540 = vperm.xlu0 %7539, %v5049
          %v7541 = vpop.permute.xlu0 %7540
          %7542 = vset.pattern.permute.xlu0 0
          %7543 = vperm.xlu0 %7542, %v5098
          %v7544 = vpop.permute.xlu0 %7543
          %7545 = vset.pattern.permute.xlu0 0
          %7546 = vperm.xlu0 %7545, %v5147
          %v7547 = vpop.permute.xlu0 %7546
          %7548 = vset.pattern.permute.xlu0 0
          %7549 = vperm.xlu0 %7548, %v5196
          %v7550 = vpop.permute.xlu0 %7549
          %7551 = vset.pattern.permute.xlu0 0
          %7552 = vperm.xlu0 %7551, %v5245
          %v7553 = vpop.permute.xlu0 %7552
          %7554 = vset.pattern.permute.xlu0 0
          %7555 = vperm.xlu0 %7554, %v5294
          %v7556 = vpop.permute.xlu0 %7555
          %7557 = vset.pattern.permute.xlu0 0
          %7558 = vperm.xlu0 %7557, %v5343
          %v7559 = vpop.permute.xlu0 %7558
          %7560 = vset.pattern.permute.xlu0 0
          %7561 = vperm.xlu0 %7560, %v5392
          %v7562 = vpop.permute.xlu0 %7561
          %7563 = vset.pattern.permute.xlu0 0
          %7564 = vperm.xlu0 %7563, %v5441
          %v7565 = vpop.permute.xlu0 %7564
          %7566 = vset.pattern.permute.xlu0 0
          %7567 = vperm.xlu0 %7566, %v5490
          %v7568 = vpop.permute.xlu0 %7567
          %7569 = vset.pattern.permute.xlu0 0
          %7570 = vperm.xlu0 %7569, %v5539
          %v7571 = vpop.permute.xlu0 %7570
          %7572 = vset.pattern.permute.xlu0 0
          %7573 = vperm.xlu0 %7572, %v5588
          %v7574 = vpop.permute.xlu0 %7573
          %7575 = vset.pattern.permute.xlu0 0
          %7576 = vperm.xlu0 %7575, %v5637
          %v7577 = vpop.permute.xlu0 %7576
          %7578 = vset.pattern.permute.xlu0 0
          %7579 = vperm.xlu0 %7578, %v5686
          %v7580 = vpop.permute.xlu0 %7579
          %7581 = vset.pattern.permute.xlu0 0
          %7582 = vperm.xlu0 %7581, %v5735
          %v7583 = vpop.permute.xlu0 %7582
          %7584 = vset.pattern.permute.xlu0 0
          %7585 = vperm.xlu0 %7584, %v5784
          %v7586 = vpop.permute.xlu0 %7585
          %7587 = vset.pattern.permute.xlu0 0
          %7588 = vperm.xlu0 %7587, %v5833
          %v7589 = vpop.permute.xlu0 %7588
          %7590 = vset.pattern.permute.xlu0 0
          %7591 = vperm.xlu0 %7590, %v5882
          %v7592 = vpop.permute.xlu0 %7591
          %7593 = vset.pattern.permute.xlu0 0
          %7594 = vperm.xlu0 %7593, %v5931
          %v7595 = vpop.permute.xlu0 %7594
          %7596 = vset.pattern.permute.xlu0 0
          %7597 = vperm.xlu0 %7596, %v5980
          %v7598 = vpop.permute.xlu0 %7597
          %7599 = vset.pattern.permute.xlu0 0
          %7600 = vperm.xlu0 %7599, %v6029
          %v7601 = vpop.permute.xlu0 %7600
          %7602 = vset.pattern.permute.xlu0 0
          %7603 = vperm.xlu0 %7602, %v6078
          %v7604 = vpop.permute.xlu0 %7603
          %7605 = vset.pattern.permute.xlu0 0
          %7606 = vperm.xlu0 %7605, %v6127
          %v7607 = vpop.permute.xlu0 %7606
          %7608 = vset.pattern.permute.xlu0 0
          %7609 = vperm.xlu0 %7608, %v6176
          %v7610 = vpop.permute.xlu0 %7609
          %7611 = vset.pattern.permute.xlu0 0
          %7612 = vperm.xlu0 %7611, %v6225
          %v7613 = vpop.permute.xlu0 %7612
          %7614 = vset.pattern.permute.xlu0 0
          %7615 = vperm.xlu0 %7614, %v6274
          %v7616 = vpop.permute.xlu0 %7615
          %7617 = vset.pattern.permute.xlu0 0
          %7618 = vperm.xlu0 %7617, %v6323
          %v7619 = vpop.permute.xlu0 %7618
          %7620 = vset.pattern.permute.xlu0 0
          %7621 = vperm.xlu0 %7620, %v6372
          %v7622 = vpop.permute.xlu0 %7621
          %7623 = vset.pattern.permute.xlu0 0
          %7624 = vperm.xlu0 %7623, %v6421
          %v7625 = vpop.permute.xlu0 %7624
          %7626 = vset.pattern.permute.xlu0 0
          %7627 = vperm.xlu0 %7626, %v6470
          %v7628 = vpop.permute.xlu0 %7627
          %7629 = vset.pattern.permute.xlu0 0
          %7630 = vperm.xlu0 %7629, %v6519
          %v7631 = vpop.permute.xlu0 %7630
          %7632 = vset.pattern.permute.xlu0 0
          %7633 = vperm.xlu0 %7632, %v6568
          %v7634 = vpop.permute.xlu0 %7633
          %7635 = vset.pattern.permute.xlu0 0
          %7636 = vperm.xlu0 %7635, %v6617
          %v7637 = vpop.permute.xlu0 %7636
          %7638 = vset.pattern.permute.xlu0 0
          %7639 = vperm.xlu0 %7638, %v6666
          %v7640 = vpop.permute.xlu0 %7639
          %7641 = vset.pattern.permute.xlu0 0
          %7642 = vperm.xlu0 %7641, %v6715
          %v7643 = vpop.permute.xlu0 %7642
          %7644 = vset.pattern.permute.xlu0 0
          %7645 = vperm.xlu0 %7644, %v6764
          %v7646 = vpop.permute.xlu0 %7645
          %7647 = vset.pattern.permute.xlu0 0
          %7648 = vperm.xlu0 %7647, %v6813
          %v7649 = vpop.permute.xlu0 %7648
          %7650 = vset.pattern.permute.xlu0 0
          %7651 = vperm.xlu0 %7650, %v6862
          %v7652 = vpop.permute.xlu0 %7651
          %7653 = vset.pattern.permute.xlu0 0
          %7654 = vperm.xlu0 %7653, %v6911
          %v7655 = vpop.permute.xlu0 %7654
          %7656 = vset.pattern.permute.xlu0 0
          %7657 = vperm.xlu0 %7656, %v6960
          %v7658 = vpop.permute.xlu0 %7657
          %7659 = vset.pattern.permute.xlu0 0
          %7660 = vperm.xlu0 %7659, %v7009
          %v7661 = vpop.permute.xlu0 %7660
          %7662 = vset.pattern.permute.xlu0 0
          %7663 = vperm.xlu0 %7662, %v7058
          %v7664 = vpop.permute.xlu0 %7663
          %7665 = vset.pattern.permute.xlu0 0
          %7666 = vperm.xlu0 %7665, %v7107
          %v7667 = vpop.permute.xlu0 %7666
          %7668 = vset.pattern.permute.xlu0 0
          %7669 = vperm.xlu0 %7668, %v7156
          %v7670 = vpop.permute.xlu0 %7669
          %7671 = vset.pattern.permute.xlu0 0
          %7672 = vperm.xlu0 %7671, %v7205
          %v7673 = vpop.permute.xlu0 %7672
          %7674 = vset.pattern.permute.xlu0 0
          %7675 = vperm.xlu0 %7674, %v7254
          %v7676 = vpop.permute.xlu0 %7675
          %7677 = vset.pattern.permute.xlu0 0
          %7678 = vperm.xlu0 %7677, %v7303
          %v7679 = vpop.permute.xlu0 %7678
          %7680 = vset.pattern.permute.xlu0 0
          %7681 = vperm.xlu0 %7680, %v7352
          %v7682 = vpop.permute.xlu0 %7681
          %7683 = vset.pattern.permute.xlu0 0
          %7684 = vperm.xlu0 %7683, %v7401
          %v7685 = vpop.permute.xlu0 %7684
          %7686 = vset.pattern.permute.xlu0 0
          %7687 = vperm.xlu0 %7686, %v7450
          %v7688 = vpop.permute.xlu0 %7687
          %7689 = vset.pattern.permute.xlu0 0
          %7690 = vperm.xlu0 %7689, %v7499
          %v7691 = vpop.permute.xlu0 %7690
          %v7692 = vlaneseq
          %v7693 = vand.u32 %v7692, 127
          %v7694 = vlaneseq
          %v7695 = vshrl.u32 %v7694, 7
          %v7696 = vsub.s32 %v7693, %v7695
          %v7697 = vrot.slane %v7502, %v7696
          %v7698 = vadd.s32 %v7693, 4294967288
          %v7699 = vlaneseq
          %v7700 = vshrl.u32 %v7699, 7
          %v7701 = vsub.s32 %v7698, %v7700
          %v7702 = vrot.slane %v7505, %v7701
          %vm7703 = vcmask 130112
          %v7704 = vsel %vm7703, %v7702, %v7697
          %v7705 = vadd.s32 %v7693, 4294967280
          %v7706 = vlaneseq
          %v7707 = vshrl.u32 %v7706, 7
          %v7708 = vsub.s32 %v7705, %v7707
          %v7709 = vrot.slane %v7508, %v7708
          %vm7710 = vcmask 195712
          %v7711 = vsel %vm7710, %v7709, %v7704
          %v7712 = vadd.s32 %v7693, 4294967272
          %v7713 = vlaneseq
          %v7714 = vshrl.u32 %v7713, 7
          %v7715 = vsub.s32 %v7712, %v7714
          %v7716 = vrot.slane %v7511, %v7715
          %vm7717 = vcmask 261312
          %v7718 = vsel %vm7717, %v7716, %v7711
          %v7719 = vadd.s32 %v7693, 4294967264
          %v7720 = vlaneseq
          %v7721 = vshrl.u32 %v7720, 7
          %v7722 = vsub.s32 %v7719, %v7721
          %v7723 = vrot.slane %v7514, %v7722
          %vm7724 = vcmask 326912
          %v7725 = vsel %vm7724, %v7723, %v7718
          %v7726 = vadd.s32 %v7693, 4294967256
          %v7727 = vlaneseq
          %v7728 = vshrl.u32 %v7727, 7
          %v7729 = vsub.s32 %v7726, %v7728
          %v7730 = vrot.slane %v7517, %v7729
          %vm7731 = vcmask 392512
          %v7732 = vsel %vm7731, %v7730, %v7725
          %v7733 = vadd.s32 %v7693, 4294967248
          %v7734 = vlaneseq
          %v7735 = vshrl.u32 %v7734, 7
          %v7736 = vsub.s32 %v7733, %v7735
          %v7737 = vrot.slane %v7520, %v7736
          %vm7738 = vcmask 458112
          %v7739 = vsel %vm7738, %v7737, %v7732
          %v7740 = vadd.s32 %v7693, 4294967240
          %v7741 = vlaneseq
          %v7742 = vshrl.u32 %v7741, 7
          %v7743 = vsub.s32 %v7740, %v7742
          %v7744 = vrot.slane %v7523, %v7743
          %vm7745 = vcmask 523712
          %v7746 = vsel %vm7745, %v7744, %v7739
          %v7747 = vadd.s32 %v7693, 4294967232
          %v7748 = vlaneseq
          %v7749 = vshrl.u32 %v7748, 7
          %v7750 = vsub.s32 %v7747, %v7749
          %v7751 = vrot.slane %v7526, %v7750
          %vm7752 = vcmask 589312
          %v7753 = vsel %vm7752, %v7751, %v7746
          %v7754 = vadd.s32 %v7693, 4294967224
          %v7755 = vlaneseq
          %v7756 = vshrl.u32 %v7755, 7
          %v7757 = vsub.s32 %v7754, %v7756
          %v7758 = vrot.slane %v7529, %v7757
          %vm7759 = vcmask 654912
          %v7760 = vsel %vm7759, %v7758, %v7753
          %v7761 = vadd.s32 %v7693, 4294967216
          %v7762 = vlaneseq
          %v7763 = vshrl.u32 %v7762, 7
          %v7764 = vsub.s32 %v7761, %v7763
          %v7765 = vrot.slane %v7532, %v7764
          %vm7766 = vcmask 720512
          %v7767 = vsel %vm7766, %v7765, %v7760
          %v7768 = vadd.s32 %v7693, 4294967208
          %v7769 = vlaneseq
          %v7770 = vshrl.u32 %v7769, 7
          %v7771 = vsub.s32 %v7768, %v7770
          %v7772 = vrot.slane %v7535, %v7771
          %vm7773 = vcmask 786112
          %v7774 = vsel %vm7773, %v7772, %v7767
          %v7775 = vadd.s32 %v7693, 4294967200
          %v7776 = vlaneseq
          %v7777 = vshrl.u32 %v7776, 7
          %v7778 = vsub.s32 %v7775, %v7777
          %v7779 = vrot.slane %v7538, %v7778
          %vm7780 = vcmask 851712
          %v7781 = vsel %vm7780, %v7779, %v7774
          %v7782 = vadd.s32 %v7693, 4294967192
          %v7783 = vlaneseq
          %v7784 = vshrl.u32 %v7783, 7
          %v7785 = vsub.s32 %v7782, %v7784
          %v7786 = vrot.slane %v7541, %v7785
          %vm7787 = vcmask 917312
          %v7788 = vsel %vm7787, %v7786, %v7781
          %v7789 = vadd.s32 %v7693, 4294967184
          %v7790 = vlaneseq
          %v7791 = vshrl.u32 %v7790, 7
          %v7792 = vsub.s32 %v7789, %v7791
          %v7793 = vrot.slane %v7544, %v7792
          %vm7794 = vcmask 982912
          %v7795 = vsel %vm7794, %v7793, %v7788
          %v7796 = vadd.s32 %v7693, 4294967176
          %v7797 = vlaneseq
          %v7798 = vshrl.u32 %v7797, 7
          %v7799 = vsub.s32 %v7796, %v7798
          %v7800 = vrot.slane %v7547, %v7799
          %vm7801 = vcmask 1048512
          %v7802 = vsel %vm7801, %v7800, %v7795
          %v7803 = vlaneseq
          %v7804 = vshrl.u32 %v7803, 7
          %v7805 = vsub.s32 %v7693, %v7804
          %v7806 = vrot.slane %v7550, %v7805
          %v7807 = vlaneseq
          %v7808 = vshrl.u32 %v7807, 7
          %v7809 = vsub.s32 %v7698, %v7808
          %v7810 = vrot.slane %v7553, %v7809
          %v7811 = vsel %vm7703, %v7810, %v7806
          %v7812 = vlaneseq
          %v7813 = vshrl.u32 %v7812, 7
          %v7814 = vsub.s32 %v7705, %v7813
          %v7815 = vrot.slane %v7556, %v7814
          %v7816 = vsel %vm7710, %v7815, %v7811
          %v7817 = vlaneseq
          %v7818 = vshrl.u32 %v7817, 7
          %v7819 = vsub.s32 %v7712, %v7818
          %v7820 = vrot.slane %v7559, %v7819
          %v7821 = vsel %vm7717, %v7820, %v7816
          %v7822 = vlaneseq
          %v7823 = vshrl.u32 %v7822, 7
          %v7824 = vsub.s32 %v7719, %v7823
          %v7825 = vrot.slane %v7562, %v7824
          %v7826 = vsel %vm7724, %v7825, %v7821
          %v7827 = vlaneseq
          %v7828 = vshrl.u32 %v7827, 7
          %v7829 = vsub.s32 %v7726, %v7828
          %v7830 = vrot.slane %v7565, %v7829
          %v7831 = vsel %vm7731, %v7830, %v7826
          %v7832 = vlaneseq
          %v7833 = vshrl.u32 %v7832, 7
          %v7834 = vsub.s32 %v7733, %v7833
          %v7835 = vrot.slane %v7568, %v7834
          %v7836 = vsel %vm7738, %v7835, %v7831
          %v7837 = vlaneseq
          %v7838 = vshrl.u32 %v7837, 7
          %v7839 = vsub.s32 %v7740, %v7838
          %v7840 = vrot.slane %v7571, %v7839
          %v7841 = vsel %vm7745, %v7840, %v7836
          %v7842 = vlaneseq
          %v7843 = vshrl.u32 %v7842, 7
          %v7844 = vsub.s32 %v7747, %v7843
          %v7845 = vrot.slane %v7574, %v7844
          %v7846 = vsel %vm7752, %v7845, %v7841
          %v7847 = vlaneseq
          %v7848 = vshrl.u32 %v7847, 7
          %v7849 = vsub.s32 %v7754, %v7848
          %v7850 = vrot.slane %v7577, %v7849
          %v7851 = vsel %vm7759, %v7850, %v7846
          %v7852 = vlaneseq
          %v7853 = vshrl.u32 %v7852, 7
          %v7854 = vsub.s32 %v7761, %v7853
          %v7855 = vrot.slane %v7580, %v7854
          %v7856 = vsel %vm7766, %v7855, %v7851
          %v7857 = vlaneseq
          %v7858 = vshrl.u32 %v7857, 7
          %v7859 = vsub.s32 %v7768, %v7858
          %v7860 = vrot.slane %v7583, %v7859
          %v7861 = vsel %vm7773, %v7860, %v7856
          %v7862 = vlaneseq
          %v7863 = vshrl.u32 %v7862, 7
          %v7864 = vsub.s32 %v7775, %v7863
          %v7865 = vrot.slane %v7586, %v7864
          %v7866 = vsel %vm7780, %v7865, %v7861
          %v7867 = vlaneseq
          %v7868 = vshrl.u32 %v7867, 7
          %v7869 = vsub.s32 %v7782, %v7868
          %v7870 = vrot.slane %v7589, %v7869
          %v7871 = vsel %vm7787, %v7870, %v7866
          %v7872 = vlaneseq
          %v7873 = vshrl.u32 %v7872, 7
          %v7874 = vsub.s32 %v7789, %v7873
          %v7875 = vrot.slane %v7592, %v7874
          %v7876 = vsel %vm7794, %v7875, %v7871
          %v7877 = vlaneseq
          %v7878 = vshrl.u32 %v7877, 7
          %v7879 = vsub.s32 %v7796, %v7878
          %v7880 = vrot.slane %v7595, %v7879
          %v7881 = vsel %vm7801, %v7880, %v7876
          %v7882 = vlaneseq
          %v7883 = vshrl.u32 %v7882, 7
          %v7884 = vsub.s32 %v7693, %v7883
          %v7885 = vrot.slane %v7598, %v7884
          %v7886 = vlaneseq
          %v7887 = vshrl.u32 %v7886, 7
          %v7888 = vsub.s32 %v7698, %v7887
          %v7889 = vrot.slane %v7601, %v7888
          %v7890 = vsel %vm7703, %v7889, %v7885
          %v7891 = vlaneseq
          %v7892 = vshrl.u32 %v7891, 7
          %v7893 = vsub.s32 %v7705, %v7892
          %v7894 = vrot.slane %v7604, %v7893
          %v7895 = vsel %vm7710, %v7894, %v7890
          %v7896 = vlaneseq
          %v7897 = vshrl.u32 %v7896, 7
          %v7898 = vsub.s32 %v7712, %v7897
          %v7899 = vrot.slane %v7607, %v7898
          %v7900 = vsel %vm7717, %v7899, %v7895
          %v7901 = vlaneseq
          %v7902 = vshrl.u32 %v7901, 7
          %v7903 = vsub.s32 %v7719, %v7902
          %v7904 = vrot.slane %v7610, %v7903
          %v7905 = vsel %vm7724, %v7904, %v7900
          %v7906 = vlaneseq
          %v7907 = vshrl.u32 %v7906, 7
          %v7908 = vsub.s32 %v7726, %v7907
          %v7909 = vrot.slane %v7613, %v7908
          %v7910 = vsel %vm7731, %v7909, %v7905
          %v7911 = vlaneseq
          %v7912 = vshrl.u32 %v7911, 7
          %v7913 = vsub.s32 %v7733, %v7912
          %v7914 = vrot.slane %v7616, %v7913
          %v7915 = vsel %vm7738, %v7914, %v7910
          %v7916 = vlaneseq
          %v7917 = vshrl.u32 %v7916, 7
          %v7918 = vsub.s32 %v7740, %v7917
          %v7919 = vrot.slane %v7619, %v7918
          %v7920 = vsel %vm7745, %v7919, %v7915
          %v7921 = vlaneseq
          %v7922 = vshrl.u32 %v7921, 7
          %v7923 = vsub.s32 %v7747, %v7922
          %v7924 = vrot.slane %v7622, %v7923
          %v7925 = vsel %vm7752, %v7924, %v7920
          %v7926 = vlaneseq
          %v7927 = vshrl.u32 %v7926, 7
          %v7928 = vsub.s32 %v7754, %v7927
          %v7929 = vrot.slane %v7625, %v7928
          %v7930 = vsel %vm7759, %v7929, %v7925
          %v7931 = vlaneseq
          %v7932 = vshrl.u32 %v7931, 7
          %v7933 = vsub.s32 %v7761, %v7932
          %v7934 = vrot.slane %v7628, %v7933
          %v7935 = vsel %vm7766, %v7934, %v7930
          %v7936 = vlaneseq
          %v7937 = vshrl.u32 %v7936, 7
          %v7938 = vsub.s32 %v7768, %v7937
          %v7939 = vrot.slane %v7631, %v7938
          %v7940 = vsel %vm7773, %v7939, %v7935
          %v7941 = vlaneseq
          %v7942 = vshrl.u32 %v7941, 7
          %v7943 = vsub.s32 %v7775, %v7942
          %v7944 = vrot.slane %v7634, %v7943
          %v7945 = vsel %vm7780, %v7944, %v7940
          %v7946 = vlaneseq
          %v7947 = vshrl.u32 %v7946, 7
          %v7948 = vsub.s32 %v7782, %v7947
          %v7949 = vrot.slane %v7637, %v7948
          %v7950 = vsel %vm7787, %v7949, %v7945
          %v7951 = vlaneseq
          %v7952 = vshrl.u32 %v7951, 7
          %v7953 = vsub.s32 %v7789, %v7952
          %v7954 = vrot.slane %v7640, %v7953
          %v7955 = vsel %vm7794, %v7954, %v7950
          %v7956 = vlaneseq
          %v7957 = vshrl.u32 %v7956, 7
          %v7958 = vsub.s32 %v7796, %v7957
          %v7959 = vrot.slane %v7643, %v7958
          %v7960 = vsel %vm7801, %v7959, %v7955
          %v7961 = vlaneseq
          %v7962 = vshrl.u32 %v7961, 7
          %v7963 = vsub.s32 %v7693, %v7962
          %v7964 = vrot.slane %v7646, %v7963
          %v7965 = vlaneseq
          %v7966 = vshrl.u32 %v7965, 7
          %v7967 = vsub.s32 %v7698, %v7966
          %v7968 = vrot.slane %v7649, %v7967
          %v7969 = vsel %vm7703, %v7968, %v7964
          %v7970 = vlaneseq
          %v7971 = vshrl.u32 %v7970, 7
          %v7972 = vsub.s32 %v7705, %v7971
          %v7973 = vrot.slane %v7652, %v7972
          %v7974 = vsel %vm7710, %v7973, %v7969
          %v7975 = vlaneseq
          %v7976 = vshrl.u32 %v7975, 7
          %v7977 = vsub.s32 %v7712, %v7976
          %v7978 = vrot.slane %v7655, %v7977
          %v7979 = vsel %vm7717, %v7978, %v7974
          %v7980 = vlaneseq
          %v7981 = vshrl.u32 %v7980, 7
          %v7982 = vsub.s32 %v7719, %v7981
          %v7983 = vrot.slane %v7658, %v7982
          %v7984 = vsel %vm7724, %v7983, %v7979
          %v7985 = vlaneseq
          %v7986 = vshrl.u32 %v7985, 7
          %v7987 = vsub.s32 %v7726, %v7986
          %v7988 = vrot.slane %v7661, %v7987
          %v7989 = vsel %vm7731, %v7988, %v7984
          %v7990 = vlaneseq
          %v7991 = vshrl.u32 %v7990, 7
          %v7992 = vsub.s32 %v7733, %v7991
          %v7993 = vrot.slane %v7664, %v7992
          %v7994 = vsel %vm7738, %v7993, %v7989
          %v7995 = vlaneseq
          %v7996 = vshrl.u32 %v7995, 7
          %v7997 = vsub.s32 %v7740, %v7996
          %v7998 = vrot.slane %v7667, %v7997
          %v7999 = vsel %vm7745, %v7998, %v7994
          %v8000 = vlaneseq
          %v8001 = vshrl.u32 %v8000, 7
          %v8002 = vsub.s32 %v7747, %v8001
          %v8003 = vrot.slane %v7670, %v8002
          %v8004 = vsel %vm7752, %v8003, %v7999
          %v8005 = vlaneseq
          %v8006 = vshrl.u32 %v8005, 7
          %v8007 = vsub.s32 %v7754, %v8006
          %v8008 = vrot.slane %v7673, %v8007
          %v8009 = vsel %vm7759, %v8008, %v8004
          %v8010 = vlaneseq
          %v8011 = vshrl.u32 %v8010, 7
          %v8012 = vsub.s32 %v7761, %v8011
          %v8013 = vrot.slane %v7676, %v8012
          %v8014 = vsel %vm7766, %v8013, %v8009
          %v8015 = vlaneseq
          %v8016 = vshrl.u32 %v8015, 7
          %v8017 = vsub.s32 %v7768, %v8016
          %v8018 = vrot.slane %v7679, %v8017
          %v8019 = vsel %vm7773, %v8018, %v8014
          %v8020 = vlaneseq
          %v8021 = vshrl.u32 %v8020, 7
          %v8022 = vsub.s32 %v7775, %v8021
          %v8023 = vrot.slane %v7682, %v8022
          %v8024 = vsel %vm7780, %v8023, %v8019
          %v8025 = vlaneseq
          %v8026 = vshrl.u32 %v8025, 7
          %v8027 = vsub.s32 %v7782, %v8026
          %v8028 = vrot.slane %v7685, %v8027
          %v8029 = vsel %vm7787, %v8028, %v8024
          %v8030 = vlaneseq
          %v8031 = vshrl.u32 %v8030, 7
          %v8032 = vsub.s32 %v7789, %v8031
          %v8033 = vrot.slane %v7688, %v8032
          %v8034 = vsel %vm7794, %v8033, %v8029
          %v8035 = vlaneseq
          %v8036 = vshrl.u32 %v8035, 7
          %v8037 = vsub.s32 %v7796, %v8036
          %v8038 = vrot.slane %v7691, %v8037
          %v8039 = vsel %vm7801, %v8038, %v8034
          %v8040 = vcombine.low %v7802, %v7881
          %v8041 = vcombine.low %v7960, %v8039
          %v8043 = vunpack.c.l.s4 1966171168
          %v8044 = vunpack.c.0.s8 %v8043
          %v8045 = vlaneseq
          %v8046 = vshrl.u32 %v8045, 7
          %v8047 = vsub.s32 %v8044, %v8046
          %v8048 = vrot.slane %v8040, %v8047
          %v8050 = vunpack.c.l.s4 1966171168
          %v8051 = vunpack.c.0.s8 %v8050
          %v8052 = vlaneseq
          %v8053 = vshrl.u32 %v8052, 7
          %v8054 = vsub.s32 %v8051, %v8053
          %v8055 = vrot.slane %v8041, %v8054
          %v8056 = vcombine.low %v8048, %v8055
          %v8058 = vunpack.c.l.s4 1966171168
          %v8059 = vunpack.c.0.s8 %v8058
          %v8060 = vlaneseq
          %v8061 = vshrl.u32 %v8060, 7
          %v8062 = vsub.s32 %v8059, %v8061
          %v8063 = vrot.slane %v8056, %v8062
          %v8065 = vlaneseq
          %vm8066 = vcmp.ge.s32.totalorder %v8065, 0
          %vm8067 = vcmp.lt.s32.totalorder %v8065, 512
          %vm8068 = vmand %vm8066, %vm8067
          %8069 = vst.msk [vmem:[%s288] sm:$0xf] %vm8068, %v8063
        $region64: #{edge_glam_forward.1} parent=47 // pred_fallthru
          _
        %s8070 = sand.u32 %s197, 1
        %s8071 = scalar_lea.sflag [#allocation8], %s8070
        %s8072 = sand.u32 %s197, 1
        %s8073 = smul.addr %s8072, 4
        %s8074 = scalar_lea.vmem [#allocation7], %s8073
        // Predicated region
        $region65: #{edge_glam_forward.1} parent=47 // pred_check
          %p8075 = pneg %p207
        $region66: #{edge_glam_forward.1} parent=47 // pred_check_branch
          %8077 = sbr.rel (%p8075) target = $region68
        $region67: #{edge_glam_forward.1} parent=47 // pred_region
          %s8078 = smul.u32 %s28, %s27
          %s8079 = smul.u32 4, %s8078
          %s8081 = ssub.s32 64, 64
          %8082 = vsyncadd %s8071, %s8081
          %s8083 = smul.addr %s8079, 16
          %s8084 = scalar_lea.hbm %s7, %s8083
          %s8086 = sshll.u32 %s8074, 4
          %s8087 = int_to_ptr.vmem [resolvable:$true] %s8086
          %8089 = dma.vmem_to_hbm [thread:$0]  %s8087, 64, %s8084, %s8071
        $region68: #{edge_glam_forward.1} parent=47 // pred_fallthru
          _
      $region48: #{edge_glam_forward.1} parent=5 // pred_fallthru
        _
      %p8090 = scmp.le.s32.totalorder 2, %s18
      // Predicated region
      $region69: #{edge_glam_forward.1} parent=5 // pred_check
        %p8091 = pneg %p8090
      $region70: #{edge_glam_forward.1} parent=5 // pred_check_branch
        %8093 = sbr.rel (%p8091) target = $region72
      $region71: #{edge_glam_forward.1} parent=5 // pred_region
        %s8094 = ssub.s32 %s18, 2
        // Predicated region
        $region73: #{edge_glam_forward.1} parent=71 // pred_check
          %p8095 = pneg %p213
        $region74: #{edge_glam_forward.1} parent=71 // pred_check_branch
          %8097 = sbr.rel (%p8095) target = $region76
        $region75: #{edge_glam_forward.1} parent=71 // pred_region
          %s8098 = sand.u32 %s198, 1
          %s8099 = scalar_lea.sflag [#allocation8], %s8098
          %s8100 = sand.u32 %s198, 1
          %s8101 = smul.addr %s8100, 4
          %s8102 = scalar_lea.vmem [#allocation7], %s8101
          %8103 = dma.done %s8099, 64
        $region76: #{edge_glam_forward.1} parent=71 // pred_fallthru
          _
      $region72: #{edge_glam_forward.1} parent=5 // pred_fallthru
        _
    $region6: #{edge_glam_forward.1} parent=1 // loop_footer
      %s22 = sadd.s32 1, %s18
    $region7: #{edge_glam_forward.1} parent=1 // loop_footer_branch
      %17 = sbr.rel target = $region3
    $region8: #{edge_glam_forward.1} parent=1 // loop_exit
      _
    %8104 = vsyncpa [#allocation8], 1
    %s8105 = scalar_lea.sflag [#allocation8], 1
    %8106 = vsyncpa %s8105, 1

</llo_original>
